<compile_context>
chip_gen: v6e
topology: v6e:2x2x1
jax: 0.10.0
libtpu: 0.0.40
codegen_flags: <defaults>
</compile_context>

<pallas_src>
import functools
import math

import jax
import jax.numpy as jnp
from jax.experimental import pallas as pl
from jax.experimental.pallas import tpu as pltpu

# ----------------------------- configuration --------------------------------
BATCH = 256              # example batch (any multiple of 8 works)
LATENT_DIM = 32          # cfg.latent_dim
NUM_STEPS = 100          # cfg.diffusion.timesteps
TIME_EMB_DIM = 128       # sinusoidal embedding size
TE_HID = 256             # time_embed hidden
LN_EPS = 1e-5

D = LATENT_DIM
H2 = 2 * D               # 64
H4 = 4 * D               # 128

# ---------------- packed lane-dense input slab (B, 128) f32 ------------------
IN_W = 128
C_Z0, C_COND, C_NOISE, C_T = 0, D, 2 * D, 3 * D          # column offsets

# ---------------- bf16 weight slab (640 rows x 128 lanes) --------------------
# Row offsets are multiples of 16 -> clean bf16 (16,128) tiles. te_w1 is the
# only 256-lane matrix and is kept as its own (128,256) bf16 operand.
W_DN_W1M = 0      # (32, 128)  denoise linear 1, z-part
W_DN_W2 = 32      # (128, 128) denoise linear 2
W_DN_W3 = 160     # (128, 128) denoise linear 3; output lanes >= D are zero
W_CE_W1 = 288     # (32, 64)   cond-encoder linear 1
W_CE_W2F = 320    # (64, 32)   cond-encoder linear 2 folded w/ condition_proj
W_TE_W2 = 384     # (256, 32)  time_embed linear 2
W_ROWS = 640
W_LANES = 128

# ---------------- f32 vector slab (16 rows x 256 lanes) ----------------------
(V_TE_B1, V_CE_B1, V_CE_G, V_CE_BE, V_CE_B2F, V_TE_B2,
 V_DN_B1, V_DN_G, V_DN_BE, V_DN_B2, V_DN_B3,
 V_FREQ128, V_PHASE128, V_SSEMASK, V_DN_W1T) = range(15)
V_ROWS = 16
V_LANES = 256

# ---------------- output slab (B, 128) f32 -----------------------------------
# lanes [0,D) = predicted flow, lane D = per-row squared error,
# lanes [2D,3D) = target (= noise - z0), everything else 0.
OUT_W = 128


# ------------------------------ kernel helpers -------------------------------
def _silu(x):
    return x * jax.nn.sigmoid(x)


def _layernorm(x, gamma, beta):
    # one-pass variance: two independent reduces instead of two dependent ones
    n_inv = 1.0 / x.shape[-1]
    mean = jnp.sum(x, axis=-1, keepdims=True) * n_inv
    meansq = jnp.sum(x * x, axis=-1, keepdims=True) * n_inv
    var = jnp.maximum(meansq - mean * mean, 0.0)
    return (x - mean) * jax.lax.rsqrt(var + LN_EPS) * gamma + beta


def _dot(a, w_bf16):
    # bf16 MXU operands, f32 accumulation
    return jnp.dot(a.astype(jnp.bfloat16), w_bf16,
                   preferred_element_type=jnp.float32)


# --------------------------------- kernel ------------------------------------
def kced_kernel(in_ref, w_ref, te_w1_ref, v_ref, out_ref):
    # ---- packed activations (single lane-dense load source)
    z0 = in_ref[:, C_Z0:C_Z0 + D]                       # (TB, D)
    cond = in_ref[:, C_COND:C_COND + D]                 # (TB, D)
    noise = in_ref[:, C_NOISE:C_NOISE + D]              # (TB, D)
    t = in_ref[:, C_T:C_T + 1]                          # (TB, 1) float timesteps

    # ---- static windows into the packed bf16 weight slab (128 lanes)
    # TODO(synk): verify via pl.lower_as_mlir that the partial-lane windows
    # below lower to strided loads rather than materialized VMEM copies.
    dn_w1m = w_ref[W_DN_W1M:W_DN_W1M + D, 0:H4]         # (32, 128)
    dn_w2 = w_ref[W_DN_W2:W_DN_W2 + H4, 0:H4]           # (128, 128)
    dn_w3p = w_ref[W_DN_W3:W_DN_W3 + H4, 0:H4]          # (128, 128), cols >= D zero
    ce_w1 = w_ref[W_CE_W1:W_CE_W1 + D, 0:H2]            # (32, 64)
    ce_w2f = w_ref[W_CE_W2F:W_CE_W2F + H2, 0:D]         # (64, 32) folded w/ cond_proj
    te_w2 = w_ref[W_TE_W2:W_TE_W2 + TE_HID, 0:D]        # (256, 32)
    te_w1 = te_w1_ref[...]                               # (128, 256)

    # ---- f32 vector params (single-row windows)
    te_b1 = v_ref[V_TE_B1:V_TE_B1 + 1, 0:TE_HID]
    ce_b1 = v_ref[V_CE_B1:V_CE_B1 + 1, 0:H2]
    ce_g = v_ref[V_CE_G:V_CE_G + 1, 0:H2]
    ce_be = v_ref[V_CE_BE:V_CE_BE + 1, 0:H2]
    ce_b2f = v_ref[V_CE_B2F:V_CE_B2F + 1, 0:D]
    te_b2 = v_ref[V_TE_B2:V_TE_B2 + 1, 0:D]
    dn_b1 = v_ref[V_DN_B1:V_DN_B1 + 1, 0:H4]
    dn_g = v_ref[V_DN_G:V_DN_G + 1, 0:H4]
    dn_be = v_ref[V_DN_BE:V_DN_BE + 1, 0:H4]
    dn_b2 = v_ref[V_DN_B2:V_DN_B2 + 1, 0:H4]
    dn_b3p = v_ref[V_DN_B3:V_DN_B3 + 1, 0:H4]            # lanes >= D zero
    freq128 = v_ref[V_FREQ128:V_FREQ128 + 1, 0:TIME_EMB_DIM]   # [f | f]
    phase128 = v_ref[V_PHASE128:V_PHASE128 + 1, 0:TIME_EMB_DIM]  # [0 | pi/2]
    sse_mask = v_ref[V_SSEMASK:V_SSEMASK + 1, 0:H4]      # 1.0 at lane D
    dn_w1t = v_ref[V_DN_W1T:V_DN_W1T + 1, 0:H4]          # t_norm column of dn lin 1

    # ---- condition_encoder (Lin->SiLU->LN->Lin) with condition_proj folded in
    h = _silu(_dot(cond, ce_w1) + ce_b1)                 # (TB, 64)
    h = _layernorm(h, ce_g, ce_be)
    cond_proj = _dot(h, ce_w2f) + ce_b2f                 # (TB, D)
    # Dropout(0.1) -> identity (inference semantics)

    # ---- flow-matching noise mix
    t_norm = t * (1.0 / NUM_STEPS)                       # (TB, 1)
    z_t = (1.0 - t_norm) * z0 + t_norm * noise

    # ---- sinusoidal time embedding as ONE full-lane sin (cos = sin(.+pi/2))
    te_in = jnp.sin(t * freq128 + phase128)              # (TB, 128) == [sin|cos]
    te_h = _silu(_dot(te_in, te_w1) + te_b1)             # (TB, 256)
    t_emb = _dot(te_h, te_w2) + te_b2                    # (TB, D)

    # ---- denoising net on concat([z_t + cond_proj + t_emb, t_norm]); concat folded
    x = z_t + cond_proj + t_emb
    h1 = _silu(_dot(x, dn_w1m) + t_norm * dn_w1t + dn_b1)
    h1 = _layernorm(h1, dn_g, dn_be)
    h2 = _silu(_dot(h1, dn_w2) + dn_b2)
    # Dropout(0.1) -> identity (inference semantics)
    flow_full = _dot(h2, dn_w3p) + dn_b3p                # (TB, 128); lanes >= D are 0

    # ---- target + per-row squared error, stashed in spare output lanes
    target = noise - z0                                  # (TB, D) exact f32
    diff = flow_full[:, :D] - target
    row_sse = jnp.sum(diff * diff, axis=-1, keepdims=True)  # (TB, 1)

    out_ref[...] = flow_full + row_sse * sse_mask        # full-lane store
    out_ref[:, C_NOISE:C_NOISE + D] = target             # lanes [64:96) were zero


# ------------------------------- wrapper --------------------------------------
@functools.partial(jax.jit, static_argnames=("num_tiles",))
def knowledge_conditioned_diffusion_forward(z0, condition, noise, t,
                                            w_slab, te_w1, v_slab, *,
                                            num_tiles=1):
    """Returns (predicted_flow, loss, target) exactly like the torch module."""
    B = z0.shape[0]
    assert B % (num_tiles * 8) == 0
    tile_b = B // num_tiles

    # one lane-dense (B, 128) input slab: z0 | condition | noise | t | zeros
    t_col = t.astype(jnp.float32).reshape(B, 1)
    pad = jnp.zeros((B, IN_W - (3 * D + 1)), jnp.float32)
    packed_in = jnp.concatenate([z0, condition, noise, t_col, pad], axis=1)

    out = pl.pallas_call(
        kced_kernel,
        out_shape=jax.ShapeDtypeStruct((B, OUT_W), jnp.float32),
        grid=(num_tiles,),
        in_specs=[
            pl.BlockSpec((tile_b, IN_W), lambda i: (i, 0)),        # packed activations
            pl.BlockSpec((W_ROWS, W_LANES), lambda i: (0, 0)),     # bf16 weight slab
            pl.BlockSpec((TIME_EMB_DIM, TE_HID), lambda i: (0, 0)),  # te_w1 (bf16)
            pl.BlockSpec((V_ROWS, V_LANES), lambda i: (0, 0)),     # f32 vector slab
        ],
        out_specs=pl.BlockSpec((tile_b, OUT_W), lambda i: (i, 0)),
        compiler_params=pltpu.CompilerParams(
            dimension_semantics=("parallel",)),   # v7x: batch tiles across both TCs
    )(packed_in, w_slab, te_w1, v_slab)

    predicted_flow = out[:, :D]
    target = out[:, C_NOISE:C_NOISE + D]                 # noise - z0, computed in-kernel
    loss = jnp.sum(out[:, D]) * (1.0 / (B * D))          # finish MSE mean (tiny epilogue)
    return predicted_flow, loss, target


def default_num_tiles(batch):
    """1 grid step on single-TensorCore parts (v5e/v6e); 2 parallel batch
    tiles on v7x so both TensorCores get work."""
    try:
        kind = jax.devices()[0].device_kind.lower()
    except Exception:
        kind = ""
    return 2 if ("v7" in kind and batch % 16 == 0) else 1


# --------------------------- parameter construction ---------------------------
def _linear_init(key, fan_in, fan_out):
    """PyTorch nn.Linear default init; weight as [in, out], bias as [out]."""
    kw, kb = jax.random.split(key)
    bound = 1.0 / math.sqrt(fan_in)
    w = jax.random.uniform(kw, (fan_in, fan_out), jnp.float32, -bound, bound)
    b = jax.random.uniform(kb, (fan_out,), jnp.float32, -bound, bound)
    return w, b


def make_packed_params(key):
    """Build PyTorch-default-initialised weights, fold condition_proj, and pack
    them into (bf16 128-lane weight slab, bf16 te_w1, f32 vector slab)."""
    ks = jax.random.split(key, 8)

    # condition_encoder: Linear(D,2D) SiLU LN(2D) Linear(2D,D) Dropout
    ce_w1, ce_b1 = _linear_init(ks[0], D, H2)
    ce_g, ce_be = jnp.ones((H2,), jnp.float32), jnp.zeros((H2,), jnp.float32)
    ce_w2, ce_b2 = _linear_init(ks[1], H2, D)

    # time_embed: Linear(128,256) SiLU Linear(256,D)
    te_w1, te_b1 = _linear_init(ks[2], TIME_EMB_DIM, TE_HID)
    te_w2, te_b2 = _linear_init(ks[3], TE_HID, D)

    # condition_proj: Linear(D,D) -> folded into ce linear 2 (Dropout is identity)
    cp_w, cp_b = _linear_init(ks[4], D, D)
    ce_w2f = ce_w2 @ cp_w
    ce_b2f = ce_b2 @ cp_w + cp_b

    # denoising_net: Linear(D+1,4D) SiLU LN(4D) Linear(4D,4D) SiLU Dropout Linear(4D,D)
    dn_w1, dn_b1 = _linear_init(ks[5], D + 1, H4)
    dn_w1m, dn_w1t = dn_w1[:D], dn_w1[D]            # z-part + t_norm column
    dn_g, dn_be = jnp.ones((H4,), jnp.float32), jnp.zeros((H4,), jnp.float32)
    dn_w2, dn_b2 = _linear_init(ks[6], H4, H4)
    dn_w3, dn_b3 = _linear_init(ks[7], H4, D)

    # sinusoidal frequencies, duplicated across 128 lanes; phase row gives cos
    half = TIME_EMB_DIM // 2
    scale = math.log(10000.0) / (half - 1)
    freq = jnp.exp(jnp.arange(half, dtype=jnp.float32) * (-scale))
    freq128 = jnp.concatenate([freq, freq])
    phase128 = jnp.concatenate([jnp.zeros((half,), jnp.float32),
                                jnp.full((half,), 0.5 * math.pi, jnp.float32)])

    # one-hot mask placing the per-row SSE at lane D of the output slab
    sse_mask = jnp.zeros((H4,), jnp.float32).at[D].set(1.0)

    # ---- bf16 weight slab (128 lanes, no structural-zero lanes beyond padding)
    w = jnp.zeros((W_ROWS, W_LANES), jnp.float32)
    w = w.at[W_DN_W1M:W_DN_W1M + D, :H4].set(dn_w1m)
    w = w.at[W_DN_W2:W_DN_W2 + H4, :H4].set(dn_w2)
    w = w.at[W_DN_W3:W_DN_W3 + H4, :D].set(dn_w3)       # output lanes >= D stay zero
    w = w.at[W_CE_W1:W_CE_W1 + D, :H2].set(ce_w1)
    w = w.at[W_CE_W2F:W_CE_W2F + H2, :D].set(ce_w2f)
    w = w.at[W_TE_W2:W_TE_W2 + TE_HID, :D].set(te_w2)
    w = w.astype(jnp.bfloat16)

    te_w1_bf16 = te_w1.astype(jnp.bfloat16)             # (128, 256)

    # ---- f32 vector slab
    v = jnp.zeros((V_ROWS, V_LANES), jnp.float32)
    v = v.at[V_TE_B1, :TE_HID].set(te_b1)
    v = v.at[V_CE_B1, :H2].set(ce_b1)
    v = v.at[V_CE_G, :H2].set(ce_g)
    v = v.at[V_CE_BE, :H2].set(ce_be)
    v = v.at[V_CE_B2F, :D].set(ce_b2f)
    v = v.at[V_TE_B2, :D].set(te_b2)
    v = v.at[V_DN_B1, :H4].set(dn_b1)
    v = v.at[V_DN_G, :H4].set(dn_g)
    v = v.at[V_DN_BE, :H4].set(dn_be)
    v = v.at[V_DN_B2, :H4].set(dn_b2)
    v = v.at[V_DN_B3, :D].set(dn_b3)                    # lanes >= D stay zero
    v = v.at[V_FREQ128, :TIME_EMB_DIM].set(freq128)
    v = v.at[V_PHASE128, :TIME_EMB_DIM].set(phase128)
    v = v.at[V_SSEMASK, :H4].set(sse_mask)
    v = v.at[V_DN_W1T, :H4].set(dn_w1t)
    return w, te_w1_bf16, jax.block_until_ready(v)


# ----------------------------------- main --------------------------------------
if __name__ == "__main__":
    root = jax.random.PRNGKey(0)
    k_param, k_z, k_cond, k_noise, k_t = jax.random.split(root, 5)

    w_slab, te_w1_slab, v_slab = make_packed_params(k_param)

    z = jax.random.normal(k_z, (BATCH, LATENT_DIM), jnp.float32)
    condition = jax.random.normal(k_cond, (BATCH, LATENT_DIM), jnp.float32)
    # torch.randint / torch.randn_like are drawn deterministically host-side here
    noise = jax.random.normal(k_noise, (BATCH, LATENT_DIM), jnp.float32)
    t = jax.random.randint(k_t, (BATCH,), 0, NUM_STEPS)

    flow, loss, target = knowledge_conditioned_diffusion_forward(
        z, condition, noise, t, w_slab, te_w1_slab, v_slab,
        num_tiles=default_num_tiles(BATCH))
    jax.block_until_ready((flow, loss, target))

    assert flow.shape == (BATCH, LATENT_DIM)
    assert target.shape == (BATCH, LATENT_DIM)
    assert loss.shape == ()
    assert bool(jnp.isfinite(loss))
    assert bool(jnp.allclose(target, noise - z, atol=1e-6))
    print("KERNEL_OK")
</pallas_src>

<mosaic_0001>
module attributes {stable_mosaic.version = 11 : i64} {
  func.func @kced_kernel(%arg0: i32, %arg1: memref<256x128xf32, #tpu.memory_space<vmem>>, %arg2: memref<640x128xbf16, #tpu.memory_space<vmem>>, %arg3: memref<128x256xbf16, #tpu.memory_space<vmem>>, %arg4: memref<16x256xf32, #tpu.memory_space<vmem>>, %arg5: memref<256x128xf32, #tpu.memory_space<vmem>>) attributes {dimension_semantics = [#tpu.dimension_semantics<parallel>], iteration_bounds = array<i64: 1>, scalar_prefetch = 0 : i64, scratch_operands = 0 : i64, tpu.core_type = #tpu.core_type<tc>, window_params = [{transform_indices = @transform_0, window_bounds = array<i64: 256, 128>}, {pipeline_mode = #tpu.pipeline_mode<synchronous>, transform_indices = @transform_1, window_bounds = array<i64: 640, 128>}, {pipeline_mode = #tpu.pipeline_mode<synchronous>, transform_indices = @transform_2, window_bounds = array<i64: 128, 256>}, {pipeline_mode = #tpu.pipeline_mode<synchronous>, transform_indices = @transform_3, window_bounds = array<i64: 16, 256>}, {transform_indices = @transform_4, window_bounds = array<i64: 256, 128>}]} {
    %c0 = arith.constant 0 : index
    %c0_0 = arith.constant 0 : index
    %0 = vector.load %arg1[%c0, %c0_0] : memref<256x128xf32, #tpu.memory_space<vmem>>, vector<256x32xf32>
    %c0_1 = arith.constant 0 : index
    %c32 = arith.constant 32 : index
    %1 = vector.load %arg1[%c0_1, %c32] : memref<256x128xf32, #tpu.memory_space<vmem>>, vector<256x32xf32>
    %c0_2 = arith.constant 0 : index
    %c64 = arith.constant 64 : index
    %2 = vector.load %arg1[%c0_2, %c64] : memref<256x128xf32, #tpu.memory_space<vmem>>, vector<256x32xf32>
    %c0_3 = arith.constant 0 : index
    %c96 = arith.constant 96 : index
    %3 = vector.load %arg1[%c0_3, %c96] : memref<256x128xf32, #tpu.memory_space<vmem>>, vector<256x1xf32>
    %c0_4 = arith.constant 0 : index
    %c0_5 = arith.constant 0 : index
    %4 = vector.load %arg2[%c0_4, %c0_5] : memref<640x128xbf16, #tpu.memory_space<vmem>>, vector<32x128xbf16>
    %c32_6 = arith.constant 32 : index
    %c0_7 = arith.constant 0 : index
    %5 = vector.load %arg2[%c32_6, %c0_7] : memref<640x128xbf16, #tpu.memory_space<vmem>>, vector<128x128xbf16>
    %c160 = arith.constant 160 : index
    %c0_8 = arith.constant 0 : index
    %6 = vector.load %arg2[%c160, %c0_8] : memref<640x128xbf16, #tpu.memory_space<vmem>>, vector<128x128xbf16>
    %c288 = arith.constant 288 : index
    %c0_9 = arith.constant 0 : index
    %7 = vector.load %arg2[%c288, %c0_9] : memref<640x128xbf16, #tpu.memory_space<vmem>>, vector<32x64xbf16>
    %c320 = arith.constant 320 : index
    %c0_10 = arith.constant 0 : index
    %8 = vector.load %arg2[%c320, %c0_10] : memref<640x128xbf16, #tpu.memory_space<vmem>>, vector<64x32xbf16>
    %c384 = arith.constant 384 : index
    %c0_11 = arith.constant 0 : index
    %9 = vector.load %arg2[%c384, %c0_11] : memref<640x128xbf16, #tpu.memory_space<vmem>>, vector<256x32xbf16>
    %c0_12 = arith.constant 0 : index
    %c0_13 = arith.constant 0 : index
    %10 = vector.load %arg3[%c0_12, %c0_13] : memref<128x256xbf16, #tpu.memory_space<vmem>>, vector<128x256xbf16>
    %c0_14 = arith.constant 0 : index
    %c0_15 = arith.constant 0 : index
    %11 = vector.load %arg4[%c0_14, %c0_15] : memref<16x256xf32, #tpu.memory_space<vmem>>, vector<1x256xf32>
    %c1 = arith.constant 1 : index
    %c0_16 = arith.constant 0 : index
    %12 = vector.load %arg4[%c1, %c0_16] : memref<16x256xf32, #tpu.memory_space<vmem>>, vector<1x64xf32>
    %c2 = arith.constant 2 : index
    %c0_17 = arith.constant 0 : index
    %13 = vector.load %arg4[%c2, %c0_17] : memref<16x256xf32, #tpu.memory_space<vmem>>, vector<1x64xf32>
    %c3 = arith.constant 3 : index
    %c0_18 = arith.constant 0 : index
    %14 = vector.load %arg4[%c3, %c0_18] : memref<16x256xf32, #tpu.memory_space<vmem>>, vector<1x64xf32>
    %c4 = arith.constant 4 : index
    %c0_19 = arith.constant 0 : index
    %15 = vector.load %arg4[%c4, %c0_19] : memref<16x256xf32, #tpu.memory_space<vmem>>, vector<1x32xf32>
    %c5 = arith.constant 5 : index
    %c0_20 = arith.constant 0 : index
    %16 = vector.load %arg4[%c5, %c0_20] : memref<16x256xf32, #tpu.memory_space<vmem>>, vector<1x32xf32>
    %c6 = arith.constant 6 : index
    %c0_21 = arith.constant 0 : index
    %17 = vector.load %arg4[%c6, %c0_21] : memref<16x256xf32, #tpu.memory_space<vmem>>, vector<1x128xf32>
    %c7 = arith.constant 7 : index
    %c0_22 = arith.constant 0 : index
    %18 = vector.load %arg4[%c7, %c0_22] : memref<16x256xf32, #tpu.memory_space<vmem>>, vector<1x128xf32>
    %c8 = arith.constant 8 : index
    %c0_23 = arith.constant 0 : index
    %19 = vector.load %arg4[%c8, %c0_23] : memref<16x256xf32, #tpu.memory_space<vmem>>, vector<1x128xf32>
    %c9 = arith.constant 9 : index
    %c0_24 = arith.constant 0 : index
    %20 = vector.load %arg4[%c9, %c0_24] : memref<16x256xf32, #tpu.memory_space<vmem>>, vector<1x128xf32>
    %c10 = arith.constant 10 : index
    %c0_25 = arith.constant 0 : index
    %21 = vector.load %arg4[%c10, %c0_25] : memref<16x256xf32, #tpu.memory_space<vmem>>, vector<1x128xf32>
    %c11 = arith.constant 11 : index
    %c0_26 = arith.constant 0 : index
    %22 = vector.load %arg4[%c11, %c0_26] : memref<16x256xf32, #tpu.memory_space<vmem>>, vector<1x128xf32>
    %c12 = arith.constant 12 : index
    %c0_27 = arith.constant 0 : index
    %23 = vector.load %arg4[%c12, %c0_27] : memref<16x256xf32, #tpu.memory_space<vmem>>, vector<1x128xf32>
    %c13 = arith.constant 13 : index
    %c0_28 = arith.constant 0 : index
    %24 = vector.load %arg4[%c13, %c0_28] : memref<16x256xf32, #tpu.memory_space<vmem>>, vector<1x128xf32>
    %c14 = arith.constant 14 : index
    %c0_29 = arith.constant 0 : index
    %25 = vector.load %arg4[%c14, %c0_29] : memref<16x256xf32, #tpu.memory_space<vmem>>, vector<1x128xf32>
    %26 = arith.truncf %1 : vector<256x32xf32> to vector<256x32xbf16>
    %cst = arith.constant dense<0.000000e+00> : vector<256x64xf32>
    %27 = tpu.matmul %26, %7, %cst {dimension_numbers = #tpu.dot_dimension_numbers<[1], [0], [0], [1], [0, 0, 1, 1], [], []>} : vector<256x32xbf16>, vector<32x64xbf16>, vector<256x64xf32> -> vector<256x64xf32>
    %28 = vector.broadcast %12 : vector<1x64xf32> to vector<256x64xf32>
    %29 = arith.addf %27, %28 : vector<256x64xf32>
    %30 = arith.negf %29 : vector<256x64xf32>
    %31 = math.exp %30 : vector<256x64xf32>
    %cst_30 = arith.constant 1.000000e+00 : f32
    %32 = vector.broadcast %cst_30 : f32 to vector<256x64xf32>
    %33 = arith.addf %32, %31 : vector<256x64xf32>
    %34 = arith.divf %32, %33 : vector<256x64xf32>
    %35 = arith.mulf %29, %34 : vector<256x64xf32>
    %cst_31 = arith.constant dense<0.000000e+00> : vector<256xf32>
    %36 = vector.multi_reduction <add>, %35, %cst_31 [1] : vector<256x64xf32> to vector<256xf32>
    %37 = vector.shape_cast %36 : vector<256xf32> to vector<256x1xf32>
    %cst_32 = arith.constant 1.562500e-02 : f32
    %38 = vector.broadcast %cst_32 : f32 to vector<256x1xf32>
    %39 = arith.mulf %37, %38 : vector<256x1xf32>
    %40 = arith.mulf %35, %35 : vector<256x64xf32>
    %cst_33 = arith.constant dense<0.000000e+00> : vector<256xf32>
    %41 = vector.multi_reduction <add>, %40, %cst_33 [1] : vector<256x64xf32> to vector<256xf32>
    %42 = vector.shape_cast %41 : vector<256xf32> to vector<256x1xf32>
    %cst_34 = arith.constant 1.562500e-02 : f32
    %43 = vector.broadcast %cst_34 : f32 to vector<256x1xf32>
    %44 = arith.mulf %42, %43 : vector<256x1xf32>
    %45 = arith.mulf %39, %39 : vector<256x1xf32>
    %46 = arith.subf %44, %45 : vector<256x1xf32>
    %cst_35 = arith.constant 0.000000e+00 : f32
    %47 = vector.broadcast %cst_35 : f32 to vector<256x1xf32>
    %48 = arith.maximumf %46, %47 : vector<256x1xf32>
    %49 = vector.broadcast %39 : vector<256x1xf32> to vector<256x64xf32>
    %50 = arith.subf %35, %49 : vector<256x64xf32>
    %cst_36 = arith.constant 9.99999974E-6 : f32
    %51 = vector.broadcast %cst_36 : f32 to vector<256x1xf32>
    %52 = arith.addf %48, %51 : vector<256x1xf32>
    %53 = math.rsqrt %52 : vector<256x1xf32>
    %54 = vector.broadcast %53 : vector<256x1xf32> to vector<256x64xf32>
    %55 = arith.mulf %50, %54 : vector<256x64xf32>
    %56 = vector.broadcast %13 : vector<1x64xf32> to vector<256x64xf32>
    %57 = arith.mulf %55, %56 : vector<256x64xf32>
    %58 = vector.broadcast %14 : vector<1x64xf32> to vector<256x64xf32>
    %59 = arith.addf %57, %58 : vector<256x64xf32>
    %60 = arith.truncf %59 : vector<256x64xf32> to vector<256x64xbf16>
    %cst_37 = arith.constant dense<0.000000e+00> : vector<256x32xf32>
    %61 = tpu.matmul %60, %8, %cst_37 {dimension_numbers = #tpu.dot_dimension_numbers<[1], [0], [0], [1], [0, 0, 1, 1], [], []>} : vector<256x64xbf16>, vector<64x32xbf16>, vector<256x32xf32> -> vector<256x32xf32>
    %62 = vector.broadcast %15 : vector<1x32xf32> to vector<256x32xf32>
    %63 = arith.addf %61, %62 : vector<256x32xf32>
    %cst_38 = arith.constant 0.00999999977 : f32
    %64 = vector.broadcast %cst_38 : f32 to vector<256x1xf32>
    %65 = arith.mulf %3, %64 : vector<256x1xf32>
    %cst_39 = arith.constant 1.000000e+00 : f32
    %66 = vector.broadcast %cst_39 : f32 to vector<256x1xf32>
    %67 = arith.subf %66, %65 : vector<256x1xf32>
    %68 = vector.broadcast %67 : vector<256x1xf32> to vector<256x32xf32>
    %69 = arith.mulf %68, %0 : vector<256x32xf32>
    %70 = vector.broadcast %65 : vector<256x1xf32> to vector<256x32xf32>
    %71 = arith.mulf %70, %2 : vector<256x32xf32>
    %72 = arith.addf %69, %71 : vector<256x32xf32>
    %73 = vector.broadcast %3 : vector<256x1xf32> to vector<256x128xf32>
    %74 = vector.broadcast %22 : vector<1x128xf32> to vector<256x128xf32>
    %75 = arith.mulf %73, %74 : vector<256x128xf32>
    %76 = vector.broadcast %23 : vector<1x128xf32> to vector<256x128xf32>
    %77 = arith.addf %75, %76 : vector<256x128xf32>
    %78 = math.sin %77 : vector<256x128xf32>
    %79 = arith.truncf %78 : vector<256x128xf32> to vector<256x128xbf16>
    %cst_40 = arith.constant dense<0.000000e+00> : vector<256x256xf32>
    %80 = tpu.matmul %79, %10, %cst_40 {dimension_numbers = #tpu.dot_dimension_numbers<[1], [0], [0], [1], [0, 0, 1, 1], [], []>} : vector<256x128xbf16>, vector<128x256xbf16>, vector<256x256xf32> -> vector<256x256xf32>
    %81 = vector.broadcast %11 : vector<1x256xf32> to vector<256x256xf32>
    %82 = arith.addf %80, %81 : vector<256x256xf32>
    %83 = arith.negf %82 : vector<256x256xf32>
    %84 = math.exp %83 : vector<256x256xf32>
    %cst_41 = arith.constant 1.000000e+00 : f32
    %85 = vector.broadcast %cst_41 : f32 to vector<256x256xf32>
    %86 = arith.addf %85, %84 : vector<256x256xf32>
    %87 = arith.divf %85, %86 : vector<256x256xf32>
    %88 = arith.mulf %82, %87 : vector<256x256xf32>
    %89 = arith.truncf %88 : vector<256x256xf32> to vector<256x256xbf16>
    %cst_42 = arith.constant dense<0.000000e+00> : vector<256x32xf32>
    %90 = tpu.matmul %89, %9, %cst_42 {dimension_numbers = #tpu.dot_dimension_numbers<[1], [0], [0], [1], [0, 0, 1, 1], [], []>} : vector<256x256xbf16>, vector<256x32xbf16>, vector<256x32xf32> -> vector<256x32xf32>
    %91 = vector.broadcast %16 : vector<1x32xf32> to vector<256x32xf32>
    %92 = arith.addf %90, %91 : vector<256x32xf32>
    %93 = arith.addf %72, %63 : vector<256x32xf32>
    %94 = arith.addf %93, %92 : vector<256x32xf32>
    %95 = arith.truncf %94 : vector<256x32xf32> to vector<256x32xbf16>
    %cst_43 = arith.constant dense<0.000000e+00> : vector<256x128xf32>
    %96 = tpu.matmul %95, %4, %cst_43 {dimension_numbers = #tpu.dot_dimension_numbers<[1], [0], [0], [1], [0, 0, 1, 1], [], []>} : vector<256x32xbf16>, vector<32x128xbf16>, vector<256x128xf32> -> vector<256x128xf32>
    %97 = vector.broadcast %65 : vector<256x1xf32> to vector<256x128xf32>
    %98 = vector.broadcast %25 : vector<1x128xf32> to vector<256x128xf32>
    %99 = arith.mulf %97, %98 : vector<256x128xf32>
    %100 = arith.addf %96, %99 : vector<256x128xf32>
    %101 = vector.broadcast %17 : vector<1x128xf32> to vector<256x128xf32>
    %102 = arith.addf %100, %101 : vector<256x128xf32>
    %103 = arith.negf %102 : vector<256x128xf32>
    %104 = math.exp %103 : vector<256x128xf32>
    %cst_44 = arith.constant 1.000000e+00 : f32
    %105 = vector.broadcast %cst_44 : f32 to vector<256x128xf32>
    %106 = arith.addf %105, %104 : vector<256x128xf32>
    %107 = arith.divf %105, %106 : vector<256x128xf32>
    %108 = arith.mulf %102, %107 : vector<256x128xf32>
    %cst_45 = arith.constant dense<0.000000e+00> : vector<256xf32>
    %109 = vector.multi_reduction <add>, %108, %cst_45 [1] : vector<256x128xf32> to vector<256xf32>
    %110 = vector.shape_cast %109 : vector<256xf32> to vector<256x1xf32>
    %cst_46 = arith.constant 7.812500e-03 : f32
    %111 = vector.broadcast %cst_46 : f32 to vector<256x1xf32>
    %112 = arith.mulf %110, %111 : vector<256x1xf32>
    %113 = arith.mulf %108, %108 : vector<256x128xf32>
    %cst_47 = arith.constant dense<0.000000e+00> : vector<256xf32>
    %114 = vector.multi_reduction <add>, %113, %cst_47 [1] : vector<256x128xf32> to vector<256xf32>
    %115 = vector.shape_cast %114 : vector<256xf32> to vector<256x1xf32>
    %cst_48 = arith.constant 7.812500e-03 : f32
    %116 = vector.broadcast %cst_48 : f32 to vector<256x1xf32>
    %117 = arith.mulf %115, %116 : vector<256x1xf32>
    %118 = arith.mulf %112, %112 : vector<256x1xf32>
    %119 = arith.subf %117, %118 : vector<256x1xf32>
    %cst_49 = arith.constant 0.000000e+00 : f32
    %120 = vector.broadcast %cst_49 : f32 to vector<256x1xf32>
    %121 = arith.maximumf %119, %120 : vector<256x1xf32>
    %122 = vector.broadcast %112 : vector<256x1xf32> to vector<256x128xf32>
    %123 = arith.subf %108, %122 : vector<256x128xf32>
    %cst_50 = arith.constant 9.99999974E-6 : f32
    %124 = vector.broadcast %cst_50 : f32 to vector<256x1xf32>
    %125 = arith.addf %121, %124 : vector<256x1xf32>
    %126 = math.rsqrt %125 : vector<256x1xf32>
    %127 = vector.broadcast %126 : vector<256x1xf32> to vector<256x128xf32>
    %128 = arith.mulf %123, %127 : vector<256x128xf32>
    %129 = vector.broadcast %18 : vector<1x128xf32> to vector<256x128xf32>
    %130 = arith.mulf %128, %129 : vector<256x128xf32>
    %131 = vector.broadcast %19 : vector<1x128xf32> to vector<256x128xf32>
    %132 = arith.addf %130, %131 : vector<256x128xf32>
    %133 = arith.truncf %132 : vector<256x128xf32> to vector<256x128xbf16>
    %cst_51 = arith.constant dense<0.000000e+00> : vector<256x128xf32>
    %134 = tpu.matmul %133, %5, %cst_51 {dimension_numbers = #tpu.dot_dimension_numbers<[1], [0], [0], [1], [0, 0, 1, 1], [], []>} : vector<256x128xbf16>, vector<128x128xbf16>, vector<256x128xf32> -> vector<256x128xf32>
    %135 = vector.broadcast %20 : vector<1x128xf32> to vector<256x128xf32>
    %136 = arith.addf %134, %135 : vector<256x128xf32>
    %137 = arith.negf %136 : vector<256x128xf32>
    %138 = math.exp %137 : vector<256x128xf32>
    %cst_52 = arith.constant 1.000000e+00 : f32
    %139 = vector.broadcast %cst_52 : f32 to vector<256x128xf32>
    %140 = arith.addf %139, %138 : vector<256x128xf32>
    %141 = arith.divf %139, %140 : vector<256x128xf32>
    %142 = arith.mulf %136, %141 : vector<256x128xf32>
    %143 = arith.truncf %142 : vector<256x128xf32> to vector<256x128xbf16>
    %cst_53 = arith.constant dense<0.000000e+00> : vector<256x128xf32>
    %144 = tpu.matmul %143, %6, %cst_53 {dimension_numbers = #tpu.dot_dimension_numbers<[1], [0], [0], [1], [0, 0, 1, 1], [], []>} : vector<256x128xbf16>, vector<128x128xbf16>, vector<256x128xf32> -> vector<256x128xf32>
    %145 = vector.broadcast %21 : vector<1x128xf32> to vector<256x128xf32>
    %146 = arith.addf %144, %145 : vector<256x128xf32>
    %147 = arith.subf %2, %0 : vector<256x32xf32>
    %148 = vector.extract_strided_slice %146 {offsets = [0, 0], sizes = [256, 32], strides = [1, 1]} : vector<256x128xf32> to vector<256x32xf32>
    %149 = arith.subf %148, %147 : vector<256x32xf32>
    %150 = arith.mulf %149, %149 : vector<256x32xf32>
    %cst_54 = arith.constant dense<0.000000e+00> : vector<256xf32>
    %151 = vector.multi_reduction <add>, %150, %cst_54 [1] : vector<256x32xf32> to vector<256xf32>
    %152 = vector.shape_cast %151 : vector<256xf32> to vector<256x1xf32>
    %153 = vector.broadcast %152 : vector<256x1xf32> to vector<256x128xf32>
    %154 = vector.broadcast %24 : vector<1x128xf32> to vector<256x128xf32>
    %155 = arith.mulf %153, %154 : vector<256x128xf32>
    %156 = arith.addf %146, %155 : vector<256x128xf32>
    %c0_55 = arith.constant 0 : index
    %c0_56 = arith.constant 0 : index
    %157 = vector.load %arg5[%c0_55, %c0_56] : memref<256x128xf32, #tpu.memory_space<vmem>>, vector<256x128xf32>
    tpu.vector_store %arg5[%c0_55, %c0_56], %156 {strides = array<i32>} : memref<256x128xf32, #tpu.memory_space<vmem>>, vector<256x128xf32>,
    %c0_57 = arith.constant 0 : index
    %c64_58 = arith.constant 64 : index
    %158 = vector.load %arg5[%c0_57, %c64_58] : memref<256x128xf32, #tpu.memory_space<vmem>>, vector<256x32xf32>
    tpu.vector_store %arg5[%c0_57, %c64_58], %147 {strides = array<i32>} : memref<256x128xf32, #tpu.memory_space<vmem>>, vector<256x32xf32>,
    return
  }
  func.func @transform_0(%arg0: i32) -> (i32, i32) {
    %c0_i32 = arith.constant 0 : i32
    %c0_i32_0 = arith.constant 0 : i32
    return %arg0, %c0_i32 : i32, i32
  }
  func.func @transform_1(%arg0: i32) -> (i32, i32) {
    %c0_i32 = arith.constant 0 : i32
    %c0_i32_0 = arith.constant 0 : i32
    %c0_i32_1 = arith.constant 0 : i32
    return %c0_i32, %c0_i32_0 : i32, i32
  }
  func.func @transform_2(%arg0: i32) -> (i32, i32) {
    %c0_i32 = arith.constant 0 : i32
    %c0_i32_0 = arith.constant 0 : i32
    %c0_i32_1 = arith.constant 0 : i32
    return %c0_i32, %c0_i32_0 : i32, i32
  }
  func.func @transform_3(%arg0: i32) -> (i32, i32) {
    %c0_i32 = arith.constant 0 : i32
    %c0_i32_0 = arith.constant 0 : i32
    %c0_i32_1 = arith.constant 0 : i32
    return %c0_i32, %c0_i32_0 : i32, i32
  }
  func.func @transform_4(%arg0: i32) -> (i32, i32) {
    %c0_i32 = arith.constant 0 : i32
    %c0_i32_0 = arith.constant 0 : i32
    return %arg0, %c0_i32 : i32, i32
  }
}

</mosaic_0001>

<llo_original>
// kernel: knowledge_conditioned_diffusion_forward.1
$region0: #{knowledge_conditioned_diffusion_forward.1}
  #allocation0 [shape = 'u32[]', space=smem, size = 0x4, offset = 0x4, fixed_abs, tag = 'smem constant byte address 0x4 - core index']
  #allocation1 [shape = 'u32[144,128]{1,0:T(1,128)}', space=vmem, size = 0x12000, scoped, tag = 'internal scratch']
  %s0 = inlined_call_operand.vmem [shape: f32[256,128], index: 0, kind: input, shape index: {}]
  %s1 = inlined_call_operand.vmem [shape: bf16[640,128], index: 1, kind: input, shape index: {}]
  %s2 = inlined_call_operand.vmem [shape: bf16[128,256], index: 2, kind: input, shape index: {}]
  %s3 = inlined_call_operand.vmem [shape: f32[16,256], index: 3, kind: input, shape index: {}]
  %s4 = inlined_call_operand.vmem [shape: f32[256,128], index: 4, kind: output, shape index: {}]
  %s5 = sld [smem:[#allocation0]]
  $region26: #{knowledge_conditioned_diffusion_forward.1} parent=0
    _
  %s7 = ssub.s32 1, %s5
  %s8 = scalar_select 0, %s7, %s5
  // Predicated region
  $region2: #{knowledge_conditioned_diffusion_forward.1} parent=0 // pred_check
    _
  $region3: #{knowledge_conditioned_diffusion_forward.1} parent=0 // pred_check_branch
    %10 = sbr.rel (0) target = $region5
  $region4: #{knowledge_conditioned_diffusion_forward.1} parent=0 // pred_region
    _
  $region5: #{knowledge_conditioned_diffusion_forward.1} parent=0 // pred_fallthru
    _
  // Predicated region
  $region6: #{knowledge_conditioned_diffusion_forward.1} parent=0 // pred_check
    _
  $region7: #{knowledge_conditioned_diffusion_forward.1} parent=0 // pred_check_branch
    %12 = sbr.rel (0) target = $region9
  $region8: #{knowledge_conditioned_diffusion_forward.1} parent=0 // pred_region
    _
  $region9: #{knowledge_conditioned_diffusion_forward.1} parent=0 // pred_fallthru
    _
  // Predicated region
  $region10: #{knowledge_conditioned_diffusion_forward.1} parent=0 // pred_check
    _
  $region11: #{knowledge_conditioned_diffusion_forward.1} parent=0 // pred_check_branch
    %14 = sbr.rel (0) target = $region13
  $region12: #{knowledge_conditioned_diffusion_forward.1} parent=0 // pred_region
    _
  $region13: #{knowledge_conditioned_diffusion_forward.1} parent=0 // pred_fallthru
    _
  // Predicated region
  $region14: #{knowledge_conditioned_diffusion_forward.1} parent=0 // pred_check
    _
  $region15: #{knowledge_conditioned_diffusion_forward.1} parent=0 // pred_check_branch
    %16 = sbr.rel (0) target = $region17
  $region16: #{knowledge_conditioned_diffusion_forward.1} parent=0 // pred_region
    _
  $region17: #{knowledge_conditioned_diffusion_forward.1} parent=0 // pred_fallthru
    _
  %v18 = vld [vmem:[%s0] sm:$0xff]
  %v19 = vld [vmem:[%s0 + $0x8] sm:$0xff]
  %v20 = vld [vmem:[%s0 + $0x10] sm:$0xff]
  %v21 = vld [vmem:[%s0 + $0x18] sm:$0xff]
  %v22 = vld [vmem:[%s0 + $0x20] sm:$0xff]
  %v23 = vld [vmem:[%s0 + $0x28] sm:$0xff]
  %v24 = vld [vmem:[%s0 + $0x30] sm:$0xff]
  %v25 = vld [vmem:[%s0 + $0x38] sm:$0xff]
  %v26 = vld [vmem:[%s0 + $0x40] sm:$0xff]
  %v27 = vld [vmem:[%s0 + $0x48] sm:$0xff]
  %v28 = vld [vmem:[%s0 + $0x50] sm:$0xff]
  %v29 = vld [vmem:[%s0 + $0x58] sm:$0xff]
  %v30 = vld [vmem:[%s0 + $0x60] sm:$0xff]
  %v31 = vld [vmem:[%s0 + $0x68] sm:$0xff]
  %v32 = vld [vmem:[%s0 + $0x70] sm:$0xff]
  %v33 = vld [vmem:[%s0 + $0x78] sm:$0xff]
  %v34 = vld [vmem:[%s0 + $0x80] sm:$0xff]
  %v35 = vld [vmem:[%s0 + $0x88] sm:$0xff]
  %v36 = vld [vmem:[%s0 + $0x90] sm:$0xff]
  %v37 = vld [vmem:[%s0 + $0x98] sm:$0xff]
  %v38 = vld [vmem:[%s0 + $0xa0] sm:$0xff]
  %v39 = vld [vmem:[%s0 + $0xa8] sm:$0xff]
  %v40 = vld [vmem:[%s0 + $0xb0] sm:$0xff]
  %v41 = vld [vmem:[%s0 + $0xb8] sm:$0xff]
  %v42 = vld [vmem:[%s0 + $0xc0] sm:$0xff]
  %v43 = vld [vmem:[%s0 + $0xc8] sm:$0xff]
  %v44 = vld [vmem:[%s0 + $0xd0] sm:$0xff]
  %v45 = vld [vmem:[%s0 + $0xd8] sm:$0xff]
  %v46 = vld [vmem:[%s0 + $0xe0] sm:$0xff]
  %v47 = vld [vmem:[%s0 + $0xe8] sm:$0xff]
  %v48 = vld [vmem:[%s0 + $0xf0] sm:$0xff]
  %v49 = vld [vmem:[%s0 + $0xf8] sm:$0xff]
  %v50 = vld [vmem:[%s1] sm:$0xf]
  %v51 = vld [vmem:[%s1 + $0x4] sm:$0xf]
  %v52 = vld [vmem:[%s1 + $0x8] sm:$0xf]
  %v53 = vld [vmem:[%s1 + $0xc] sm:$0xf]
  %v54 = vld [vmem:[%s1 + $0x10] sm:$0xf]
  %v55 = vld [vmem:[%s1 + $0x14] sm:$0xf]
  %v56 = vld [vmem:[%s1 + $0x18] sm:$0xf]
  %v57 = vld [vmem:[%s1 + $0x1c] sm:$0xf]
  %v58 = vld [vmem:[%s1 + $0x20] sm:$0xf]
  %v59 = vld [vmem:[%s1 + $0x24] sm:$0xf]
  %v60 = vld [vmem:[%s1 + $0x28] sm:$0xf]
  %v61 = vld [vmem:[%s1 + $0x2c] sm:$0xf]
  %v62 = vld [vmem:[%s1 + $0x30] sm:$0xf]
  %v63 = vld [vmem:[%s1 + $0x34] sm:$0xf]
  %v64 = vld [vmem:[%s1 + $0x38] sm:$0xf]
  %v65 = vld [vmem:[%s1 + $0x3c] sm:$0xf]
  %v66 = vld [vmem:[%s1 + $0x40] sm:$0xf]
  %v67 = vld [vmem:[%s1 + $0x44] sm:$0xf]
  %v68 = vld [vmem:[%s1 + $0x48] sm:$0xf]
  %v69 = vld [vmem:[%s1 + $0x4c] sm:$0xf]
  %v70 = vld [vmem:[%s1 + $0x50] sm:$0xf]
  %v71 = vld [vmem:[%s1 + $0x54] sm:$0xf]
  %v72 = vld [vmem:[%s1 + $0x58] sm:$0xf]
  %v73 = vld [vmem:[%s1 + $0x5c] sm:$0xf]
  %v74 = vld [vmem:[%s1 + $0x60] sm:$0xf]
  %v75 = vld [vmem:[%s1 + $0x64] sm:$0xf]
  %v76 = vld [vmem:[%s1 + $0x68] sm:$0xf]
  %v77 = vld [vmem:[%s1 + $0x6c] sm:$0xf]
  %v78 = vld [vmem:[%s1 + $0x70] sm:$0xf]
  %v79 = vld [vmem:[%s1 + $0x74] sm:$0xf]
  %v80 = vld [vmem:[%s1 + $0x78] sm:$0xf]
  %v81 = vld [vmem:[%s1 + $0x7c] sm:$0xf]
  %v82 = vld [vmem:[%s1 + $0x80] sm:$0xf]
  %v83 = vld [vmem:[%s1 + $0x84] sm:$0xf]
  %v84 = vld [vmem:[%s1 + $0x88] sm:$0xf]
  %v85 = vld [vmem:[%s1 + $0x8c] sm:$0xf]
  %v86 = vld [vmem:[%s1 + $0x90] sm:$0xf]
  %v87 = vld [vmem:[%s1 + $0x94] sm:$0xf]
  %v88 = vld [vmem:[%s1 + $0x98] sm:$0xf]
  %v89 = vld [vmem:[%s1 + $0x9c] sm:$0xf]
  %v90 = vld [vmem:[%s1 + $0xa0] sm:$0xf]
  %v91 = vld [vmem:[%s1 + $0xa4] sm:$0xf]
  %v92 = vld [vmem:[%s1 + $0xa8] sm:$0xf]
  %v93 = vld [vmem:[%s1 + $0xac] sm:$0xf]
  %v94 = vld [vmem:[%s1 + $0xb0] sm:$0xf]
  %v95 = vld [vmem:[%s1 + $0xb4] sm:$0xf]
  %v96 = vld [vmem:[%s1 + $0xb8] sm:$0xf]
  %v97 = vld [vmem:[%s1 + $0xbc] sm:$0xf]
  %v98 = vld [vmem:[%s1 + $0xc0] sm:$0xf]
  %v99 = vld [vmem:[%s1 + $0xc4] sm:$0xf]
  %v100 = vld [vmem:[%s1 + $0xc8] sm:$0xf]
  %v101 = vld [vmem:[%s1 + $0xcc] sm:$0xf]
  %v102 = vld [vmem:[%s1 + $0xd0] sm:$0xf]
  %v103 = vld [vmem:[%s1 + $0xd4] sm:$0xf]
  %v104 = vld [vmem:[%s1 + $0xd8] sm:$0xf]
  %v105 = vld [vmem:[%s1 + $0xdc] sm:$0xf]
  %v106 = vld [vmem:[%s1 + $0xe0] sm:$0xf]
  %v107 = vld [vmem:[%s1 + $0xe4] sm:$0xf]
  %v108 = vld [vmem:[%s1 + $0xe8] sm:$0xf]
  %v109 = vld [vmem:[%s1 + $0xec] sm:$0xf]
  %v110 = vld [vmem:[%s1 + $0xf0] sm:$0xf]
  %v111 = vld [vmem:[%s1 + $0xf4] sm:$0xf]
  %v112 = vld [vmem:[%s1 + $0xf8] sm:$0xf]
  %v113 = vld [vmem:[%s1 + $0xfc] sm:$0xf]
  %v114 = vld [vmem:[%s1 + $0x100] sm:$0xf]
  %v115 = vld [vmem:[%s1 + $0x104] sm:$0xf]
  %v116 = vld [vmem:[%s1 + $0x108] sm:$0xf]
  %v117 = vld [vmem:[%s1 + $0x10c] sm:$0xf]
  %v118 = vld [vmem:[%s1 + $0x110] sm:$0xf]
  %v119 = vld [vmem:[%s1 + $0x114] sm:$0xf]
  %v120 = vld [vmem:[%s1 + $0x118] sm:$0xf]
  %v121 = vld [vmem:[%s1 + $0x11c] sm:$0xf]
  %v122 = vld [vmem:[%s1 + $0x120] sm:$0xf]
  %v123 = vld [vmem:[%s1 + $0x124] sm:$0xf]
  %v124 = vld [vmem:[%s1 + $0x128] sm:$0xf]
  %v125 = vld [vmem:[%s1 + $0x12c] sm:$0xf]
  %v126 = vld [vmem:[%s1 + $0x130] sm:$0xf]
  %v127 = vld [vmem:[%s1 + $0x134] sm:$0xf]
  %v128 = vld [vmem:[%s1 + $0x138] sm:$0xf]
  %v129 = vld [vmem:[%s1 + $0x13c] sm:$0xf]
  %v130 = vld [vmem:[%s2] sm:$0xff]
  %v131 = vld [vmem:[%s2 + $0x8] sm:$0xff]
  %v132 = vld [vmem:[%s2 + $0x10] sm:$0xff]
  %v133 = vld [vmem:[%s2 + $0x18] sm:$0xff]
  %v134 = vld [vmem:[%s2 + $0x20] sm:$0xff]
  %v135 = vld [vmem:[%s2 + $0x28] sm:$0xff]
  %v136 = vld [vmem:[%s2 + $0x30] sm:$0xff]
  %v137 = vld [vmem:[%s2 + $0x38] sm:$0xff]
  %v138 = vld [vmem:[%s2 + $0x40] sm:$0xff]
  %v139 = vld [vmem:[%s2 + $0x48] sm:$0xff]
  %v140 = vld [vmem:[%s2 + $0x50] sm:$0xff]
  %v141 = vld [vmem:[%s2 + $0x58] sm:$0xff]
  %v142 = vld [vmem:[%s2 + $0x60] sm:$0xff]
  %v143 = vld [vmem:[%s2 + $0x68] sm:$0xff]
  %v144 = vld [vmem:[%s2 + $0x70] sm:$0xff]
  %v145 = vld [vmem:[%s2 + $0x78] sm:$0xff]
  %v146 = vld [vmem:[%s3] ss:$8 sm:$0x3]
  %v147 = vld [vmem:[%s3 + $0x1] ss:$0 sm:$0xff]
  %v148 = vld [vmem:[%s3 + $0x2] ss:$0 sm:$0xff]
  %v149 = vld [vmem:[%s3 + $0x3] ss:$0 sm:$0xff]
  %v150 = vld [vmem:[%s3 + $0x4] ss:$0 sm:$0xff]
  %v151 = vld [vmem:[%s3 + $0x5] ss:$0 sm:$0xff]
  %v152 = vld [vmem:[%s3 + $0x6] ss:$0 sm:$0xff]
  %v153 = vld [vmem:[%s3 + $0x7] ss:$0 sm:$0xff]
  %v154 = vld [vmem:[%s3 + $0x10] ss:$0 sm:$0xff]
  %v155 = vld [vmem:[%s3 + $0x11] ss:$0 sm:$0xff]
  %v156 = vld [vmem:[%s3 + $0x12] ss:$0 sm:$0xff]
  %v157 = vld [vmem:[%s3 + $0x13] ss:$0 sm:$0xff]
  %v158 = vld [vmem:[%s3 + $0x14] ss:$0 sm:$0xff]
  %v159 = vld [vmem:[%s3 + $0x15] ss:$0 sm:$0xff]
  %v160 = vld [vmem:[%s3 + $0x16] ss:$0 sm:$0xff]
  %v161 = vpack.c.bf16 %v19, %v18
  %v162 = vpack.c.bf16 %v21, %v20
  %v163 = vpack.c.bf16 %v23, %v22
  %v164 = vpack.c.bf16 %v25, %v24
  %v165 = vpack.c.bf16 %v27, %v26
  %v166 = vpack.c.bf16 %v29, %v28
  %v167 = vpack.c.bf16 %v31, %v30
  %v168 = vpack.c.bf16 %v33, %v32
  %v169 = vpack.c.bf16 %v35, %v34
  %v170 = vpack.c.bf16 %v37, %v36
  %v171 = vpack.c.bf16 %v39, %v38
  %v172 = vpack.c.bf16 %v41, %v40
  %v173 = vpack.c.bf16 %v43, %v42
  %v174 = vpack.c.bf16 %v45, %v44
  %v175 = vpack.c.bf16 %v47, %v46
  %v176 = vpack.c.bf16 %v49, %v48
  %193 = vrot.lane.b32.xlu0 %v161, 96
  %v194 = vpop.permute.xlu0 %193
  %195 = vrot.lane.b32.xlu0 %v162, 96
  %v196 = vpop.permute.xlu0 %195
  %197 = vrot.lane.b32.xlu0 %v163, 96
  %v198 = vpop.permute.xlu0 %197
  %199 = vrot.lane.b32.xlu0 %v164, 96
  %v200 = vpop.permute.xlu0 %199
  %201 = vrot.lane.b32.xlu0 %v165, 96
  %v202 = vpop.permute.xlu0 %201
  %203 = vrot.lane.b32.xlu0 %v166, 96
  %v204 = vpop.permute.xlu0 %203
  %205 = vrot.lane.b32.xlu0 %v167, 96
  %v206 = vpop.permute.xlu0 %205
  %207 = vrot.lane.b32.xlu0 %v168, 96
  %v208 = vpop.permute.xlu0 %207
  %209 = vrot.lane.b32.xlu0 %v169, 96
  %v210 = vpop.permute.xlu0 %209
  %211 = vrot.lane.b32.xlu0 %v170, 96
  %v212 = vpop.permute.xlu0 %211
  %213 = vrot.lane.b32.xlu0 %v171, 96
  %v214 = vpop.permute.xlu0 %213
  %215 = vrot.lane.b32.xlu0 %v172, 96
  %v216 = vpop.permute.xlu0 %215
  %217 = vrot.lane.b32.xlu0 %v173, 96
  %v218 = vpop.permute.xlu0 %217
  %219 = vrot.lane.b32.xlu0 %v174, 96
  %v220 = vpop.permute.xlu0 %219
  %221 = vrot.lane.b32.xlu0 %v175, 96
  %v222 = vpop.permute.xlu0 %221
  %223 = vrot.lane.b32.xlu0 %v176, 96
  %v224 = vpop.permute.xlu0 %223
  %v229 = vunpack.c.l.b16 %v86
  %v230 = vunpack.c.l.b16 %v87
  %v231 = vunpack.c.l.b16 %v88
  %v232 = vunpack.c.l.b16 %v89
  %v233 = vpack.c.b16 %v230, %v229
  %v234 = vpack.c.b16 %v232, %v231
  %vm237 = vcmask 261120
  %v239 = vsel %vm237, %v194, 0
  %v242 = vsel %vm237, %v196, 0
  %v245 = vsel %vm237, %v198, 0
  %v248 = vsel %vm237, %v200, 0
  %v251 = vsel %vm237, %v202, 0
  %v254 = vsel %vm237, %v204, 0
  %v257 = vsel %vm237, %v206, 0
  %v260 = vsel %vm237, %v208, 0
  %v263 = vsel %vm237, %v210, 0
  %v266 = vsel %vm237, %v212, 0
  %v269 = vsel %vm237, %v214, 0
  %v272 = vsel %vm237, %v216, 0
  %v275 = vsel %vm237, %v218, 0
  %v278 = vsel %vm237, %v220, 0
  %v281 = vsel %vm237, %v222, 0
  %v284 = vsel %vm237, %v224, 0
  %286 = vmatprep.subr.bf16.mxu0 0
  %287 = vmatpush1.bf16.msra.mxu0 0
  %288 = vmatprep.subr.bf16.mxu0 0
  %289 = vmatpush1.bf16.msra.mxu0 0
  %290 = vmatprep.subr.bf16.mxu0 0
  %291 = vmatpush1.bf16.msra.mxu0 0
  %292 = vmatprep.subr.bf16.mxu0 0
  %293 = vmatpush1.bf16.msra.mxu0 0
  %294 = vmatprep.subr.bf16.mxu0 0
  %295 = vmatpush1.bf16.msra.mxu0 0
  %296 = vmatprep.subr.bf16.mxu0 0
  %297 = vmatpush1.bf16.msra.mxu0 0
  %298 = vmatprep.subr.bf16.mxu0 0
  %299 = vmatpush1.bf16.msra.mxu0 %v234
  %300 = vmatprep.subr.bf16.mxu0 0
  %301 = vmatpush1.bf16.msra.mxu0 %v233
  %302 = vmatprep.subr.bf16.mxu0 0
  %303 = vmatpush2.bf16.msra.mxu0 0
  %304 = vmatprep.subr.bf16.mxu0 0
  %305 = vmatpush2.bf16.msra.mxu0 0
  %306 = vmatprep.subr.bf16.mxu0 0
  %307 = vmatpush2.bf16.msra.mxu0 0
  %308 = vmatprep.subr.bf16.mxu0 0
  %309 = vmatpush2.bf16.msra.mxu0 0
  %310 = vmatprep.subr.bf16.mxu0 0
  %311 = vmatpush2.bf16.msra.mxu0 0
  %312 = vmatprep.subr.bf16.mxu0 0
  %313 = vmatpush2.bf16.msra.mxu0 0
  %314 = vmatprep.subr.bf16.mxu0 0
  %315 = vmatpush2.bf16.msra.mxu0 0
  %316 = vmatprep.subr.bf16.mxu0 0
  %317 = vmatpush2.bf16.msra.mxu0 0
  %318 = vmatprep.mubr.bf16.mxu0 0
  %319 = vmatmul.mubr.bf16.gmra.mxu0 %v239
  %v320 = vpop.f32.mrf.mxu0
  %v321 = vadd.f32 %v147, %v320
  %v322 = vpop.f32.mrf.mxu0
  %v323 = vpop.f32.mrf.mxu0
  %v324 = vadd.f32 %v147, %v323
  %v325 = vpop.f32.mrf.mxu0
  %326 = vmatprep.mubr.bf16.mxu0 0
  %327 = vmatmul.mubr.bf16.gmra.mxu0 %v242
  %v328 = vpop.f32.mrf.mxu0
  %v329 = vadd.f32 %v147, %v328
  %v330 = vpop.f32.mrf.mxu0
  %v331 = vpop.f32.mrf.mxu0
  %v332 = vadd.f32 %v147, %v331
  %v333 = vpop.f32.mrf.mxu0
  %334 = vmatprep.mubr.bf16.mxu0 0
  %335 = vmatmul.mubr.bf16.gmra.mxu0 %v245
  %v336 = vpop.f32.mrf.mxu0
  %v337 = vadd.f32 %v147, %v336
  %v338 = vpop.f32.mrf.mxu0
  %v339 = vpop.f32.mrf.mxu0
  %v340 = vadd.f32 %v147, %v339
  %v341 = vpop.f32.mrf.mxu0
  %342 = vmatprep.mubr.bf16.mxu0 0
  %343 = vmatmul.mubr.bf16.gmra.mxu0 %v248
  %v344 = vpop.f32.mrf.mxu0
  %v345 = vadd.f32 %v147, %v344
  %v346 = vpop.f32.mrf.mxu0
  %v347 = vpop.f32.mrf.mxu0
  %v348 = vadd.f32 %v147, %v347
  %v349 = vpop.f32.mrf.mxu0
  %350 = vmatprep.mubr.bf16.mxu0 0
  %351 = vmatmul.mubr.bf16.gmra.mxu0 %v251
  %v352 = vpop.f32.mrf.mxu0
  %v353 = vadd.f32 %v147, %v352
  %v354 = vpop.f32.mrf.mxu0
  %v355 = vpop.f32.mrf.mxu0
  %v356 = vadd.f32 %v147, %v355
  %v357 = vpop.f32.mrf.mxu0
  %358 = vmatprep.mubr.bf16.mxu0 0
  %359 = vmatmul.mubr.bf16.gmra.mxu0 %v254
  %v360 = vpop.f32.mrf.mxu0
  %v361 = vadd.f32 %v147, %v360
  %v362 = vpop.f32.mrf.mxu0
  %v363 = vpop.f32.mrf.mxu0
  %v364 = vadd.f32 %v147, %v363
  %v365 = vpop.f32.mrf.mxu0
  %366 = vmatprep.mubr.bf16.mxu0 0
  %367 = vmatmul.mubr.bf16.gmra.mxu0 %v257
  %v368 = vpop.f32.mrf.mxu0
  %v369 = vadd.f32 %v147, %v368
  %v370 = vpop.f32.mrf.mxu0
  %v371 = vpop.f32.mrf.mxu0
  %v372 = vadd.f32 %v147, %v371
  %v373 = vpop.f32.mrf.mxu0
  %374 = vmatprep.mubr.bf16.mxu0 0
  %375 = vmatmul.mubr.bf16.gmra.mxu0 %v260
  %v376 = vpop.f32.mrf.mxu0
  %v377 = vadd.f32 %v147, %v376
  %v378 = vpop.f32.mrf.mxu0
  %v379 = vpop.f32.mrf.mxu0
  %v380 = vadd.f32 %v147, %v379
  %v381 = vpop.f32.mrf.mxu0
  %382 = vmatprep.mubr.bf16.mxu0 0
  %383 = vmatmul.mubr.bf16.gmra.mxu0 %v263
  %v384 = vpop.f32.mrf.mxu0
  %v385 = vadd.f32 %v147, %v384
  %v386 = vpop.f32.mrf.mxu0
  %v387 = vpop.f32.mrf.mxu0
  %v388 = vadd.f32 %v147, %v387
  %v389 = vpop.f32.mrf.mxu0
  %390 = vmatprep.mubr.bf16.mxu0 0
  %391 = vmatmul.mubr.bf16.gmra.mxu0 %v266
  %v392 = vpop.f32.mrf.mxu0
  %v393 = vadd.f32 %v147, %v392
  %v394 = vpop.f32.mrf.mxu0
  %v395 = vpop.f32.mrf.mxu0
  %v396 = vadd.f32 %v147, %v395
  %v397 = vpop.f32.mrf.mxu0
  %398 = vmatprep.mubr.bf16.mxu0 0
  %399 = vmatmul.mubr.bf16.gmra.mxu0 %v269
  %v400 = vpop.f32.mrf.mxu0
  %v401 = vadd.f32 %v147, %v400
  %v402 = vpop.f32.mrf.mxu0
  %v403 = vpop.f32.mrf.mxu0
  %v404 = vadd.f32 %v147, %v403
  %v405 = vpop.f32.mrf.mxu0
  %406 = vmatprep.mubr.bf16.mxu0 0
  %407 = vmatmul.mubr.bf16.gmra.mxu0 %v272
  %v408 = vpop.f32.mrf.mxu0
  %v409 = vadd.f32 %v147, %v408
  %v410 = vpop.f32.mrf.mxu0
  %v411 = vpop.f32.mrf.mxu0
  %v412 = vadd.f32 %v147, %v411
  %v413 = vpop.f32.mrf.mxu0
  %414 = vmatprep.mubr.bf16.mxu0 0
  %415 = vmatmul.mubr.bf16.gmra.mxu0 %v275
  %v416 = vpop.f32.mrf.mxu0
  %v417 = vadd.f32 %v147, %v416
  %v418 = vpop.f32.mrf.mxu0
  %v419 = vpop.f32.mrf.mxu0
  %v420 = vadd.f32 %v147, %v419
  %v421 = vpop.f32.mrf.mxu0
  %422 = vmatprep.mubr.bf16.mxu0 0
  %423 = vmatmul.mubr.bf16.gmra.mxu0 %v278
  %v424 = vpop.f32.mrf.mxu0
  %v425 = vadd.f32 %v147, %v424
  %v426 = vpop.f32.mrf.mxu0
  %v427 = vpop.f32.mrf.mxu0
  %v428 = vadd.f32 %v147, %v427
  %v429 = vpop.f32.mrf.mxu0
  %430 = vmatprep.mubr.bf16.mxu0 0
  %431 = vmatmul.mubr.bf16.gmra.mxu0 %v281
  %v432 = vpop.f32.mrf.mxu0
  %v433 = vadd.f32 %v147, %v432
  %v434 = vpop.f32.mrf.mxu0
  %v435 = vpop.f32.mrf.mxu0
  %v436 = vadd.f32 %v147, %v435
  %v437 = vpop.f32.mrf.mxu0
  %438 = vmatprep.mubr.bf16.mxu0 0
  %439 = vmatmul.mubr.bf16.gmra.mxu0 %v284
  %v440 = vpop.f32.mrf.mxu0
  %v441 = vadd.f32 %v147, %v440
  %v442 = vpop.f32.mrf.mxu0
  %v443 = vpop.f32.mrf.mxu0
  %v444 = vadd.f32 %v147, %v443
  %v445 = vpop.f32.mrf.mxu0
  %446 = vdwg.mxu0
  %v447 = vxor.u32 %v321, 2147483648
  %v448 = vxor.u32 %v324, 2147483648
  %v449 = vxor.u32 %v329, 2147483648
  %v450 = vxor.u32 %v332, 2147483648
  %v451 = vxor.u32 %v337, 2147483648
  %v452 = vxor.u32 %v340, 2147483648
  %v453 = vxor.u32 %v345, 2147483648
  %v454 = vxor.u32 %v348, 2147483648
  %v455 = vxor.u32 %v353, 2147483648
  %v456 = vxor.u32 %v356, 2147483648
  %v457 = vxor.u32 %v361, 2147483648
  %v458 = vxor.u32 %v364, 2147483648
  %v459 = vxor.u32 %v369, 2147483648
  %v460 = vxor.u32 %v372, 2147483648
  %v461 = vxor.u32 %v377, 2147483648
  %v462 = vxor.u32 %v380, 2147483648
  %v463 = vxor.u32 %v385, 2147483648
  %v464 = vxor.u32 %v388, 2147483648
  %v465 = vxor.u32 %v393, 2147483648
  %v466 = vxor.u32 %v396, 2147483648
  %v467 = vxor.u32 %v401, 2147483648
  %v468 = vxor.u32 %v404, 2147483648
  %v469 = vxor.u32 %v409, 2147483648
  %v470 = vxor.u32 %v412, 2147483648
  %v471 = vxor.u32 %v417, 2147483648
  %v472 = vxor.u32 %v420, 2147483648
  %v473 = vxor.u32 %v425, 2147483648
  %v474 = vxor.u32 %v428, 2147483648
  %v475 = vxor.u32 %v433, 2147483648
  %v476 = vxor.u32 %v436, 2147483648
  %v477 = vxor.u32 %v441, 2147483648
  %v478 = vxor.u32 %v444, 2147483648
  %v479 = vmul.f32 %v447, 1.442695
  %v480 = vpow.pop %v479
  %v481 = vmul.f32 %v448, 1.442695
  %v482 = vpow.pop %v481
  %v483 = vmul.f32 %v449, 1.442695
  %v484 = vpow.pop %v483
  %v485 = vmul.f32 %v450, 1.442695
  %v486 = vpow.pop %v485
  %v487 = vmul.f32 %v451, 1.442695
  %v488 = vpow.pop %v487
  %v489 = vmul.f32 %v452, 1.442695
  %v490 = vpow.pop %v489
  %v491 = vmul.f32 %v453, 1.442695
  %v492 = vpow.pop %v491
  %v493 = vmul.f32 %v454, 1.442695
  %v494 = vpow.pop %v493
  %v495 = vmul.f32 %v455, 1.442695
  %v496 = vpow.pop %v495
  %v497 = vmul.f32 %v456, 1.442695
  %v498 = vpow.pop %v497
  %v499 = vmul.f32 %v457, 1.442695
  %v500 = vpow.pop %v499
  %v501 = vmul.f32 %v458, 1.442695
  %v502 = vpow.pop %v501
  %v503 = vmul.f32 %v459, 1.442695
  %v504 = vpow.pop %v503
  %v505 = vmul.f32 %v460, 1.442695
  %v506 = vpow.pop %v505
  %v507 = vmul.f32 %v461, 1.442695
  %v508 = vpow.pop %v507
  %v509 = vmul.f32 %v462, 1.442695
  %v510 = vpow.pop %v509
  %v511 = vmul.f32 %v463, 1.442695
  %v512 = vpow.pop %v511
  %v513 = vmul.f32 %v464, 1.442695
  %v514 = vpow.pop %v513
  %v515 = vmul.f32 %v465, 1.442695
  %v516 = vpow.pop %v515
  %v517 = vmul.f32 %v466, 1.442695
  %v518 = vpow.pop %v517
  %v519 = vmul.f32 %v467, 1.442695
  %v520 = vpow.pop %v519
  %v521 = vmul.f32 %v468, 1.442695
  %v522 = vpow.pop %v521
  %v523 = vmul.f32 %v469, 1.442695
  %v524 = vpow.pop %v523
  %v525 = vmul.f32 %v470, 1.442695
  %v526 = vpow.pop %v525
  %v527 = vmul.f32 %v471, 1.442695
  %v528 = vpow.pop %v527
  %v529 = vmul.f32 %v472, 1.442695
  %v530 = vpow.pop %v529
  %v531 = vmul.f32 %v473, 1.442695
  %v532 = vpow.pop %v531
  %v533 = vmul.f32 %v474, 1.442695
  %v534 = vpow.pop %v533
  %v535 = vmul.f32 %v475, 1.442695
  %v536 = vpow.pop %v535
  %v537 = vmul.f32 %v476, 1.442695
  %v538 = vpow.pop %v537
  %v539 = vmul.f32 %v477, 1.442695
  %v540 = vpow.pop %v539
  %v541 = vmul.f32 %v478, 1.442695
  %v542 = vpow.pop %v541
  %v543 = vadd.f32 %v480, 1.0
  %v544 = vadd.f32 %v482, 1.0
  %v545 = vadd.f32 %v484, 1.0
  %v546 = vadd.f32 %v486, 1.0
  %v547 = vadd.f32 %v488, 1.0
  %v548 = vadd.f32 %v490, 1.0
  %v549 = vadd.f32 %v492, 1.0
  %v550 = vadd.f32 %v494, 1.0
  %v551 = vadd.f32 %v496, 1.0
  %v552 = vadd.f32 %v498, 1.0
  %v553 = vadd.f32 %v500, 1.0
  %v554 = vadd.f32 %v502, 1.0
  %v555 = vadd.f32 %v504, 1.0
  %v556 = vadd.f32 %v506, 1.0
  %v557 = vadd.f32 %v508, 1.0
  %v558 = vadd.f32 %v510, 1.0
  %v559 = vadd.f32 %v512, 1.0
  %v560 = vadd.f32 %v514, 1.0
  %v561 = vadd.f32 %v516, 1.0
  %v562 = vadd.f32 %v518, 1.0
  %v563 = vadd.f32 %v520, 1.0
  %v564 = vadd.f32 %v522, 1.0
  %v565 = vadd.f32 %v524, 1.0
  %v566 = vadd.f32 %v526, 1.0
  %v567 = vadd.f32 %v528, 1.0
  %v568 = vadd.f32 %v530, 1.0
  %v569 = vadd.f32 %v532, 1.0
  %v570 = vadd.f32 %v534, 1.0
  %v571 = vadd.f32 %v536, 1.0
  %v572 = vadd.f32 %v538, 1.0
  %v573 = vadd.f32 %v540, 1.0
  %v574 = vadd.f32 %v542, 1.0
  %v575 = vrcp.pop %v543
  %v576 = vmul.f32 1.0, %v575
  %v577 = vrcp.pop %v544
  %v578 = vmul.f32 1.0, %v577
  %v579 = vrcp.pop %v545
  %v580 = vmul.f32 1.0, %v579
  %v581 = vrcp.pop %v546
  %v582 = vmul.f32 1.0, %v581
  %v583 = vrcp.pop %v547
  %v584 = vmul.f32 1.0, %v583
  %v585 = vrcp.pop %v548
  %v586 = vmul.f32 1.0, %v585
  %v587 = vrcp.pop %v549
  %v588 = vmul.f32 1.0, %v587
  %v589 = vrcp.pop %v550
  %v590 = vmul.f32 1.0, %v589
  %v591 = vrcp.pop %v551
  %v592 = vmul.f32 1.0, %v591
  %v593 = vrcp.pop %v552
  %v594 = vmul.f32 1.0, %v593
  %v595 = vrcp.pop %v553
  %v596 = vmul.f32 1.0, %v595
  %v597 = vrcp.pop %v554
  %v598 = vmul.f32 1.0, %v597
  %v599 = vrcp.pop %v555
  %v600 = vmul.f32 1.0, %v599
  %v601 = vrcp.pop %v556
  %v602 = vmul.f32 1.0, %v601
  %v603 = vrcp.pop %v557
  %v604 = vmul.f32 1.0, %v603
  %v605 = vrcp.pop %v558
  %v606 = vmul.f32 1.0, %v605
  %v607 = vrcp.pop %v559
  %v608 = vmul.f32 1.0, %v607
  %v609 = vrcp.pop %v560
  %v610 = vmul.f32 1.0, %v609
  %v611 = vrcp.pop %v561
  %v612 = vmul.f32 1.0, %v611
  %v613 = vrcp.pop %v562
  %v614 = vmul.f32 1.0, %v613
  %v615 = vrcp.pop %v563
  %v616 = vmul.f32 1.0, %v615
  %v617 = vrcp.pop %v564
  %v618 = vmul.f32 1.0, %v617
  %v619 = vrcp.pop %v565
  %v620 = vmul.f32 1.0, %v619
  %v621 = vrcp.pop %v566
  %v622 = vmul.f32 1.0, %v621
  %v623 = vrcp.pop %v567
  %v624 = vmul.f32 1.0, %v623
  %v625 = vrcp.pop %v568
  %v626 = vmul.f32 1.0, %v625
  %v627 = vrcp.pop %v569
  %v628 = vmul.f32 1.0, %v627
  %v629 = vrcp.pop %v570
  %v630 = vmul.f32 1.0, %v629
  %v631 = vrcp.pop %v571
  %v632 = vmul.f32 1.0, %v631
  %v633 = vrcp.pop %v572
  %v634 = vmul.f32 1.0, %v633
  %v635 = vrcp.pop %v573
  %v636 = vmul.f32 1.0, %v635
  %v637 = vrcp.pop %v574
  %v638 = vmul.f32 1.0, %v637
  %v639 = vmul.f32 %v321, %v576
  %v640 = vmul.f32 %v324, %v578
  %v641 = vmul.f32 %v329, %v580
  %v642 = vmul.f32 %v332, %v582
  %v643 = vmul.f32 %v337, %v584
  %v644 = vmul.f32 %v340, %v586
  %v645 = vmul.f32 %v345, %v588
  %v646 = vmul.f32 %v348, %v590
  %v647 = vmul.f32 %v353, %v592
  %v648 = vmul.f32 %v356, %v594
  %v649 = vmul.f32 %v361, %v596
  %v650 = vmul.f32 %v364, %v598
  %v651 = vmul.f32 %v369, %v600
  %v652 = vmul.f32 %v372, %v602
  %v653 = vmul.f32 %v377, %v604
  %v654 = vmul.f32 %v380, %v606
  %v655 = vmul.f32 %v385, %v608
  %v656 = vmul.f32 %v388, %v610
  %v657 = vmul.f32 %v393, %v612
  %v658 = vmul.f32 %v396, %v614
  %v659 = vmul.f32 %v401, %v616
  %v660 = vmul.f32 %v404, %v618
  %v661 = vmul.f32 %v409, %v620
  %v662 = vmul.f32 %v412, %v622
  %v663 = vmul.f32 %v417, %v624
  %v664 = vmul.f32 %v420, %v626
  %v665 = vmul.f32 %v425, %v628
  %v666 = vmul.f32 %v428, %v630
  %v667 = vmul.f32 %v433, %v632
  %v668 = vmul.f32 %v436, %v634
  %v669 = vmul.f32 %v441, %v636
  %v670 = vmul.f32 %v444, %v638
  %vm671 = vcmask 523264
  %v672 = vsel %vm671, %v639, 0.0
  %673 = vadd.xlane.f32.xlu0 %v672
  %v674 = vpop.xlane.xlu0 %673
  %v675 = vsel %vm671, %v640, 0.0
  %676 = vadd.xlane.f32.xlu0 %v675
  %v677 = vpop.xlane.xlu0 %676
  %v678 = vsel %vm671, %v641, 0.0
  %679 = vadd.xlane.f32.xlu0 %v678
  %v680 = vpop.xlane.xlu0 %679
  %v681 = vsel %vm671, %v642, 0.0
  %682 = vadd.xlane.f32.xlu0 %v681
  %v683 = vpop.xlane.xlu0 %682
  %v684 = vsel %vm671, %v643, 0.0
  %685 = vadd.xlane.f32.xlu0 %v684
  %v686 = vpop.xlane.xlu0 %685
  %v687 = vsel %vm671, %v644, 0.0
  %688 = vadd.xlane.f32.xlu0 %v687
  %v689 = vpop.xlane.xlu0 %688
  %v690 = vsel %vm671, %v645, 0.0
  %691 = vadd.xlane.f32.xlu0 %v690
  %v692 = vpop.xlane.xlu0 %691
  %v693 = vsel %vm671, %v646, 0.0
  %694 = vadd.xlane.f32.xlu0 %v693
  %v695 = vpop.xlane.xlu0 %694
  %v696 = vsel %vm671, %v647, 0.0
  %697 = vadd.xlane.f32.xlu0 %v696
  %v698 = vpop.xlane.xlu0 %697
  %v699 = vsel %vm671, %v648, 0.0
  %700 = vadd.xlane.f32.xlu0 %v699
  %v701 = vpop.xlane.xlu0 %700
  %v702 = vsel %vm671, %v649, 0.0
  %703 = vadd.xlane.f32.xlu0 %v702
  %v704 = vpop.xlane.xlu0 %703
  %v705 = vsel %vm671, %v650, 0.0
  %706 = vadd.xlane.f32.xlu0 %v705
  %v707 = vpop.xlane.xlu0 %706
  %v708 = vsel %vm671, %v651, 0.0
  %709 = vadd.xlane.f32.xlu0 %v708
  %v710 = vpop.xlane.xlu0 %709
  %v711 = vsel %vm671, %v652, 0.0
  %712 = vadd.xlane.f32.xlu0 %v711
  %v713 = vpop.xlane.xlu0 %712
  %v714 = vsel %vm671, %v653, 0.0
  %715 = vadd.xlane.f32.xlu0 %v714
  %v716 = vpop.xlane.xlu0 %715
  %v717 = vsel %vm671, %v654, 0.0
  %718 = vadd.xlane.f32.xlu0 %v717
  %v719 = vpop.xlane.xlu0 %718
  %v720 = vsel %vm671, %v655, 0.0
  %721 = vadd.xlane.f32.xlu0 %v720
  %v722 = vpop.xlane.xlu0 %721
  %v723 = vsel %vm671, %v656, 0.0
  %724 = vadd.xlane.f32.xlu0 %v723
  %v725 = vpop.xlane.xlu0 %724
  %v726 = vsel %vm671, %v657, 0.0
  %727 = vadd.xlane.f32.xlu0 %v726
  %v728 = vpop.xlane.xlu0 %727
  %v729 = vsel %vm671, %v658, 0.0
  %730 = vadd.xlane.f32.xlu0 %v729
  %v731 = vpop.xlane.xlu0 %730
  %v732 = vsel %vm671, %v659, 0.0
  %733 = vadd.xlane.f32.xlu0 %v732
  %v734 = vpop.xlane.xlu0 %733
  %v735 = vsel %vm671, %v660, 0.0
  %736 = vadd.xlane.f32.xlu0 %v735
  %v737 = vpop.xlane.xlu0 %736
  %v738 = vsel %vm671, %v661, 0.0
  %739 = vadd.xlane.f32.xlu0 %v738
  %v740 = vpop.xlane.xlu0 %739
  %v741 = vsel %vm671, %v662, 0.0
  %742 = vadd.xlane.f32.xlu0 %v741
  %v743 = vpop.xlane.xlu0 %742
  %v744 = vsel %vm671, %v663, 0.0
  %745 = vadd.xlane.f32.xlu0 %v744
  %v746 = vpop.xlane.xlu0 %745
  %v747 = vsel %vm671, %v664, 0.0
  %748 = vadd.xlane.f32.xlu0 %v747
  %v749 = vpop.xlane.xlu0 %748
  %v750 = vsel %vm671, %v665, 0.0
  %751 = vadd.xlane.f32.xlu0 %v750
  %v752 = vpop.xlane.xlu0 %751
  %v753 = vsel %vm671, %v666, 0.0
  %754 = vadd.xlane.f32.xlu0 %v753
  %v755 = vpop.xlane.xlu0 %754
  %v756 = vsel %vm671, %v667, 0.0
  %757 = vadd.xlane.f32.xlu0 %v756
  %v758 = vpop.xlane.xlu0 %757
  %v759 = vsel %vm671, %v668, 0.0
  %760 = vadd.xlane.f32.xlu0 %v759
  %v761 = vpop.xlane.xlu0 %760
  %v762 = vsel %vm671, %v669, 0.0
  %763 = vadd.xlane.f32.xlu0 %v762
  %v764 = vpop.xlane.xlu0 %763
  %v765 = vsel %vm671, %v670, 0.0
  %766 = vadd.xlane.f32.xlu0 %v765
  %v767 = vpop.xlane.xlu0 %766
  %v768 = vmul.f32 %v674, 0.015625
  %v769 = vmul.f32 %v677, 0.015625
  %v770 = vmul.f32 %v680, 0.015625
  %v771 = vmul.f32 %v683, 0.015625
  %v772 = vmul.f32 %v686, 0.015625
  %v773 = vmul.f32 %v689, 0.015625
  %v774 = vmul.f32 %v692, 0.015625
  %v775 = vmul.f32 %v695, 0.015625
  %v776 = vmul.f32 %v698, 0.015625
  %v777 = vmul.f32 %v701, 0.015625
  %v778 = vmul.f32 %v704, 0.015625
  %v779 = vmul.f32 %v707, 0.015625
  %v780 = vmul.f32 %v710, 0.015625
  %v781 = vmul.f32 %v713, 0.015625
  %v782 = vmul.f32 %v716, 0.015625
  %v783 = vmul.f32 %v719, 0.015625
  %v784 = vmul.f32 %v722, 0.015625
  %v785 = vmul.f32 %v725, 0.015625
  %v786 = vmul.f32 %v728, 0.015625
  %v787 = vmul.f32 %v731, 0.015625
  %v788 = vmul.f32 %v734, 0.015625
  %v789 = vmul.f32 %v737, 0.015625
  %v790 = vmul.f32 %v740, 0.015625
  %v791 = vmul.f32 %v743, 0.015625
  %v792 = vmul.f32 %v746, 0.015625
  %v793 = vmul.f32 %v749, 0.015625
  %v794 = vmul.f32 %v752, 0.015625
  %v795 = vmul.f32 %v755, 0.015625
  %v796 = vmul.f32 %v758, 0.015625
  %v797 = vmul.f32 %v761, 0.015625
  %v798 = vmul.f32 %v764, 0.015625
  %v799 = vmul.f32 %v767, 0.015625
  %v800 = vmul.f32 %v639, %v639
  %v801 = vmul.f32 %v640, %v640
  %v802 = vmul.f32 %v641, %v641
  %v803 = vmul.f32 %v642, %v642
  %v804 = vmul.f32 %v643, %v643
  %v805 = vmul.f32 %v644, %v644
  %v806 = vmul.f32 %v645, %v645
  %v807 = vmul.f32 %v646, %v646
  %v808 = vmul.f32 %v647, %v647
  %v809 = vmul.f32 %v648, %v648
  %v810 = vmul.f32 %v649, %v649
  %v811 = vmul.f32 %v650, %v650
  %v812 = vmul.f32 %v651, %v651
  %v813 = vmul.f32 %v652, %v652
  %v814 = vmul.f32 %v653, %v653
  %v815 = vmul.f32 %v654, %v654
  %v816 = vmul.f32 %v655, %v655
  %v817 = vmul.f32 %v656, %v656
  %v818 = vmul.f32 %v657, %v657
  %v819 = vmul.f32 %v658, %v658
  %v820 = vmul.f32 %v659, %v659
  %v821 = vmul.f32 %v660, %v660
  %v822 = vmul.f32 %v661, %v661
  %v823 = vmul.f32 %v662, %v662
  %v824 = vmul.f32 %v663, %v663
  %v825 = vmul.f32 %v664, %v664
  %v826 = vmul.f32 %v665, %v665
  %v827 = vmul.f32 %v666, %v666
  %v828 = vmul.f32 %v667, %v667
  %v829 = vmul.f32 %v668, %v668
  %v830 = vmul.f32 %v669, %v669
  %v831 = vmul.f32 %v670, %v670
  %v832 = vsel %vm671, %v800, 0.0
  %833 = vadd.xlane.f32.xlu0 %v832
  %v834 = vpop.xlane.xlu0 %833
  %v835 = vsel %vm671, %v801, 0.0
  %836 = vadd.xlane.f32.xlu0 %v835
  %v837 = vpop.xlane.xlu0 %836
  %v838 = vsel %vm671, %v802, 0.0
  %839 = vadd.xlane.f32.xlu0 %v838
  %v840 = vpop.xlane.xlu0 %839
  %v841 = vsel %vm671, %v803, 0.0
  %842 = vadd.xlane.f32.xlu0 %v841
  %v843 = vpop.xlane.xlu0 %842
  %v844 = vsel %vm671, %v804, 0.0
  %845 = vadd.xlane.f32.xlu0 %v844
  %v846 = vpop.xlane.xlu0 %845
  %v847 = vsel %vm671, %v805, 0.0
  %848 = vadd.xlane.f32.xlu0 %v847
  %v849 = vpop.xlane.xlu0 %848
  %v850 = vsel %vm671, %v806, 0.0
  %851 = vadd.xlane.f32.xlu0 %v850
  %v852 = vpop.xlane.xlu0 %851
  %v853 = vsel %vm671, %v807, 0.0
  %854 = vadd.xlane.f32.xlu0 %v853
  %v855 = vpop.xlane.xlu0 %854
  %v856 = vsel %vm671, %v808, 0.0
  %857 = vadd.xlane.f32.xlu0 %v856
  %v858 = vpop.xlane.xlu0 %857
  %v859 = vsel %vm671, %v809, 0.0
  %860 = vadd.xlane.f32.xlu0 %v859
  %v861 = vpop.xlane.xlu0 %860
  %v862 = vsel %vm671, %v810, 0.0
  %863 = vadd.xlane.f32.xlu0 %v862
  %v864 = vpop.xlane.xlu0 %863
  %v865 = vsel %vm671, %v811, 0.0
  %866 = vadd.xlane.f32.xlu0 %v865
  %v867 = vpop.xlane.xlu0 %866
  %v868 = vsel %vm671, %v812, 0.0
  %869 = vadd.xlane.f32.xlu0 %v868
  %v870 = vpop.xlane.xlu0 %869
  %v871 = vsel %vm671, %v813, 0.0
  %872 = vadd.xlane.f32.xlu0 %v871
  %v873 = vpop.xlane.xlu0 %872
  %v874 = vsel %vm671, %v814, 0.0
  %875 = vadd.xlane.f32.xlu0 %v874
  %v876 = vpop.xlane.xlu0 %875
  %v877 = vsel %vm671, %v815, 0.0
  %878 = vadd.xlane.f32.xlu0 %v877
  %v879 = vpop.xlane.xlu0 %878
  %v880 = vsel %vm671, %v816, 0.0
  %881 = vadd.xlane.f32.xlu0 %v880
  %v882 = vpop.xlane.xlu0 %881
  %v883 = vsel %vm671, %v817, 0.0
  %884 = vadd.xlane.f32.xlu0 %v883
  %v885 = vpop.xlane.xlu0 %884
  %v886 = vsel %vm671, %v818, 0.0
  %887 = vadd.xlane.f32.xlu0 %v886
  %v888 = vpop.xlane.xlu0 %887
  %v889 = vsel %vm671, %v819, 0.0
  %890 = vadd.xlane.f32.xlu0 %v889
  %v891 = vpop.xlane.xlu0 %890
  %v892 = vsel %vm671, %v820, 0.0
  %893 = vadd.xlane.f32.xlu0 %v892
  %v894 = vpop.xlane.xlu0 %893
  %v895 = vsel %vm671, %v821, 0.0
  %896 = vadd.xlane.f32.xlu0 %v895
  %v897 = vpop.xlane.xlu0 %896
  %v898 = vsel %vm671, %v822, 0.0
  %899 = vadd.xlane.f32.xlu0 %v898
  %v900 = vpop.xlane.xlu0 %899
  %v901 = vsel %vm671, %v823, 0.0
  %902 = vadd.xlane.f32.xlu0 %v901
  %v903 = vpop.xlane.xlu0 %902
  %v904 = vsel %vm671, %v824, 0.0
  %905 = vadd.xlane.f32.xlu0 %v904
  %v906 = vpop.xlane.xlu0 %905
  %v907 = vsel %vm671, %v825, 0.0
  %908 = vadd.xlane.f32.xlu0 %v907
  %v909 = vpop.xlane.xlu0 %908
  %v910 = vsel %vm671, %v826, 0.0
  %911 = vadd.xlane.f32.xlu0 %v910
  %v912 = vpop.xlane.xlu0 %911
  %v913 = vsel %vm671, %v827, 0.0
  %914 = vadd.xlane.f32.xlu0 %v913
  %v915 = vpop.xlane.xlu0 %914
  %v916 = vsel %vm671, %v828, 0.0
  %917 = vadd.xlane.f32.xlu0 %v916
  %v918 = vpop.xlane.xlu0 %917
  %v919 = vsel %vm671, %v829, 0.0
  %920 = vadd.xlane.f32.xlu0 %v919
  %v921 = vpop.xlane.xlu0 %920
  %v922 = vsel %vm671, %v830, 0.0
  %923 = vadd.xlane.f32.xlu0 %v922
  %v924 = vpop.xlane.xlu0 %923
  %v925 = vsel %vm671, %v831, 0.0
  %926 = vadd.xlane.f32.xlu0 %v925
  %v927 = vpop.xlane.xlu0 %926
  %v928 = vmul.f32 %v834, 0.015625
  %v929 = vmul.f32 %v837, 0.015625
  %v930 = vmul.f32 %v840, 0.015625
  %v931 = vmul.f32 %v843, 0.015625
  %v932 = vmul.f32 %v846, 0.015625
  %v933 = vmul.f32 %v849, 0.015625
  %v934 = vmul.f32 %v852, 0.015625
  %v935 = vmul.f32 %v855, 0.015625
  %v936 = vmul.f32 %v858, 0.015625
  %v937 = vmul.f32 %v861, 0.015625
  %v938 = vmul.f32 %v864, 0.015625
  %v939 = vmul.f32 %v867, 0.015625
  %v940 = vmul.f32 %v870, 0.015625
  %v941 = vmul.f32 %v873, 0.015625
  %v942 = vmul.f32 %v876, 0.015625
  %v943 = vmul.f32 %v879, 0.015625
  %v944 = vmul.f32 %v882, 0.015625
  %v945 = vmul.f32 %v885, 0.015625
  %v946 = vmul.f32 %v888, 0.015625
  %v947 = vmul.f32 %v891, 0.015625
  %v948 = vmul.f32 %v894, 0.015625
  %v949 = vmul.f32 %v897, 0.015625
  %v950 = vmul.f32 %v900, 0.015625
  %v951 = vmul.f32 %v903, 0.015625
  %v952 = vmul.f32 %v906, 0.015625
  %v953 = vmul.f32 %v909, 0.015625
  %v954 = vmul.f32 %v912, 0.015625
  %v955 = vmul.f32 %v915, 0.015625
  %v956 = vmul.f32 %v918, 0.015625
  %v957 = vmul.f32 %v921, 0.015625
  %v958 = vmul.f32 %v924, 0.015625
  %v959 = vmul.f32 %v927, 0.015625
  %v960 = vmul.f32 %v768, %v768
  %v961 = vmul.f32 %v769, %v769
  %v962 = vmul.f32 %v770, %v770
  %v963 = vmul.f32 %v771, %v771
  %v964 = vmul.f32 %v772, %v772
  %v965 = vmul.f32 %v773, %v773
  %v966 = vmul.f32 %v774, %v774
  %v967 = vmul.f32 %v775, %v775
  %v968 = vmul.f32 %v776, %v776
  %v969 = vmul.f32 %v777, %v777
  %v970 = vmul.f32 %v778, %v778
  %v971 = vmul.f32 %v779, %v779
  %v972 = vmul.f32 %v780, %v780
  %v973 = vmul.f32 %v781, %v781
  %v974 = vmul.f32 %v782, %v782
  %v975 = vmul.f32 %v783, %v783
  %v976 = vmul.f32 %v784, %v784
  %v977 = vmul.f32 %v785, %v785
  %v978 = vmul.f32 %v786, %v786
  %v979 = vmul.f32 %v787, %v787
  %v980 = vmul.f32 %v788, %v788
  %v981 = vmul.f32 %v789, %v789
  %v982 = vmul.f32 %v790, %v790
  %v983 = vmul.f32 %v791, %v791
  %v984 = vmul.f32 %v792, %v792
  %v985 = vmul.f32 %v793, %v793
  %v986 = vmul.f32 %v794, %v794
  %v987 = vmul.f32 %v795, %v795
  %v988 = vmul.f32 %v796, %v796
  %v989 = vmul.f32 %v797, %v797
  %v990 = vmul.f32 %v798, %v798
  %v991 = vmul.f32 %v799, %v799
  %v992 = vsub.f32 %v928, %v960
  %v993 = vsub.f32 %v929, %v961
  %v994 = vsub.f32 %v930, %v962
  %v995 = vsub.f32 %v931, %v963
  %v996 = vsub.f32 %v932, %v964
  %v997 = vsub.f32 %v933, %v965
  %v998 = vsub.f32 %v934, %v966
  %v999 = vsub.f32 %v935, %v967
  %v1000 = vsub.f32 %v936, %v968
  %v1001 = vsub.f32 %v937, %v969
  %v1002 = vsub.f32 %v938, %v970
  %v1003 = vsub.f32 %v939, %v971
  %v1004 = vsub.f32 %v940, %v972
  %v1005 = vsub.f32 %v941, %v973
  %v1006 = vsub.f32 %v942, %v974
  %v1007 = vsub.f32 %v943, %v975
  %v1008 = vsub.f32 %v944, %v976
  %v1009 = vsub.f32 %v945, %v977
  %v1010 = vsub.f32 %v946, %v978
  %v1011 = vsub.f32 %v947, %v979
  %v1012 = vsub.f32 %v948, %v980
  %v1013 = vsub.f32 %v949, %v981
  %v1014 = vsub.f32 %v950, %v982
  %v1015 = vsub.f32 %v951, %v983
  %v1016 = vsub.f32 %v952, %v984
  %v1017 = vsub.f32 %v953, %v985
  %v1018 = vsub.f32 %v954, %v986
  %v1019 = vsub.f32 %v955, %v987
  %v1020 = vsub.f32 %v956, %v988
  %v1021 = vsub.f32 %v957, %v989
  %v1022 = vsub.f32 %v958, %v990
  %v1023 = vsub.f32 %v959, %v991
  %v1024 = vmax.f32 %v992, 0.0
  %v1025 = vmax.f32 %v993, 0.0
  %v1026 = vmax.f32 %v994, 0.0
  %v1027 = vmax.f32 %v995, 0.0
  %v1028 = vmax.f32 %v996, 0.0
  %v1029 = vmax.f32 %v997, 0.0
  %v1030 = vmax.f32 %v998, 0.0
  %v1031 = vmax.f32 %v999, 0.0
  %v1032 = vmax.f32 %v1000, 0.0
  %v1033 = vmax.f32 %v1001, 0.0
  %v1034 = vmax.f32 %v1002, 0.0
  %v1035 = vmax.f32 %v1003, 0.0
  %v1036 = vmax.f32 %v1004, 0.0
  %v1037 = vmax.f32 %v1005, 0.0
  %v1038 = vmax.f32 %v1006, 0.0
  %v1039 = vmax.f32 %v1007, 0.0
  %v1040 = vmax.f32 %v1008, 0.0
  %v1041 = vmax.f32 %v1009, 0.0
  %v1042 = vmax.f32 %v1010, 0.0
  %v1043 = vmax.f32 %v1011, 0.0
  %v1044 = vmax.f32 %v1012, 0.0
  %v1045 = vmax.f32 %v1013, 0.0
  %v1046 = vmax.f32 %v1014, 0.0
  %v1047 = vmax.f32 %v1015, 0.0
  %v1048 = vmax.f32 %v1016, 0.0
  %v1049 = vmax.f32 %v1017, 0.0
  %v1050 = vmax.f32 %v1018, 0.0
  %v1051 = vmax.f32 %v1019, 0.0
  %v1052 = vmax.f32 %v1020, 0.0
  %v1053 = vmax.f32 %v1021, 0.0
  %v1054 = vmax.f32 %v1022, 0.0
  %v1055 = vmax.f32 %v1023, 0.0
  %v1056 = vsub.f32 %v639, %v768
  %v1057 = vsub.f32 %v640, %v769
  %v1058 = vsub.f32 %v641, %v770
  %v1059 = vsub.f32 %v642, %v771
  %v1060 = vsub.f32 %v643, %v772
  %v1061 = vsub.f32 %v644, %v773
  %v1062 = vsub.f32 %v645, %v774
  %v1063 = vsub.f32 %v646, %v775
  %v1064 = vsub.f32 %v647, %v776
  %v1065 = vsub.f32 %v648, %v777
  %v1066 = vsub.f32 %v649, %v778
  %v1067 = vsub.f32 %v650, %v779
  %v1068 = vsub.f32 %v651, %v780
  %v1069 = vsub.f32 %v652, %v781
  %v1070 = vsub.f32 %v653, %v782
  %v1071 = vsub.f32 %v654, %v783
  %v1072 = vsub.f32 %v655, %v784
  %v1073 = vsub.f32 %v656, %v785
  %v1074 = vsub.f32 %v657, %v786
  %v1075 = vsub.f32 %v658, %v787
  %v1076 = vsub.f32 %v659, %v788
  %v1077 = vsub.f32 %v660, %v789
  %v1078 = vsub.f32 %v661, %v790
  %v1079 = vsub.f32 %v662, %v791
  %v1080 = vsub.f32 %v663, %v792
  %v1081 = vsub.f32 %v664, %v793
  %v1082 = vsub.f32 %v665, %v794
  %v1083 = vsub.f32 %v666, %v795
  %v1084 = vsub.f32 %v667, %v796
  %v1085 = vsub.f32 %v668, %v797
  %v1086 = vsub.f32 %v669, %v798
  %v1087 = vsub.f32 %v670, %v799
  %v1088 = vadd.f32 %v1024, 1e-05
  %v1089 = vadd.f32 %v1025, 1e-05
  %v1090 = vadd.f32 %v1026, 1e-05
  %v1091 = vadd.f32 %v1027, 1e-05
  %v1092 = vadd.f32 %v1028, 1e-05
  %v1093 = vadd.f32 %v1029, 1e-05
  %v1094 = vadd.f32 %v1030, 1e-05
  %v1095 = vadd.f32 %v1031, 1e-05
  %v1096 = vadd.f32 %v1032, 1e-05
  %v1097 = vadd.f32 %v1033, 1e-05
  %v1098 = vadd.f32 %v1034, 1e-05
  %v1099 = vadd.f32 %v1035, 1e-05
  %v1100 = vadd.f32 %v1036, 1e-05
  %v1101 = vadd.f32 %v1037, 1e-05
  %v1102 = vadd.f32 %v1038, 1e-05
  %v1103 = vadd.f32 %v1039, 1e-05
  %v1104 = vadd.f32 %v1040, 1e-05
  %v1105 = vadd.f32 %v1041, 1e-05
  %v1106 = vadd.f32 %v1042, 1e-05
  %v1107 = vadd.f32 %v1043, 1e-05
  %v1108 = vadd.f32 %v1044, 1e-05
  %v1109 = vadd.f32 %v1045, 1e-05
  %v1110 = vadd.f32 %v1046, 1e-05
  %v1111 = vadd.f32 %v1047, 1e-05
  %v1112 = vadd.f32 %v1048, 1e-05
  %v1113 = vadd.f32 %v1049, 1e-05
  %v1114 = vadd.f32 %v1050, 1e-05
  %v1115 = vadd.f32 %v1051, 1e-05
  %v1116 = vadd.f32 %v1052, 1e-05
  %v1117 = vadd.f32 %v1053, 1e-05
  %v1118 = vadd.f32 %v1054, 1e-05
  %v1119 = vadd.f32 %v1055, 1e-05
  %v1120 = vrsqrt.pop %v1088
  %v1121 = vrsqrt.pop %v1089
  %v1122 = vrsqrt.pop %v1090
  %v1123 = vrsqrt.pop %v1091
  %v1124 = vrsqrt.pop %v1092
  %v1125 = vrsqrt.pop %v1093
  %v1126 = vrsqrt.pop %v1094
  %v1127 = vrsqrt.pop %v1095
  %v1128 = vrsqrt.pop %v1096
  %v1129 = vrsqrt.pop %v1097
  %v1130 = vrsqrt.pop %v1098
  %v1131 = vrsqrt.pop %v1099
  %v1132 = vrsqrt.pop %v1100
  %v1133 = vrsqrt.pop %v1101
  %v1134 = vrsqrt.pop %v1102
  %v1135 = vrsqrt.pop %v1103
  %v1136 = vrsqrt.pop %v1104
  %v1137 = vrsqrt.pop %v1105
  %v1138 = vrsqrt.pop %v1106
  %v1139 = vrsqrt.pop %v1107
  %v1140 = vrsqrt.pop %v1108
  %v1141 = vrsqrt.pop %v1109
  %v1142 = vrsqrt.pop %v1110
  %v1143 = vrsqrt.pop %v1111
  %v1144 = vrsqrt.pop %v1112
  %v1145 = vrsqrt.pop %v1113
  %v1146 = vrsqrt.pop %v1114
  %v1147 = vrsqrt.pop %v1115
  %v1148 = vrsqrt.pop %v1116
  %v1149 = vrsqrt.pop %v1117
  %v1150 = vrsqrt.pop %v1118
  %v1151 = vrsqrt.pop %v1119
  %v1152 = vmul.f32 %v1056, %v1120
  %v1153 = vmul.f32 %v1057, %v1121
  %v1154 = vmul.f32 %v1058, %v1122
  %v1155 = vmul.f32 %v1059, %v1123
  %v1156 = vmul.f32 %v1060, %v1124
  %v1157 = vmul.f32 %v1061, %v1125
  %v1158 = vmul.f32 %v1062, %v1126
  %v1159 = vmul.f32 %v1063, %v1127
  %v1160 = vmul.f32 %v1064, %v1128
  %v1161 = vmul.f32 %v1065, %v1129
  %v1162 = vmul.f32 %v1066, %v1130
  %v1163 = vmul.f32 %v1067, %v1131
  %v1164 = vmul.f32 %v1068, %v1132
  %v1165 = vmul.f32 %v1069, %v1133
  %v1166 = vmul.f32 %v1070, %v1134
  %v1167 = vmul.f32 %v1071, %v1135
  %v1168 = vmul.f32 %v1072, %v1136
  %v1169 = vmul.f32 %v1073, %v1137
  %v1170 = vmul.f32 %v1074, %v1138
  %v1171 = vmul.f32 %v1075, %v1139
  %v1172 = vmul.f32 %v1076, %v1140
  %v1173 = vmul.f32 %v1077, %v1141
  %v1174 = vmul.f32 %v1078, %v1142
  %v1175 = vmul.f32 %v1079, %v1143
  %v1176 = vmul.f32 %v1080, %v1144
  %v1177 = vmul.f32 %v1081, %v1145
  %v1178 = vmul.f32 %v1082, %v1146
  %v1179 = vmul.f32 %v1083, %v1147
  %v1180 = vmul.f32 %v1084, %v1148
  %v1181 = vmul.f32 %v1085, %v1149
  %v1182 = vmul.f32 %v1086, %v1150
  %v1183 = vmul.f32 %v1087, %v1151
  %v1184 = vmul.f32 %v1152, %v148
  %v1185 = vmul.f32 %v1153, %v148
  %v1186 = vmul.f32 %v1154, %v148
  %v1187 = vmul.f32 %v1155, %v148
  %v1188 = vmul.f32 %v1156, %v148
  %v1189 = vmul.f32 %v1157, %v148
  %v1190 = vmul.f32 %v1158, %v148
  %v1191 = vmul.f32 %v1159, %v148
  %v1192 = vmul.f32 %v1160, %v148
  %v1193 = vmul.f32 %v1161, %v148
  %v1194 = vmul.f32 %v1162, %v148
  %v1195 = vmul.f32 %v1163, %v148
  %v1196 = vmul.f32 %v1164, %v148
  %v1197 = vmul.f32 %v1165, %v148
  %v1198 = vmul.f32 %v1166, %v148
  %v1199 = vmul.f32 %v1167, %v148
  %v1200 = vmul.f32 %v1168, %v148
  %v1201 = vmul.f32 %v1169, %v148
  %v1202 = vmul.f32 %v1170, %v148
  %v1203 = vmul.f32 %v1171, %v148
  %v1204 = vmul.f32 %v1172, %v148
  %v1205 = vmul.f32 %v1173, %v148
  %v1206 = vmul.f32 %v1174, %v148
  %v1207 = vmul.f32 %v1175, %v148
  %v1208 = vmul.f32 %v1176, %v148
  %v1209 = vmul.f32 %v1177, %v148
  %v1210 = vmul.f32 %v1178, %v148
  %v1211 = vmul.f32 %v1179, %v148
  %v1212 = vmul.f32 %v1180, %v148
  %v1213 = vmul.f32 %v1181, %v148
  %v1214 = vmul.f32 %v1182, %v148
  %v1215 = vmul.f32 %v1183, %v148
  %v1216 = vadd.f32 %v1184, %v149
  %v1217 = vadd.f32 %v1185, %v149
  %v1218 = vadd.f32 %v1186, %v149
  %v1219 = vadd.f32 %v1187, %v149
  %v1220 = vadd.f32 %v1188, %v149
  %v1221 = vadd.f32 %v1189, %v149
  %v1222 = vadd.f32 %v1190, %v149
  %v1223 = vadd.f32 %v1191, %v149
  %v1224 = vadd.f32 %v1192, %v149
  %v1225 = vadd.f32 %v1193, %v149
  %v1226 = vadd.f32 %v1194, %v149
  %v1227 = vadd.f32 %v1195, %v149
  %v1228 = vadd.f32 %v1196, %v149
  %v1229 = vadd.f32 %v1197, %v149
  %v1230 = vadd.f32 %v1198, %v149
  %v1231 = vadd.f32 %v1199, %v149
  %v1232 = vadd.f32 %v1200, %v149
  %v1233 = vadd.f32 %v1201, %v149
  %v1234 = vadd.f32 %v1202, %v149
  %v1235 = vadd.f32 %v1203, %v149
  %v1236 = vadd.f32 %v1204, %v149
  %v1237 = vadd.f32 %v1205, %v149
  %v1238 = vadd.f32 %v1206, %v149
  %v1239 = vadd.f32 %v1207, %v149
  %v1240 = vadd.f32 %v1208, %v149
  %v1241 = vadd.f32 %v1209, %v149
  %v1242 = vadd.f32 %v1210, %v149
  %v1243 = vadd.f32 %v1211, %v149
  %v1244 = vadd.f32 %v1212, %v149
  %v1245 = vadd.f32 %v1213, %v149
  %v1246 = vadd.f32 %v1214, %v149
  %v1247 = vadd.f32 %v1215, %v149
  %v1248 = vpack.c.bf16 %v1217, %v1216
  %v1249 = vpack.c.bf16 %v1219, %v1218
  %v1250 = vpack.c.bf16 %v1221, %v1220
  %v1251 = vpack.c.bf16 %v1223, %v1222
  %v1252 = vpack.c.bf16 %v1225, %v1224
  %v1253 = vpack.c.bf16 %v1227, %v1226
  %v1254 = vpack.c.bf16 %v1229, %v1228
  %v1255 = vpack.c.bf16 %v1231, %v1230
  %v1256 = vpack.c.bf16 %v1233, %v1232
  %v1257 = vpack.c.bf16 %v1235, %v1234
  %v1258 = vpack.c.bf16 %v1237, %v1236
  %v1259 = vpack.c.bf16 %v1239, %v1238
  %v1260 = vpack.c.bf16 %v1241, %v1240
  %v1261 = vpack.c.bf16 %v1243, %v1242
  %v1262 = vpack.c.bf16 %v1245, %v1244
  %v1263 = vpack.c.bf16 %v1247, %v1246
  %v1272 = vunpack.c.l.b16 %v90
  %v1273 = vunpack.c.l.b16 %v91
  %v1274 = vunpack.c.l.b16 %v92
  %v1275 = vunpack.c.l.b16 %v93
  %v1276 = vunpack.c.l.b16 %v94
  %v1277 = vunpack.c.l.b16 %v95
  %v1278 = vunpack.c.l.b16 %v96
  %v1279 = vunpack.c.l.b16 %v97
  %v1280 = vpack.c.b16 %v1273, %v1272
  %v1281 = vpack.c.b16 %v1275, %v1274
  %v1282 = vpack.c.b16 %v1277, %v1276
  %v1283 = vpack.c.b16 %v1279, %v1278
  %v1289 = vsel %vm671, %v1248, 0
  %v1292 = vsel %vm671, %v1249, 0
  %v1295 = vsel %vm671, %v1250, 0
  %v1298 = vsel %vm671, %v1251, 0
  %v1301 = vsel %vm671, %v1252, 0
  %v1304 = vsel %vm671, %v1253, 0
  %v1307 = vsel %vm671, %v1254, 0
  %v1310 = vsel %vm671, %v1255, 0
  %v1313 = vsel %vm671, %v1256, 0
  %v1316 = vsel %vm671, %v1257, 0
  %v1319 = vsel %vm671, %v1258, 0
  %v1322 = vsel %vm671, %v1259, 0
  %v1325 = vsel %vm671, %v1260, 0
  %v1328 = vsel %vm671, %v1261, 0
  %v1331 = vsel %vm671, %v1262, 0
  %v1334 = vsel %vm671, %v1263, 0
  %1336 = vmatprep.subr.bf16.mxu0 0
  %1337 = vmatpush1.bf16.msra.mxu0 0
  %1338 = vmatprep.subr.bf16.mxu0 0
  %1339 = vmatpush1.bf16.msra.mxu0 0
  %1340 = vmatprep.subr.bf16.mxu0 0
  %1341 = vmatpush1.bf16.msra.mxu0 0
  %1342 = vmatprep.subr.bf16.mxu0 0
  %1343 = vmatpush1.bf16.msra.mxu0 0
  %1344 = vmatprep.subr.bf16.mxu0 0
  %1345 = vmatpush1.bf16.msra.mxu0 %v1283
  %1346 = vmatprep.subr.bf16.mxu0 0
  %1347 = vmatpush1.bf16.msra.mxu0 %v1282
  %1348 = vmatprep.subr.bf16.mxu0 0
  %1349 = vmatpush1.bf16.msra.mxu0 %v1281
  %1350 = vmatprep.subr.bf16.mxu0 0
  %1351 = vmatpush1.bf16.msra.mxu0 %v1280
  %1352 = vmatprep.subr.bf16.mxu0 0
  %1353 = vmatpush2.bf16.msra.mxu0 0
  %1354 = vmatprep.subr.bf16.mxu0 0
  %1355 = vmatpush2.bf16.msra.mxu0 0
  %1356 = vmatprep.subr.bf16.mxu0 0
  %1357 = vmatpush2.bf16.msra.mxu0 0
  %1358 = vmatprep.subr.bf16.mxu0 0
  %1359 = vmatpush2.bf16.msra.mxu0 0
  %1360 = vmatprep.subr.bf16.mxu0 0
  %1361 = vmatpush2.bf16.msra.mxu0 0
  %1362 = vmatprep.subr.bf16.mxu0 0
  %1363 = vmatpush2.bf16.msra.mxu0 0
  %1364 = vmatprep.subr.bf16.mxu0 0
  %1365 = vmatpush2.bf16.msra.mxu0 0
  %1366 = vmatprep.subr.bf16.mxu0 0
  %1367 = vmatpush2.bf16.msra.mxu0 0
  %1368 = vmatprep.mubr.bf16.mxu0 0
  %1369 = vmatmul.mubr.bf16.gmra.mxu0 %v1289
  %v1370 = vpop.f32.mrf.mxu0
  %v1371 = vadd.f32 %v150, %v1370
  %v1372 = vpop.f32.mrf.mxu0
  %v1373 = vpop.f32.mrf.mxu0
  %v1374 = vadd.f32 %v150, %v1373
  %v1375 = vpop.f32.mrf.mxu0
  %1376 = vmatprep.mubr.bf16.mxu0 0
  %1377 = vmatmul.mubr.bf16.gmra.mxu0 %v1292
  %v1378 = vpop.f32.mrf.mxu0
  %v1379 = vadd.f32 %v150, %v1378
  %v1380 = vpop.f32.mrf.mxu0
  %v1381 = vpop.f32.mrf.mxu0
  %v1382 = vadd.f32 %v150, %v1381
  %v1383 = vpop.f32.mrf.mxu0
  %1384 = vmatprep.mubr.bf16.mxu0 0
  %1385 = vmatmul.mubr.bf16.gmra.mxu0 %v1295
  %v1386 = vpop.f32.mrf.mxu0
  %v1387 = vadd.f32 %v150, %v1386
  %v1388 = vpop.f32.mrf.mxu0
  %v1389 = vpop.f32.mrf.mxu0
  %v1390 = vadd.f32 %v150, %v1389
  %v1391 = vpop.f32.mrf.mxu0
  %1392 = vmatprep.mubr.bf16.mxu0 0
  %1393 = vmatmul.mubr.bf16.gmra.mxu0 %v1298
  %v1394 = vpop.f32.mrf.mxu0
  %v1395 = vadd.f32 %v150, %v1394
  %v1396 = vpop.f32.mrf.mxu0
  %v1397 = vpop.f32.mrf.mxu0
  %v1398 = vadd.f32 %v150, %v1397
  %v1399 = vpop.f32.mrf.mxu0
  %1400 = vmatprep.mubr.bf16.mxu0 0
  %1401 = vmatmul.mubr.bf16.gmra.mxu0 %v1301
  %v1402 = vpop.f32.mrf.mxu0
  %v1403 = vadd.f32 %v150, %v1402
  %v1404 = vpop.f32.mrf.mxu0
  %v1405 = vpop.f32.mrf.mxu0
  %v1406 = vadd.f32 %v150, %v1405
  %v1407 = vpop.f32.mrf.mxu0
  %1408 = vmatprep.mubr.bf16.mxu0 0
  %1409 = vmatmul.mubr.bf16.gmra.mxu0 %v1304
  %v1410 = vpop.f32.mrf.mxu0
  %v1411 = vadd.f32 %v150, %v1410
  %v1412 = vpop.f32.mrf.mxu0
  %v1413 = vpop.f32.mrf.mxu0
  %v1414 = vadd.f32 %v150, %v1413
  %v1415 = vpop.f32.mrf.mxu0
  %1416 = vmatprep.mubr.bf16.mxu0 0
  %1417 = vmatmul.mubr.bf16.gmra.mxu0 %v1307
  %v1418 = vpop.f32.mrf.mxu0
  %v1419 = vadd.f32 %v150, %v1418
  %v1420 = vpop.f32.mrf.mxu0
  %v1421 = vpop.f32.mrf.mxu0
  %v1422 = vadd.f32 %v150, %v1421
  %v1423 = vpop.f32.mrf.mxu0
  %1424 = vmatprep.mubr.bf16.mxu0 0
  %1425 = vmatmul.mubr.bf16.gmra.mxu0 %v1310
  %v1426 = vpop.f32.mrf.mxu0
  %v1427 = vadd.f32 %v150, %v1426
  %v1428 = vpop.f32.mrf.mxu0
  %v1429 = vpop.f32.mrf.mxu0
  %v1430 = vadd.f32 %v150, %v1429
  %v1431 = vpop.f32.mrf.mxu0
  %1432 = vmatprep.mubr.bf16.mxu0 0
  %1433 = vmatmul.mubr.bf16.gmra.mxu0 %v1313
  %v1434 = vpop.f32.mrf.mxu0
  %v1435 = vadd.f32 %v150, %v1434
  %v1436 = vpop.f32.mrf.mxu0
  %v1437 = vpop.f32.mrf.mxu0
  %v1438 = vadd.f32 %v150, %v1437
  %v1439 = vpop.f32.mrf.mxu0
  %1440 = vmatprep.mubr.bf16.mxu0 0
  %1441 = vmatmul.mubr.bf16.gmra.mxu0 %v1316
  %v1442 = vpop.f32.mrf.mxu0
  %v1443 = vadd.f32 %v150, %v1442
  %v1444 = vpop.f32.mrf.mxu0
  %v1445 = vpop.f32.mrf.mxu0
  %v1446 = vadd.f32 %v150, %v1445
  %v1447 = vpop.f32.mrf.mxu0
  %1448 = vmatprep.mubr.bf16.mxu0 0
  %1449 = vmatmul.mubr.bf16.gmra.mxu0 %v1319
  %v1450 = vpop.f32.mrf.mxu0
  %v1451 = vadd.f32 %v150, %v1450
  %v1452 = vpop.f32.mrf.mxu0
  %v1453 = vpop.f32.mrf.mxu0
  %v1454 = vadd.f32 %v150, %v1453
  %v1455 = vpop.f32.mrf.mxu0
  %1456 = vmatprep.mubr.bf16.mxu0 0
  %1457 = vmatmul.mubr.bf16.gmra.mxu0 %v1322
  %v1458 = vpop.f32.mrf.mxu0
  %v1459 = vadd.f32 %v150, %v1458
  %v1460 = vpop.f32.mrf.mxu0
  %v1461 = vpop.f32.mrf.mxu0
  %v1462 = vadd.f32 %v150, %v1461
  %v1463 = vpop.f32.mrf.mxu0
  %1464 = vmatprep.mubr.bf16.mxu0 0
  %1465 = vmatmul.mubr.bf16.gmra.mxu0 %v1325
  %v1466 = vpop.f32.mrf.mxu0
  %v1467 = vadd.f32 %v150, %v1466
  %v1468 = vpop.f32.mrf.mxu0
  %v1469 = vpop.f32.mrf.mxu0
  %v1470 = vadd.f32 %v150, %v1469
  %v1471 = vpop.f32.mrf.mxu0
  %1472 = vmatprep.mubr.bf16.mxu0 0
  %1473 = vmatmul.mubr.bf16.gmra.mxu0 %v1328
  %v1474 = vpop.f32.mrf.mxu0
  %v1475 = vadd.f32 %v150, %v1474
  %v1476 = vpop.f32.mrf.mxu0
  %v1477 = vpop.f32.mrf.mxu0
  %v1478 = vadd.f32 %v150, %v1477
  %v1479 = vpop.f32.mrf.mxu0
  %1480 = vmatprep.mubr.bf16.mxu0 0
  %1481 = vmatmul.mubr.bf16.gmra.mxu0 %v1331
  %v1482 = vpop.f32.mrf.mxu0
  %v1483 = vadd.f32 %v150, %v1482
  %v1484 = vpop.f32.mrf.mxu0
  %v1485 = vpop.f32.mrf.mxu0
  %v1486 = vadd.f32 %v150, %v1485
  %v1487 = vpop.f32.mrf.mxu0
  %1488 = vmatprep.mubr.bf16.mxu0 0
  %1489 = vmatmul.mubr.bf16.gmra.mxu0 %v1334
  %v1490 = vpop.f32.mrf.mxu0
  %v1491 = vadd.f32 %v150, %v1490
  %v1492 = vpop.f32.mrf.mxu0
  %v1493 = vpop.f32.mrf.mxu0
  %v1494 = vadd.f32 %v150, %v1493
  %v1495 = vpop.f32.mrf.mxu0
  %1496 = vdwg.mxu0
  %v1497 = vmul.f32 %v18, 0.01
  %v1498 = vmul.f32 %v19, 0.01
  %v1499 = vmul.f32 %v20, 0.01
  %v1500 = vmul.f32 %v21, 0.01
  %v1501 = vmul.f32 %v22, 0.01
  %v1502 = vmul.f32 %v23, 0.01
  %v1503 = vmul.f32 %v24, 0.01
  %v1504 = vmul.f32 %v25, 0.01
  %v1505 = vmul.f32 %v26, 0.01
  %v1506 = vmul.f32 %v27, 0.01
  %v1507 = vmul.f32 %v28, 0.01
  %v1508 = vmul.f32 %v29, 0.01
  %v1509 = vmul.f32 %v30, 0.01
  %v1510 = vmul.f32 %v31, 0.01
  %v1511 = vmul.f32 %v32, 0.01
  %v1512 = vmul.f32 %v33, 0.01
  %v1513 = vmul.f32 %v34, 0.01
  %v1514 = vmul.f32 %v35, 0.01
  %v1515 = vmul.f32 %v36, 0.01
  %v1516 = vmul.f32 %v37, 0.01
  %v1517 = vmul.f32 %v38, 0.01
  %v1518 = vmul.f32 %v39, 0.01
  %v1519 = vmul.f32 %v40, 0.01
  %v1520 = vmul.f32 %v41, 0.01
  %v1521 = vmul.f32 %v42, 0.01
  %v1522 = vmul.f32 %v43, 0.01
  %v1523 = vmul.f32 %v44, 0.01
  %v1524 = vmul.f32 %v45, 0.01
  %v1525 = vmul.f32 %v46, 0.01
  %v1526 = vmul.f32 %v47, 0.01
  %v1527 = vmul.f32 %v48, 0.01
  %v1528 = vmul.f32 %v49, 0.01
  %v1529 = vsub.f32 1.0, %v1497
  %v1530 = vsub.f32 1.0, %v1498
  %v1531 = vsub.f32 1.0, %v1499
  %v1532 = vsub.f32 1.0, %v1500
  %v1533 = vsub.f32 1.0, %v1501
  %v1534 = vsub.f32 1.0, %v1502
  %v1535 = vsub.f32 1.0, %v1503
  %v1536 = vsub.f32 1.0, %v1504
  %v1537 = vsub.f32 1.0, %v1505
  %v1538 = vsub.f32 1.0, %v1506
  %v1539 = vsub.f32 1.0, %v1507
  %v1540 = vsub.f32 1.0, %v1508
  %v1541 = vsub.f32 1.0, %v1509
  %v1542 = vsub.f32 1.0, %v1510
  %v1543 = vsub.f32 1.0, %v1511
  %v1544 = vsub.f32 1.0, %v1512
  %v1545 = vsub.f32 1.0, %v1513
  %v1546 = vsub.f32 1.0, %v1514
  %v1547 = vsub.f32 1.0, %v1515
  %v1548 = vsub.f32 1.0, %v1516
  %v1549 = vsub.f32 1.0, %v1517
  %v1550 = vsub.f32 1.0, %v1518
  %v1551 = vsub.f32 1.0, %v1519
  %v1552 = vsub.f32 1.0, %v1520
  %v1553 = vsub.f32 1.0, %v1521
  %v1554 = vsub.f32 1.0, %v1522
  %v1555 = vsub.f32 1.0, %v1523
  %v1556 = vsub.f32 1.0, %v1524
  %v1557 = vsub.f32 1.0, %v1525
  %v1558 = vsub.f32 1.0, %v1526
  %v1559 = vsub.f32 1.0, %v1527
  %v1560 = vsub.f32 1.0, %v1528
  %1562 = vset.pattern.permute.xlu0 96
  %1563 = vperm.xlu0 %1562, %v1529
  %v1564 = vpop.permute.xlu0 %1563
  %1567 = vset.pattern.permute.xlu0 96
  %1568 = vperm.xlu0 %1567, %v1530
  %v1569 = vpop.permute.xlu0 %1568
  %1572 = vset.pattern.permute.xlu0 96
  %1573 = vperm.xlu0 %1572, %v1531
  %v1574 = vpop.permute.xlu0 %1573
  %1577 = vset.pattern.permute.xlu0 96
  %1578 = vperm.xlu0 %1577, %v1532
  %v1579 = vpop.permute.xlu0 %1578
  %1582 = vset.pattern.permute.xlu0 96
  %1583 = vperm.xlu0 %1582, %v1533
  %v1584 = vpop.permute.xlu0 %1583
  %1587 = vset.pattern.permute.xlu0 96
  %1588 = vperm.xlu0 %1587, %v1534
  %v1589 = vpop.permute.xlu0 %1588
  %1592 = vset.pattern.permute.xlu0 96
  %1593 = vperm.xlu0 %1592, %v1535
  %v1594 = vpop.permute.xlu0 %1593
  %1597 = vset.pattern.permute.xlu0 96
  %1598 = vperm.xlu0 %1597, %v1536
  %v1599 = vpop.permute.xlu0 %1598
  %1602 = vset.pattern.permute.xlu0 96
  %1603 = vperm.xlu0 %1602, %v1537
  %v1604 = vpop.permute.xlu0 %1603
  %1607 = vset.pattern.permute.xlu0 96
  %1608 = vperm.xlu0 %1607, %v1538
  %v1609 = vpop.permute.xlu0 %1608
  %1612 = vset.pattern.permute.xlu0 96
  %1613 = vperm.xlu0 %1612, %v1539
  %v1614 = vpop.permute.xlu0 %1613
  %1617 = vset.pattern.permute.xlu0 96
  %1618 = vperm.xlu0 %1617, %v1540
  %v1619 = vpop.permute.xlu0 %1618
  %1622 = vset.pattern.permute.xlu0 96
  %1623 = vperm.xlu0 %1622, %v1541
  %v1624 = vpop.permute.xlu0 %1623
  %1627 = vset.pattern.permute.xlu0 96
  %1628 = vperm.xlu0 %1627, %v1542
  %v1629 = vpop.permute.xlu0 %1628
  %1632 = vset.pattern.permute.xlu0 96
  %1633 = vperm.xlu0 %1632, %v1543
  %v1634 = vpop.permute.xlu0 %1633
  %1637 = vset.pattern.permute.xlu0 96
  %1638 = vperm.xlu0 %1637, %v1544
  %v1639 = vpop.permute.xlu0 %1638
  %1642 = vset.pattern.permute.xlu0 96
  %1643 = vperm.xlu0 %1642, %v1545
  %v1644 = vpop.permute.xlu0 %1643
  %1647 = vset.pattern.permute.xlu0 96
  %1648 = vperm.xlu0 %1647, %v1546
  %v1649 = vpop.permute.xlu0 %1648
  %1652 = vset.pattern.permute.xlu0 96
  %1653 = vperm.xlu0 %1652, %v1547
  %v1654 = vpop.permute.xlu0 %1653
  %1657 = vset.pattern.permute.xlu0 96
  %1658 = vperm.xlu0 %1657, %v1548
  %v1659 = vpop.permute.xlu0 %1658
  %1662 = vset.pattern.permute.xlu0 96
  %1663 = vperm.xlu0 %1662, %v1549
  %v1664 = vpop.permute.xlu0 %1663
  %1667 = vset.pattern.permute.xlu0 96
  %1668 = vperm.xlu0 %1667, %v1550
  %v1669 = vpop.permute.xlu0 %1668
  %1672 = vset.pattern.permute.xlu0 96
  %1673 = vperm.xlu0 %1672, %v1551
  %v1674 = vpop.permute.xlu0 %1673
  %1677 = vset.pattern.permute.xlu0 96
  %1678 = vperm.xlu0 %1677, %v1552
  %v1679 = vpop.permute.xlu0 %1678
  %1682 = vset.pattern.permute.xlu0 96
  %1683 = vperm.xlu0 %1682, %v1553
  %v1684 = vpop.permute.xlu0 %1683
  %1687 = vset.pattern.permute.xlu0 96
  %1688 = vperm.xlu0 %1687, %v1554
  %v1689 = vpop.permute.xlu0 %1688
  %1692 = vset.pattern.permute.xlu0 96
  %1693 = vperm.xlu0 %1692, %v1555
  %v1694 = vpop.permute.xlu0 %1693
  %1697 = vset.pattern.permute.xlu0 96
  %1698 = vperm.xlu0 %1697, %v1556
  %v1699 = vpop.permute.xlu0 %1698
  %1702 = vset.pattern.permute.xlu0 96
  %1703 = vperm.xlu0 %1702, %v1557
  %v1704 = vpop.permute.xlu0 %1703
  %1707 = vset.pattern.permute.xlu0 96
  %1708 = vperm.xlu0 %1707, %v1558
  %v1709 = vpop.permute.xlu0 %1708
  %1712 = vset.pattern.permute.xlu0 96
  %1713 = vperm.xlu0 %1712, %v1559
  %v1714 = vpop.permute.xlu0 %1713
  %1717 = vset.pattern.permute.xlu0 96
  %1718 = vperm.xlu0 %1717, %v1560
  %v1719 = vpop.permute.xlu0 %1718
  %v1721 = vmul.f32 %v1564, %v18
  %v1722 = vmul.f32 %v1569, %v19
  %v1723 = vmul.f32 %v1574, %v20
  %v1724 = vmul.f32 %v1579, %v21
  %v1725 = vmul.f32 %v1584, %v22
  %v1726 = vmul.f32 %v1589, %v23
  %v1727 = vmul.f32 %v1594, %v24
  %v1728 = vmul.f32 %v1599, %v25
  %v1729 = vmul.f32 %v1604, %v26
  %v1730 = vmul.f32 %v1609, %v27
  %v1731 = vmul.f32 %v1614, %v28
  %v1732 = vmul.f32 %v1619, %v29
  %v1733 = vmul.f32 %v1624, %v30
  %v1734 = vmul.f32 %v1629, %v31
  %v1735 = vmul.f32 %v1634, %v32
  %v1736 = vmul.f32 %v1639, %v33
  %v1737 = vmul.f32 %v1644, %v34
  %v1738 = vmul.f32 %v1649, %v35
  %v1739 = vmul.f32 %v1654, %v36
  %v1740 = vmul.f32 %v1659, %v37
  %v1741 = vmul.f32 %v1664, %v38
  %v1742 = vmul.f32 %v1669, %v39
  %v1743 = vmul.f32 %v1674, %v40
  %v1744 = vmul.f32 %v1679, %v41
  %v1745 = vmul.f32 %v1684, %v42
  %v1746 = vmul.f32 %v1689, %v43
  %v1747 = vmul.f32 %v1694, %v44
  %v1748 = vmul.f32 %v1699, %v45
  %v1749 = vmul.f32 %v1704, %v46
  %v1750 = vmul.f32 %v1709, %v47
  %v1751 = vmul.f32 %v1714, %v48
  %v1752 = vmul.f32 %v1719, %v49
  %1754 = vset.pattern.permute.xlu0 96
  %1755 = vperm.xlu0 %1754, %v1497
  %v1756 = vpop.permute.xlu0 %1755
  %1759 = vset.pattern.permute.xlu0 96
  %1760 = vperm.xlu0 %1759, %v1498
  %v1761 = vpop.permute.xlu0 %1760
  %1764 = vset.pattern.permute.xlu0 96
  %1765 = vperm.xlu0 %1764, %v1499
  %v1766 = vpop.permute.xlu0 %1765
  %1769 = vset.pattern.permute.xlu0 96
  %1770 = vperm.xlu0 %1769, %v1500
  %v1771 = vpop.permute.xlu0 %1770
  %1774 = vset.pattern.permute.xlu0 96
  %1775 = vperm.xlu0 %1774, %v1501
  %v1776 = vpop.permute.xlu0 %1775
  %1779 = vset.pattern.permute.xlu0 96
  %1780 = vperm.xlu0 %1779, %v1502
  %v1781 = vpop.permute.xlu0 %1780
  %1784 = vset.pattern.permute.xlu0 96
  %1785 = vperm.xlu0 %1784, %v1503
  %v1786 = vpop.permute.xlu0 %1785
  %1789 = vset.pattern.permute.xlu0 96
  %1790 = vperm.xlu0 %1789, %v1504
  %v1791 = vpop.permute.xlu0 %1790
  %1794 = vset.pattern.permute.xlu0 96
  %1795 = vperm.xlu0 %1794, %v1505
  %v1796 = vpop.permute.xlu0 %1795
  %1799 = vset.pattern.permute.xlu0 96
  %1800 = vperm.xlu0 %1799, %v1506
  %v1801 = vpop.permute.xlu0 %1800
  %1804 = vset.pattern.permute.xlu0 96
  %1805 = vperm.xlu0 %1804, %v1507
  %v1806 = vpop.permute.xlu0 %1805
  %1809 = vset.pattern.permute.xlu0 96
  %1810 = vperm.xlu0 %1809, %v1508
  %v1811 = vpop.permute.xlu0 %1810
  %1814 = vset.pattern.permute.xlu0 96
  %1815 = vperm.xlu0 %1814, %v1509
  %v1816 = vpop.permute.xlu0 %1815
  %1819 = vset.pattern.permute.xlu0 96
  %1820 = vperm.xlu0 %1819, %v1510
  %v1821 = vpop.permute.xlu0 %1820
  %1824 = vset.pattern.permute.xlu0 96
  %1825 = vperm.xlu0 %1824, %v1511
  %v1826 = vpop.permute.xlu0 %1825
  %1829 = vset.pattern.permute.xlu0 96
  %1830 = vperm.xlu0 %1829, %v1512
  %v1831 = vpop.permute.xlu0 %1830
  %1834 = vset.pattern.permute.xlu0 96
  %1835 = vperm.xlu0 %1834, %v1513
  %v1836 = vpop.permute.xlu0 %1835
  %1839 = vset.pattern.permute.xlu0 96
  %1840 = vperm.xlu0 %1839, %v1514
  %v1841 = vpop.permute.xlu0 %1840
  %1844 = vset.pattern.permute.xlu0 96
  %1845 = vperm.xlu0 %1844, %v1515
  %v1846 = vpop.permute.xlu0 %1845
  %1849 = vset.pattern.permute.xlu0 96
  %1850 = vperm.xlu0 %1849, %v1516
  %v1851 = vpop.permute.xlu0 %1850
  %1854 = vset.pattern.permute.xlu0 96
  %1855 = vperm.xlu0 %1854, %v1517
  %v1856 = vpop.permute.xlu0 %1855
  %1859 = vset.pattern.permute.xlu0 96
  %1860 = vperm.xlu0 %1859, %v1518
  %v1861 = vpop.permute.xlu0 %1860
  %1864 = vset.pattern.permute.xlu0 96
  %1865 = vperm.xlu0 %1864, %v1519
  %v1866 = vpop.permute.xlu0 %1865
  %1869 = vset.pattern.permute.xlu0 96
  %1870 = vperm.xlu0 %1869, %v1520
  %v1871 = vpop.permute.xlu0 %1870
  %1874 = vset.pattern.permute.xlu0 96
  %1875 = vperm.xlu0 %1874, %v1521
  %v1876 = vpop.permute.xlu0 %1875
  %1879 = vset.pattern.permute.xlu0 96
  %1880 = vperm.xlu0 %1879, %v1522
  %v1881 = vpop.permute.xlu0 %1880
  %1884 = vset.pattern.permute.xlu0 96
  %1885 = vperm.xlu0 %1884, %v1523
  %v1886 = vpop.permute.xlu0 %1885
  %1889 = vset.pattern.permute.xlu0 96
  %1890 = vperm.xlu0 %1889, %v1524
  %v1891 = vpop.permute.xlu0 %1890
  %1894 = vset.pattern.permute.xlu0 96
  %1895 = vperm.xlu0 %1894, %v1525
  %v1896 = vpop.permute.xlu0 %1895
  %1899 = vset.pattern.permute.xlu0 96
  %1900 = vperm.xlu0 %1899, %v1526
  %v1901 = vpop.permute.xlu0 %1900
  %1904 = vset.pattern.permute.xlu0 96
  %1905 = vperm.xlu0 %1904, %v1527
  %v1906 = vpop.permute.xlu0 %1905
  %1909 = vset.pattern.permute.xlu0 96
  %1910 = vperm.xlu0 %1909, %v1528
  %v1911 = vpop.permute.xlu0 %1910
  %v1913 = vmul.f32 %v1756, %v18
  %v1914 = vmul.f32 %v1761, %v19
  %v1915 = vmul.f32 %v1766, %v20
  %v1916 = vmul.f32 %v1771, %v21
  %v1917 = vmul.f32 %v1776, %v22
  %v1918 = vmul.f32 %v1781, %v23
  %v1919 = vmul.f32 %v1786, %v24
  %v1920 = vmul.f32 %v1791, %v25
  %v1921 = vmul.f32 %v1796, %v26
  %v1922 = vmul.f32 %v1801, %v27
  %v1923 = vmul.f32 %v1806, %v28
  %v1924 = vmul.f32 %v1811, %v29
  %v1925 = vmul.f32 %v1816, %v30
  %v1926 = vmul.f32 %v1821, %v31
  %v1927 = vmul.f32 %v1826, %v32
  %v1928 = vmul.f32 %v1831, %v33
  %v1929 = vmul.f32 %v1836, %v34
  %v1930 = vmul.f32 %v1841, %v35
  %v1931 = vmul.f32 %v1846, %v36
  %v1932 = vmul.f32 %v1851, %v37
  %v1933 = vmul.f32 %v1856, %v38
  %v1934 = vmul.f32 %v1861, %v39
  %v1935 = vmul.f32 %v1866, %v40
  %v1936 = vmul.f32 %v1871, %v41
  %v1937 = vmul.f32 %v1876, %v42
  %v1938 = vmul.f32 %v1881, %v43
  %v1939 = vmul.f32 %v1886, %v44
  %v1940 = vmul.f32 %v1891, %v45
  %v1941 = vmul.f32 %v1896, %v46
  %v1942 = vmul.f32 %v1901, %v47
  %v1943 = vmul.f32 %v1906, %v48
  %v1944 = vmul.f32 %v1911, %v49
  %1977 = vrot.lane.b32.xlu0 %v1913, 64
  %v1978 = vpop.permute.xlu0 %1977
  %1979 = vrot.lane.b32.xlu0 %v1914, 64
  %v1980 = vpop.permute.xlu0 %1979
  %1981 = vrot.lane.b32.xlu0 %v1915, 64
  %v1982 = vpop.permute.xlu0 %1981
  %1983 = vrot.lane.b32.xlu0 %v1916, 64
  %v1984 = vpop.permute.xlu0 %1983
  %1985 = vrot.lane.b32.xlu0 %v1917, 64
  %v1986 = vpop.permute.xlu0 %1985
  %1987 = vrot.lane.b32.xlu0 %v1918, 64
  %v1988 = vpop.permute.xlu0 %1987
  %1989 = vrot.lane.b32.xlu0 %v1919, 64
  %v1990 = vpop.permute.xlu0 %1989
  %1991 = vrot.lane.b32.xlu0 %v1920, 64
  %v1992 = vpop.permute.xlu0 %1991
  %1993 = vrot.lane.b32.xlu0 %v1921, 64
  %v1994 = vpop.permute.xlu0 %1993
  %1995 = vrot.lane.b32.xlu0 %v1922, 64
  %v1996 = vpop.permute.xlu0 %1995
  %1997 = vrot.lane.b32.xlu0 %v1923, 64
  %v1998 = vpop.permute.xlu0 %1997
  %1999 = vrot.lane.b32.xlu0 %v1924, 64
  %v2000 = vpop.permute.xlu0 %1999
  %2001 = vrot.lane.b32.xlu0 %v1925, 64
  %v2002 = vpop.permute.xlu0 %2001
  %2003 = vrot.lane.b32.xlu0 %v1926, 64
  %v2004 = vpop.permute.xlu0 %2003
  %2005 = vrot.lane.b32.xlu0 %v1927, 64
  %v2006 = vpop.permute.xlu0 %2005
  %2007 = vrot.lane.b32.xlu0 %v1928, 64
  %v2008 = vpop.permute.xlu0 %2007
  %2009 = vrot.lane.b32.xlu0 %v1929, 64
  %v2010 = vpop.permute.xlu0 %2009
  %2011 = vrot.lane.b32.xlu0 %v1930, 64
  %v2012 = vpop.permute.xlu0 %2011
  %2013 = vrot.lane.b32.xlu0 %v1931, 64
  %v2014 = vpop.permute.xlu0 %2013
  %2015 = vrot.lane.b32.xlu0 %v1932, 64
  %v2016 = vpop.permute.xlu0 %2015
  %2017 = vrot.lane.b32.xlu0 %v1933, 64
  %v2018 = vpop.permute.xlu0 %2017
  %2019 = vrot.lane.b32.xlu0 %v1934, 64
  %v2020 = vpop.permute.xlu0 %2019
  %2021 = vrot.lane.b32.xlu0 %v1935, 64
  %v2022 = vpop.permute.xlu0 %2021
  %2023 = vrot.lane.b32.xlu0 %v1936, 64
  %v2024 = vpop.permute.xlu0 %2023
  %2025 = vrot.lane.b32.xlu0 %v1937, 64
  %v2026 = vpop.permute.xlu0 %2025
  %2027 = vrot.lane.b32.xlu0 %v1938, 64
  %v2028 = vpop.permute.xlu0 %2027
  %2029 = vrot.lane.b32.xlu0 %v1939, 64
  %v2030 = vpop.permute.xlu0 %2029
  %2031 = vrot.lane.b32.xlu0 %v1940, 64
  %v2032 = vpop.permute.xlu0 %2031
  %2033 = vrot.lane.b32.xlu0 %v1941, 64
  %v2034 = vpop.permute.xlu0 %2033
  %2035 = vrot.lane.b32.xlu0 %v1942, 64
  %v2036 = vpop.permute.xlu0 %2035
  %2037 = vrot.lane.b32.xlu0 %v1943, 64
  %v2038 = vpop.permute.xlu0 %2037
  %2039 = vrot.lane.b32.xlu0 %v1944, 64
  %v2040 = vpop.permute.xlu0 %2039
  %v2073 = vadd.f32 %v1721, %v1978
  %v2074 = vadd.f32 %v1722, %v1980
  %v2075 = vadd.f32 %v1723, %v1982
  %v2076 = vadd.f32 %v1724, %v1984
  %v2077 = vadd.f32 %v1725, %v1986
  %v2078 = vadd.f32 %v1726, %v1988
  %v2079 = vadd.f32 %v1727, %v1990
  %v2080 = vadd.f32 %v1728, %v1992
  %v2081 = vadd.f32 %v1729, %v1994
  %v2082 = vadd.f32 %v1730, %v1996
  %v2083 = vadd.f32 %v1731, %v1998
  %v2084 = vadd.f32 %v1732, %v2000
  %v2085 = vadd.f32 %v1733, %v2002
  %v2086 = vadd.f32 %v1734, %v2004
  %v2087 = vadd.f32 %v1735, %v2006
  %v2088 = vadd.f32 %v1736, %v2008
  %v2089 = vadd.f32 %v1737, %v2010
  %v2090 = vadd.f32 %v1738, %v2012
  %v2091 = vadd.f32 %v1739, %v2014
  %v2092 = vadd.f32 %v1740, %v2016
  %v2093 = vadd.f32 %v1741, %v2018
  %v2094 = vadd.f32 %v1742, %v2020
  %v2095 = vadd.f32 %v1743, %v2022
  %v2096 = vadd.f32 %v1744, %v2024
  %v2097 = vadd.f32 %v1745, %v2026
  %v2098 = vadd.f32 %v1746, %v2028
  %v2099 = vadd.f32 %v1747, %v2030
  %v2100 = vadd.f32 %v1748, %v2032
  %v2101 = vadd.f32 %v1749, %v2034
  %v2102 = vadd.f32 %v1750, %v2036
  %v2103 = vadd.f32 %v1751, %v2038
  %v2104 = vadd.f32 %v1752, %v2040
  %2106 = vset.pattern.permute.xlu0 96
  %2107 = vperm.xlu0 %2106, %v18
  %v2108 = vpop.permute.xlu0 %2107
  %2111 = vset.pattern.permute.xlu0 96
  %2112 = vperm.xlu0 %2111, %v19
  %v2113 = vpop.permute.xlu0 %2112
  %2116 = vset.pattern.permute.xlu0 96
  %2117 = vperm.xlu0 %2116, %v20
  %v2118 = vpop.permute.xlu0 %2117
  %2121 = vset.pattern.permute.xlu0 96
  %2122 = vperm.xlu0 %2121, %v21
  %v2123 = vpop.permute.xlu0 %2122
  %2126 = vset.pattern.permute.xlu0 96
  %2127 = vperm.xlu0 %2126, %v22
  %v2128 = vpop.permute.xlu0 %2127
  %2131 = vset.pattern.permute.xlu0 96
  %2132 = vperm.xlu0 %2131, %v23
  %v2133 = vpop.permute.xlu0 %2132
  %2136 = vset.pattern.permute.xlu0 96
  %2137 = vperm.xlu0 %2136, %v24
  %v2138 = vpop.permute.xlu0 %2137
  %2141 = vset.pattern.permute.xlu0 96
  %2142 = vperm.xlu0 %2141, %v25
  %v2143 = vpop.permute.xlu0 %2142
  %2146 = vset.pattern.permute.xlu0 96
  %2147 = vperm.xlu0 %2146, %v26
  %v2148 = vpop.permute.xlu0 %2147
  %2151 = vset.pattern.permute.xlu0 96
  %2152 = vperm.xlu0 %2151, %v27
  %v2153 = vpop.permute.xlu0 %2152
  %2156 = vset.pattern.permute.xlu0 96
  %2157 = vperm.xlu0 %2156, %v28
  %v2158 = vpop.permute.xlu0 %2157
  %2161 = vset.pattern.permute.xlu0 96
  %2162 = vperm.xlu0 %2161, %v29
  %v2163 = vpop.permute.xlu0 %2162
  %2166 = vset.pattern.permute.xlu0 96
  %2167 = vperm.xlu0 %2166, %v30
  %v2168 = vpop.permute.xlu0 %2167
  %2171 = vset.pattern.permute.xlu0 96
  %2172 = vperm.xlu0 %2171, %v31
  %v2173 = vpop.permute.xlu0 %2172
  %2176 = vset.pattern.permute.xlu0 96
  %2177 = vperm.xlu0 %2176, %v32
  %v2178 = vpop.permute.xlu0 %2177
  %2181 = vset.pattern.permute.xlu0 96
  %2182 = vperm.xlu0 %2181, %v33
  %v2183 = vpop.permute.xlu0 %2182
  %2186 = vset.pattern.permute.xlu0 96
  %2187 = vperm.xlu0 %2186, %v34
  %v2188 = vpop.permute.xlu0 %2187
  %2191 = vset.pattern.permute.xlu0 96
  %2192 = vperm.xlu0 %2191, %v35
  %v2193 = vpop.permute.xlu0 %2192
  %2196 = vset.pattern.permute.xlu0 96
  %2197 = vperm.xlu0 %2196, %v36
  %v2198 = vpop.permute.xlu0 %2197
  %2201 = vset.pattern.permute.xlu0 96
  %2202 = vperm.xlu0 %2201, %v37
  %v2203 = vpop.permute.xlu0 %2202
  %2206 = vset.pattern.permute.xlu0 96
  %2207 = vperm.xlu0 %2206, %v38
  %v2208 = vpop.permute.xlu0 %2207
  %2211 = vset.pattern.permute.xlu0 96
  %2212 = vperm.xlu0 %2211, %v39
  %v2213 = vpop.permute.xlu0 %2212
  %2216 = vset.pattern.permute.xlu0 96
  %2217 = vperm.xlu0 %2216, %v40
  %v2218 = vpop.permute.xlu0 %2217
  %2221 = vset.pattern.permute.xlu0 96
  %2222 = vperm.xlu0 %2221, %v41
  %v2223 = vpop.permute.xlu0 %2222
  %2226 = vset.pattern.permute.xlu0 96
  %2227 = vperm.xlu0 %2226, %v42
  %v2228 = vpop.permute.xlu0 %2227
  %2231 = vset.pattern.permute.xlu0 96
  %2232 = vperm.xlu0 %2231, %v43
  %v2233 = vpop.permute.xlu0 %2232
  %2236 = vset.pattern.permute.xlu0 96
  %2237 = vperm.xlu0 %2236, %v44
  %v2238 = vpop.permute.xlu0 %2237
  %2241 = vset.pattern.permute.xlu0 96
  %2242 = vperm.xlu0 %2241, %v45
  %v2243 = vpop.permute.xlu0 %2242
  %2246 = vset.pattern.permute.xlu0 96
  %2247 = vperm.xlu0 %2246, %v46
  %v2248 = vpop.permute.xlu0 %2247
  %2251 = vset.pattern.permute.xlu0 96
  %2252 = vperm.xlu0 %2251, %v47
  %v2253 = vpop.permute.xlu0 %2252
  %2256 = vset.pattern.permute.xlu0 96
  %2257 = vperm.xlu0 %2256, %v48
  %v2258 = vpop.permute.xlu0 %2257
  %2261 = vset.pattern.permute.xlu0 96
  %2262 = vperm.xlu0 %2261, %v49
  %v2263 = vpop.permute.xlu0 %2262
  %v2265 = vmul.f32 %v2108, %v157
  %v2266 = vmul.f32 %v2113, %v157
  %v2267 = vmul.f32 %v2118, %v157
  %v2268 = vmul.f32 %v2123, %v157
  %v2269 = vmul.f32 %v2128, %v157
  %v2270 = vmul.f32 %v2133, %v157
  %v2271 = vmul.f32 %v2138, %v157
  %v2272 = vmul.f32 %v2143, %v157
  %v2273 = vmul.f32 %v2148, %v157
  %v2274 = vmul.f32 %v2153, %v157
  %v2275 = vmul.f32 %v2158, %v157
  %v2276 = vmul.f32 %v2163, %v157
  %v2277 = vmul.f32 %v2168, %v157
  %v2278 = vmul.f32 %v2173, %v157
  %v2279 = vmul.f32 %v2178, %v157
  %v2280 = vmul.f32 %v2183, %v157
  %v2281 = vmul.f32 %v2188, %v157
  %v2282 = vmul.f32 %v2193, %v157
  %v2283 = vmul.f32 %v2198, %v157
  %v2284 = vmul.f32 %v2203, %v157
  %v2285 = vmul.f32 %v2208, %v157
  %v2286 = vmul.f32 %v2213, %v157
  %v2287 = vmul.f32 %v2218, %v157
  %v2288 = vmul.f32 %v2223, %v157
  %v2289 = vmul.f32 %v2228, %v157
  %v2290 = vmul.f32 %v2233, %v157
  %v2291 = vmul.f32 %v2238, %v157
  %v2292 = vmul.f32 %v2243, %v157
  %v2293 = vmul.f32 %v2248, %v157
  %v2294 = vmul.f32 %v2253, %v157
  %v2295 = vmul.f32 %v2258, %v157
  %v2296 = vmul.f32 %v2263, %v157
  %v2297 = vadd.f32 %v2265, %v158
  %v2298 = vadd.f32 %v2266, %v158
  %v2299 = vadd.f32 %v2267, %v158
  %v2300 = vadd.f32 %v2268, %v158
  %v2301 = vadd.f32 %v2269, %v158
  %v2302 = vadd.f32 %v2270, %v158
  %v2303 = vadd.f32 %v2271, %v158
  %v2304 = vadd.f32 %v2272, %v158
  %v2305 = vadd.f32 %v2273, %v158
  %v2306 = vadd.f32 %v2274, %v158
  %v2307 = vadd.f32 %v2275, %v158
  %v2308 = vadd.f32 %v2276, %v158
  %v2309 = vadd.f32 %v2277, %v158
  %v2310 = vadd.f32 %v2278, %v158
  %v2311 = vadd.f32 %v2279, %v158
  %v2312 = vadd.f32 %v2280, %v158
  %v2313 = vadd.f32 %v2281, %v158
  %v2314 = vadd.f32 %v2282, %v158
  %v2315 = vadd.f32 %v2283, %v158
  %v2316 = vadd.f32 %v2284, %v158
  %v2317 = vadd.f32 %v2285, %v158
  %v2318 = vadd.f32 %v2286, %v158
  %v2319 = vadd.f32 %v2287, %v158
  %v2320 = vadd.f32 %v2288, %v158
  %v2321 = vadd.f32 %v2289, %v158
  %v2322 = vadd.f32 %v2290, %v158
  %v2323 = vadd.f32 %v2291, %v158
  %v2324 = vadd.f32 %v2292, %v158
  %v2325 = vadd.f32 %v2293, %v158
  %v2326 = vadd.f32 %v2294, %v158
  %v2327 = vadd.f32 %v2295, %v158
  %v2328 = vadd.f32 %v2296, %v158
  %v2329 = vand.u32 2147483647, %v2297
  %vm2330 = vcmp.le.f32.partialorder %v2329, 0.7853982
  %vm2331 = vcmp.lt.s32.totalorder %v2297, 0
  %v2332 = vand.u32 %v2297, 2139095040
  %v2333 = vshrl.u32 %v2332, 23
  %v2334 = vsub.s32 %v2333, 127
  %v2335 = vand.u32 2147483647, %v2297
  %v2336 = vand.u32 %v2335, 8388607
  %v2337 = vor.u32 %v2336, 8388608
  %v2338 = vsub.s32 0, %v2337
  %v2339 = vadd.s32 %v2334, 1
  %vm2340 = vcmp.gt.s32.totalorder %v2339, 0
  %v2341 = vsel %vm2340, %v2339, 0
  %v2342 = vshrl.u32 %v2341, 5
  %v2343 = vand.u32 %v2341, 31
  %v2344 = vsub.s32 32, %v2343
  %v2345 = vshrl.u32 683565275, %v2344
  %v2346 = vshll.u32 683565275, %v2343
  %v2347 = vshrl.u32 2475754826, %v2344
  %v2348 = vor.u32 %v2346, %v2347
  %v2349 = vshll.u32 2475754826, %v2343
  %v2350 = vshrl.u32 2131351028, %v2344
  %v2351 = vor.u32 %v2349, %v2350
  %v2352 = vshll.u32 2131351028, %v2343
  %v2353 = vshrl.u32 2102212464, %v2344
  %v2354 = vor.u32 %v2352, %v2353
  %v2355 = vshll.u32 2102212464, %v2343
  %v2356 = vshrl.u32 920167782, %v2344
  %v2357 = vor.u32 %v2355, %v2356
  %v2358 = vshll.u32 920167782, %v2343
  %v2359 = vshrl.u32 1326507024, %v2344
  %v2360 = vor.u32 %v2358, %v2359
  %vm2361 = vcmp.lt.s32.totalorder %v2342, 1
  %vm2362 = vcmp.lt.s32.totalorder %v2342, 2
  %vm2363 = vcmp.lt.s32.totalorder %v2342, 3
  %vm2364 = vcmp.lt.s32.totalorder %v2342, 4
  %v2365 = vsel %vm2361, %v2345, %v2348
  %v2366 = vsel %vm2364, %v2354, 2102212464
  %v2367 = vsel %vm2363, %v2351, %v2366
  %v2368 = vsel %vm2362, %v2365, %v2367
  %v2369 = vsel %vm2361, %v2348, %v2351
  %v2370 = vsel %vm2364, %v2357, 920167782
  %v2371 = vsel %vm2363, %v2354, %v2370
  %v2372 = vsel %vm2362, %v2369, %v2371
  %v2373 = vsel %vm2361, %v2351, %v2354
  %v2374 = vsel %vm2364, %v2360, 1326507024
  %v2375 = vsel %vm2363, %v2357, %v2374
  %v2376 = vsel %vm2362, %v2373, %v2375
  %v2377 = vshll.u32 %v2337, 8
  %v2378 = vmul.u32.u64.compose %v2377, %v2376
  %v2379 = vextract.low.u32 %v2378
  %v2380 = vextract.high.u32 %v2378
  %v2381 = vmul.u32.u64.compose %v2377, %v2372
  %v2382 = vextract.low.u32 %v2381
  %v2383 = vextract.high.u32 %v2381
  %v2384 = vmul.u32 %v2377, %v2368
  %v2385 = vadd.s32 %v2380, %v2382
  %vm2386 = vc.u32 %v2380, %v2382
  %v2387 = vadd.s32 %v2383, 1
  %v2388 = vsel %vm2386, %v2387, %v2383
  %v2389 = vadd.s32 %v2384, %v2388
  %v2390 = vadd.s32 %v2389, 536870912
  %v2391 = vshrl.u32 %v2390, 30
  %v2392 = vshll.u32 %v2391, 30
  %v2393 = vsub.s32 %v2389, %v2392
  %vm2394 = vcmp.lt.s32.totalorder %v2393, 0
  %v2395 = vsub.s32 0, %v2393
  %v2396 = vsel %vm2394, %v2395, %v2393
  %v2397 = vclz %v2396
  %v2398 = vsub.s32 %v2397, 2
  %vm2399 = vcmp.gt.s32.totalorder 0, %v2398
  %v2400 = vsel %vm2399, 0, %v2398
  %v2401 = vsub.s32 32, %v2400
  %v2402 = vshll.u32 %v2393, %v2400
  %v2403 = vshrl.u32 %v2385, %v2401
  %v2404 = vor.u32 %v2402, %v2403
  %v2405 = vsub.s32 4294967266, %v2400
  %v2406 = vadd.s32 %v2405, 127
  %v2407 = vshll.u32 %v2406, 23
  %v2408 = vor.u32 4788187, %v2407
  %v2409 = vand.u32 2147483647, %v2408
  %v2411 = vcvt.s32.f32 %v2404
  %v2412 = vmul.f32 %v2411, %v2409
  %v2413 = vxor.u32 %v2412, 2147483648
  %v2414 = vsel %vm2331, %v2413, %v2412
  %v2415 = vsub.s32 4, %v2391
  %v2416 = vsel %vm2331, %v2415, %v2391
  %v2417 = vsel %vm2330, %v2297, %v2414
  %v2418 = vsel %vm2330, 0, %v2416
  %v2419 = vcosq.f32.pop %v2417
  %v2420 = vsinq.f32.pop %v2417
  %vm2421 = vweird.f32 %v2297
  %v2422 = vadd.s32 %v2418, 3
  %v2423 = vand.u32 %v2422, 3
  %vm2424 = vcmp.lt.s32.totalorder %v2423, 2
  %vm2425 = vcmp.eq.s32.totalorder %v2423, 0
  %v2426 = vxor.u32 %v2420, 2147483648
  %v2427 = vsel %vm2425, %v2419, %v2426
  %vm2428 = vcmp.eq.s32.totalorder %v2423, 2
  %v2429 = vxor.u32 %v2419, 2147483648
  %v2430 = vsel %vm2428, %v2429, %v2420
  %v2431 = vsel %vm2424, %v2427, %v2430
  %v2432 = vsel %vm2421, nan, %v2431
  %v2433 = vand.u32 2147483647, %v2298
  %vm2434 = vcmp.le.f32.partialorder %v2433, 0.7853982
  %vm2435 = vcmp.lt.s32.totalorder %v2298, 0
  %v2436 = vand.u32 %v2298, 2139095040
  %v2437 = vshrl.u32 %v2436, 23
  %v2438 = vsub.s32 %v2437, 127
  %v2439 = vand.u32 2147483647, %v2298
  %v2440 = vand.u32 %v2439, 8388607
  %v2441 = vor.u32 %v2440, 8388608
  %v2442 = vsub.s32 0, %v2441
  %v2443 = vadd.s32 %v2438, 1
  %vm2444 = vcmp.gt.s32.totalorder %v2443, 0
  %v2445 = vsel %vm2444, %v2443, 0
  %v2446 = vshrl.u32 %v2445, 5
  %v2447 = vand.u32 %v2445, 31
  %v2448 = vsub.s32 32, %v2447
  %v2449 = vshrl.u32 683565275, %v2448
  %v2450 = vshll.u32 683565275, %v2447
  %v2451 = vshrl.u32 2475754826, %v2448
  %v2452 = vor.u32 %v2450, %v2451
  %v2453 = vshll.u32 2475754826, %v2447
  %v2454 = vshrl.u32 2131351028, %v2448
  %v2455 = vor.u32 %v2453, %v2454
  %v2456 = vshll.u32 2131351028, %v2447
  %v2457 = vshrl.u32 2102212464, %v2448
  %v2458 = vor.u32 %v2456, %v2457
  %v2459 = vshll.u32 2102212464, %v2447
  %v2460 = vshrl.u32 920167782, %v2448
  %v2461 = vor.u32 %v2459, %v2460
  %v2462 = vshll.u32 920167782, %v2447
  %v2463 = vshrl.u32 1326507024, %v2448
  %v2464 = vor.u32 %v2462, %v2463
  %vm2465 = vcmp.lt.s32.totalorder %v2446, 1
  %vm2466 = vcmp.lt.s32.totalorder %v2446, 2
  %vm2467 = vcmp.lt.s32.totalorder %v2446, 3
  %vm2468 = vcmp.lt.s32.totalorder %v2446, 4
  %v2469 = vsel %vm2465, %v2449, %v2452
  %v2470 = vsel %vm2468, %v2458, 2102212464
  %v2471 = vsel %vm2467, %v2455, %v2470
  %v2472 = vsel %vm2466, %v2469, %v2471
  %v2473 = vsel %vm2465, %v2452, %v2455
  %v2474 = vsel %vm2468, %v2461, 920167782
  %v2475 = vsel %vm2467, %v2458, %v2474
  %v2476 = vsel %vm2466, %v2473, %v2475
  %v2477 = vsel %vm2465, %v2455, %v2458
  %v2478 = vsel %vm2468, %v2464, 1326507024
  %v2479 = vsel %vm2467, %v2461, %v2478
  %v2480 = vsel %vm2466, %v2477, %v2479
  %v2481 = vshll.u32 %v2441, 8
  %v2482 = vmul.u32.u64.compose %v2481, %v2480
  %v2483 = vextract.low.u32 %v2482
  %v2484 = vextract.high.u32 %v2482
  %v2485 = vmul.u32.u64.compose %v2481, %v2476
  %v2486 = vextract.low.u32 %v2485
  %v2487 = vextract.high.u32 %v2485
  %v2488 = vmul.u32 %v2481, %v2472
  %v2489 = vadd.s32 %v2484, %v2486
  %vm2490 = vc.u32 %v2484, %v2486
  %v2491 = vadd.s32 %v2487, 1
  %v2492 = vsel %vm2490, %v2491, %v2487
  %v2493 = vadd.s32 %v2488, %v2492
  %v2494 = vadd.s32 %v2493, 536870912
  %v2495 = vshrl.u32 %v2494, 30
  %v2496 = vshll.u32 %v2495, 30
  %v2497 = vsub.s32 %v2493, %v2496
  %vm2498 = vcmp.lt.s32.totalorder %v2497, 0
  %v2499 = vsub.s32 0, %v2497
  %v2500 = vsel %vm2498, %v2499, %v2497
  %v2501 = vclz %v2500
  %v2502 = vsub.s32 %v2501, 2
  %vm2503 = vcmp.gt.s32.totalorder 0, %v2502
  %v2504 = vsel %vm2503, 0, %v2502
  %v2505 = vsub.s32 32, %v2504
  %v2506 = vshll.u32 %v2497, %v2504
  %v2507 = vshrl.u32 %v2489, %v2505
  %v2508 = vor.u32 %v2506, %v2507
  %v2509 = vsub.s32 4294967266, %v2504
  %v2510 = vadd.s32 %v2509, 127
  %v2511 = vshll.u32 %v2510, 23
  %v2512 = vor.u32 4788187, %v2511
  %v2513 = vand.u32 2147483647, %v2512
  %v2515 = vcvt.s32.f32 %v2508
  %v2516 = vmul.f32 %v2515, %v2513
  %v2517 = vxor.u32 %v2516, 2147483648
  %v2518 = vsel %vm2435, %v2517, %v2516
  %v2519 = vsub.s32 4, %v2495
  %v2520 = vsel %vm2435, %v2519, %v2495
  %v2521 = vsel %vm2434, %v2298, %v2518
  %v2522 = vsel %vm2434, 0, %v2520
  %v2523 = vcosq.f32.pop %v2521
  %v2524 = vsinq.f32.pop %v2521
  %vm2525 = vweird.f32 %v2298
  %v2526 = vadd.s32 %v2522, 3
  %v2527 = vand.u32 %v2526, 3
  %vm2528 = vcmp.lt.s32.totalorder %v2527, 2
  %vm2529 = vcmp.eq.s32.totalorder %v2527, 0
  %v2530 = vxor.u32 %v2524, 2147483648
  %v2531 = vsel %vm2529, %v2523, %v2530
  %vm2532 = vcmp.eq.s32.totalorder %v2527, 2
  %v2533 = vxor.u32 %v2523, 2147483648
  %v2534 = vsel %vm2532, %v2533, %v2524
  %v2535 = vsel %vm2528, %v2531, %v2534
  %v2536 = vsel %vm2525, nan, %v2535
  %v2537 = vand.u32 2147483647, %v2299
  %vm2538 = vcmp.le.f32.partialorder %v2537, 0.7853982
  %vm2539 = vcmp.lt.s32.totalorder %v2299, 0
  %v2540 = vand.u32 %v2299, 2139095040
  %v2541 = vshrl.u32 %v2540, 23
  %v2542 = vsub.s32 %v2541, 127
  %v2543 = vand.u32 2147483647, %v2299
  %v2544 = vand.u32 %v2543, 8388607
  %v2545 = vor.u32 %v2544, 8388608
  %v2546 = vsub.s32 0, %v2545
  %v2547 = vadd.s32 %v2542, 1
  %vm2548 = vcmp.gt.s32.totalorder %v2547, 0
  %v2549 = vsel %vm2548, %v2547, 0
  %v2550 = vshrl.u32 %v2549, 5
  %v2551 = vand.u32 %v2549, 31
  %v2552 = vsub.s32 32, %v2551
  %v2553 = vshrl.u32 683565275, %v2552
  %v2554 = vshll.u32 683565275, %v2551
  %v2555 = vshrl.u32 2475754826, %v2552
  %v2556 = vor.u32 %v2554, %v2555
  %v2557 = vshll.u32 2475754826, %v2551
  %v2558 = vshrl.u32 2131351028, %v2552
  %v2559 = vor.u32 %v2557, %v2558
  %v2560 = vshll.u32 2131351028, %v2551
  %v2561 = vshrl.u32 2102212464, %v2552
  %v2562 = vor.u32 %v2560, %v2561
  %v2563 = vshll.u32 2102212464, %v2551
  %v2564 = vshrl.u32 920167782, %v2552
  %v2565 = vor.u32 %v2563, %v2564
  %v2566 = vshll.u32 920167782, %v2551
  %v2567 = vshrl.u32 1326507024, %v2552
  %v2568 = vor.u32 %v2566, %v2567
  %vm2569 = vcmp.lt.s32.totalorder %v2550, 1
  %vm2570 = vcmp.lt.s32.totalorder %v2550, 2
  %vm2571 = vcmp.lt.s32.totalorder %v2550, 3
  %vm2572 = vcmp.lt.s32.totalorder %v2550, 4
  %v2573 = vsel %vm2569, %v2553, %v2556
  %v2574 = vsel %vm2572, %v2562, 2102212464
  %v2575 = vsel %vm2571, %v2559, %v2574
  %v2576 = vsel %vm2570, %v2573, %v2575
  %v2577 = vsel %vm2569, %v2556, %v2559
  %v2578 = vsel %vm2572, %v2565, 920167782
  %v2579 = vsel %vm2571, %v2562, %v2578
  %v2580 = vsel %vm2570, %v2577, %v2579
  %v2581 = vsel %vm2569, %v2559, %v2562
  %v2582 = vsel %vm2572, %v2568, 1326507024
  %v2583 = vsel %vm2571, %v2565, %v2582
  %v2584 = vsel %vm2570, %v2581, %v2583
  %v2585 = vshll.u32 %v2545, 8
  %v2586 = vmul.u32.u64.compose %v2585, %v2584
  %v2587 = vextract.low.u32 %v2586
  %v2588 = vextract.high.u32 %v2586
  %v2589 = vmul.u32.u64.compose %v2585, %v2580
  %v2590 = vextract.low.u32 %v2589
  %v2591 = vextract.high.u32 %v2589
  %v2592 = vmul.u32 %v2585, %v2576
  %v2593 = vadd.s32 %v2588, %v2590
  %vm2594 = vc.u32 %v2588, %v2590
  %v2595 = vadd.s32 %v2591, 1
  %v2596 = vsel %vm2594, %v2595, %v2591
  %v2597 = vadd.s32 %v2592, %v2596
  %v2598 = vadd.s32 %v2597, 536870912
  %v2599 = vshrl.u32 %v2598, 30
  %v2600 = vshll.u32 %v2599, 30
  %v2601 = vsub.s32 %v2597, %v2600
  %vm2602 = vcmp.lt.s32.totalorder %v2601, 0
  %v2603 = vsub.s32 0, %v2601
  %v2604 = vsel %vm2602, %v2603, %v2601
  %v2605 = vclz %v2604
  %v2606 = vsub.s32 %v2605, 2
  %vm2607 = vcmp.gt.s32.totalorder 0, %v2606
  %v2608 = vsel %vm2607, 0, %v2606
  %v2609 = vsub.s32 32, %v2608
  %v2610 = vshll.u32 %v2601, %v2608
  %v2611 = vshrl.u32 %v2593, %v2609
  %v2612 = vor.u32 %v2610, %v2611
  %v2613 = vsub.s32 4294967266, %v2608
  %v2614 = vadd.s32 %v2613, 127
  %v2615 = vshll.u32 %v2614, 23
  %v2616 = vor.u32 4788187, %v2615
  %v2617 = vand.u32 2147483647, %v2616
  %v2619 = vcvt.s32.f32 %v2612
  %v2620 = vmul.f32 %v2619, %v2617
  %v2621 = vxor.u32 %v2620, 2147483648
  %v2622 = vsel %vm2539, %v2621, %v2620
  %v2623 = vsub.s32 4, %v2599
  %v2624 = vsel %vm2539, %v2623, %v2599
  %v2625 = vsel %vm2538, %v2299, %v2622
  %v2626 = vsel %vm2538, 0, %v2624
  %v2627 = vcosq.f32.pop %v2625
  %v2628 = vsinq.f32.pop %v2625
  %vm2629 = vweird.f32 %v2299
  %v2630 = vadd.s32 %v2626, 3
  %v2631 = vand.u32 %v2630, 3
  %vm2632 = vcmp.lt.s32.totalorder %v2631, 2
  %vm2633 = vcmp.eq.s32.totalorder %v2631, 0
  %v2634 = vxor.u32 %v2628, 2147483648
  %v2635 = vsel %vm2633, %v2627, %v2634
  %vm2636 = vcmp.eq.s32.totalorder %v2631, 2
  %v2637 = vxor.u32 %v2627, 2147483648
  %v2638 = vsel %vm2636, %v2637, %v2628
  %v2639 = vsel %vm2632, %v2635, %v2638
  %v2640 = vsel %vm2629, nan, %v2639
  %v2641 = vand.u32 2147483647, %v2300
  %vm2642 = vcmp.le.f32.partialorder %v2641, 0.7853982
  %vm2643 = vcmp.lt.s32.totalorder %v2300, 0
  %v2644 = vand.u32 %v2300, 2139095040
  %v2645 = vshrl.u32 %v2644, 23
  %v2646 = vsub.s32 %v2645, 127
  %v2647 = vand.u32 2147483647, %v2300
  %v2648 = vand.u32 %v2647, 8388607
  %v2649 = vor.u32 %v2648, 8388608
  %v2650 = vsub.s32 0, %v2649
  %v2651 = vadd.s32 %v2646, 1
  %vm2652 = vcmp.gt.s32.totalorder %v2651, 0
  %v2653 = vsel %vm2652, %v2651, 0
  %v2654 = vshrl.u32 %v2653, 5
  %v2655 = vand.u32 %v2653, 31
  %v2656 = vsub.s32 32, %v2655
  %v2657 = vshrl.u32 683565275, %v2656
  %v2658 = vshll.u32 683565275, %v2655
  %v2659 = vshrl.u32 2475754826, %v2656
  %v2660 = vor.u32 %v2658, %v2659
  %v2661 = vshll.u32 2475754826, %v2655
  %v2662 = vshrl.u32 2131351028, %v2656
  %v2663 = vor.u32 %v2661, %v2662
  %v2664 = vshll.u32 2131351028, %v2655
  %v2665 = vshrl.u32 2102212464, %v2656
  %v2666 = vor.u32 %v2664, %v2665
  %v2667 = vshll.u32 2102212464, %v2655
  %v2668 = vshrl.u32 920167782, %v2656
  %v2669 = vor.u32 %v2667, %v2668
  %v2670 = vshll.u32 920167782, %v2655
  %v2671 = vshrl.u32 1326507024, %v2656
  %v2672 = vor.u32 %v2670, %v2671
  %vm2673 = vcmp.lt.s32.totalorder %v2654, 1
  %vm2674 = vcmp.lt.s32.totalorder %v2654, 2
  %vm2675 = vcmp.lt.s32.totalorder %v2654, 3
  %vm2676 = vcmp.lt.s32.totalorder %v2654, 4
  %v2677 = vsel %vm2673, %v2657, %v2660
  %v2678 = vsel %vm2676, %v2666, 2102212464
  %v2679 = vsel %vm2675, %v2663, %v2678
  %v2680 = vsel %vm2674, %v2677, %v2679
  %v2681 = vsel %vm2673, %v2660, %v2663
  %v2682 = vsel %vm2676, %v2669, 920167782
  %v2683 = vsel %vm2675, %v2666, %v2682
  %v2684 = vsel %vm2674, %v2681, %v2683
  %v2685 = vsel %vm2673, %v2663, %v2666
  %v2686 = vsel %vm2676, %v2672, 1326507024
  %v2687 = vsel %vm2675, %v2669, %v2686
  %v2688 = vsel %vm2674, %v2685, %v2687
  %v2689 = vshll.u32 %v2649, 8
  %v2690 = vmul.u32.u64.compose %v2689, %v2688
  %v2691 = vextract.low.u32 %v2690
  %v2692 = vextract.high.u32 %v2690
  %v2693 = vmul.u32.u64.compose %v2689, %v2684
  %v2694 = vextract.low.u32 %v2693
  %v2695 = vextract.high.u32 %v2693
  %v2696 = vmul.u32 %v2689, %v2680
  %v2697 = vadd.s32 %v2692, %v2694
  %vm2698 = vc.u32 %v2692, %v2694
  %v2699 = vadd.s32 %v2695, 1
  %v2700 = vsel %vm2698, %v2699, %v2695
  %v2701 = vadd.s32 %v2696, %v2700
  %v2702 = vadd.s32 %v2701, 536870912
  %v2703 = vshrl.u32 %v2702, 30
  %v2704 = vshll.u32 %v2703, 30
  %v2705 = vsub.s32 %v2701, %v2704
  %vm2706 = vcmp.lt.s32.totalorder %v2705, 0
  %v2707 = vsub.s32 0, %v2705
  %v2708 = vsel %vm2706, %v2707, %v2705
  %v2709 = vclz %v2708
  %v2710 = vsub.s32 %v2709, 2
  %vm2711 = vcmp.gt.s32.totalorder 0, %v2710
  %v2712 = vsel %vm2711, 0, %v2710
  %v2713 = vsub.s32 32, %v2712
  %v2714 = vshll.u32 %v2705, %v2712
  %v2715 = vshrl.u32 %v2697, %v2713
  %v2716 = vor.u32 %v2714, %v2715
  %v2717 = vsub.s32 4294967266, %v2712
  %v2718 = vadd.s32 %v2717, 127
  %v2719 = vshll.u32 %v2718, 23
  %v2720 = vor.u32 4788187, %v2719
  %v2721 = vand.u32 2147483647, %v2720
  %v2723 = vcvt.s32.f32 %v2716
  %v2724 = vmul.f32 %v2723, %v2721
  %v2725 = vxor.u32 %v2724, 2147483648
  %v2726 = vsel %vm2643, %v2725, %v2724
  %v2727 = vsub.s32 4, %v2703
  %v2728 = vsel %vm2643, %v2727, %v2703
  %v2729 = vsel %vm2642, %v2300, %v2726
  %v2730 = vsel %vm2642, 0, %v2728
  %v2731 = vcosq.f32.pop %v2729
  %v2732 = vsinq.f32.pop %v2729
  %vm2733 = vweird.f32 %v2300
  %v2734 = vadd.s32 %v2730, 3
  %v2735 = vand.u32 %v2734, 3
  %vm2736 = vcmp.lt.s32.totalorder %v2735, 2
  %vm2737 = vcmp.eq.s32.totalorder %v2735, 0
  %v2738 = vxor.u32 %v2732, 2147483648
  %v2739 = vsel %vm2737, %v2731, %v2738
  %vm2740 = vcmp.eq.s32.totalorder %v2735, 2
  %v2741 = vxor.u32 %v2731, 2147483648
  %v2742 = vsel %vm2740, %v2741, %v2732
  %v2743 = vsel %vm2736, %v2739, %v2742
  %v2744 = vsel %vm2733, nan, %v2743
  %v2745 = vand.u32 2147483647, %v2301
  %vm2746 = vcmp.le.f32.partialorder %v2745, 0.7853982
  %vm2747 = vcmp.lt.s32.totalorder %v2301, 0
  %v2748 = vand.u32 %v2301, 2139095040
  %v2749 = vshrl.u32 %v2748, 23
  %v2750 = vsub.s32 %v2749, 127
  %v2751 = vand.u32 2147483647, %v2301
  %v2752 = vand.u32 %v2751, 8388607
  %v2753 = vor.u32 %v2752, 8388608
  %v2754 = vsub.s32 0, %v2753
  %v2755 = vadd.s32 %v2750, 1
  %vm2756 = vcmp.gt.s32.totalorder %v2755, 0
  %v2757 = vsel %vm2756, %v2755, 0
  %v2758 = vshrl.u32 %v2757, 5
  %v2759 = vand.u32 %v2757, 31
  %v2760 = vsub.s32 32, %v2759
  %v2761 = vshrl.u32 683565275, %v2760
  %v2762 = vshll.u32 683565275, %v2759
  %v2763 = vshrl.u32 2475754826, %v2760
  %v2764 = vor.u32 %v2762, %v2763
  %v2765 = vshll.u32 2475754826, %v2759
  %v2766 = vshrl.u32 2131351028, %v2760
  %v2767 = vor.u32 %v2765, %v2766
  %v2768 = vshll.u32 2131351028, %v2759
  %v2769 = vshrl.u32 2102212464, %v2760
  %v2770 = vor.u32 %v2768, %v2769
  %v2771 = vshll.u32 2102212464, %v2759
  %v2772 = vshrl.u32 920167782, %v2760
  %v2773 = vor.u32 %v2771, %v2772
  %v2774 = vshll.u32 920167782, %v2759
  %v2775 = vshrl.u32 1326507024, %v2760
  %v2776 = vor.u32 %v2774, %v2775
  %vm2777 = vcmp.lt.s32.totalorder %v2758, 1
  %vm2778 = vcmp.lt.s32.totalorder %v2758, 2
  %vm2779 = vcmp.lt.s32.totalorder %v2758, 3
  %vm2780 = vcmp.lt.s32.totalorder %v2758, 4
  %v2781 = vsel %vm2777, %v2761, %v2764
  %v2782 = vsel %vm2780, %v2770, 2102212464
  %v2783 = vsel %vm2779, %v2767, %v2782
  %v2784 = vsel %vm2778, %v2781, %v2783
  %v2785 = vsel %vm2777, %v2764, %v2767
  %v2786 = vsel %vm2780, %v2773, 920167782
  %v2787 = vsel %vm2779, %v2770, %v2786
  %v2788 = vsel %vm2778, %v2785, %v2787
  %v2789 = vsel %vm2777, %v2767, %v2770
  %v2790 = vsel %vm2780, %v2776, 1326507024
  %v2791 = vsel %vm2779, %v2773, %v2790
  %v2792 = vsel %vm2778, %v2789, %v2791
  %v2793 = vshll.u32 %v2753, 8
  %v2794 = vmul.u32.u64.compose %v2793, %v2792
  %v2795 = vextract.low.u32 %v2794
  %v2796 = vextract.high.u32 %v2794
  %v2797 = vmul.u32.u64.compose %v2793, %v2788
  %v2798 = vextract.low.u32 %v2797
  %v2799 = vextract.high.u32 %v2797
  %v2800 = vmul.u32 %v2793, %v2784
  %v2801 = vadd.s32 %v2796, %v2798
  %vm2802 = vc.u32 %v2796, %v2798
  %v2803 = vadd.s32 %v2799, 1
  %v2804 = vsel %vm2802, %v2803, %v2799
  %v2805 = vadd.s32 %v2800, %v2804
  %v2806 = vadd.s32 %v2805, 536870912
  %v2807 = vshrl.u32 %v2806, 30
  %v2808 = vshll.u32 %v2807, 30
  %v2809 = vsub.s32 %v2805, %v2808
  %vm2810 = vcmp.lt.s32.totalorder %v2809, 0
  %v2811 = vsub.s32 0, %v2809
  %v2812 = vsel %vm2810, %v2811, %v2809
  %v2813 = vclz %v2812
  %v2814 = vsub.s32 %v2813, 2
  %vm2815 = vcmp.gt.s32.totalorder 0, %v2814
  %v2816 = vsel %vm2815, 0, %v2814
  %v2817 = vsub.s32 32, %v2816
  %v2818 = vshll.u32 %v2809, %v2816
  %v2819 = vshrl.u32 %v2801, %v2817
  %v2820 = vor.u32 %v2818, %v2819
  %v2821 = vsub.s32 4294967266, %v2816
  %v2822 = vadd.s32 %v2821, 127
  %v2823 = vshll.u32 %v2822, 23
  %v2824 = vor.u32 4788187, %v2823
  %v2825 = vand.u32 2147483647, %v2824
  %v2827 = vcvt.s32.f32 %v2820
  %v2828 = vmul.f32 %v2827, %v2825
  %v2829 = vxor.u32 %v2828, 2147483648
  %v2830 = vsel %vm2747, %v2829, %v2828
  %v2831 = vsub.s32 4, %v2807
  %v2832 = vsel %vm2747, %v2831, %v2807
  %v2833 = vsel %vm2746, %v2301, %v2830
  %v2834 = vsel %vm2746, 0, %v2832
  %v2835 = vcosq.f32.pop %v2833
  %v2836 = vsinq.f32.pop %v2833
  %vm2837 = vweird.f32 %v2301
  %v2838 = vadd.s32 %v2834, 3
  %v2839 = vand.u32 %v2838, 3
  %vm2840 = vcmp.lt.s32.totalorder %v2839, 2
  %vm2841 = vcmp.eq.s32.totalorder %v2839, 0
  %v2842 = vxor.u32 %v2836, 2147483648
  %v2843 = vsel %vm2841, %v2835, %v2842
  %vm2844 = vcmp.eq.s32.totalorder %v2839, 2
  %v2845 = vxor.u32 %v2835, 2147483648
  %v2846 = vsel %vm2844, %v2845, %v2836
  %v2847 = vsel %vm2840, %v2843, %v2846
  %v2848 = vsel %vm2837, nan, %v2847
  %v2849 = vand.u32 2147483647, %v2302
  %vm2850 = vcmp.le.f32.partialorder %v2849, 0.7853982
  %vm2851 = vcmp.lt.s32.totalorder %v2302, 0
  %v2852 = vand.u32 %v2302, 2139095040
  %v2853 = vshrl.u32 %v2852, 23
  %v2854 = vsub.s32 %v2853, 127
  %v2855 = vand.u32 2147483647, %v2302
  %v2856 = vand.u32 %v2855, 8388607
  %v2857 = vor.u32 %v2856, 8388608
  %v2858 = vsub.s32 0, %v2857
  %v2859 = vadd.s32 %v2854, 1
  %vm2860 = vcmp.gt.s32.totalorder %v2859, 0
  %v2861 = vsel %vm2860, %v2859, 0
  %v2862 = vshrl.u32 %v2861, 5
  %v2863 = vand.u32 %v2861, 31
  %v2864 = vsub.s32 32, %v2863
  %v2865 = vshrl.u32 683565275, %v2864
  %v2866 = vshll.u32 683565275, %v2863
  %v2867 = vshrl.u32 2475754826, %v2864
  %v2868 = vor.u32 %v2866, %v2867
  %v2869 = vshll.u32 2475754826, %v2863
  %v2870 = vshrl.u32 2131351028, %v2864
  %v2871 = vor.u32 %v2869, %v2870
  %v2872 = vshll.u32 2131351028, %v2863
  %v2873 = vshrl.u32 2102212464, %v2864
  %v2874 = vor.u32 %v2872, %v2873
  %v2875 = vshll.u32 2102212464, %v2863
  %v2876 = vshrl.u32 920167782, %v2864
  %v2877 = vor.u32 %v2875, %v2876
  %v2878 = vshll.u32 920167782, %v2863
  %v2879 = vshrl.u32 1326507024, %v2864
  %v2880 = vor.u32 %v2878, %v2879
  %vm2881 = vcmp.lt.s32.totalorder %v2862, 1
  %vm2882 = vcmp.lt.s32.totalorder %v2862, 2
  %vm2883 = vcmp.lt.s32.totalorder %v2862, 3
  %vm2884 = vcmp.lt.s32.totalorder %v2862, 4
  %v2885 = vsel %vm2881, %v2865, %v2868
  %v2886 = vsel %vm2884, %v2874, 2102212464
  %v2887 = vsel %vm2883, %v2871, %v2886
  %v2888 = vsel %vm2882, %v2885, %v2887
  %v2889 = vsel %vm2881, %v2868, %v2871
  %v2890 = vsel %vm2884, %v2877, 920167782
  %v2891 = vsel %vm2883, %v2874, %v2890
  %v2892 = vsel %vm2882, %v2889, %v2891
  %v2893 = vsel %vm2881, %v2871, %v2874
  %v2894 = vsel %vm2884, %v2880, 1326507024
  %v2895 = vsel %vm2883, %v2877, %v2894
  %v2896 = vsel %vm2882, %v2893, %v2895
  %v2897 = vshll.u32 %v2857, 8
  %v2898 = vmul.u32.u64.compose %v2897, %v2896
  %v2899 = vextract.low.u32 %v2898
  %v2900 = vextract.high.u32 %v2898
  %v2901 = vmul.u32.u64.compose %v2897, %v2892
  %v2902 = vextract.low.u32 %v2901
  %v2903 = vextract.high.u32 %v2901
  %v2904 = vmul.u32 %v2897, %v2888
  %v2905 = vadd.s32 %v2900, %v2902
  %vm2906 = vc.u32 %v2900, %v2902
  %v2907 = vadd.s32 %v2903, 1
  %v2908 = vsel %vm2906, %v2907, %v2903
  %v2909 = vadd.s32 %v2904, %v2908
  %v2910 = vadd.s32 %v2909, 536870912
  %v2911 = vshrl.u32 %v2910, 30
  %v2912 = vshll.u32 %v2911, 30
  %v2913 = vsub.s32 %v2909, %v2912
  %vm2914 = vcmp.lt.s32.totalorder %v2913, 0
  %v2915 = vsub.s32 0, %v2913
  %v2916 = vsel %vm2914, %v2915, %v2913
  %v2917 = vclz %v2916
  %v2918 = vsub.s32 %v2917, 2
  %vm2919 = vcmp.gt.s32.totalorder 0, %v2918
  %v2920 = vsel %vm2919, 0, %v2918
  %v2921 = vsub.s32 32, %v2920
  %v2922 = vshll.u32 %v2913, %v2920
  %v2923 = vshrl.u32 %v2905, %v2921
  %v2924 = vor.u32 %v2922, %v2923
  %v2925 = vsub.s32 4294967266, %v2920
  %v2926 = vadd.s32 %v2925, 127
  %v2927 = vshll.u32 %v2926, 23
  %v2928 = vor.u32 4788187, %v2927
  %v2929 = vand.u32 2147483647, %v2928
  %v2931 = vcvt.s32.f32 %v2924
  %v2932 = vmul.f32 %v2931, %v2929
  %v2933 = vxor.u32 %v2932, 2147483648
  %v2934 = vsel %vm2851, %v2933, %v2932
  %v2935 = vsub.s32 4, %v2911
  %v2936 = vsel %vm2851, %v2935, %v2911
  %v2937 = vsel %vm2850, %v2302, %v2934
  %v2938 = vsel %vm2850, 0, %v2936
  %v2939 = vcosq.f32.pop %v2937
  %v2940 = vsinq.f32.pop %v2937
  %vm2941 = vweird.f32 %v2302
  %v2942 = vadd.s32 %v2938, 3
  %v2943 = vand.u32 %v2942, 3
  %vm2944 = vcmp.lt.s32.totalorder %v2943, 2
  %vm2945 = vcmp.eq.s32.totalorder %v2943, 0
  %v2946 = vxor.u32 %v2940, 2147483648
  %v2947 = vsel %vm2945, %v2939, %v2946
  %vm2948 = vcmp.eq.s32.totalorder %v2943, 2
  %v2949 = vxor.u32 %v2939, 2147483648
  %v2950 = vsel %vm2948, %v2949, %v2940
  %v2951 = vsel %vm2944, %v2947, %v2950
  %v2952 = vsel %vm2941, nan, %v2951
  %v2953 = vand.u32 2147483647, %v2303
  %vm2954 = vcmp.le.f32.partialorder %v2953, 0.7853982
  %vm2955 = vcmp.lt.s32.totalorder %v2303, 0
  %v2956 = vand.u32 %v2303, 2139095040
  %v2957 = vshrl.u32 %v2956, 23
  %v2958 = vsub.s32 %v2957, 127
  %v2959 = vand.u32 2147483647, %v2303
  %v2960 = vand.u32 %v2959, 8388607
  %v2961 = vor.u32 %v2960, 8388608
  %v2962 = vsub.s32 0, %v2961
  %v2963 = vadd.s32 %v2958, 1
  %vm2964 = vcmp.gt.s32.totalorder %v2963, 0
  %v2965 = vsel %vm2964, %v2963, 0
  %v2966 = vshrl.u32 %v2965, 5
  %v2967 = vand.u32 %v2965, 31
  %v2968 = vsub.s32 32, %v2967
  %v2969 = vshrl.u32 683565275, %v2968
  %v2970 = vshll.u32 683565275, %v2967
  %v2971 = vshrl.u32 2475754826, %v2968
  %v2972 = vor.u32 %v2970, %v2971
  %v2973 = vshll.u32 2475754826, %v2967
  %v2974 = vshrl.u32 2131351028, %v2968
  %v2975 = vor.u32 %v2973, %v2974
  %v2976 = vshll.u32 2131351028, %v2967
  %v2977 = vshrl.u32 2102212464, %v2968
  %v2978 = vor.u32 %v2976, %v2977
  %v2979 = vshll.u32 2102212464, %v2967
  %v2980 = vshrl.u32 920167782, %v2968
  %v2981 = vor.u32 %v2979, %v2980
  %v2982 = vshll.u32 920167782, %v2967
  %v2983 = vshrl.u32 1326507024, %v2968
  %v2984 = vor.u32 %v2982, %v2983
  %vm2985 = vcmp.lt.s32.totalorder %v2966, 1
  %vm2986 = vcmp.lt.s32.totalorder %v2966, 2
  %vm2987 = vcmp.lt.s32.totalorder %v2966, 3
  %vm2988 = vcmp.lt.s32.totalorder %v2966, 4
  %v2989 = vsel %vm2985, %v2969, %v2972
  %v2990 = vsel %vm2988, %v2978, 2102212464
  %v2991 = vsel %vm2987, %v2975, %v2990
  %v2992 = vsel %vm2986, %v2989, %v2991
  %v2993 = vsel %vm2985, %v2972, %v2975
  %v2994 = vsel %vm2988, %v2981, 920167782
  %v2995 = vsel %vm2987, %v2978, %v2994
  %v2996 = vsel %vm2986, %v2993, %v2995
  %v2997 = vsel %vm2985, %v2975, %v2978
  %v2998 = vsel %vm2988, %v2984, 1326507024
  %v2999 = vsel %vm2987, %v2981, %v2998
  %v3000 = vsel %vm2986, %v2997, %v2999
  %v3001 = vshll.u32 %v2961, 8
  %v3002 = vmul.u32.u64.compose %v3001, %v3000
  %v3003 = vextract.low.u32 %v3002
  %v3004 = vextract.high.u32 %v3002
  %v3005 = vmul.u32.u64.compose %v3001, %v2996
  %v3006 = vextract.low.u32 %v3005
  %v3007 = vextract.high.u32 %v3005
  %v3008 = vmul.u32 %v3001, %v2992
  %v3009 = vadd.s32 %v3004, %v3006
  %vm3010 = vc.u32 %v3004, %v3006
  %v3011 = vadd.s32 %v3007, 1
  %v3012 = vsel %vm3010, %v3011, %v3007
  %v3013 = vadd.s32 %v3008, %v3012
  %v3014 = vadd.s32 %v3013, 536870912
  %v3015 = vshrl.u32 %v3014, 30
  %v3016 = vshll.u32 %v3015, 30
  %v3017 = vsub.s32 %v3013, %v3016
  %vm3018 = vcmp.lt.s32.totalorder %v3017, 0
  %v3019 = vsub.s32 0, %v3017
  %v3020 = vsel %vm3018, %v3019, %v3017
  %v3021 = vclz %v3020
  %v3022 = vsub.s32 %v3021, 2
  %vm3023 = vcmp.gt.s32.totalorder 0, %v3022
  %v3024 = vsel %vm3023, 0, %v3022
  %v3025 = vsub.s32 32, %v3024
  %v3026 = vshll.u32 %v3017, %v3024
  %v3027 = vshrl.u32 %v3009, %v3025
  %v3028 = vor.u32 %v3026, %v3027
  %v3029 = vsub.s32 4294967266, %v3024
  %v3030 = vadd.s32 %v3029, 127
  %v3031 = vshll.u32 %v3030, 23
  %v3032 = vor.u32 4788187, %v3031
  %v3033 = vand.u32 2147483647, %v3032
  %v3035 = vcvt.s32.f32 %v3028
  %v3036 = vmul.f32 %v3035, %v3033
  %v3037 = vxor.u32 %v3036, 2147483648
  %v3038 = vsel %vm2955, %v3037, %v3036
  %v3039 = vsub.s32 4, %v3015
  %v3040 = vsel %vm2955, %v3039, %v3015
  %v3041 = vsel %vm2954, %v2303, %v3038
  %v3042 = vsel %vm2954, 0, %v3040
  %v3043 = vcosq.f32.pop %v3041
  %v3044 = vsinq.f32.pop %v3041
  %vm3045 = vweird.f32 %v2303
  %v3046 = vadd.s32 %v3042, 3
  %v3047 = vand.u32 %v3046, 3
  %vm3048 = vcmp.lt.s32.totalorder %v3047, 2
  %vm3049 = vcmp.eq.s32.totalorder %v3047, 0
  %v3050 = vxor.u32 %v3044, 2147483648
  %v3051 = vsel %vm3049, %v3043, %v3050
  %vm3052 = vcmp.eq.s32.totalorder %v3047, 2
  %v3053 = vxor.u32 %v3043, 2147483648
  %v3054 = vsel %vm3052, %v3053, %v3044
  %v3055 = vsel %vm3048, %v3051, %v3054
  %v3056 = vsel %vm3045, nan, %v3055
  %v3057 = vand.u32 2147483647, %v2304
  %vm3058 = vcmp.le.f32.partialorder %v3057, 0.7853982
  %vm3059 = vcmp.lt.s32.totalorder %v2304, 0
  %v3060 = vand.u32 %v2304, 2139095040
  %v3061 = vshrl.u32 %v3060, 23
  %v3062 = vsub.s32 %v3061, 127
  %v3063 = vand.u32 2147483647, %v2304
  %v3064 = vand.u32 %v3063, 8388607
  %v3065 = vor.u32 %v3064, 8388608
  %v3066 = vsub.s32 0, %v3065
  %v3067 = vadd.s32 %v3062, 1
  %vm3068 = vcmp.gt.s32.totalorder %v3067, 0
  %v3069 = vsel %vm3068, %v3067, 0
  %v3070 = vshrl.u32 %v3069, 5
  %v3071 = vand.u32 %v3069, 31
  %v3072 = vsub.s32 32, %v3071
  %v3073 = vshrl.u32 683565275, %v3072
  %v3074 = vshll.u32 683565275, %v3071
  %v3075 = vshrl.u32 2475754826, %v3072
  %v3076 = vor.u32 %v3074, %v3075
  %v3077 = vshll.u32 2475754826, %v3071
  %v3078 = vshrl.u32 2131351028, %v3072
  %v3079 = vor.u32 %v3077, %v3078
  %v3080 = vshll.u32 2131351028, %v3071
  %v3081 = vshrl.u32 2102212464, %v3072
  %v3082 = vor.u32 %v3080, %v3081
  %v3083 = vshll.u32 2102212464, %v3071
  %v3084 = vshrl.u32 920167782, %v3072
  %v3085 = vor.u32 %v3083, %v3084
  %v3086 = vshll.u32 920167782, %v3071
  %v3087 = vshrl.u32 1326507024, %v3072
  %v3088 = vor.u32 %v3086, %v3087
  %vm3089 = vcmp.lt.s32.totalorder %v3070, 1
  %vm3090 = vcmp.lt.s32.totalorder %v3070, 2
  %vm3091 = vcmp.lt.s32.totalorder %v3070, 3
  %vm3092 = vcmp.lt.s32.totalorder %v3070, 4
  %v3093 = vsel %vm3089, %v3073, %v3076
  %v3094 = vsel %vm3092, %v3082, 2102212464
  %v3095 = vsel %vm3091, %v3079, %v3094
  %v3096 = vsel %vm3090, %v3093, %v3095
  %v3097 = vsel %vm3089, %v3076, %v3079
  %v3098 = vsel %vm3092, %v3085, 920167782
  %v3099 = vsel %vm3091, %v3082, %v3098
  %v3100 = vsel %vm3090, %v3097, %v3099
  %v3101 = vsel %vm3089, %v3079, %v3082
  %v3102 = vsel %vm3092, %v3088, 1326507024
  %v3103 = vsel %vm3091, %v3085, %v3102
  %v3104 = vsel %vm3090, %v3101, %v3103
  %v3105 = vshll.u32 %v3065, 8
  %v3106 = vmul.u32.u64.compose %v3105, %v3104
  %v3107 = vextract.low.u32 %v3106
  %v3108 = vextract.high.u32 %v3106
  %v3109 = vmul.u32.u64.compose %v3105, %v3100
  %v3110 = vextract.low.u32 %v3109
  %v3111 = vextract.high.u32 %v3109
  %v3112 = vmul.u32 %v3105, %v3096
  %v3113 = vadd.s32 %v3108, %v3110
  %vm3114 = vc.u32 %v3108, %v3110
  %v3115 = vadd.s32 %v3111, 1
  %v3116 = vsel %vm3114, %v3115, %v3111
  %v3117 = vadd.s32 %v3112, %v3116
  %v3118 = vadd.s32 %v3117, 536870912
  %v3119 = vshrl.u32 %v3118, 30
  %v3120 = vshll.u32 %v3119, 30
  %v3121 = vsub.s32 %v3117, %v3120
  %vm3122 = vcmp.lt.s32.totalorder %v3121, 0
  %v3123 = vsub.s32 0, %v3121
  %v3124 = vsel %vm3122, %v3123, %v3121
  %v3125 = vclz %v3124
  %v3126 = vsub.s32 %v3125, 2
  %vm3127 = vcmp.gt.s32.totalorder 0, %v3126
  %v3128 = vsel %vm3127, 0, %v3126
  %v3129 = vsub.s32 32, %v3128
  %v3130 = vshll.u32 %v3121, %v3128
  %v3131 = vshrl.u32 %v3113, %v3129
  %v3132 = vor.u32 %v3130, %v3131
  %v3133 = vsub.s32 4294967266, %v3128
  %v3134 = vadd.s32 %v3133, 127
  %v3135 = vshll.u32 %v3134, 23
  %v3136 = vor.u32 4788187, %v3135
  %v3137 = vand.u32 2147483647, %v3136
  %v3139 = vcvt.s32.f32 %v3132
  %v3140 = vmul.f32 %v3139, %v3137
  %v3141 = vxor.u32 %v3140, 2147483648
  %v3142 = vsel %vm3059, %v3141, %v3140
  %v3143 = vsub.s32 4, %v3119
  %v3144 = vsel %vm3059, %v3143, %v3119
  %v3145 = vsel %vm3058, %v2304, %v3142
  %v3146 = vsel %vm3058, 0, %v3144
  %v3147 = vcosq.f32.pop %v3145
  %v3148 = vsinq.f32.pop %v3145
  %vm3149 = vweird.f32 %v2304
  %v3150 = vadd.s32 %v3146, 3
  %v3151 = vand.u32 %v3150, 3
  %vm3152 = vcmp.lt.s32.totalorder %v3151, 2
  %vm3153 = vcmp.eq.s32.totalorder %v3151, 0
  %v3154 = vxor.u32 %v3148, 2147483648
  %v3155 = vsel %vm3153, %v3147, %v3154
  %vm3156 = vcmp.eq.s32.totalorder %v3151, 2
  %v3157 = vxor.u32 %v3147, 2147483648
  %v3158 = vsel %vm3156, %v3157, %v3148
  %v3159 = vsel %vm3152, %v3155, %v3158
  %v3160 = vsel %vm3149, nan, %v3159
  %v3161 = vand.u32 2147483647, %v2305
  %vm3162 = vcmp.le.f32.partialorder %v3161, 0.7853982
  %vm3163 = vcmp.lt.s32.totalorder %v2305, 0
  %v3164 = vand.u32 %v2305, 2139095040
  %v3165 = vshrl.u32 %v3164, 23
  %v3166 = vsub.s32 %v3165, 127
  %v3167 = vand.u32 2147483647, %v2305
  %v3168 = vand.u32 %v3167, 8388607
  %v3169 = vor.u32 %v3168, 8388608
  %v3170 = vsub.s32 0, %v3169
  %v3171 = vadd.s32 %v3166, 1
  %vm3172 = vcmp.gt.s32.totalorder %v3171, 0
  %v3173 = vsel %vm3172, %v3171, 0
  %v3174 = vshrl.u32 %v3173, 5
  %v3175 = vand.u32 %v3173, 31
  %v3176 = vsub.s32 32, %v3175
  %v3177 = vshrl.u32 683565275, %v3176
  %v3178 = vshll.u32 683565275, %v3175
  %v3179 = vshrl.u32 2475754826, %v3176
  %v3180 = vor.u32 %v3178, %v3179
  %v3181 = vshll.u32 2475754826, %v3175
  %v3182 = vshrl.u32 2131351028, %v3176
  %v3183 = vor.u32 %v3181, %v3182
  %v3184 = vshll.u32 2131351028, %v3175
  %v3185 = vshrl.u32 2102212464, %v3176
  %v3186 = vor.u32 %v3184, %v3185
  %v3187 = vshll.u32 2102212464, %v3175
  %v3188 = vshrl.u32 920167782, %v3176
  %v3189 = vor.u32 %v3187, %v3188
  %v3190 = vshll.u32 920167782, %v3175
  %v3191 = vshrl.u32 1326507024, %v3176
  %v3192 = vor.u32 %v3190, %v3191
  %vm3193 = vcmp.lt.s32.totalorder %v3174, 1
  %vm3194 = vcmp.lt.s32.totalorder %v3174, 2
  %vm3195 = vcmp.lt.s32.totalorder %v3174, 3
  %vm3196 = vcmp.lt.s32.totalorder %v3174, 4
  %v3197 = vsel %vm3193, %v3177, %v3180
  %v3198 = vsel %vm3196, %v3186, 2102212464
  %v3199 = vsel %vm3195, %v3183, %v3198
  %v3200 = vsel %vm3194, %v3197, %v3199
  %v3201 = vsel %vm3193, %v3180, %v3183
  %v3202 = vsel %vm3196, %v3189, 920167782
  %v3203 = vsel %vm3195, %v3186, %v3202
  %v3204 = vsel %vm3194, %v3201, %v3203
  %v3205 = vsel %vm3193, %v3183, %v3186
  %v3206 = vsel %vm3196, %v3192, 1326507024
  %v3207 = vsel %vm3195, %v3189, %v3206
  %v3208 = vsel %vm3194, %v3205, %v3207
  %v3209 = vshll.u32 %v3169, 8
  %v3210 = vmul.u32.u64.compose %v3209, %v3208
  %v3211 = vextract.low.u32 %v3210
  %v3212 = vextract.high.u32 %v3210
  %v3213 = vmul.u32.u64.compose %v3209, %v3204
  %v3214 = vextract.low.u32 %v3213
  %v3215 = vextract.high.u32 %v3213
  %v3216 = vmul.u32 %v3209, %v3200
  %v3217 = vadd.s32 %v3212, %v3214
  %vm3218 = vc.u32 %v3212, %v3214
  %v3219 = vadd.s32 %v3215, 1
  %v3220 = vsel %vm3218, %v3219, %v3215
  %v3221 = vadd.s32 %v3216, %v3220
  %v3222 = vadd.s32 %v3221, 536870912
  %v3223 = vshrl.u32 %v3222, 30
  %v3224 = vshll.u32 %v3223, 30
  %v3225 = vsub.s32 %v3221, %v3224
  %vm3226 = vcmp.lt.s32.totalorder %v3225, 0
  %v3227 = vsub.s32 0, %v3225
  %v3228 = vsel %vm3226, %v3227, %v3225
  %v3229 = vclz %v3228
  %v3230 = vsub.s32 %v3229, 2
  %vm3231 = vcmp.gt.s32.totalorder 0, %v3230
  %v3232 = vsel %vm3231, 0, %v3230
  %v3233 = vsub.s32 32, %v3232
  %v3234 = vshll.u32 %v3225, %v3232
  %v3235 = vshrl.u32 %v3217, %v3233
  %v3236 = vor.u32 %v3234, %v3235
  %v3237 = vsub.s32 4294967266, %v3232
  %v3238 = vadd.s32 %v3237, 127
  %v3239 = vshll.u32 %v3238, 23
  %v3240 = vor.u32 4788187, %v3239
  %v3241 = vand.u32 2147483647, %v3240
  %v3243 = vcvt.s32.f32 %v3236
  %v3244 = vmul.f32 %v3243, %v3241
  %v3245 = vxor.u32 %v3244, 2147483648
  %v3246 = vsel %vm3163, %v3245, %v3244
  %v3247 = vsub.s32 4, %v3223
  %v3248 = vsel %vm3163, %v3247, %v3223
  %v3249 = vsel %vm3162, %v2305, %v3246
  %v3250 = vsel %vm3162, 0, %v3248
  %v3251 = vcosq.f32.pop %v3249
  %v3252 = vsinq.f32.pop %v3249
  %vm3253 = vweird.f32 %v2305
  %v3254 = vadd.s32 %v3250, 3
  %v3255 = vand.u32 %v3254, 3
  %vm3256 = vcmp.lt.s32.totalorder %v3255, 2
  %vm3257 = vcmp.eq.s32.totalorder %v3255, 0
  %v3258 = vxor.u32 %v3252, 2147483648
  %v3259 = vsel %vm3257, %v3251, %v3258
  %vm3260 = vcmp.eq.s32.totalorder %v3255, 2
  %v3261 = vxor.u32 %v3251, 2147483648
  %v3262 = vsel %vm3260, %v3261, %v3252
  %v3263 = vsel %vm3256, %v3259, %v3262
  %v3264 = vsel %vm3253, nan, %v3263
  %v3265 = vand.u32 2147483647, %v2306
  %vm3266 = vcmp.le.f32.partialorder %v3265, 0.7853982
  %vm3267 = vcmp.lt.s32.totalorder %v2306, 0
  %v3268 = vand.u32 %v2306, 2139095040
  %v3269 = vshrl.u32 %v3268, 23
  %v3270 = vsub.s32 %v3269, 127
  %v3271 = vand.u32 2147483647, %v2306
  %v3272 = vand.u32 %v3271, 8388607
  %v3273 = vor.u32 %v3272, 8388608
  %v3274 = vsub.s32 0, %v3273
  %v3275 = vadd.s32 %v3270, 1
  %vm3276 = vcmp.gt.s32.totalorder %v3275, 0
  %v3277 = vsel %vm3276, %v3275, 0
  %v3278 = vshrl.u32 %v3277, 5
  %v3279 = vand.u32 %v3277, 31
  %v3280 = vsub.s32 32, %v3279
  %v3281 = vshrl.u32 683565275, %v3280
  %v3282 = vshll.u32 683565275, %v3279
  %v3283 = vshrl.u32 2475754826, %v3280
  %v3284 = vor.u32 %v3282, %v3283
  %v3285 = vshll.u32 2475754826, %v3279
  %v3286 = vshrl.u32 2131351028, %v3280
  %v3287 = vor.u32 %v3285, %v3286
  %v3288 = vshll.u32 2131351028, %v3279
  %v3289 = vshrl.u32 2102212464, %v3280
  %v3290 = vor.u32 %v3288, %v3289
  %v3291 = vshll.u32 2102212464, %v3279
  %v3292 = vshrl.u32 920167782, %v3280
  %v3293 = vor.u32 %v3291, %v3292
  %v3294 = vshll.u32 920167782, %v3279
  %v3295 = vshrl.u32 1326507024, %v3280
  %v3296 = vor.u32 %v3294, %v3295
  %vm3297 = vcmp.lt.s32.totalorder %v3278, 1
  %vm3298 = vcmp.lt.s32.totalorder %v3278, 2
  %vm3299 = vcmp.lt.s32.totalorder %v3278, 3
  %vm3300 = vcmp.lt.s32.totalorder %v3278, 4
  %v3301 = vsel %vm3297, %v3281, %v3284
  %v3302 = vsel %vm3300, %v3290, 2102212464
  %v3303 = vsel %vm3299, %v3287, %v3302
  %v3304 = vsel %vm3298, %v3301, %v3303
  %v3305 = vsel %vm3297, %v3284, %v3287
  %v3306 = vsel %vm3300, %v3293, 920167782
  %v3307 = vsel %vm3299, %v3290, %v3306
  %v3308 = vsel %vm3298, %v3305, %v3307
  %v3309 = vsel %vm3297, %v3287, %v3290
  %v3310 = vsel %vm3300, %v3296, 1326507024
  %v3311 = vsel %vm3299, %v3293, %v3310
  %v3312 = vsel %vm3298, %v3309, %v3311
  %v3313 = vshll.u32 %v3273, 8
  %v3314 = vmul.u32.u64.compose %v3313, %v3312
  %v3315 = vextract.low.u32 %v3314
  %v3316 = vextract.high.u32 %v3314
  %v3317 = vmul.u32.u64.compose %v3313, %v3308
  %v3318 = vextract.low.u32 %v3317
  %v3319 = vextract.high.u32 %v3317
  %v3320 = vmul.u32 %v3313, %v3304
  %v3321 = vadd.s32 %v3316, %v3318
  %vm3322 = vc.u32 %v3316, %v3318
  %v3323 = vadd.s32 %v3319, 1
  %v3324 = vsel %vm3322, %v3323, %v3319
  %v3325 = vadd.s32 %v3320, %v3324
  %v3326 = vadd.s32 %v3325, 536870912
  %v3327 = vshrl.u32 %v3326, 30
  %v3328 = vshll.u32 %v3327, 30
  %v3329 = vsub.s32 %v3325, %v3328
  %vm3330 = vcmp.lt.s32.totalorder %v3329, 0
  %v3331 = vsub.s32 0, %v3329
  %v3332 = vsel %vm3330, %v3331, %v3329
  %v3333 = vclz %v3332
  %v3334 = vsub.s32 %v3333, 2
  %vm3335 = vcmp.gt.s32.totalorder 0, %v3334
  %v3336 = vsel %vm3335, 0, %v3334
  %v3337 = vsub.s32 32, %v3336
  %v3338 = vshll.u32 %v3329, %v3336
  %v3339 = vshrl.u32 %v3321, %v3337
  %v3340 = vor.u32 %v3338, %v3339
  %v3341 = vsub.s32 4294967266, %v3336
  %v3342 = vadd.s32 %v3341, 127
  %v3343 = vshll.u32 %v3342, 23
  %v3344 = vor.u32 4788187, %v3343
  %v3345 = vand.u32 2147483647, %v3344
  %v3347 = vcvt.s32.f32 %v3340
  %v3348 = vmul.f32 %v3347, %v3345
  %v3349 = vxor.u32 %v3348, 2147483648
  %v3350 = vsel %vm3267, %v3349, %v3348
  %v3351 = vsub.s32 4, %v3327
  %v3352 = vsel %vm3267, %v3351, %v3327
  %v3353 = vsel %vm3266, %v2306, %v3350
  %v3354 = vsel %vm3266, 0, %v3352
  %v3355 = vcosq.f32.pop %v3353
  %v3356 = vsinq.f32.pop %v3353
  %vm3357 = vweird.f32 %v2306
  %v3358 = vadd.s32 %v3354, 3
  %v3359 = vand.u32 %v3358, 3
  %vm3360 = vcmp.lt.s32.totalorder %v3359, 2
  %vm3361 = vcmp.eq.s32.totalorder %v3359, 0
  %v3362 = vxor.u32 %v3356, 2147483648
  %v3363 = vsel %vm3361, %v3355, %v3362
  %vm3364 = vcmp.eq.s32.totalorder %v3359, 2
  %v3365 = vxor.u32 %v3355, 2147483648
  %v3366 = vsel %vm3364, %v3365, %v3356
  %v3367 = vsel %vm3360, %v3363, %v3366
  %v3368 = vsel %vm3357, nan, %v3367
  %v3369 = vand.u32 2147483647, %v2307
  %vm3370 = vcmp.le.f32.partialorder %v3369, 0.7853982
  %vm3371 = vcmp.lt.s32.totalorder %v2307, 0
  %v3372 = vand.u32 %v2307, 2139095040
  %v3373 = vshrl.u32 %v3372, 23
  %v3374 = vsub.s32 %v3373, 127
  %v3375 = vand.u32 2147483647, %v2307
  %v3376 = vand.u32 %v3375, 8388607
  %v3377 = vor.u32 %v3376, 8388608
  %v3378 = vsub.s32 0, %v3377
  %v3379 = vadd.s32 %v3374, 1
  %vm3380 = vcmp.gt.s32.totalorder %v3379, 0
  %v3381 = vsel %vm3380, %v3379, 0
  %v3382 = vshrl.u32 %v3381, 5
  %v3383 = vand.u32 %v3381, 31
  %v3384 = vsub.s32 32, %v3383
  %v3385 = vshrl.u32 683565275, %v3384
  %v3386 = vshll.u32 683565275, %v3383
  %v3387 = vshrl.u32 2475754826, %v3384
  %v3388 = vor.u32 %v3386, %v3387
  %v3389 = vshll.u32 2475754826, %v3383
  %v3390 = vshrl.u32 2131351028, %v3384
  %v3391 = vor.u32 %v3389, %v3390
  %v3392 = vshll.u32 2131351028, %v3383
  %v3393 = vshrl.u32 2102212464, %v3384
  %v3394 = vor.u32 %v3392, %v3393
  %v3395 = vshll.u32 2102212464, %v3383
  %v3396 = vshrl.u32 920167782, %v3384
  %v3397 = vor.u32 %v3395, %v3396
  %v3398 = vshll.u32 920167782, %v3383
  %v3399 = vshrl.u32 1326507024, %v3384
  %v3400 = vor.u32 %v3398, %v3399
  %vm3401 = vcmp.lt.s32.totalorder %v3382, 1
  %vm3402 = vcmp.lt.s32.totalorder %v3382, 2
  %vm3403 = vcmp.lt.s32.totalorder %v3382, 3
  %vm3404 = vcmp.lt.s32.totalorder %v3382, 4
  %v3405 = vsel %vm3401, %v3385, %v3388
  %v3406 = vsel %vm3404, %v3394, 2102212464
  %v3407 = vsel %vm3403, %v3391, %v3406
  %v3408 = vsel %vm3402, %v3405, %v3407
  %v3409 = vsel %vm3401, %v3388, %v3391
  %v3410 = vsel %vm3404, %v3397, 920167782
  %v3411 = vsel %vm3403, %v3394, %v3410
  %v3412 = vsel %vm3402, %v3409, %v3411
  %v3413 = vsel %vm3401, %v3391, %v3394
  %v3414 = vsel %vm3404, %v3400, 1326507024
  %v3415 = vsel %vm3403, %v3397, %v3414
  %v3416 = vsel %vm3402, %v3413, %v3415
  %v3417 = vshll.u32 %v3377, 8
  %v3418 = vmul.u32.u64.compose %v3417, %v3416
  %v3419 = vextract.low.u32 %v3418
  %v3420 = vextract.high.u32 %v3418
  %v3421 = vmul.u32.u64.compose %v3417, %v3412
  %v3422 = vextract.low.u32 %v3421
  %v3423 = vextract.high.u32 %v3421
  %v3424 = vmul.u32 %v3417, %v3408
  %v3425 = vadd.s32 %v3420, %v3422
  %vm3426 = vc.u32 %v3420, %v3422
  %v3427 = vadd.s32 %v3423, 1
  %v3428 = vsel %vm3426, %v3427, %v3423
  %v3429 = vadd.s32 %v3424, %v3428
  %v3430 = vadd.s32 %v3429, 536870912
  %v3431 = vshrl.u32 %v3430, 30
  %v3432 = vshll.u32 %v3431, 30
  %v3433 = vsub.s32 %v3429, %v3432
  %vm3434 = vcmp.lt.s32.totalorder %v3433, 0
  %v3435 = vsub.s32 0, %v3433
  %v3436 = vsel %vm3434, %v3435, %v3433
  %v3437 = vclz %v3436
  %v3438 = vsub.s32 %v3437, 2
  %vm3439 = vcmp.gt.s32.totalorder 0, %v3438
  %v3440 = vsel %vm3439, 0, %v3438
  %v3441 = vsub.s32 32, %v3440
  %v3442 = vshll.u32 %v3433, %v3440
  %v3443 = vshrl.u32 %v3425, %v3441
  %v3444 = vor.u32 %v3442, %v3443
  %v3445 = vsub.s32 4294967266, %v3440
  %v3446 = vadd.s32 %v3445, 127
  %v3447 = vshll.u32 %v3446, 23
  %v3448 = vor.u32 4788187, %v3447
  %v3449 = vand.u32 2147483647, %v3448
  %v3451 = vcvt.s32.f32 %v3444
  %v3452 = vmul.f32 %v3451, %v3449
  %v3453 = vxor.u32 %v3452, 2147483648
  %v3454 = vsel %vm3371, %v3453, %v3452
  %v3455 = vsub.s32 4, %v3431
  %v3456 = vsel %vm3371, %v3455, %v3431
  %v3457 = vsel %vm3370, %v2307, %v3454
  %v3458 = vsel %vm3370, 0, %v3456
  %v3459 = vcosq.f32.pop %v3457
  %v3460 = vsinq.f32.pop %v3457
  %vm3461 = vweird.f32 %v2307
  %v3462 = vadd.s32 %v3458, 3
  %v3463 = vand.u32 %v3462, 3
  %vm3464 = vcmp.lt.s32.totalorder %v3463, 2
  %vm3465 = vcmp.eq.s32.totalorder %v3463, 0
  %v3466 = vxor.u32 %v3460, 2147483648
  %v3467 = vsel %vm3465, %v3459, %v3466
  %vm3468 = vcmp.eq.s32.totalorder %v3463, 2
  %v3469 = vxor.u32 %v3459, 2147483648
  %v3470 = vsel %vm3468, %v3469, %v3460
  %v3471 = vsel %vm3464, %v3467, %v3470
  %v3472 = vsel %vm3461, nan, %v3471
  %v3473 = vand.u32 2147483647, %v2308
  %vm3474 = vcmp.le.f32.partialorder %v3473, 0.7853982
  %vm3475 = vcmp.lt.s32.totalorder %v2308, 0
  %v3476 = vand.u32 %v2308, 2139095040
  %v3477 = vshrl.u32 %v3476, 23
  %v3478 = vsub.s32 %v3477, 127
  %v3479 = vand.u32 2147483647, %v2308
  %v3480 = vand.u32 %v3479, 8388607
  %v3481 = vor.u32 %v3480, 8388608
  %v3482 = vsub.s32 0, %v3481
  %v3483 = vadd.s32 %v3478, 1
  %vm3484 = vcmp.gt.s32.totalorder %v3483, 0
  %v3485 = vsel %vm3484, %v3483, 0
  %v3486 = vshrl.u32 %v3485, 5
  %v3487 = vand.u32 %v3485, 31
  %v3488 = vsub.s32 32, %v3487
  %v3489 = vshrl.u32 683565275, %v3488
  %v3490 = vshll.u32 683565275, %v3487
  %v3491 = vshrl.u32 2475754826, %v3488
  %v3492 = vor.u32 %v3490, %v3491
  %v3493 = vshll.u32 2475754826, %v3487
  %v3494 = vshrl.u32 2131351028, %v3488
  %v3495 = vor.u32 %v3493, %v3494
  %v3496 = vshll.u32 2131351028, %v3487
  %v3497 = vshrl.u32 2102212464, %v3488
  %v3498 = vor.u32 %v3496, %v3497
  %v3499 = vshll.u32 2102212464, %v3487
  %v3500 = vshrl.u32 920167782, %v3488
  %v3501 = vor.u32 %v3499, %v3500
  %v3502 = vshll.u32 920167782, %v3487
  %v3503 = vshrl.u32 1326507024, %v3488
  %v3504 = vor.u32 %v3502, %v3503
  %vm3505 = vcmp.lt.s32.totalorder %v3486, 1
  %vm3506 = vcmp.lt.s32.totalorder %v3486, 2
  %vm3507 = vcmp.lt.s32.totalorder %v3486, 3
  %vm3508 = vcmp.lt.s32.totalorder %v3486, 4
  %v3509 = vsel %vm3505, %v3489, %v3492
  %v3510 = vsel %vm3508, %v3498, 2102212464
  %v3511 = vsel %vm3507, %v3495, %v3510
  %v3512 = vsel %vm3506, %v3509, %v3511
  %v3513 = vsel %vm3505, %v3492, %v3495
  %v3514 = vsel %vm3508, %v3501, 920167782
  %v3515 = vsel %vm3507, %v3498, %v3514
  %v3516 = vsel %vm3506, %v3513, %v3515
  %v3517 = vsel %vm3505, %v3495, %v3498
  %v3518 = vsel %vm3508, %v3504, 1326507024
  %v3519 = vsel %vm3507, %v3501, %v3518
  %v3520 = vsel %vm3506, %v3517, %v3519
  %v3521 = vshll.u32 %v3481, 8
  %v3522 = vmul.u32.u64.compose %v3521, %v3520
  %v3523 = vextract.low.u32 %v3522
  %v3524 = vextract.high.u32 %v3522
  %v3525 = vmul.u32.u64.compose %v3521, %v3516
  %v3526 = vextract.low.u32 %v3525
  %v3527 = vextract.high.u32 %v3525
  %v3528 = vmul.u32 %v3521, %v3512
  %v3529 = vadd.s32 %v3524, %v3526
  %vm3530 = vc.u32 %v3524, %v3526
  %v3531 = vadd.s32 %v3527, 1
  %v3532 = vsel %vm3530, %v3531, %v3527
  %v3533 = vadd.s32 %v3528, %v3532
  %v3534 = vadd.s32 %v3533, 536870912
  %v3535 = vshrl.u32 %v3534, 30
  %v3536 = vshll.u32 %v3535, 30
  %v3537 = vsub.s32 %v3533, %v3536
  %vm3538 = vcmp.lt.s32.totalorder %v3537, 0
  %v3539 = vsub.s32 0, %v3537
  %v3540 = vsel %vm3538, %v3539, %v3537
  %v3541 = vclz %v3540
  %v3542 = vsub.s32 %v3541, 2
  %vm3543 = vcmp.gt.s32.totalorder 0, %v3542
  %v3544 = vsel %vm3543, 0, %v3542
  %v3545 = vsub.s32 32, %v3544
  %v3546 = vshll.u32 %v3537, %v3544
  %v3547 = vshrl.u32 %v3529, %v3545
  %v3548 = vor.u32 %v3546, %v3547
  %v3549 = vsub.s32 4294967266, %v3544
  %v3550 = vadd.s32 %v3549, 127
  %v3551 = vshll.u32 %v3550, 23
  %v3552 = vor.u32 4788187, %v3551
  %v3553 = vand.u32 2147483647, %v3552
  %v3555 = vcvt.s32.f32 %v3548
  %v3556 = vmul.f32 %v3555, %v3553
  %v3557 = vxor.u32 %v3556, 2147483648
  %v3558 = vsel %vm3475, %v3557, %v3556
  %v3559 = vsub.s32 4, %v3535
  %v3560 = vsel %vm3475, %v3559, %v3535
  %v3561 = vsel %vm3474, %v2308, %v3558
  %v3562 = vsel %vm3474, 0, %v3560
  %v3563 = vcosq.f32.pop %v3561
  %v3564 = vsinq.f32.pop %v3561
  %vm3565 = vweird.f32 %v2308
  %v3566 = vadd.s32 %v3562, 3
  %v3567 = vand.u32 %v3566, 3
  %vm3568 = vcmp.lt.s32.totalorder %v3567, 2
  %vm3569 = vcmp.eq.s32.totalorder %v3567, 0
  %v3570 = vxor.u32 %v3564, 2147483648
  %v3571 = vsel %vm3569, %v3563, %v3570
  %vm3572 = vcmp.eq.s32.totalorder %v3567, 2
  %v3573 = vxor.u32 %v3563, 2147483648
  %v3574 = vsel %vm3572, %v3573, %v3564
  %v3575 = vsel %vm3568, %v3571, %v3574
  %v3576 = vsel %vm3565, nan, %v3575
  %v3577 = vand.u32 2147483647, %v2309
  %vm3578 = vcmp.le.f32.partialorder %v3577, 0.7853982
  %vm3579 = vcmp.lt.s32.totalorder %v2309, 0
  %v3580 = vand.u32 %v2309, 2139095040
  %v3581 = vshrl.u32 %v3580, 23
  %v3582 = vsub.s32 %v3581, 127
  %v3583 = vand.u32 2147483647, %v2309
  %v3584 = vand.u32 %v3583, 8388607
  %v3585 = vor.u32 %v3584, 8388608
  %v3586 = vsub.s32 0, %v3585
  %v3587 = vadd.s32 %v3582, 1
  %vm3588 = vcmp.gt.s32.totalorder %v3587, 0
  %v3589 = vsel %vm3588, %v3587, 0
  %v3590 = vshrl.u32 %v3589, 5
  %v3591 = vand.u32 %v3589, 31
  %v3592 = vsub.s32 32, %v3591
  %v3593 = vshrl.u32 683565275, %v3592
  %v3594 = vshll.u32 683565275, %v3591
  %v3595 = vshrl.u32 2475754826, %v3592
  %v3596 = vor.u32 %v3594, %v3595
  %v3597 = vshll.u32 2475754826, %v3591
  %v3598 = vshrl.u32 2131351028, %v3592
  %v3599 = vor.u32 %v3597, %v3598
  %v3600 = vshll.u32 2131351028, %v3591
  %v3601 = vshrl.u32 2102212464, %v3592
  %v3602 = vor.u32 %v3600, %v3601
  %v3603 = vshll.u32 2102212464, %v3591
  %v3604 = vshrl.u32 920167782, %v3592
  %v3605 = vor.u32 %v3603, %v3604
  %v3606 = vshll.u32 920167782, %v3591
  %v3607 = vshrl.u32 1326507024, %v3592
  %v3608 = vor.u32 %v3606, %v3607
  %vm3609 = vcmp.lt.s32.totalorder %v3590, 1
  %vm3610 = vcmp.lt.s32.totalorder %v3590, 2
  %vm3611 = vcmp.lt.s32.totalorder %v3590, 3
  %vm3612 = vcmp.lt.s32.totalorder %v3590, 4
  %v3613 = vsel %vm3609, %v3593, %v3596
  %v3614 = vsel %vm3612, %v3602, 2102212464
  %v3615 = vsel %vm3611, %v3599, %v3614
  %v3616 = vsel %vm3610, %v3613, %v3615
  %v3617 = vsel %vm3609, %v3596, %v3599
  %v3618 = vsel %vm3612, %v3605, 920167782
  %v3619 = vsel %vm3611, %v3602, %v3618
  %v3620 = vsel %vm3610, %v3617, %v3619
  %v3621 = vsel %vm3609, %v3599, %v3602
  %v3622 = vsel %vm3612, %v3608, 1326507024
  %v3623 = vsel %vm3611, %v3605, %v3622
  %v3624 = vsel %vm3610, %v3621, %v3623
  %v3625 = vshll.u32 %v3585, 8
  %v3626 = vmul.u32.u64.compose %v3625, %v3624
  %v3627 = vextract.low.u32 %v3626
  %v3628 = vextract.high.u32 %v3626
  %v3629 = vmul.u32.u64.compose %v3625, %v3620
  %v3630 = vextract.low.u32 %v3629
  %v3631 = vextract.high.u32 %v3629
  %v3632 = vmul.u32 %v3625, %v3616
  %v3633 = vadd.s32 %v3628, %v3630
  %vm3634 = vc.u32 %v3628, %v3630
  %v3635 = vadd.s32 %v3631, 1
  %v3636 = vsel %vm3634, %v3635, %v3631
  %v3637 = vadd.s32 %v3632, %v3636
  %v3638 = vadd.s32 %v3637, 536870912
  %v3639 = vshrl.u32 %v3638, 30
  %v3640 = vshll.u32 %v3639, 30
  %v3641 = vsub.s32 %v3637, %v3640
  %vm3642 = vcmp.lt.s32.totalorder %v3641, 0
  %v3643 = vsub.s32 0, %v3641
  %v3644 = vsel %vm3642, %v3643, %v3641
  %v3645 = vclz %v3644
  %v3646 = vsub.s32 %v3645, 2
  %vm3647 = vcmp.gt.s32.totalorder 0, %v3646
  %v3648 = vsel %vm3647, 0, %v3646
  %v3649 = vsub.s32 32, %v3648
  %v3650 = vshll.u32 %v3641, %v3648
  %v3651 = vshrl.u32 %v3633, %v3649
  %v3652 = vor.u32 %v3650, %v3651
  %v3653 = vsub.s32 4294967266, %v3648
  %v3654 = vadd.s32 %v3653, 127
  %v3655 = vshll.u32 %v3654, 23
  %v3656 = vor.u32 4788187, %v3655
  %v3657 = vand.u32 2147483647, %v3656
  %v3659 = vcvt.s32.f32 %v3652
  %v3660 = vmul.f32 %v3659, %v3657
  %v3661 = vxor.u32 %v3660, 2147483648
  %v3662 = vsel %vm3579, %v3661, %v3660
  %v3663 = vsub.s32 4, %v3639
  %v3664 = vsel %vm3579, %v3663, %v3639
  %v3665 = vsel %vm3578, %v2309, %v3662
  %v3666 = vsel %vm3578, 0, %v3664
  %v3667 = vcosq.f32.pop %v3665
  %v3668 = vsinq.f32.pop %v3665
  %vm3669 = vweird.f32 %v2309
  %v3670 = vadd.s32 %v3666, 3
  %v3671 = vand.u32 %v3670, 3
  %vm3672 = vcmp.lt.s32.totalorder %v3671, 2
  %vm3673 = vcmp.eq.s32.totalorder %v3671, 0
  %v3674 = vxor.u32 %v3668, 2147483648
  %v3675 = vsel %vm3673, %v3667, %v3674
  %vm3676 = vcmp.eq.s32.totalorder %v3671, 2
  %v3677 = vxor.u32 %v3667, 2147483648
  %v3678 = vsel %vm3676, %v3677, %v3668
  %v3679 = vsel %vm3672, %v3675, %v3678
  %v3680 = vsel %vm3669, nan, %v3679
  %v3681 = vand.u32 2147483647, %v2310
  %vm3682 = vcmp.le.f32.partialorder %v3681, 0.7853982
  %vm3683 = vcmp.lt.s32.totalorder %v2310, 0
  %v3684 = vand.u32 %v2310, 2139095040
  %v3685 = vshrl.u32 %v3684, 23
  %v3686 = vsub.s32 %v3685, 127
  %v3687 = vand.u32 2147483647, %v2310
  %v3688 = vand.u32 %v3687, 8388607
  %v3689 = vor.u32 %v3688, 8388608
  %v3690 = vsub.s32 0, %v3689
  %v3691 = vadd.s32 %v3686, 1
  %vm3692 = vcmp.gt.s32.totalorder %v3691, 0
  %v3693 = vsel %vm3692, %v3691, 0
  %v3694 = vshrl.u32 %v3693, 5
  %v3695 = vand.u32 %v3693, 31
  %v3696 = vsub.s32 32, %v3695
  %v3697 = vshrl.u32 683565275, %v3696
  %v3698 = vshll.u32 683565275, %v3695
  %v3699 = vshrl.u32 2475754826, %v3696
  %v3700 = vor.u32 %v3698, %v3699
  %v3701 = vshll.u32 2475754826, %v3695
  %v3702 = vshrl.u32 2131351028, %v3696
  %v3703 = vor.u32 %v3701, %v3702
  %v3704 = vshll.u32 2131351028, %v3695
  %v3705 = vshrl.u32 2102212464, %v3696
  %v3706 = vor.u32 %v3704, %v3705
  %v3707 = vshll.u32 2102212464, %v3695
  %v3708 = vshrl.u32 920167782, %v3696
  %v3709 = vor.u32 %v3707, %v3708
  %v3710 = vshll.u32 920167782, %v3695
  %v3711 = vshrl.u32 1326507024, %v3696
  %v3712 = vor.u32 %v3710, %v3711
  %vm3713 = vcmp.lt.s32.totalorder %v3694, 1
  %vm3714 = vcmp.lt.s32.totalorder %v3694, 2
  %vm3715 = vcmp.lt.s32.totalorder %v3694, 3
  %vm3716 = vcmp.lt.s32.totalorder %v3694, 4
  %v3717 = vsel %vm3713, %v3697, %v3700
  %v3718 = vsel %vm3716, %v3706, 2102212464
  %v3719 = vsel %vm3715, %v3703, %v3718
  %v3720 = vsel %vm3714, %v3717, %v3719
  %v3721 = vsel %vm3713, %v3700, %v3703
  %v3722 = vsel %vm3716, %v3709, 920167782
  %v3723 = vsel %vm3715, %v3706, %v3722
  %v3724 = vsel %vm3714, %v3721, %v3723
  %v3725 = vsel %vm3713, %v3703, %v3706
  %v3726 = vsel %vm3716, %v3712, 1326507024
  %v3727 = vsel %vm3715, %v3709, %v3726
  %v3728 = vsel %vm3714, %v3725, %v3727
  %v3729 = vshll.u32 %v3689, 8
  %v3730 = vmul.u32.u64.compose %v3729, %v3728
  %v3731 = vextract.low.u32 %v3730
  %v3732 = vextract.high.u32 %v3730
  %v3733 = vmul.u32.u64.compose %v3729, %v3724
  %v3734 = vextract.low.u32 %v3733
  %v3735 = vextract.high.u32 %v3733
  %v3736 = vmul.u32 %v3729, %v3720
  %v3737 = vadd.s32 %v3732, %v3734
  %vm3738 = vc.u32 %v3732, %v3734
  %v3739 = vadd.s32 %v3735, 1
  %v3740 = vsel %vm3738, %v3739, %v3735
  %v3741 = vadd.s32 %v3736, %v3740
  %v3742 = vadd.s32 %v3741, 536870912
  %v3743 = vshrl.u32 %v3742, 30
  %v3744 = vshll.u32 %v3743, 30
  %v3745 = vsub.s32 %v3741, %v3744
  %vm3746 = vcmp.lt.s32.totalorder %v3745, 0
  %v3747 = vsub.s32 0, %v3745
  %v3748 = vsel %vm3746, %v3747, %v3745
  %v3749 = vclz %v3748
  %v3750 = vsub.s32 %v3749, 2
  %vm3751 = vcmp.gt.s32.totalorder 0, %v3750
  %v3752 = vsel %vm3751, 0, %v3750
  %v3753 = vsub.s32 32, %v3752
  %v3754 = vshll.u32 %v3745, %v3752
  %v3755 = vshrl.u32 %v3737, %v3753
  %v3756 = vor.u32 %v3754, %v3755
  %v3757 = vsub.s32 4294967266, %v3752
  %v3758 = vadd.s32 %v3757, 127
  %v3759 = vshll.u32 %v3758, 23
  %v3760 = vor.u32 4788187, %v3759
  %v3761 = vand.u32 2147483647, %v3760
  %v3763 = vcvt.s32.f32 %v3756
  %v3764 = vmul.f32 %v3763, %v3761
  %v3765 = vxor.u32 %v3764, 2147483648
  %v3766 = vsel %vm3683, %v3765, %v3764
  %v3767 = vsub.s32 4, %v3743
  %v3768 = vsel %vm3683, %v3767, %v3743
  %v3769 = vsel %vm3682, %v2310, %v3766
  %v3770 = vsel %vm3682, 0, %v3768
  %v3771 = vcosq.f32.pop %v3769
  %v3772 = vsinq.f32.pop %v3769
  %vm3773 = vweird.f32 %v2310
  %v3774 = vadd.s32 %v3770, 3
  %v3775 = vand.u32 %v3774, 3
  %vm3776 = vcmp.lt.s32.totalorder %v3775, 2
  %vm3777 = vcmp.eq.s32.totalorder %v3775, 0
  %v3778 = vxor.u32 %v3772, 2147483648
  %v3779 = vsel %vm3777, %v3771, %v3778
  %vm3780 = vcmp.eq.s32.totalorder %v3775, 2
  %v3781 = vxor.u32 %v3771, 2147483648
  %v3782 = vsel %vm3780, %v3781, %v3772
  %v3783 = vsel %vm3776, %v3779, %v3782
  %v3784 = vsel %vm3773, nan, %v3783
  %v3785 = vand.u32 2147483647, %v2311
  %vm3786 = vcmp.le.f32.partialorder %v3785, 0.7853982
  %vm3787 = vcmp.lt.s32.totalorder %v2311, 0
  %v3788 = vand.u32 %v2311, 2139095040
  %v3789 = vshrl.u32 %v3788, 23
  %v3790 = vsub.s32 %v3789, 127
  %v3791 = vand.u32 2147483647, %v2311
  %v3792 = vand.u32 %v3791, 8388607
  %v3793 = vor.u32 %v3792, 8388608
  %v3794 = vsub.s32 0, %v3793
  %v3795 = vadd.s32 %v3790, 1
  %vm3796 = vcmp.gt.s32.totalorder %v3795, 0
  %v3797 = vsel %vm3796, %v3795, 0
  %v3798 = vshrl.u32 %v3797, 5
  %v3799 = vand.u32 %v3797, 31
  %v3800 = vsub.s32 32, %v3799
  %v3801 = vshrl.u32 683565275, %v3800
  %v3802 = vshll.u32 683565275, %v3799
  %v3803 = vshrl.u32 2475754826, %v3800
  %v3804 = vor.u32 %v3802, %v3803
  %v3805 = vshll.u32 2475754826, %v3799
  %v3806 = vshrl.u32 2131351028, %v3800
  %v3807 = vor.u32 %v3805, %v3806
  %v3808 = vshll.u32 2131351028, %v3799
  %v3809 = vshrl.u32 2102212464, %v3800
  %v3810 = vor.u32 %v3808, %v3809
  %v3811 = vshll.u32 2102212464, %v3799
  %v3812 = vshrl.u32 920167782, %v3800
  %v3813 = vor.u32 %v3811, %v3812
  %v3814 = vshll.u32 920167782, %v3799
  %v3815 = vshrl.u32 1326507024, %v3800
  %v3816 = vor.u32 %v3814, %v3815
  %vm3817 = vcmp.lt.s32.totalorder %v3798, 1
  %vm3818 = vcmp.lt.s32.totalorder %v3798, 2
  %vm3819 = vcmp.lt.s32.totalorder %v3798, 3
  %vm3820 = vcmp.lt.s32.totalorder %v3798, 4
  %v3821 = vsel %vm3817, %v3801, %v3804
  %v3822 = vsel %vm3820, %v3810, 2102212464
  %v3823 = vsel %vm3819, %v3807, %v3822
  %v3824 = vsel %vm3818, %v3821, %v3823
  %v3825 = vsel %vm3817, %v3804, %v3807
  %v3826 = vsel %vm3820, %v3813, 920167782
  %v3827 = vsel %vm3819, %v3810, %v3826
  %v3828 = vsel %vm3818, %v3825, %v3827
  %v3829 = vsel %vm3817, %v3807, %v3810
  %v3830 = vsel %vm3820, %v3816, 1326507024
  %v3831 = vsel %vm3819, %v3813, %v3830
  %v3832 = vsel %vm3818, %v3829, %v3831
  %v3833 = vshll.u32 %v3793, 8
  %v3834 = vmul.u32.u64.compose %v3833, %v3832
  %v3835 = vextract.low.u32 %v3834
  %v3836 = vextract.high.u32 %v3834
  %v3837 = vmul.u32.u64.compose %v3833, %v3828
  %v3838 = vextract.low.u32 %v3837
  %v3839 = vextract.high.u32 %v3837
  %v3840 = vmul.u32 %v3833, %v3824
  %v3841 = vadd.s32 %v3836, %v3838
  %vm3842 = vc.u32 %v3836, %v3838
  %v3843 = vadd.s32 %v3839, 1
  %v3844 = vsel %vm3842, %v3843, %v3839
  %v3845 = vadd.s32 %v3840, %v3844
  %v3846 = vadd.s32 %v3845, 536870912
  %v3847 = vshrl.u32 %v3846, 30
  %v3848 = vshll.u32 %v3847, 30
  %v3849 = vsub.s32 %v3845, %v3848
  %vm3850 = vcmp.lt.s32.totalorder %v3849, 0
  %v3851 = vsub.s32 0, %v3849
  %v3852 = vsel %vm3850, %v3851, %v3849
  %v3853 = vclz %v3852
  %v3854 = vsub.s32 %v3853, 2
  %vm3855 = vcmp.gt.s32.totalorder 0, %v3854
  %v3856 = vsel %vm3855, 0, %v3854
  %v3857 = vsub.s32 32, %v3856
  %v3858 = vshll.u32 %v3849, %v3856
  %v3859 = vshrl.u32 %v3841, %v3857
  %v3860 = vor.u32 %v3858, %v3859
  %v3861 = vsub.s32 4294967266, %v3856
  %v3862 = vadd.s32 %v3861, 127
  %v3863 = vshll.u32 %v3862, 23
  %v3864 = vor.u32 4788187, %v3863
  %v3865 = vand.u32 2147483647, %v3864
  %v3867 = vcvt.s32.f32 %v3860
  %v3868 = vmul.f32 %v3867, %v3865
  %v3869 = vxor.u32 %v3868, 2147483648
  %v3870 = vsel %vm3787, %v3869, %v3868
  %v3871 = vsub.s32 4, %v3847
  %v3872 = vsel %vm3787, %v3871, %v3847
  %v3873 = vsel %vm3786, %v2311, %v3870
  %v3874 = vsel %vm3786, 0, %v3872
  %v3875 = vcosq.f32.pop %v3873
  %v3876 = vsinq.f32.pop %v3873
  %vm3877 = vweird.f32 %v2311
  %v3878 = vadd.s32 %v3874, 3
  %v3879 = vand.u32 %v3878, 3
  %vm3880 = vcmp.lt.s32.totalorder %v3879, 2
  %vm3881 = vcmp.eq.s32.totalorder %v3879, 0
  %v3882 = vxor.u32 %v3876, 2147483648
  %v3883 = vsel %vm3881, %v3875, %v3882
  %vm3884 = vcmp.eq.s32.totalorder %v3879, 2
  %v3885 = vxor.u32 %v3875, 2147483648
  %v3886 = vsel %vm3884, %v3885, %v3876
  %v3887 = vsel %vm3880, %v3883, %v3886
  %v3888 = vsel %vm3877, nan, %v3887
  %v3889 = vand.u32 2147483647, %v2312
  %vm3890 = vcmp.le.f32.partialorder %v3889, 0.7853982
  %vm3891 = vcmp.lt.s32.totalorder %v2312, 0
  %v3892 = vand.u32 %v2312, 2139095040
  %v3893 = vshrl.u32 %v3892, 23
  %v3894 = vsub.s32 %v3893, 127
  %v3895 = vand.u32 2147483647, %v2312
  %v3896 = vand.u32 %v3895, 8388607
  %v3897 = vor.u32 %v3896, 8388608
  %v3898 = vsub.s32 0, %v3897
  %v3899 = vadd.s32 %v3894, 1
  %vm3900 = vcmp.gt.s32.totalorder %v3899, 0
  %v3901 = vsel %vm3900, %v3899, 0
  %v3902 = vshrl.u32 %v3901, 5
  %v3903 = vand.u32 %v3901, 31
  %v3904 = vsub.s32 32, %v3903
  %v3905 = vshrl.u32 683565275, %v3904
  %v3906 = vshll.u32 683565275, %v3903
  %v3907 = vshrl.u32 2475754826, %v3904
  %v3908 = vor.u32 %v3906, %v3907
  %v3909 = vshll.u32 2475754826, %v3903
  %v3910 = vshrl.u32 2131351028, %v3904
  %v3911 = vor.u32 %v3909, %v3910
  %v3912 = vshll.u32 2131351028, %v3903
  %v3913 = vshrl.u32 2102212464, %v3904
  %v3914 = vor.u32 %v3912, %v3913
  %v3915 = vshll.u32 2102212464, %v3903
  %v3916 = vshrl.u32 920167782, %v3904
  %v3917 = vor.u32 %v3915, %v3916
  %v3918 = vshll.u32 920167782, %v3903
  %v3919 = vshrl.u32 1326507024, %v3904
  %v3920 = vor.u32 %v3918, %v3919
  %vm3921 = vcmp.lt.s32.totalorder %v3902, 1
  %vm3922 = vcmp.lt.s32.totalorder %v3902, 2
  %vm3923 = vcmp.lt.s32.totalorder %v3902, 3
  %vm3924 = vcmp.lt.s32.totalorder %v3902, 4
  %v3925 = vsel %vm3921, %v3905, %v3908
  %v3926 = vsel %vm3924, %v3914, 2102212464
  %v3927 = vsel %vm3923, %v3911, %v3926
  %v3928 = vsel %vm3922, %v3925, %v3927
  %v3929 = vsel %vm3921, %v3908, %v3911
  %v3930 = vsel %vm3924, %v3917, 920167782
  %v3931 = vsel %vm3923, %v3914, %v3930
  %v3932 = vsel %vm3922, %v3929, %v3931
  %v3933 = vsel %vm3921, %v3911, %v3914
  %v3934 = vsel %vm3924, %v3920, 1326507024
  %v3935 = vsel %vm3923, %v3917, %v3934
  %v3936 = vsel %vm3922, %v3933, %v3935
  %v3937 = vshll.u32 %v3897, 8
  %v3938 = vmul.u32.u64.compose %v3937, %v3936
  %v3939 = vextract.low.u32 %v3938
  %v3940 = vextract.high.u32 %v3938
  %v3941 = vmul.u32.u64.compose %v3937, %v3932
  %v3942 = vextract.low.u32 %v3941
  %v3943 = vextract.high.u32 %v3941
  %v3944 = vmul.u32 %v3937, %v3928
  %v3945 = vadd.s32 %v3940, %v3942
  %vm3946 = vc.u32 %v3940, %v3942
  %v3947 = vadd.s32 %v3943, 1
  %v3948 = vsel %vm3946, %v3947, %v3943
  %v3949 = vadd.s32 %v3944, %v3948
  %v3950 = vadd.s32 %v3949, 536870912
  %v3951 = vshrl.u32 %v3950, 30
  %v3952 = vshll.u32 %v3951, 30
  %v3953 = vsub.s32 %v3949, %v3952
  %vm3954 = vcmp.lt.s32.totalorder %v3953, 0
  %v3955 = vsub.s32 0, %v3953
  %v3956 = vsel %vm3954, %v3955, %v3953
  %v3957 = vclz %v3956
  %v3958 = vsub.s32 %v3957, 2
  %vm3959 = vcmp.gt.s32.totalorder 0, %v3958
  %v3960 = vsel %vm3959, 0, %v3958
  %v3961 = vsub.s32 32, %v3960
  %v3962 = vshll.u32 %v3953, %v3960
  %v3963 = vshrl.u32 %v3945, %v3961
  %v3964 = vor.u32 %v3962, %v3963
  %v3965 = vsub.s32 4294967266, %v3960
  %v3966 = vadd.s32 %v3965, 127
  %v3967 = vshll.u32 %v3966, 23
  %v3968 = vor.u32 4788187, %v3967
  %v3969 = vand.u32 2147483647, %v3968
  %v3971 = vcvt.s32.f32 %v3964
  %v3972 = vmul.f32 %v3971, %v3969
  %v3973 = vxor.u32 %v3972, 2147483648
  %v3974 = vsel %vm3891, %v3973, %v3972
  %v3975 = vsub.s32 4, %v3951
  %v3976 = vsel %vm3891, %v3975, %v3951
  %v3977 = vsel %vm3890, %v2312, %v3974
  %v3978 = vsel %vm3890, 0, %v3976
  %v3979 = vcosq.f32.pop %v3977
  %v3980 = vsinq.f32.pop %v3977
  %vm3981 = vweird.f32 %v2312
  %v3982 = vadd.s32 %v3978, 3
  %v3983 = vand.u32 %v3982, 3
  %vm3984 = vcmp.lt.s32.totalorder %v3983, 2
  %vm3985 = vcmp.eq.s32.totalorder %v3983, 0
  %v3986 = vxor.u32 %v3980, 2147483648
  %v3987 = vsel %vm3985, %v3979, %v3986
  %vm3988 = vcmp.eq.s32.totalorder %v3983, 2
  %v3989 = vxor.u32 %v3979, 2147483648
  %v3990 = vsel %vm3988, %v3989, %v3980
  %v3991 = vsel %vm3984, %v3987, %v3990
  %v3992 = vsel %vm3981, nan, %v3991
  %v3993 = vand.u32 2147483647, %v2313
  %vm3994 = vcmp.le.f32.partialorder %v3993, 0.7853982
  %vm3995 = vcmp.lt.s32.totalorder %v2313, 0
  %v3996 = vand.u32 %v2313, 2139095040
  %v3997 = vshrl.u32 %v3996, 23
  %v3998 = vsub.s32 %v3997, 127
  %v3999 = vand.u32 2147483647, %v2313
  %v4000 = vand.u32 %v3999, 8388607
  %v4001 = vor.u32 %v4000, 8388608
  %v4002 = vsub.s32 0, %v4001
  %v4003 = vadd.s32 %v3998, 1
  %vm4004 = vcmp.gt.s32.totalorder %v4003, 0
  %v4005 = vsel %vm4004, %v4003, 0
  %v4006 = vshrl.u32 %v4005, 5
  %v4007 = vand.u32 %v4005, 31
  %v4008 = vsub.s32 32, %v4007
  %v4009 = vshrl.u32 683565275, %v4008
  %v4010 = vshll.u32 683565275, %v4007
  %v4011 = vshrl.u32 2475754826, %v4008
  %v4012 = vor.u32 %v4010, %v4011
  %v4013 = vshll.u32 2475754826, %v4007
  %v4014 = vshrl.u32 2131351028, %v4008
  %v4015 = vor.u32 %v4013, %v4014
  %v4016 = vshll.u32 2131351028, %v4007
  %v4017 = vshrl.u32 2102212464, %v4008
  %v4018 = vor.u32 %v4016, %v4017
  %v4019 = vshll.u32 2102212464, %v4007
  %v4020 = vshrl.u32 920167782, %v4008
  %v4021 = vor.u32 %v4019, %v4020
  %v4022 = vshll.u32 920167782, %v4007
  %v4023 = vshrl.u32 1326507024, %v4008
  %v4024 = vor.u32 %v4022, %v4023
  %vm4025 = vcmp.lt.s32.totalorder %v4006, 1
  %vm4026 = vcmp.lt.s32.totalorder %v4006, 2
  %vm4027 = vcmp.lt.s32.totalorder %v4006, 3
  %vm4028 = vcmp.lt.s32.totalorder %v4006, 4
  %v4029 = vsel %vm4025, %v4009, %v4012
  %v4030 = vsel %vm4028, %v4018, 2102212464
  %v4031 = vsel %vm4027, %v4015, %v4030
  %v4032 = vsel %vm4026, %v4029, %v4031
  %v4033 = vsel %vm4025, %v4012, %v4015
  %v4034 = vsel %vm4028, %v4021, 920167782
  %v4035 = vsel %vm4027, %v4018, %v4034
  %v4036 = vsel %vm4026, %v4033, %v4035
  %v4037 = vsel %vm4025, %v4015, %v4018
  %v4038 = vsel %vm4028, %v4024, 1326507024
  %v4039 = vsel %vm4027, %v4021, %v4038
  %v4040 = vsel %vm4026, %v4037, %v4039
  %v4041 = vshll.u32 %v4001, 8
  %v4042 = vmul.u32.u64.compose %v4041, %v4040
  %v4043 = vextract.low.u32 %v4042
  %v4044 = vextract.high.u32 %v4042
  %v4045 = vmul.u32.u64.compose %v4041, %v4036
  %v4046 = vextract.low.u32 %v4045
  %v4047 = vextract.high.u32 %v4045
  %v4048 = vmul.u32 %v4041, %v4032
  %v4049 = vadd.s32 %v4044, %v4046
  %vm4050 = vc.u32 %v4044, %v4046
  %v4051 = vadd.s32 %v4047, 1
  %v4052 = vsel %vm4050, %v4051, %v4047
  %v4053 = vadd.s32 %v4048, %v4052
  %v4054 = vadd.s32 %v4053, 536870912
  %v4055 = vshrl.u32 %v4054, 30
  %v4056 = vshll.u32 %v4055, 30
  %v4057 = vsub.s32 %v4053, %v4056
  %vm4058 = vcmp.lt.s32.totalorder %v4057, 0
  %v4059 = vsub.s32 0, %v4057
  %v4060 = vsel %vm4058, %v4059, %v4057
  %v4061 = vclz %v4060
  %v4062 = vsub.s32 %v4061, 2
  %vm4063 = vcmp.gt.s32.totalorder 0, %v4062
  %v4064 = vsel %vm4063, 0, %v4062
  %v4065 = vsub.s32 32, %v4064
  %v4066 = vshll.u32 %v4057, %v4064
  %v4067 = vshrl.u32 %v4049, %v4065
  %v4068 = vor.u32 %v4066, %v4067
  %v4069 = vsub.s32 4294967266, %v4064
  %v4070 = vadd.s32 %v4069, 127
  %v4071 = vshll.u32 %v4070, 23
  %v4072 = vor.u32 4788187, %v4071
  %v4073 = vand.u32 2147483647, %v4072
  %v4075 = vcvt.s32.f32 %v4068
  %v4076 = vmul.f32 %v4075, %v4073
  %v4077 = vxor.u32 %v4076, 2147483648
  %v4078 = vsel %vm3995, %v4077, %v4076
  %v4079 = vsub.s32 4, %v4055
  %v4080 = vsel %vm3995, %v4079, %v4055
  %v4081 = vsel %vm3994, %v2313, %v4078
  %v4082 = vsel %vm3994, 0, %v4080
  %v4083 = vcosq.f32.pop %v4081
  %v4084 = vsinq.f32.pop %v4081
  %vm4085 = vweird.f32 %v2313
  %v4086 = vadd.s32 %v4082, 3
  %v4087 = vand.u32 %v4086, 3
  %vm4088 = vcmp.lt.s32.totalorder %v4087, 2
  %vm4089 = vcmp.eq.s32.totalorder %v4087, 0
  %v4090 = vxor.u32 %v4084, 2147483648
  %v4091 = vsel %vm4089, %v4083, %v4090
  %vm4092 = vcmp.eq.s32.totalorder %v4087, 2
  %v4093 = vxor.u32 %v4083, 2147483648
  %v4094 = vsel %vm4092, %v4093, %v4084
  %v4095 = vsel %vm4088, %v4091, %v4094
  %v4096 = vsel %vm4085, nan, %v4095
  %v4097 = vand.u32 2147483647, %v2314
  %vm4098 = vcmp.le.f32.partialorder %v4097, 0.7853982
  %vm4099 = vcmp.lt.s32.totalorder %v2314, 0
  %v4100 = vand.u32 %v2314, 2139095040
  %v4101 = vshrl.u32 %v4100, 23
  %v4102 = vsub.s32 %v4101, 127
  %v4103 = vand.u32 2147483647, %v2314
  %v4104 = vand.u32 %v4103, 8388607
  %v4105 = vor.u32 %v4104, 8388608
  %v4106 = vsub.s32 0, %v4105
  %v4107 = vadd.s32 %v4102, 1
  %vm4108 = vcmp.gt.s32.totalorder %v4107, 0
  %v4109 = vsel %vm4108, %v4107, 0
  %v4110 = vshrl.u32 %v4109, 5
  %v4111 = vand.u32 %v4109, 31
  %v4112 = vsub.s32 32, %v4111
  %v4113 = vshrl.u32 683565275, %v4112
  %v4114 = vshll.u32 683565275, %v4111
  %v4115 = vshrl.u32 2475754826, %v4112
  %v4116 = vor.u32 %v4114, %v4115
  %v4117 = vshll.u32 2475754826, %v4111
  %v4118 = vshrl.u32 2131351028, %v4112
  %v4119 = vor.u32 %v4117, %v4118
  %v4120 = vshll.u32 2131351028, %v4111
  %v4121 = vshrl.u32 2102212464, %v4112
  %v4122 = vor.u32 %v4120, %v4121
  %v4123 = vshll.u32 2102212464, %v4111
  %v4124 = vshrl.u32 920167782, %v4112
  %v4125 = vor.u32 %v4123, %v4124
  %v4126 = vshll.u32 920167782, %v4111
  %v4127 = vshrl.u32 1326507024, %v4112
  %v4128 = vor.u32 %v4126, %v4127
  %vm4129 = vcmp.lt.s32.totalorder %v4110, 1
  %vm4130 = vcmp.lt.s32.totalorder %v4110, 2
  %vm4131 = vcmp.lt.s32.totalorder %v4110, 3
  %vm4132 = vcmp.lt.s32.totalorder %v4110, 4
  %v4133 = vsel %vm4129, %v4113, %v4116
  %v4134 = vsel %vm4132, %v4122, 2102212464
  %v4135 = vsel %vm4131, %v4119, %v4134
  %v4136 = vsel %vm4130, %v4133, %v4135
  %v4137 = vsel %vm4129, %v4116, %v4119
  %v4138 = vsel %vm4132, %v4125, 920167782
  %v4139 = vsel %vm4131, %v4122, %v4138
  %v4140 = vsel %vm4130, %v4137, %v4139
  %v4141 = vsel %vm4129, %v4119, %v4122
  %v4142 = vsel %vm4132, %v4128, 1326507024
  %v4143 = vsel %vm4131, %v4125, %v4142
  %v4144 = vsel %vm4130, %v4141, %v4143
  %v4145 = vshll.u32 %v4105, 8
  %v4146 = vmul.u32.u64.compose %v4145, %v4144
  %v4147 = vextract.low.u32 %v4146
  %v4148 = vextract.high.u32 %v4146
  %v4149 = vmul.u32.u64.compose %v4145, %v4140
  %v4150 = vextract.low.u32 %v4149
  %v4151 = vextract.high.u32 %v4149
  %v4152 = vmul.u32 %v4145, %v4136
  %v4153 = vadd.s32 %v4148, %v4150
  %vm4154 = vc.u32 %v4148, %v4150
  %v4155 = vadd.s32 %v4151, 1
  %v4156 = vsel %vm4154, %v4155, %v4151
  %v4157 = vadd.s32 %v4152, %v4156
  %v4158 = vadd.s32 %v4157, 536870912
  %v4159 = vshrl.u32 %v4158, 30
  %v4160 = vshll.u32 %v4159, 30
  %v4161 = vsub.s32 %v4157, %v4160
  %vm4162 = vcmp.lt.s32.totalorder %v4161, 0
  %v4163 = vsub.s32 0, %v4161
  %v4164 = vsel %vm4162, %v4163, %v4161
  %v4165 = vclz %v4164
  %v4166 = vsub.s32 %v4165, 2
  %vm4167 = vcmp.gt.s32.totalorder 0, %v4166
  %v4168 = vsel %vm4167, 0, %v4166
  %v4169 = vsub.s32 32, %v4168
  %v4170 = vshll.u32 %v4161, %v4168
  %v4171 = vshrl.u32 %v4153, %v4169
  %v4172 = vor.u32 %v4170, %v4171
  %v4173 = vsub.s32 4294967266, %v4168
  %v4174 = vadd.s32 %v4173, 127
  %v4175 = vshll.u32 %v4174, 23
  %v4176 = vor.u32 4788187, %v4175
  %v4177 = vand.u32 2147483647, %v4176
  %v4179 = vcvt.s32.f32 %v4172
  %v4180 = vmul.f32 %v4179, %v4177
  %v4181 = vxor.u32 %v4180, 2147483648
  %v4182 = vsel %vm4099, %v4181, %v4180
  %v4183 = vsub.s32 4, %v4159
  %v4184 = vsel %vm4099, %v4183, %v4159
  %v4185 = vsel %vm4098, %v2314, %v4182
  %v4186 = vsel %vm4098, 0, %v4184
  %v4187 = vcosq.f32.pop %v4185
  %v4188 = vsinq.f32.pop %v4185
  %vm4189 = vweird.f32 %v2314
  %v4190 = vadd.s32 %v4186, 3
  %v4191 = vand.u32 %v4190, 3
  %vm4192 = vcmp.lt.s32.totalorder %v4191, 2
  %vm4193 = vcmp.eq.s32.totalorder %v4191, 0
  %v4194 = vxor.u32 %v4188, 2147483648
  %v4195 = vsel %vm4193, %v4187, %v4194
  %vm4196 = vcmp.eq.s32.totalorder %v4191, 2
  %v4197 = vxor.u32 %v4187, 2147483648
  %v4198 = vsel %vm4196, %v4197, %v4188
  %v4199 = vsel %vm4192, %v4195, %v4198
  %v4200 = vsel %vm4189, nan, %v4199
  %v4201 = vand.u32 2147483647, %v2315
  %vm4202 = vcmp.le.f32.partialorder %v4201, 0.7853982
  %vm4203 = vcmp.lt.s32.totalorder %v2315, 0
  %v4204 = vand.u32 %v2315, 2139095040
  %v4205 = vshrl.u32 %v4204, 23
  %v4206 = vsub.s32 %v4205, 127
  %v4207 = vand.u32 2147483647, %v2315
  %v4208 = vand.u32 %v4207, 8388607
  %v4209 = vor.u32 %v4208, 8388608
  %v4210 = vsub.s32 0, %v4209
  %v4211 = vadd.s32 %v4206, 1
  %vm4212 = vcmp.gt.s32.totalorder %v4211, 0
  %v4213 = vsel %vm4212, %v4211, 0
  %v4214 = vshrl.u32 %v4213, 5
  %v4215 = vand.u32 %v4213, 31
  %v4216 = vsub.s32 32, %v4215
  %v4217 = vshrl.u32 683565275, %v4216
  %v4218 = vshll.u32 683565275, %v4215
  %v4219 = vshrl.u32 2475754826, %v4216
  %v4220 = vor.u32 %v4218, %v4219
  %v4221 = vshll.u32 2475754826, %v4215
  %v4222 = vshrl.u32 2131351028, %v4216
  %v4223 = vor.u32 %v4221, %v4222
  %v4224 = vshll.u32 2131351028, %v4215
  %v4225 = vshrl.u32 2102212464, %v4216
  %v4226 = vor.u32 %v4224, %v4225
  %v4227 = vshll.u32 2102212464, %v4215
  %v4228 = vshrl.u32 920167782, %v4216
  %v4229 = vor.u32 %v4227, %v4228
  %v4230 = vshll.u32 920167782, %v4215
  %v4231 = vshrl.u32 1326507024, %v4216
  %v4232 = vor.u32 %v4230, %v4231
  %vm4233 = vcmp.lt.s32.totalorder %v4214, 1
  %vm4234 = vcmp.lt.s32.totalorder %v4214, 2
  %vm4235 = vcmp.lt.s32.totalorder %v4214, 3
  %vm4236 = vcmp.lt.s32.totalorder %v4214, 4
  %v4237 = vsel %vm4233, %v4217, %v4220
  %v4238 = vsel %vm4236, %v4226, 2102212464
  %v4239 = vsel %vm4235, %v4223, %v4238
  %v4240 = vsel %vm4234, %v4237, %v4239
  %v4241 = vsel %vm4233, %v4220, %v4223
  %v4242 = vsel %vm4236, %v4229, 920167782
  %v4243 = vsel %vm4235, %v4226, %v4242
  %v4244 = vsel %vm4234, %v4241, %v4243
  %v4245 = vsel %vm4233, %v4223, %v4226
  %v4246 = vsel %vm4236, %v4232, 1326507024
  %v4247 = vsel %vm4235, %v4229, %v4246
  %v4248 = vsel %vm4234, %v4245, %v4247
  %v4249 = vshll.u32 %v4209, 8
  %v4250 = vmul.u32.u64.compose %v4249, %v4248
  %v4251 = vextract.low.u32 %v4250
  %v4252 = vextract.high.u32 %v4250
  %v4253 = vmul.u32.u64.compose %v4249, %v4244
  %v4254 = vextract.low.u32 %v4253
  %v4255 = vextract.high.u32 %v4253
  %v4256 = vmul.u32 %v4249, %v4240
  %v4257 = vadd.s32 %v4252, %v4254
  %vm4258 = vc.u32 %v4252, %v4254
  %v4259 = vadd.s32 %v4255, 1
  %v4260 = vsel %vm4258, %v4259, %v4255
  %v4261 = vadd.s32 %v4256, %v4260
  %v4262 = vadd.s32 %v4261, 536870912
  %v4263 = vshrl.u32 %v4262, 30
  %v4264 = vshll.u32 %v4263, 30
  %v4265 = vsub.s32 %v4261, %v4264
  %vm4266 = vcmp.lt.s32.totalorder %v4265, 0
  %v4267 = vsub.s32 0, %v4265
  %v4268 = vsel %vm4266, %v4267, %v4265
  %v4269 = vclz %v4268
  %v4270 = vsub.s32 %v4269, 2
  %vm4271 = vcmp.gt.s32.totalorder 0, %v4270
  %v4272 = vsel %vm4271, 0, %v4270
  %v4273 = vsub.s32 32, %v4272
  %v4274 = vshll.u32 %v4265, %v4272
  %v4275 = vshrl.u32 %v4257, %v4273
  %v4276 = vor.u32 %v4274, %v4275
  %v4277 = vsub.s32 4294967266, %v4272
  %v4278 = vadd.s32 %v4277, 127
  %v4279 = vshll.u32 %v4278, 23
  %v4280 = vor.u32 4788187, %v4279
  %v4281 = vand.u32 2147483647, %v4280
  %v4283 = vcvt.s32.f32 %v4276
  %v4284 = vmul.f32 %v4283, %v4281
  %v4285 = vxor.u32 %v4284, 2147483648
  %v4286 = vsel %vm4203, %v4285, %v4284
  %v4287 = vsub.s32 4, %v4263
  %v4288 = vsel %vm4203, %v4287, %v4263
  %v4289 = vsel %vm4202, %v2315, %v4286
  %v4290 = vsel %vm4202, 0, %v4288
  %v4291 = vcosq.f32.pop %v4289
  %v4292 = vsinq.f32.pop %v4289
  %vm4293 = vweird.f32 %v2315
  %v4294 = vadd.s32 %v4290, 3
  %v4295 = vand.u32 %v4294, 3
  %vm4296 = vcmp.lt.s32.totalorder %v4295, 2
  %vm4297 = vcmp.eq.s32.totalorder %v4295, 0
  %v4298 = vxor.u32 %v4292, 2147483648
  %v4299 = vsel %vm4297, %v4291, %v4298
  %vm4300 = vcmp.eq.s32.totalorder %v4295, 2
  %v4301 = vxor.u32 %v4291, 2147483648
  %v4302 = vsel %vm4300, %v4301, %v4292
  %v4303 = vsel %vm4296, %v4299, %v4302
  %v4304 = vsel %vm4293, nan, %v4303
  %v4305 = vand.u32 2147483647, %v2316
  %vm4306 = vcmp.le.f32.partialorder %v4305, 0.7853982
  %vm4307 = vcmp.lt.s32.totalorder %v2316, 0
  %v4308 = vand.u32 %v2316, 2139095040
  %v4309 = vshrl.u32 %v4308, 23
  %v4310 = vsub.s32 %v4309, 127
  %v4311 = vand.u32 2147483647, %v2316
  %v4312 = vand.u32 %v4311, 8388607
  %v4313 = vor.u32 %v4312, 8388608
  %v4314 = vsub.s32 0, %v4313
  %v4315 = vadd.s32 %v4310, 1
  %vm4316 = vcmp.gt.s32.totalorder %v4315, 0
  %v4317 = vsel %vm4316, %v4315, 0
  %v4318 = vshrl.u32 %v4317, 5
  %v4319 = vand.u32 %v4317, 31
  %v4320 = vsub.s32 32, %v4319
  %v4321 = vshrl.u32 683565275, %v4320
  %v4322 = vshll.u32 683565275, %v4319
  %v4323 = vshrl.u32 2475754826, %v4320
  %v4324 = vor.u32 %v4322, %v4323
  %v4325 = vshll.u32 2475754826, %v4319
  %v4326 = vshrl.u32 2131351028, %v4320
  %v4327 = vor.u32 %v4325, %v4326
  %v4328 = vshll.u32 2131351028, %v4319
  %v4329 = vshrl.u32 2102212464, %v4320
  %v4330 = vor.u32 %v4328, %v4329
  %v4331 = vshll.u32 2102212464, %v4319
  %v4332 = vshrl.u32 920167782, %v4320
  %v4333 = vor.u32 %v4331, %v4332
  %v4334 = vshll.u32 920167782, %v4319
  %v4335 = vshrl.u32 1326507024, %v4320
  %v4336 = vor.u32 %v4334, %v4335
  %vm4337 = vcmp.lt.s32.totalorder %v4318, 1
  %vm4338 = vcmp.lt.s32.totalorder %v4318, 2
  %vm4339 = vcmp.lt.s32.totalorder %v4318, 3
  %vm4340 = vcmp.lt.s32.totalorder %v4318, 4
  %v4341 = vsel %vm4337, %v4321, %v4324
  %v4342 = vsel %vm4340, %v4330, 2102212464
  %v4343 = vsel %vm4339, %v4327, %v4342
  %v4344 = vsel %vm4338, %v4341, %v4343
  %v4345 = vsel %vm4337, %v4324, %v4327
  %v4346 = vsel %vm4340, %v4333, 920167782
  %v4347 = vsel %vm4339, %v4330, %v4346
  %v4348 = vsel %vm4338, %v4345, %v4347
  %v4349 = vsel %vm4337, %v4327, %v4330
  %v4350 = vsel %vm4340, %v4336, 1326507024
  %v4351 = vsel %vm4339, %v4333, %v4350
  %v4352 = vsel %vm4338, %v4349, %v4351
  %v4353 = vshll.u32 %v4313, 8
  %v4354 = vmul.u32.u64.compose %v4353, %v4352
  %v4355 = vextract.low.u32 %v4354
  %v4356 = vextract.high.u32 %v4354
  %v4357 = vmul.u32.u64.compose %v4353, %v4348
  %v4358 = vextract.low.u32 %v4357
  %v4359 = vextract.high.u32 %v4357
  %v4360 = vmul.u32 %v4353, %v4344
  %v4361 = vadd.s32 %v4356, %v4358
  %vm4362 = vc.u32 %v4356, %v4358
  %v4363 = vadd.s32 %v4359, 1
  %v4364 = vsel %vm4362, %v4363, %v4359
  %v4365 = vadd.s32 %v4360, %v4364
  %v4366 = vadd.s32 %v4365, 536870912
  %v4367 = vshrl.u32 %v4366, 30
  %v4368 = vshll.u32 %v4367, 30
  %v4369 = vsub.s32 %v4365, %v4368
  %vm4370 = vcmp.lt.s32.totalorder %v4369, 0
  %v4371 = vsub.s32 0, %v4369
  %v4372 = vsel %vm4370, %v4371, %v4369
  %v4373 = vclz %v4372
  %v4374 = vsub.s32 %v4373, 2
  %vm4375 = vcmp.gt.s32.totalorder 0, %v4374
  %v4376 = vsel %vm4375, 0, %v4374
  %v4377 = vsub.s32 32, %v4376
  %v4378 = vshll.u32 %v4369, %v4376
  %v4379 = vshrl.u32 %v4361, %v4377
  %v4380 = vor.u32 %v4378, %v4379
  %v4381 = vsub.s32 4294967266, %v4376
  %v4382 = vadd.s32 %v4381, 127
  %v4383 = vshll.u32 %v4382, 23
  %v4384 = vor.u32 4788187, %v4383
  %v4385 = vand.u32 2147483647, %v4384
  %v4387 = vcvt.s32.f32 %v4380
  %v4388 = vmul.f32 %v4387, %v4385
  %v4389 = vxor.u32 %v4388, 2147483648
  %v4390 = vsel %vm4307, %v4389, %v4388
  %v4391 = vsub.s32 4, %v4367
  %v4392 = vsel %vm4307, %v4391, %v4367
  %v4393 = vsel %vm4306, %v2316, %v4390
  %v4394 = vsel %vm4306, 0, %v4392
  %v4395 = vcosq.f32.pop %v4393
  %v4396 = vsinq.f32.pop %v4393
  %vm4397 = vweird.f32 %v2316
  %v4398 = vadd.s32 %v4394, 3
  %v4399 = vand.u32 %v4398, 3
  %vm4400 = vcmp.lt.s32.totalorder %v4399, 2
  %vm4401 = vcmp.eq.s32.totalorder %v4399, 0
  %v4402 = vxor.u32 %v4396, 2147483648
  %v4403 = vsel %vm4401, %v4395, %v4402
  %vm4404 = vcmp.eq.s32.totalorder %v4399, 2
  %v4405 = vxor.u32 %v4395, 2147483648
  %v4406 = vsel %vm4404, %v4405, %v4396
  %v4407 = vsel %vm4400, %v4403, %v4406
  %v4408 = vsel %vm4397, nan, %v4407
  %v4409 = vand.u32 2147483647, %v2317
  %vm4410 = vcmp.le.f32.partialorder %v4409, 0.7853982
  %vm4411 = vcmp.lt.s32.totalorder %v2317, 0
  %v4412 = vand.u32 %v2317, 2139095040
  %v4413 = vshrl.u32 %v4412, 23
  %v4414 = vsub.s32 %v4413, 127
  %v4415 = vand.u32 2147483647, %v2317
  %v4416 = vand.u32 %v4415, 8388607
  %v4417 = vor.u32 %v4416, 8388608
  %v4418 = vsub.s32 0, %v4417
  %v4419 = vadd.s32 %v4414, 1
  %vm4420 = vcmp.gt.s32.totalorder %v4419, 0
  %v4421 = vsel %vm4420, %v4419, 0
  %v4422 = vshrl.u32 %v4421, 5
  %v4423 = vand.u32 %v4421, 31
  %v4424 = vsub.s32 32, %v4423
  %v4425 = vshrl.u32 683565275, %v4424
  %v4426 = vshll.u32 683565275, %v4423
  %v4427 = vshrl.u32 2475754826, %v4424
  %v4428 = vor.u32 %v4426, %v4427
  %v4429 = vshll.u32 2475754826, %v4423
  %v4430 = vshrl.u32 2131351028, %v4424
  %v4431 = vor.u32 %v4429, %v4430
  %v4432 = vshll.u32 2131351028, %v4423
  %v4433 = vshrl.u32 2102212464, %v4424
  %v4434 = vor.u32 %v4432, %v4433
  %v4435 = vshll.u32 2102212464, %v4423
  %v4436 = vshrl.u32 920167782, %v4424
  %v4437 = vor.u32 %v4435, %v4436
  %v4438 = vshll.u32 920167782, %v4423
  %v4439 = vshrl.u32 1326507024, %v4424
  %v4440 = vor.u32 %v4438, %v4439
  %vm4441 = vcmp.lt.s32.totalorder %v4422, 1
  %vm4442 = vcmp.lt.s32.totalorder %v4422, 2
  %vm4443 = vcmp.lt.s32.totalorder %v4422, 3
  %vm4444 = vcmp.lt.s32.totalorder %v4422, 4
  %v4445 = vsel %vm4441, %v4425, %v4428
  %v4446 = vsel %vm4444, %v4434, 2102212464
  %v4447 = vsel %vm4443, %v4431, %v4446
  %v4448 = vsel %vm4442, %v4445, %v4447
  %v4449 = vsel %vm4441, %v4428, %v4431
  %v4450 = vsel %vm4444, %v4437, 920167782
  %v4451 = vsel %vm4443, %v4434, %v4450
  %v4452 = vsel %vm4442, %v4449, %v4451
  %v4453 = vsel %vm4441, %v4431, %v4434
  %v4454 = vsel %vm4444, %v4440, 1326507024
  %v4455 = vsel %vm4443, %v4437, %v4454
  %v4456 = vsel %vm4442, %v4453, %v4455
  %v4457 = vshll.u32 %v4417, 8
  %v4458 = vmul.u32.u64.compose %v4457, %v4456
  %v4459 = vextract.low.u32 %v4458
  %v4460 = vextract.high.u32 %v4458
  %v4461 = vmul.u32.u64.compose %v4457, %v4452
  %v4462 = vextract.low.u32 %v4461
  %v4463 = vextract.high.u32 %v4461
  %v4464 = vmul.u32 %v4457, %v4448
  %v4465 = vadd.s32 %v4460, %v4462
  %vm4466 = vc.u32 %v4460, %v4462
  %v4467 = vadd.s32 %v4463, 1
  %v4468 = vsel %vm4466, %v4467, %v4463
  %v4469 = vadd.s32 %v4464, %v4468
  %v4470 = vadd.s32 %v4469, 536870912
  %v4471 = vshrl.u32 %v4470, 30
  %v4472 = vshll.u32 %v4471, 30
  %v4473 = vsub.s32 %v4469, %v4472
  %vm4474 = vcmp.lt.s32.totalorder %v4473, 0
  %v4475 = vsub.s32 0, %v4473
  %v4476 = vsel %vm4474, %v4475, %v4473
  %v4477 = vclz %v4476
  %v4478 = vsub.s32 %v4477, 2
  %vm4479 = vcmp.gt.s32.totalorder 0, %v4478
  %v4480 = vsel %vm4479, 0, %v4478
  %v4481 = vsub.s32 32, %v4480
  %v4482 = vshll.u32 %v4473, %v4480
  %v4483 = vshrl.u32 %v4465, %v4481
  %v4484 = vor.u32 %v4482, %v4483
  %v4485 = vsub.s32 4294967266, %v4480
  %v4486 = vadd.s32 %v4485, 127
  %v4487 = vshll.u32 %v4486, 23
  %v4488 = vor.u32 4788187, %v4487
  %v4489 = vand.u32 2147483647, %v4488
  %v4491 = vcvt.s32.f32 %v4484
  %v4492 = vmul.f32 %v4491, %v4489
  %v4493 = vxor.u32 %v4492, 2147483648
  %v4494 = vsel %vm4411, %v4493, %v4492
  %v4495 = vsub.s32 4, %v4471
  %v4496 = vsel %vm4411, %v4495, %v4471
  %v4497 = vsel %vm4410, %v2317, %v4494
  %v4498 = vsel %vm4410, 0, %v4496
  %v4499 = vcosq.f32.pop %v4497
  %v4500 = vsinq.f32.pop %v4497
  %vm4501 = vweird.f32 %v2317
  %v4502 = vadd.s32 %v4498, 3
  %v4503 = vand.u32 %v4502, 3
  %vm4504 = vcmp.lt.s32.totalorder %v4503, 2
  %vm4505 = vcmp.eq.s32.totalorder %v4503, 0
  %v4506 = vxor.u32 %v4500, 2147483648
  %v4507 = vsel %vm4505, %v4499, %v4506
  %vm4508 = vcmp.eq.s32.totalorder %v4503, 2
  %v4509 = vxor.u32 %v4499, 2147483648
  %v4510 = vsel %vm4508, %v4509, %v4500
  %v4511 = vsel %vm4504, %v4507, %v4510
  %v4512 = vsel %vm4501, nan, %v4511
  %v4513 = vand.u32 2147483647, %v2318
  %vm4514 = vcmp.le.f32.partialorder %v4513, 0.7853982
  %vm4515 = vcmp.lt.s32.totalorder %v2318, 0
  %v4516 = vand.u32 %v2318, 2139095040
  %v4517 = vshrl.u32 %v4516, 23
  %v4518 = vsub.s32 %v4517, 127
  %v4519 = vand.u32 2147483647, %v2318
  %v4520 = vand.u32 %v4519, 8388607
  %v4521 = vor.u32 %v4520, 8388608
  %v4522 = vsub.s32 0, %v4521
  %v4523 = vadd.s32 %v4518, 1
  %vm4524 = vcmp.gt.s32.totalorder %v4523, 0
  %v4525 = vsel %vm4524, %v4523, 0
  %v4526 = vshrl.u32 %v4525, 5
  %v4527 = vand.u32 %v4525, 31
  %v4528 = vsub.s32 32, %v4527
  %v4529 = vshrl.u32 683565275, %v4528
  %v4530 = vshll.u32 683565275, %v4527
  %v4531 = vshrl.u32 2475754826, %v4528
  %v4532 = vor.u32 %v4530, %v4531
  %v4533 = vshll.u32 2475754826, %v4527
  %v4534 = vshrl.u32 2131351028, %v4528
  %v4535 = vor.u32 %v4533, %v4534
  %v4536 = vshll.u32 2131351028, %v4527
  %v4537 = vshrl.u32 2102212464, %v4528
  %v4538 = vor.u32 %v4536, %v4537
  %v4539 = vshll.u32 2102212464, %v4527
  %v4540 = vshrl.u32 920167782, %v4528
  %v4541 = vor.u32 %v4539, %v4540
  %v4542 = vshll.u32 920167782, %v4527
  %v4543 = vshrl.u32 1326507024, %v4528
  %v4544 = vor.u32 %v4542, %v4543
  %vm4545 = vcmp.lt.s32.totalorder %v4526, 1
  %vm4546 = vcmp.lt.s32.totalorder %v4526, 2
  %vm4547 = vcmp.lt.s32.totalorder %v4526, 3
  %vm4548 = vcmp.lt.s32.totalorder %v4526, 4
  %v4549 = vsel %vm4545, %v4529, %v4532
  %v4550 = vsel %vm4548, %v4538, 2102212464
  %v4551 = vsel %vm4547, %v4535, %v4550
  %v4552 = vsel %vm4546, %v4549, %v4551
  %v4553 = vsel %vm4545, %v4532, %v4535
  %v4554 = vsel %vm4548, %v4541, 920167782
  %v4555 = vsel %vm4547, %v4538, %v4554
  %v4556 = vsel %vm4546, %v4553, %v4555
  %v4557 = vsel %vm4545, %v4535, %v4538
  %v4558 = vsel %vm4548, %v4544, 1326507024
  %v4559 = vsel %vm4547, %v4541, %v4558
  %v4560 = vsel %vm4546, %v4557, %v4559
  %v4561 = vshll.u32 %v4521, 8
  %v4562 = vmul.u32.u64.compose %v4561, %v4560
  %v4563 = vextract.low.u32 %v4562
  %v4564 = vextract.high.u32 %v4562
  %v4565 = vmul.u32.u64.compose %v4561, %v4556
  %v4566 = vextract.low.u32 %v4565
  %v4567 = vextract.high.u32 %v4565
  %v4568 = vmul.u32 %v4561, %v4552
  %v4569 = vadd.s32 %v4564, %v4566
  %vm4570 = vc.u32 %v4564, %v4566
  %v4571 = vadd.s32 %v4567, 1
  %v4572 = vsel %vm4570, %v4571, %v4567
  %v4573 = vadd.s32 %v4568, %v4572
  %v4574 = vadd.s32 %v4573, 536870912
  %v4575 = vshrl.u32 %v4574, 30
  %v4576 = vshll.u32 %v4575, 30
  %v4577 = vsub.s32 %v4573, %v4576
  %vm4578 = vcmp.lt.s32.totalorder %v4577, 0
  %v4579 = vsub.s32 0, %v4577
  %v4580 = vsel %vm4578, %v4579, %v4577
  %v4581 = vclz %v4580
  %v4582 = vsub.s32 %v4581, 2
  %vm4583 = vcmp.gt.s32.totalorder 0, %v4582
  %v4584 = vsel %vm4583, 0, %v4582
  %v4585 = vsub.s32 32, %v4584
  %v4586 = vshll.u32 %v4577, %v4584
  %v4587 = vshrl.u32 %v4569, %v4585
  %v4588 = vor.u32 %v4586, %v4587
  %v4589 = vsub.s32 4294967266, %v4584
  %v4590 = vadd.s32 %v4589, 127
  %v4591 = vshll.u32 %v4590, 23
  %v4592 = vor.u32 4788187, %v4591
  %v4593 = vand.u32 2147483647, %v4592
  %v4595 = vcvt.s32.f32 %v4588
  %v4596 = vmul.f32 %v4595, %v4593
  %v4597 = vxor.u32 %v4596, 2147483648
  %v4598 = vsel %vm4515, %v4597, %v4596
  %v4599 = vsub.s32 4, %v4575
  %v4600 = vsel %vm4515, %v4599, %v4575
  %v4601 = vsel %vm4514, %v2318, %v4598
  %v4602 = vsel %vm4514, 0, %v4600
  %v4603 = vcosq.f32.pop %v4601
  %v4604 = vsinq.f32.pop %v4601
  %vm4605 = vweird.f32 %v2318
  %v4606 = vadd.s32 %v4602, 3
  %v4607 = vand.u32 %v4606, 3
  %vm4608 = vcmp.lt.s32.totalorder %v4607, 2
  %vm4609 = vcmp.eq.s32.totalorder %v4607, 0
  %v4610 = vxor.u32 %v4604, 2147483648
  %v4611 = vsel %vm4609, %v4603, %v4610
  %vm4612 = vcmp.eq.s32.totalorder %v4607, 2
  %v4613 = vxor.u32 %v4603, 2147483648
  %v4614 = vsel %vm4612, %v4613, %v4604
  %v4615 = vsel %vm4608, %v4611, %v4614
  %v4616 = vsel %vm4605, nan, %v4615
  %v4617 = vand.u32 2147483647, %v2319
  %vm4618 = vcmp.le.f32.partialorder %v4617, 0.7853982
  %vm4619 = vcmp.lt.s32.totalorder %v2319, 0
  %v4620 = vand.u32 %v2319, 2139095040
  %v4621 = vshrl.u32 %v4620, 23
  %v4622 = vsub.s32 %v4621, 127
  %v4623 = vand.u32 2147483647, %v2319
  %v4624 = vand.u32 %v4623, 8388607
  %v4625 = vor.u32 %v4624, 8388608
  %v4626 = vsub.s32 0, %v4625
  %v4627 = vadd.s32 %v4622, 1
  %vm4628 = vcmp.gt.s32.totalorder %v4627, 0
  %v4629 = vsel %vm4628, %v4627, 0
  %v4630 = vshrl.u32 %v4629, 5
  %v4631 = vand.u32 %v4629, 31
  %v4632 = vsub.s32 32, %v4631
  %v4633 = vshrl.u32 683565275, %v4632
  %v4634 = vshll.u32 683565275, %v4631
  %v4635 = vshrl.u32 2475754826, %v4632
  %v4636 = vor.u32 %v4634, %v4635
  %v4637 = vshll.u32 2475754826, %v4631
  %v4638 = vshrl.u32 2131351028, %v4632
  %v4639 = vor.u32 %v4637, %v4638
  %v4640 = vshll.u32 2131351028, %v4631
  %v4641 = vshrl.u32 2102212464, %v4632
  %v4642 = vor.u32 %v4640, %v4641
  %v4643 = vshll.u32 2102212464, %v4631
  %v4644 = vshrl.u32 920167782, %v4632
  %v4645 = vor.u32 %v4643, %v4644
  %v4646 = vshll.u32 920167782, %v4631
  %v4647 = vshrl.u32 1326507024, %v4632
  %v4648 = vor.u32 %v4646, %v4647
  %vm4649 = vcmp.lt.s32.totalorder %v4630, 1
  %vm4650 = vcmp.lt.s32.totalorder %v4630, 2
  %vm4651 = vcmp.lt.s32.totalorder %v4630, 3
  %vm4652 = vcmp.lt.s32.totalorder %v4630, 4
  %v4653 = vsel %vm4649, %v4633, %v4636
  %v4654 = vsel %vm4652, %v4642, 2102212464
  %v4655 = vsel %vm4651, %v4639, %v4654
  %v4656 = vsel %vm4650, %v4653, %v4655
  %v4657 = vsel %vm4649, %v4636, %v4639
  %v4658 = vsel %vm4652, %v4645, 920167782
  %v4659 = vsel %vm4651, %v4642, %v4658
  %v4660 = vsel %vm4650, %v4657, %v4659
  %v4661 = vsel %vm4649, %v4639, %v4642
  %v4662 = vsel %vm4652, %v4648, 1326507024
  %v4663 = vsel %vm4651, %v4645, %v4662
  %v4664 = vsel %vm4650, %v4661, %v4663
  %v4665 = vshll.u32 %v4625, 8
  %v4666 = vmul.u32.u64.compose %v4665, %v4664
  %v4667 = vextract.low.u32 %v4666
  %v4668 = vextract.high.u32 %v4666
  %v4669 = vmul.u32.u64.compose %v4665, %v4660
  %v4670 = vextract.low.u32 %v4669
  %v4671 = vextract.high.u32 %v4669
  %v4672 = vmul.u32 %v4665, %v4656
  %v4673 = vadd.s32 %v4668, %v4670
  %vm4674 = vc.u32 %v4668, %v4670
  %v4675 = vadd.s32 %v4671, 1
  %v4676 = vsel %vm4674, %v4675, %v4671
  %v4677 = vadd.s32 %v4672, %v4676
  %v4678 = vadd.s32 %v4677, 536870912
  %v4679 = vshrl.u32 %v4678, 30
  %v4680 = vshll.u32 %v4679, 30
  %v4681 = vsub.s32 %v4677, %v4680
  %vm4682 = vcmp.lt.s32.totalorder %v4681, 0
  %v4683 = vsub.s32 0, %v4681
  %v4684 = vsel %vm4682, %v4683, %v4681
  %v4685 = vclz %v4684
  %v4686 = vsub.s32 %v4685, 2
  %vm4687 = vcmp.gt.s32.totalorder 0, %v4686
  %v4688 = vsel %vm4687, 0, %v4686
  %v4689 = vsub.s32 32, %v4688
  %v4690 = vshll.u32 %v4681, %v4688
  %v4691 = vshrl.u32 %v4673, %v4689
  %v4692 = vor.u32 %v4690, %v4691
  %v4693 = vsub.s32 4294967266, %v4688
  %v4694 = vadd.s32 %v4693, 127
  %v4695 = vshll.u32 %v4694, 23
  %v4696 = vor.u32 4788187, %v4695
  %v4697 = vand.u32 2147483647, %v4696
  %v4699 = vcvt.s32.f32 %v4692
  %v4700 = vmul.f32 %v4699, %v4697
  %v4701 = vxor.u32 %v4700, 2147483648
  %v4702 = vsel %vm4619, %v4701, %v4700
  %v4703 = vsub.s32 4, %v4679
  %v4704 = vsel %vm4619, %v4703, %v4679
  %v4705 = vsel %vm4618, %v2319, %v4702
  %v4706 = vsel %vm4618, 0, %v4704
  %v4707 = vcosq.f32.pop %v4705
  %v4708 = vsinq.f32.pop %v4705
  %vm4709 = vweird.f32 %v2319
  %v4710 = vadd.s32 %v4706, 3
  %v4711 = vand.u32 %v4710, 3
  %vm4712 = vcmp.lt.s32.totalorder %v4711, 2
  %vm4713 = vcmp.eq.s32.totalorder %v4711, 0
  %v4714 = vxor.u32 %v4708, 2147483648
  %v4715 = vsel %vm4713, %v4707, %v4714
  %vm4716 = vcmp.eq.s32.totalorder %v4711, 2
  %v4717 = vxor.u32 %v4707, 2147483648
  %v4718 = vsel %vm4716, %v4717, %v4708
  %v4719 = vsel %vm4712, %v4715, %v4718
  %v4720 = vsel %vm4709, nan, %v4719
  %v4721 = vand.u32 2147483647, %v2320
  %vm4722 = vcmp.le.f32.partialorder %v4721, 0.7853982
  %vm4723 = vcmp.lt.s32.totalorder %v2320, 0
  %v4724 = vand.u32 %v2320, 2139095040
  %v4725 = vshrl.u32 %v4724, 23
  %v4726 = vsub.s32 %v4725, 127
  %v4727 = vand.u32 2147483647, %v2320
  %v4728 = vand.u32 %v4727, 8388607
  %v4729 = vor.u32 %v4728, 8388608
  %v4730 = vsub.s32 0, %v4729
  %v4731 = vadd.s32 %v4726, 1
  %vm4732 = vcmp.gt.s32.totalorder %v4731, 0
  %v4733 = vsel %vm4732, %v4731, 0
  %v4734 = vshrl.u32 %v4733, 5
  %v4735 = vand.u32 %v4733, 31
  %v4736 = vsub.s32 32, %v4735
  %v4737 = vshrl.u32 683565275, %v4736
  %v4738 = vshll.u32 683565275, %v4735
  %v4739 = vshrl.u32 2475754826, %v4736
  %v4740 = vor.u32 %v4738, %v4739
  %v4741 = vshll.u32 2475754826, %v4735
  %v4742 = vshrl.u32 2131351028, %v4736
  %v4743 = vor.u32 %v4741, %v4742
  %v4744 = vshll.u32 2131351028, %v4735
  %v4745 = vshrl.u32 2102212464, %v4736
  %v4746 = vor.u32 %v4744, %v4745
  %v4747 = vshll.u32 2102212464, %v4735
  %v4748 = vshrl.u32 920167782, %v4736
  %v4749 = vor.u32 %v4747, %v4748
  %v4750 = vshll.u32 920167782, %v4735
  %v4751 = vshrl.u32 1326507024, %v4736
  %v4752 = vor.u32 %v4750, %v4751
  %vm4753 = vcmp.lt.s32.totalorder %v4734, 1
  %vm4754 = vcmp.lt.s32.totalorder %v4734, 2
  %vm4755 = vcmp.lt.s32.totalorder %v4734, 3
  %vm4756 = vcmp.lt.s32.totalorder %v4734, 4
  %v4757 = vsel %vm4753, %v4737, %v4740
  %v4758 = vsel %vm4756, %v4746, 2102212464
  %v4759 = vsel %vm4755, %v4743, %v4758
  %v4760 = vsel %vm4754, %v4757, %v4759
  %v4761 = vsel %vm4753, %v4740, %v4743
  %v4762 = vsel %vm4756, %v4749, 920167782
  %v4763 = vsel %vm4755, %v4746, %v4762
  %v4764 = vsel %vm4754, %v4761, %v4763
  %v4765 = vsel %vm4753, %v4743, %v4746
  %v4766 = vsel %vm4756, %v4752, 1326507024
  %v4767 = vsel %vm4755, %v4749, %v4766
  %v4768 = vsel %vm4754, %v4765, %v4767
  %v4769 = vshll.u32 %v4729, 8
  %v4770 = vmul.u32.u64.compose %v4769, %v4768
  %v4771 = vextract.low.u32 %v4770
  %v4772 = vextract.high.u32 %v4770
  %v4773 = vmul.u32.u64.compose %v4769, %v4764
  %v4774 = vextract.low.u32 %v4773
  %v4775 = vextract.high.u32 %v4773
  %v4776 = vmul.u32 %v4769, %v4760
  %v4777 = vadd.s32 %v4772, %v4774
  %vm4778 = vc.u32 %v4772, %v4774
  %v4779 = vadd.s32 %v4775, 1
  %v4780 = vsel %vm4778, %v4779, %v4775
  %v4781 = vadd.s32 %v4776, %v4780
  %v4782 = vadd.s32 %v4781, 536870912
  %v4783 = vshrl.u32 %v4782, 30
  %v4784 = vshll.u32 %v4783, 30
  %v4785 = vsub.s32 %v4781, %v4784
  %vm4786 = vcmp.lt.s32.totalorder %v4785, 0
  %v4787 = vsub.s32 0, %v4785
  %v4788 = vsel %vm4786, %v4787, %v4785
  %v4789 = vclz %v4788
  %v4790 = vsub.s32 %v4789, 2
  %vm4791 = vcmp.gt.s32.totalorder 0, %v4790
  %v4792 = vsel %vm4791, 0, %v4790
  %v4793 = vsub.s32 32, %v4792
  %v4794 = vshll.u32 %v4785, %v4792
  %v4795 = vshrl.u32 %v4777, %v4793
  %v4796 = vor.u32 %v4794, %v4795
  %v4797 = vsub.s32 4294967266, %v4792
  %v4798 = vadd.s32 %v4797, 127
  %v4799 = vshll.u32 %v4798, 23
  %v4800 = vor.u32 4788187, %v4799
  %v4801 = vand.u32 2147483647, %v4800
  %v4803 = vcvt.s32.f32 %v4796
  %v4804 = vmul.f32 %v4803, %v4801
  %v4805 = vxor.u32 %v4804, 2147483648
  %v4806 = vsel %vm4723, %v4805, %v4804
  %v4807 = vsub.s32 4, %v4783
  %v4808 = vsel %vm4723, %v4807, %v4783
  %v4809 = vsel %vm4722, %v2320, %v4806
  %v4810 = vsel %vm4722, 0, %v4808
  %v4811 = vcosq.f32.pop %v4809
  %v4812 = vsinq.f32.pop %v4809
  %vm4813 = vweird.f32 %v2320
  %v4814 = vadd.s32 %v4810, 3
  %v4815 = vand.u32 %v4814, 3
  %vm4816 = vcmp.lt.s32.totalorder %v4815, 2
  %vm4817 = vcmp.eq.s32.totalorder %v4815, 0
  %v4818 = vxor.u32 %v4812, 2147483648
  %v4819 = vsel %vm4817, %v4811, %v4818
  %vm4820 = vcmp.eq.s32.totalorder %v4815, 2
  %v4821 = vxor.u32 %v4811, 2147483648
  %v4822 = vsel %vm4820, %v4821, %v4812
  %v4823 = vsel %vm4816, %v4819, %v4822
  %v4824 = vsel %vm4813, nan, %v4823
  %v4825 = vand.u32 2147483647, %v2321
  %vm4826 = vcmp.le.f32.partialorder %v4825, 0.7853982
  %vm4827 = vcmp.lt.s32.totalorder %v2321, 0
  %v4828 = vand.u32 %v2321, 2139095040
  %v4829 = vshrl.u32 %v4828, 23
  %v4830 = vsub.s32 %v4829, 127
  %v4831 = vand.u32 2147483647, %v2321
  %v4832 = vand.u32 %v4831, 8388607
  %v4833 = vor.u32 %v4832, 8388608
  %v4834 = vsub.s32 0, %v4833
  %v4835 = vadd.s32 %v4830, 1
  %vm4836 = vcmp.gt.s32.totalorder %v4835, 0
  %v4837 = vsel %vm4836, %v4835, 0
  %v4838 = vshrl.u32 %v4837, 5
  %v4839 = vand.u32 %v4837, 31
  %v4840 = vsub.s32 32, %v4839
  %v4841 = vshrl.u32 683565275, %v4840
  %v4842 = vshll.u32 683565275, %v4839
  %v4843 = vshrl.u32 2475754826, %v4840
  %v4844 = vor.u32 %v4842, %v4843
  %v4845 = vshll.u32 2475754826, %v4839
  %v4846 = vshrl.u32 2131351028, %v4840
  %v4847 = vor.u32 %v4845, %v4846
  %v4848 = vshll.u32 2131351028, %v4839
  %v4849 = vshrl.u32 2102212464, %v4840
  %v4850 = vor.u32 %v4848, %v4849
  %v4851 = vshll.u32 2102212464, %v4839
  %v4852 = vshrl.u32 920167782, %v4840
  %v4853 = vor.u32 %v4851, %v4852
  %v4854 = vshll.u32 920167782, %v4839
  %v4855 = vshrl.u32 1326507024, %v4840
  %v4856 = vor.u32 %v4854, %v4855
  %vm4857 = vcmp.lt.s32.totalorder %v4838, 1
  %vm4858 = vcmp.lt.s32.totalorder %v4838, 2
  %vm4859 = vcmp.lt.s32.totalorder %v4838, 3
  %vm4860 = vcmp.lt.s32.totalorder %v4838, 4
  %v4861 = vsel %vm4857, %v4841, %v4844
  %v4862 = vsel %vm4860, %v4850, 2102212464
  %v4863 = vsel %vm4859, %v4847, %v4862
  %v4864 = vsel %vm4858, %v4861, %v4863
  %v4865 = vsel %vm4857, %v4844, %v4847
  %v4866 = vsel %vm4860, %v4853, 920167782
  %v4867 = vsel %vm4859, %v4850, %v4866
  %v4868 = vsel %vm4858, %v4865, %v4867
  %v4869 = vsel %vm4857, %v4847, %v4850
  %v4870 = vsel %vm4860, %v4856, 1326507024
  %v4871 = vsel %vm4859, %v4853, %v4870
  %v4872 = vsel %vm4858, %v4869, %v4871
  %v4873 = vshll.u32 %v4833, 8
  %v4874 = vmul.u32.u64.compose %v4873, %v4872
  %v4875 = vextract.low.u32 %v4874
  %v4876 = vextract.high.u32 %v4874
  %v4877 = vmul.u32.u64.compose %v4873, %v4868
  %v4878 = vextract.low.u32 %v4877
  %v4879 = vextract.high.u32 %v4877
  %v4880 = vmul.u32 %v4873, %v4864
  %v4881 = vadd.s32 %v4876, %v4878
  %vm4882 = vc.u32 %v4876, %v4878
  %v4883 = vadd.s32 %v4879, 1
  %v4884 = vsel %vm4882, %v4883, %v4879
  %v4885 = vadd.s32 %v4880, %v4884
  %v4886 = vadd.s32 %v4885, 536870912
  %v4887 = vshrl.u32 %v4886, 30
  %v4888 = vshll.u32 %v4887, 30
  %v4889 = vsub.s32 %v4885, %v4888
  %vm4890 = vcmp.lt.s32.totalorder %v4889, 0
  %v4891 = vsub.s32 0, %v4889
  %v4892 = vsel %vm4890, %v4891, %v4889
  %v4893 = vclz %v4892
  %v4894 = vsub.s32 %v4893, 2
  %vm4895 = vcmp.gt.s32.totalorder 0, %v4894
  %v4896 = vsel %vm4895, 0, %v4894
  %v4897 = vsub.s32 32, %v4896
  %v4898 = vshll.u32 %v4889, %v4896
  %v4899 = vshrl.u32 %v4881, %v4897
  %v4900 = vor.u32 %v4898, %v4899
  %v4901 = vsub.s32 4294967266, %v4896
  %v4902 = vadd.s32 %v4901, 127
  %v4903 = vshll.u32 %v4902, 23
  %v4904 = vor.u32 4788187, %v4903
  %v4905 = vand.u32 2147483647, %v4904
  %v4907 = vcvt.s32.f32 %v4900
  %v4908 = vmul.f32 %v4907, %v4905
  %v4909 = vxor.u32 %v4908, 2147483648
  %v4910 = vsel %vm4827, %v4909, %v4908
  %v4911 = vsub.s32 4, %v4887
  %v4912 = vsel %vm4827, %v4911, %v4887
  %v4913 = vsel %vm4826, %v2321, %v4910
  %v4914 = vsel %vm4826, 0, %v4912
  %v4915 = vcosq.f32.pop %v4913
  %v4916 = vsinq.f32.pop %v4913
  %vm4917 = vweird.f32 %v2321
  %v4918 = vadd.s32 %v4914, 3
  %v4919 = vand.u32 %v4918, 3
  %vm4920 = vcmp.lt.s32.totalorder %v4919, 2
  %vm4921 = vcmp.eq.s32.totalorder %v4919, 0
  %v4922 = vxor.u32 %v4916, 2147483648
  %v4923 = vsel %vm4921, %v4915, %v4922
  %vm4924 = vcmp.eq.s32.totalorder %v4919, 2
  %v4925 = vxor.u32 %v4915, 2147483648
  %v4926 = vsel %vm4924, %v4925, %v4916
  %v4927 = vsel %vm4920, %v4923, %v4926
  %v4928 = vsel %vm4917, nan, %v4927
  %v4929 = vand.u32 2147483647, %v2322
  %vm4930 = vcmp.le.f32.partialorder %v4929, 0.7853982
  %vm4931 = vcmp.lt.s32.totalorder %v2322, 0
  %v4932 = vand.u32 %v2322, 2139095040
  %v4933 = vshrl.u32 %v4932, 23
  %v4934 = vsub.s32 %v4933, 127
  %v4935 = vand.u32 2147483647, %v2322
  %v4936 = vand.u32 %v4935, 8388607
  %v4937 = vor.u32 %v4936, 8388608
  %v4938 = vsub.s32 0, %v4937
  %v4939 = vadd.s32 %v4934, 1
  %vm4940 = vcmp.gt.s32.totalorder %v4939, 0
  %v4941 = vsel %vm4940, %v4939, 0
  %v4942 = vshrl.u32 %v4941, 5
  %v4943 = vand.u32 %v4941, 31
  %v4944 = vsub.s32 32, %v4943
  %v4945 = vshrl.u32 683565275, %v4944
  %v4946 = vshll.u32 683565275, %v4943
  %v4947 = vshrl.u32 2475754826, %v4944
  %v4948 = vor.u32 %v4946, %v4947
  %v4949 = vshll.u32 2475754826, %v4943
  %v4950 = vshrl.u32 2131351028, %v4944
  %v4951 = vor.u32 %v4949, %v4950
  %v4952 = vshll.u32 2131351028, %v4943
  %v4953 = vshrl.u32 2102212464, %v4944
  %v4954 = vor.u32 %v4952, %v4953
  %v4955 = vshll.u32 2102212464, %v4943
  %v4956 = vshrl.u32 920167782, %v4944
  %v4957 = vor.u32 %v4955, %v4956
  %v4958 = vshll.u32 920167782, %v4943
  %v4959 = vshrl.u32 1326507024, %v4944
  %v4960 = vor.u32 %v4958, %v4959
  %vm4961 = vcmp.lt.s32.totalorder %v4942, 1
  %vm4962 = vcmp.lt.s32.totalorder %v4942, 2
  %vm4963 = vcmp.lt.s32.totalorder %v4942, 3
  %vm4964 = vcmp.lt.s32.totalorder %v4942, 4
  %v4965 = vsel %vm4961, %v4945, %v4948
  %v4966 = vsel %vm4964, %v4954, 2102212464
  %v4967 = vsel %vm4963, %v4951, %v4966
  %v4968 = vsel %vm4962, %v4965, %v4967
  %v4969 = vsel %vm4961, %v4948, %v4951
  %v4970 = vsel %vm4964, %v4957, 920167782
  %v4971 = vsel %vm4963, %v4954, %v4970
  %v4972 = vsel %vm4962, %v4969, %v4971
  %v4973 = vsel %vm4961, %v4951, %v4954
  %v4974 = vsel %vm4964, %v4960, 1326507024
  %v4975 = vsel %vm4963, %v4957, %v4974
  %v4976 = vsel %vm4962, %v4973, %v4975
  %v4977 = vshll.u32 %v4937, 8
  %v4978 = vmul.u32.u64.compose %v4977, %v4976
  %v4979 = vextract.low.u32 %v4978
  %v4980 = vextract.high.u32 %v4978
  %v4981 = vmul.u32.u64.compose %v4977, %v4972
  %v4982 = vextract.low.u32 %v4981
  %v4983 = vextract.high.u32 %v4981
  %v4984 = vmul.u32 %v4977, %v4968
  %v4985 = vadd.s32 %v4980, %v4982
  %vm4986 = vc.u32 %v4980, %v4982
  %v4987 = vadd.s32 %v4983, 1
  %v4988 = vsel %vm4986, %v4987, %v4983
  %v4989 = vadd.s32 %v4984, %v4988
  %v4990 = vadd.s32 %v4989, 536870912
  %v4991 = vshrl.u32 %v4990, 30
  %v4992 = vshll.u32 %v4991, 30
  %v4993 = vsub.s32 %v4989, %v4992
  %vm4994 = vcmp.lt.s32.totalorder %v4993, 0
  %v4995 = vsub.s32 0, %v4993
  %v4996 = vsel %vm4994, %v4995, %v4993
  %v4997 = vclz %v4996
  %v4998 = vsub.s32 %v4997, 2
  %vm4999 = vcmp.gt.s32.totalorder 0, %v4998
  %v5000 = vsel %vm4999, 0, %v4998
  %v5001 = vsub.s32 32, %v5000
  %v5002 = vshll.u32 %v4993, %v5000
  %v5003 = vshrl.u32 %v4985, %v5001
  %v5004 = vor.u32 %v5002, %v5003
  %v5005 = vsub.s32 4294967266, %v5000
  %v5006 = vadd.s32 %v5005, 127
  %v5007 = vshll.u32 %v5006, 23
  %v5008 = vor.u32 4788187, %v5007
  %v5009 = vand.u32 2147483647, %v5008
  %v5011 = vcvt.s32.f32 %v5004
  %v5012 = vmul.f32 %v5011, %v5009
  %v5013 = vxor.u32 %v5012, 2147483648
  %v5014 = vsel %vm4931, %v5013, %v5012
  %v5015 = vsub.s32 4, %v4991
  %v5016 = vsel %vm4931, %v5015, %v4991
  %v5017 = vsel %vm4930, %v2322, %v5014
  %v5018 = vsel %vm4930, 0, %v5016
  %v5019 = vcosq.f32.pop %v5017
  %v5020 = vsinq.f32.pop %v5017
  %vm5021 = vweird.f32 %v2322
  %v5022 = vadd.s32 %v5018, 3
  %v5023 = vand.u32 %v5022, 3
  %vm5024 = vcmp.lt.s32.totalorder %v5023, 2
  %vm5025 = vcmp.eq.s32.totalorder %v5023, 0
  %v5026 = vxor.u32 %v5020, 2147483648
  %v5027 = vsel %vm5025, %v5019, %v5026
  %vm5028 = vcmp.eq.s32.totalorder %v5023, 2
  %v5029 = vxor.u32 %v5019, 2147483648
  %v5030 = vsel %vm5028, %v5029, %v5020
  %v5031 = vsel %vm5024, %v5027, %v5030
  %v5032 = vsel %vm5021, nan, %v5031
  %v5033 = vand.u32 2147483647, %v2323
  %vm5034 = vcmp.le.f32.partialorder %v5033, 0.7853982
  %vm5035 = vcmp.lt.s32.totalorder %v2323, 0
  %v5036 = vand.u32 %v2323, 2139095040
  %v5037 = vshrl.u32 %v5036, 23
  %v5038 = vsub.s32 %v5037, 127
  %v5039 = vand.u32 2147483647, %v2323
  %v5040 = vand.u32 %v5039, 8388607
  %v5041 = vor.u32 %v5040, 8388608
  %v5042 = vsub.s32 0, %v5041
  %v5043 = vadd.s32 %v5038, 1
  %vm5044 = vcmp.gt.s32.totalorder %v5043, 0
  %v5045 = vsel %vm5044, %v5043, 0
  %v5046 = vshrl.u32 %v5045, 5
  %v5047 = vand.u32 %v5045, 31
  %v5048 = vsub.s32 32, %v5047
  %v5049 = vshrl.u32 683565275, %v5048
  %v5050 = vshll.u32 683565275, %v5047
  %v5051 = vshrl.u32 2475754826, %v5048
  %v5052 = vor.u32 %v5050, %v5051
  %v5053 = vshll.u32 2475754826, %v5047
  %v5054 = vshrl.u32 2131351028, %v5048
  %v5055 = vor.u32 %v5053, %v5054
  %v5056 = vshll.u32 2131351028, %v5047
  %v5057 = vshrl.u32 2102212464, %v5048
  %v5058 = vor.u32 %v5056, %v5057
  %v5059 = vshll.u32 2102212464, %v5047
  %v5060 = vshrl.u32 920167782, %v5048
  %v5061 = vor.u32 %v5059, %v5060
  %v5062 = vshll.u32 920167782, %v5047
  %v5063 = vshrl.u32 1326507024, %v5048
  %v5064 = vor.u32 %v5062, %v5063
  %vm5065 = vcmp.lt.s32.totalorder %v5046, 1
  %vm5066 = vcmp.lt.s32.totalorder %v5046, 2
  %vm5067 = vcmp.lt.s32.totalorder %v5046, 3
  %vm5068 = vcmp.lt.s32.totalorder %v5046, 4
  %v5069 = vsel %vm5065, %v5049, %v5052
  %v5070 = vsel %vm5068, %v5058, 2102212464
  %v5071 = vsel %vm5067, %v5055, %v5070
  %v5072 = vsel %vm5066, %v5069, %v5071
  %v5073 = vsel %vm5065, %v5052, %v5055
  %v5074 = vsel %vm5068, %v5061, 920167782
  %v5075 = vsel %vm5067, %v5058, %v5074
  %v5076 = vsel %vm5066, %v5073, %v5075
  %v5077 = vsel %vm5065, %v5055, %v5058
  %v5078 = vsel %vm5068, %v5064, 1326507024
  %v5079 = vsel %vm5067, %v5061, %v5078
  %v5080 = vsel %vm5066, %v5077, %v5079
  %v5081 = vshll.u32 %v5041, 8
  %v5082 = vmul.u32.u64.compose %v5081, %v5080
  %v5083 = vextract.low.u32 %v5082
  %v5084 = vextract.high.u32 %v5082
  %v5085 = vmul.u32.u64.compose %v5081, %v5076
  %v5086 = vextract.low.u32 %v5085
  %v5087 = vextract.high.u32 %v5085
  %v5088 = vmul.u32 %v5081, %v5072
  %v5089 = vadd.s32 %v5084, %v5086
  %vm5090 = vc.u32 %v5084, %v5086
  %v5091 = vadd.s32 %v5087, 1
  %v5092 = vsel %vm5090, %v5091, %v5087
  %v5093 = vadd.s32 %v5088, %v5092
  %v5094 = vadd.s32 %v5093, 536870912
  %v5095 = vshrl.u32 %v5094, 30
  %v5096 = vshll.u32 %v5095, 30
  %v5097 = vsub.s32 %v5093, %v5096
  %vm5098 = vcmp.lt.s32.totalorder %v5097, 0
  %v5099 = vsub.s32 0, %v5097
  %v5100 = vsel %vm5098, %v5099, %v5097
  %v5101 = vclz %v5100
  %v5102 = vsub.s32 %v5101, 2
  %vm5103 = vcmp.gt.s32.totalorder 0, %v5102
  %v5104 = vsel %vm5103, 0, %v5102
  %v5105 = vsub.s32 32, %v5104
  %v5106 = vshll.u32 %v5097, %v5104
  %v5107 = vshrl.u32 %v5089, %v5105
  %v5108 = vor.u32 %v5106, %v5107
  %v5109 = vsub.s32 4294967266, %v5104
  %v5110 = vadd.s32 %v5109, 127
  %v5111 = vshll.u32 %v5110, 23
  %v5112 = vor.u32 4788187, %v5111
  %v5113 = vand.u32 2147483647, %v5112
  %v5115 = vcvt.s32.f32 %v5108
  %v5116 = vmul.f32 %v5115, %v5113
  %v5117 = vxor.u32 %v5116, 2147483648
  %v5118 = vsel %vm5035, %v5117, %v5116
  %v5119 = vsub.s32 4, %v5095
  %v5120 = vsel %vm5035, %v5119, %v5095
  %v5121 = vsel %vm5034, %v2323, %v5118
  %v5122 = vsel %vm5034, 0, %v5120
  %v5123 = vcosq.f32.pop %v5121
  %v5124 = vsinq.f32.pop %v5121
  %vm5125 = vweird.f32 %v2323
  %v5126 = vadd.s32 %v5122, 3
  %v5127 = vand.u32 %v5126, 3
  %vm5128 = vcmp.lt.s32.totalorder %v5127, 2
  %vm5129 = vcmp.eq.s32.totalorder %v5127, 0
  %v5130 = vxor.u32 %v5124, 2147483648
  %v5131 = vsel %vm5129, %v5123, %v5130
  %vm5132 = vcmp.eq.s32.totalorder %v5127, 2
  %v5133 = vxor.u32 %v5123, 2147483648
  %v5134 = vsel %vm5132, %v5133, %v5124
  %v5135 = vsel %vm5128, %v5131, %v5134
  %v5136 = vsel %vm5125, nan, %v5135
  %v5137 = vand.u32 2147483647, %v2324
  %vm5138 = vcmp.le.f32.partialorder %v5137, 0.7853982
  %vm5139 = vcmp.lt.s32.totalorder %v2324, 0
  %v5140 = vand.u32 %v2324, 2139095040
  %v5141 = vshrl.u32 %v5140, 23
  %v5142 = vsub.s32 %v5141, 127
  %v5143 = vand.u32 2147483647, %v2324
  %v5144 = vand.u32 %v5143, 8388607
  %v5145 = vor.u32 %v5144, 8388608
  %v5146 = vsub.s32 0, %v5145
  %v5147 = vadd.s32 %v5142, 1
  %vm5148 = vcmp.gt.s32.totalorder %v5147, 0
  %v5149 = vsel %vm5148, %v5147, 0
  %v5150 = vshrl.u32 %v5149, 5
  %v5151 = vand.u32 %v5149, 31
  %v5152 = vsub.s32 32, %v5151
  %v5153 = vshrl.u32 683565275, %v5152
  %v5154 = vshll.u32 683565275, %v5151
  %v5155 = vshrl.u32 2475754826, %v5152
  %v5156 = vor.u32 %v5154, %v5155
  %v5157 = vshll.u32 2475754826, %v5151
  %v5158 = vshrl.u32 2131351028, %v5152
  %v5159 = vor.u32 %v5157, %v5158
  %v5160 = vshll.u32 2131351028, %v5151
  %v5161 = vshrl.u32 2102212464, %v5152
  %v5162 = vor.u32 %v5160, %v5161
  %v5163 = vshll.u32 2102212464, %v5151
  %v5164 = vshrl.u32 920167782, %v5152
  %v5165 = vor.u32 %v5163, %v5164
  %v5166 = vshll.u32 920167782, %v5151
  %v5167 = vshrl.u32 1326507024, %v5152
  %v5168 = vor.u32 %v5166, %v5167
  %vm5169 = vcmp.lt.s32.totalorder %v5150, 1
  %vm5170 = vcmp.lt.s32.totalorder %v5150, 2
  %vm5171 = vcmp.lt.s32.totalorder %v5150, 3
  %vm5172 = vcmp.lt.s32.totalorder %v5150, 4
  %v5173 = vsel %vm5169, %v5153, %v5156
  %v5174 = vsel %vm5172, %v5162, 2102212464
  %v5175 = vsel %vm5171, %v5159, %v5174
  %v5176 = vsel %vm5170, %v5173, %v5175
  %v5177 = vsel %vm5169, %v5156, %v5159
  %v5178 = vsel %vm5172, %v5165, 920167782
  %v5179 = vsel %vm5171, %v5162, %v5178
  %v5180 = vsel %vm5170, %v5177, %v5179
  %v5181 = vsel %vm5169, %v5159, %v5162
  %v5182 = vsel %vm5172, %v5168, 1326507024
  %v5183 = vsel %vm5171, %v5165, %v5182
  %v5184 = vsel %vm5170, %v5181, %v5183
  %v5185 = vshll.u32 %v5145, 8
  %v5186 = vmul.u32.u64.compose %v5185, %v5184
  %v5187 = vextract.low.u32 %v5186
  %v5188 = vextract.high.u32 %v5186
  %v5189 = vmul.u32.u64.compose %v5185, %v5180
  %v5190 = vextract.low.u32 %v5189
  %v5191 = vextract.high.u32 %v5189
  %v5192 = vmul.u32 %v5185, %v5176
  %v5193 = vadd.s32 %v5188, %v5190
  %vm5194 = vc.u32 %v5188, %v5190
  %v5195 = vadd.s32 %v5191, 1
  %v5196 = vsel %vm5194, %v5195, %v5191
  %v5197 = vadd.s32 %v5192, %v5196
  %v5198 = vadd.s32 %v5197, 536870912
  %v5199 = vshrl.u32 %v5198, 30
  %v5200 = vshll.u32 %v5199, 30
  %v5201 = vsub.s32 %v5197, %v5200
  %vm5202 = vcmp.lt.s32.totalorder %v5201, 0
  %v5203 = vsub.s32 0, %v5201
  %v5204 = vsel %vm5202, %v5203, %v5201
  %v5205 = vclz %v5204
  %v5206 = vsub.s32 %v5205, 2
  %vm5207 = vcmp.gt.s32.totalorder 0, %v5206
  %v5208 = vsel %vm5207, 0, %v5206
  %v5209 = vsub.s32 32, %v5208
  %v5210 = vshll.u32 %v5201, %v5208
  %v5211 = vshrl.u32 %v5193, %v5209
  %v5212 = vor.u32 %v5210, %v5211
  %v5213 = vsub.s32 4294967266, %v5208
  %v5214 = vadd.s32 %v5213, 127
  %v5215 = vshll.u32 %v5214, 23
  %v5216 = vor.u32 4788187, %v5215
  %v5217 = vand.u32 2147483647, %v5216
  %v5219 = vcvt.s32.f32 %v5212
  %v5220 = vmul.f32 %v5219, %v5217
  %v5221 = vxor.u32 %v5220, 2147483648
  %v5222 = vsel %vm5139, %v5221, %v5220
  %v5223 = vsub.s32 4, %v5199
  %v5224 = vsel %vm5139, %v5223, %v5199
  %v5225 = vsel %vm5138, %v2324, %v5222
  %v5226 = vsel %vm5138, 0, %v5224
  %v5227 = vcosq.f32.pop %v5225
  %v5228 = vsinq.f32.pop %v5225
  %vm5229 = vweird.f32 %v2324
  %v5230 = vadd.s32 %v5226, 3
  %v5231 = vand.u32 %v5230, 3
  %vm5232 = vcmp.lt.s32.totalorder %v5231, 2
  %vm5233 = vcmp.eq.s32.totalorder %v5231, 0
  %v5234 = vxor.u32 %v5228, 2147483648
  %v5235 = vsel %vm5233, %v5227, %v5234
  %vm5236 = vcmp.eq.s32.totalorder %v5231, 2
  %v5237 = vxor.u32 %v5227, 2147483648
  %v5238 = vsel %vm5236, %v5237, %v5228
  %v5239 = vsel %vm5232, %v5235, %v5238
  %v5240 = vsel %vm5229, nan, %v5239
  %v5241 = vand.u32 2147483647, %v2325
  %vm5242 = vcmp.le.f32.partialorder %v5241, 0.7853982
  %vm5243 = vcmp.lt.s32.totalorder %v2325, 0
  %v5244 = vand.u32 %v2325, 2139095040
  %v5245 = vshrl.u32 %v5244, 23
  %v5246 = vsub.s32 %v5245, 127
  %v5247 = vand.u32 2147483647, %v2325
  %v5248 = vand.u32 %v5247, 8388607
  %v5249 = vor.u32 %v5248, 8388608
  %v5250 = vsub.s32 0, %v5249
  %v5251 = vadd.s32 %v5246, 1
  %vm5252 = vcmp.gt.s32.totalorder %v5251, 0
  %v5253 = vsel %vm5252, %v5251, 0
  %v5254 = vshrl.u32 %v5253, 5
  %v5255 = vand.u32 %v5253, 31
  %v5256 = vsub.s32 32, %v5255
  %v5257 = vshrl.u32 683565275, %v5256
  %v5258 = vshll.u32 683565275, %v5255
  %v5259 = vshrl.u32 2475754826, %v5256
  %v5260 = vor.u32 %v5258, %v5259
  %v5261 = vshll.u32 2475754826, %v5255
  %v5262 = vshrl.u32 2131351028, %v5256
  %v5263 = vor.u32 %v5261, %v5262
  %v5264 = vshll.u32 2131351028, %v5255
  %v5265 = vshrl.u32 2102212464, %v5256
  %v5266 = vor.u32 %v5264, %v5265
  %v5267 = vshll.u32 2102212464, %v5255
  %v5268 = vshrl.u32 920167782, %v5256
  %v5269 = vor.u32 %v5267, %v5268
  %v5270 = vshll.u32 920167782, %v5255
  %v5271 = vshrl.u32 1326507024, %v5256
  %v5272 = vor.u32 %v5270, %v5271
  %vm5273 = vcmp.lt.s32.totalorder %v5254, 1
  %vm5274 = vcmp.lt.s32.totalorder %v5254, 2
  %vm5275 = vcmp.lt.s32.totalorder %v5254, 3
  %vm5276 = vcmp.lt.s32.totalorder %v5254, 4
  %v5277 = vsel %vm5273, %v5257, %v5260
  %v5278 = vsel %vm5276, %v5266, 2102212464
  %v5279 = vsel %vm5275, %v5263, %v5278
  %v5280 = vsel %vm5274, %v5277, %v5279
  %v5281 = vsel %vm5273, %v5260, %v5263
  %v5282 = vsel %vm5276, %v5269, 920167782
  %v5283 = vsel %vm5275, %v5266, %v5282
  %v5284 = vsel %vm5274, %v5281, %v5283
  %v5285 = vsel %vm5273, %v5263, %v5266
  %v5286 = vsel %vm5276, %v5272, 1326507024
  %v5287 = vsel %vm5275, %v5269, %v5286
  %v5288 = vsel %vm5274, %v5285, %v5287
  %v5289 = vshll.u32 %v5249, 8
  %v5290 = vmul.u32.u64.compose %v5289, %v5288
  %v5291 = vextract.low.u32 %v5290
  %v5292 = vextract.high.u32 %v5290
  %v5293 = vmul.u32.u64.compose %v5289, %v5284
  %v5294 = vextract.low.u32 %v5293
  %v5295 = vextract.high.u32 %v5293
  %v5296 = vmul.u32 %v5289, %v5280
  %v5297 = vadd.s32 %v5292, %v5294
  %vm5298 = vc.u32 %v5292, %v5294
  %v5299 = vadd.s32 %v5295, 1
  %v5300 = vsel %vm5298, %v5299, %v5295
  %v5301 = vadd.s32 %v5296, %v5300
  %v5302 = vadd.s32 %v5301, 536870912
  %v5303 = vshrl.u32 %v5302, 30
  %v5304 = vshll.u32 %v5303, 30
  %v5305 = vsub.s32 %v5301, %v5304
  %vm5306 = vcmp.lt.s32.totalorder %v5305, 0
  %v5307 = vsub.s32 0, %v5305
  %v5308 = vsel %vm5306, %v5307, %v5305
  %v5309 = vclz %v5308
  %v5310 = vsub.s32 %v5309, 2
  %vm5311 = vcmp.gt.s32.totalorder 0, %v5310
  %v5312 = vsel %vm5311, 0, %v5310
  %v5313 = vsub.s32 32, %v5312
  %v5314 = vshll.u32 %v5305, %v5312
  %v5315 = vshrl.u32 %v5297, %v5313
  %v5316 = vor.u32 %v5314, %v5315
  %v5317 = vsub.s32 4294967266, %v5312
  %v5318 = vadd.s32 %v5317, 127
  %v5319 = vshll.u32 %v5318, 23
  %v5320 = vor.u32 4788187, %v5319
  %v5321 = vand.u32 2147483647, %v5320
  %v5323 = vcvt.s32.f32 %v5316
  %v5324 = vmul.f32 %v5323, %v5321
  %v5325 = vxor.u32 %v5324, 2147483648
  %v5326 = vsel %vm5243, %v5325, %v5324
  %v5327 = vsub.s32 4, %v5303
  %v5328 = vsel %vm5243, %v5327, %v5303
  %v5329 = vsel %vm5242, %v2325, %v5326
  %v5330 = vsel %vm5242, 0, %v5328
  %v5331 = vcosq.f32.pop %v5329
  %v5332 = vsinq.f32.pop %v5329
  %vm5333 = vweird.f32 %v2325
  %v5334 = vadd.s32 %v5330, 3
  %v5335 = vand.u32 %v5334, 3
  %vm5336 = vcmp.lt.s32.totalorder %v5335, 2
  %vm5337 = vcmp.eq.s32.totalorder %v5335, 0
  %v5338 = vxor.u32 %v5332, 2147483648
  %v5339 = vsel %vm5337, %v5331, %v5338
  %vm5340 = vcmp.eq.s32.totalorder %v5335, 2
  %v5341 = vxor.u32 %v5331, 2147483648
  %v5342 = vsel %vm5340, %v5341, %v5332
  %v5343 = vsel %vm5336, %v5339, %v5342
  %v5344 = vsel %vm5333, nan, %v5343
  %v5345 = vand.u32 2147483647, %v2326
  %vm5346 = vcmp.le.f32.partialorder %v5345, 0.7853982
  %vm5347 = vcmp.lt.s32.totalorder %v2326, 0
  %v5348 = vand.u32 %v2326, 2139095040
  %v5349 = vshrl.u32 %v5348, 23
  %v5350 = vsub.s32 %v5349, 127
  %v5351 = vand.u32 2147483647, %v2326
  %v5352 = vand.u32 %v5351, 8388607
  %v5353 = vor.u32 %v5352, 8388608
  %v5354 = vsub.s32 0, %v5353
  %v5355 = vadd.s32 %v5350, 1
  %vm5356 = vcmp.gt.s32.totalorder %v5355, 0
  %v5357 = vsel %vm5356, %v5355, 0
  %v5358 = vshrl.u32 %v5357, 5
  %v5359 = vand.u32 %v5357, 31
  %v5360 = vsub.s32 32, %v5359
  %v5361 = vshrl.u32 683565275, %v5360
  %v5362 = vshll.u32 683565275, %v5359
  %v5363 = vshrl.u32 2475754826, %v5360
  %v5364 = vor.u32 %v5362, %v5363
  %v5365 = vshll.u32 2475754826, %v5359
  %v5366 = vshrl.u32 2131351028, %v5360
  %v5367 = vor.u32 %v5365, %v5366
  %v5368 = vshll.u32 2131351028, %v5359
  %v5369 = vshrl.u32 2102212464, %v5360
  %v5370 = vor.u32 %v5368, %v5369
  %v5371 = vshll.u32 2102212464, %v5359
  %v5372 = vshrl.u32 920167782, %v5360
  %v5373 = vor.u32 %v5371, %v5372
  %v5374 = vshll.u32 920167782, %v5359
  %v5375 = vshrl.u32 1326507024, %v5360
  %v5376 = vor.u32 %v5374, %v5375
  %vm5377 = vcmp.lt.s32.totalorder %v5358, 1
  %vm5378 = vcmp.lt.s32.totalorder %v5358, 2
  %vm5379 = vcmp.lt.s32.totalorder %v5358, 3
  %vm5380 = vcmp.lt.s32.totalorder %v5358, 4
  %v5381 = vsel %vm5377, %v5361, %v5364
  %v5382 = vsel %vm5380, %v5370, 2102212464
  %v5383 = vsel %vm5379, %v5367, %v5382
  %v5384 = vsel %vm5378, %v5381, %v5383
  %v5385 = vsel %vm5377, %v5364, %v5367
  %v5386 = vsel %vm5380, %v5373, 920167782
  %v5387 = vsel %vm5379, %v5370, %v5386
  %v5388 = vsel %vm5378, %v5385, %v5387
  %v5389 = vsel %vm5377, %v5367, %v5370
  %v5390 = vsel %vm5380, %v5376, 1326507024
  %v5391 = vsel %vm5379, %v5373, %v5390
  %v5392 = vsel %vm5378, %v5389, %v5391
  %v5393 = vshll.u32 %v5353, 8
  %v5394 = vmul.u32.u64.compose %v5393, %v5392
  %v5395 = vextract.low.u32 %v5394
  %v5396 = vextract.high.u32 %v5394
  %v5397 = vmul.u32.u64.compose %v5393, %v5388
  %v5398 = vextract.low.u32 %v5397
  %v5399 = vextract.high.u32 %v5397
  %v5400 = vmul.u32 %v5393, %v5384
  %v5401 = vadd.s32 %v5396, %v5398
  %vm5402 = vc.u32 %v5396, %v5398
  %v5403 = vadd.s32 %v5399, 1
  %v5404 = vsel %vm5402, %v5403, %v5399
  %v5405 = vadd.s32 %v5400, %v5404
  %v5406 = vadd.s32 %v5405, 536870912
  %v5407 = vshrl.u32 %v5406, 30
  %v5408 = vshll.u32 %v5407, 30
  %v5409 = vsub.s32 %v5405, %v5408
  %vm5410 = vcmp.lt.s32.totalorder %v5409, 0
  %v5411 = vsub.s32 0, %v5409
  %v5412 = vsel %vm5410, %v5411, %v5409
  %v5413 = vclz %v5412
  %v5414 = vsub.s32 %v5413, 2
  %vm5415 = vcmp.gt.s32.totalorder 0, %v5414
  %v5416 = vsel %vm5415, 0, %v5414
  %v5417 = vsub.s32 32, %v5416
  %v5418 = vshll.u32 %v5409, %v5416
  %v5419 = vshrl.u32 %v5401, %v5417
  %v5420 = vor.u32 %v5418, %v5419
  %v5421 = vsub.s32 4294967266, %v5416
  %v5422 = vadd.s32 %v5421, 127
  %v5423 = vshll.u32 %v5422, 23
  %v5424 = vor.u32 4788187, %v5423
  %v5425 = vand.u32 2147483647, %v5424
  %v5427 = vcvt.s32.f32 %v5420
  %v5428 = vmul.f32 %v5427, %v5425
  %v5429 = vxor.u32 %v5428, 2147483648
  %v5430 = vsel %vm5347, %v5429, %v5428
  %v5431 = vsub.s32 4, %v5407
  %v5432 = vsel %vm5347, %v5431, %v5407
  %v5433 = vsel %vm5346, %v2326, %v5430
  %v5434 = vsel %vm5346, 0, %v5432
  %v5435 = vcosq.f32.pop %v5433
  %v5436 = vsinq.f32.pop %v5433
  %vm5437 = vweird.f32 %v2326
  %v5438 = vadd.s32 %v5434, 3
  %v5439 = vand.u32 %v5438, 3
  %vm5440 = vcmp.lt.s32.totalorder %v5439, 2
  %vm5441 = vcmp.eq.s32.totalorder %v5439, 0
  %v5442 = vxor.u32 %v5436, 2147483648
  %v5443 = vsel %vm5441, %v5435, %v5442
  %vm5444 = vcmp.eq.s32.totalorder %v5439, 2
  %v5445 = vxor.u32 %v5435, 2147483648
  %v5446 = vsel %vm5444, %v5445, %v5436
  %v5447 = vsel %vm5440, %v5443, %v5446
  %v5448 = vsel %vm5437, nan, %v5447
  %v5449 = vand.u32 2147483647, %v2327
  %vm5450 = vcmp.le.f32.partialorder %v5449, 0.7853982
  %vm5451 = vcmp.lt.s32.totalorder %v2327, 0
  %v5452 = vand.u32 %v2327, 2139095040
  %v5453 = vshrl.u32 %v5452, 23
  %v5454 = vsub.s32 %v5453, 127
  %v5455 = vand.u32 2147483647, %v2327
  %v5456 = vand.u32 %v5455, 8388607
  %v5457 = vor.u32 %v5456, 8388608
  %v5458 = vsub.s32 0, %v5457
  %v5459 = vadd.s32 %v5454, 1
  %vm5460 = vcmp.gt.s32.totalorder %v5459, 0
  %v5461 = vsel %vm5460, %v5459, 0
  %v5462 = vshrl.u32 %v5461, 5
  %v5463 = vand.u32 %v5461, 31
  %v5464 = vsub.s32 32, %v5463
  %v5465 = vshrl.u32 683565275, %v5464
  %v5466 = vshll.u32 683565275, %v5463
  %v5467 = vshrl.u32 2475754826, %v5464
  %v5468 = vor.u32 %v5466, %v5467
  %v5469 = vshll.u32 2475754826, %v5463
  %v5470 = vshrl.u32 2131351028, %v5464
  %v5471 = vor.u32 %v5469, %v5470
  %v5472 = vshll.u32 2131351028, %v5463
  %v5473 = vshrl.u32 2102212464, %v5464
  %v5474 = vor.u32 %v5472, %v5473
  %v5475 = vshll.u32 2102212464, %v5463
  %v5476 = vshrl.u32 920167782, %v5464
  %v5477 = vor.u32 %v5475, %v5476
  %v5478 = vshll.u32 920167782, %v5463
  %v5479 = vshrl.u32 1326507024, %v5464
  %v5480 = vor.u32 %v5478, %v5479
  %vm5481 = vcmp.lt.s32.totalorder %v5462, 1
  %vm5482 = vcmp.lt.s32.totalorder %v5462, 2
  %vm5483 = vcmp.lt.s32.totalorder %v5462, 3
  %vm5484 = vcmp.lt.s32.totalorder %v5462, 4
  %v5485 = vsel %vm5481, %v5465, %v5468
  %v5486 = vsel %vm5484, %v5474, 2102212464
  %v5487 = vsel %vm5483, %v5471, %v5486
  %v5488 = vsel %vm5482, %v5485, %v5487
  %v5489 = vsel %vm5481, %v5468, %v5471
  %v5490 = vsel %vm5484, %v5477, 920167782
  %v5491 = vsel %vm5483, %v5474, %v5490
  %v5492 = vsel %vm5482, %v5489, %v5491
  %v5493 = vsel %vm5481, %v5471, %v5474
  %v5494 = vsel %vm5484, %v5480, 1326507024
  %v5495 = vsel %vm5483, %v5477, %v5494
  %v5496 = vsel %vm5482, %v5493, %v5495
  %v5497 = vshll.u32 %v5457, 8
  %v5498 = vmul.u32.u64.compose %v5497, %v5496
  %v5499 = vextract.low.u32 %v5498
  %v5500 = vextract.high.u32 %v5498
  %v5501 = vmul.u32.u64.compose %v5497, %v5492
  %v5502 = vextract.low.u32 %v5501
  %v5503 = vextract.high.u32 %v5501
  %v5504 = vmul.u32 %v5497, %v5488
  %v5505 = vadd.s32 %v5500, %v5502
  %vm5506 = vc.u32 %v5500, %v5502
  %v5507 = vadd.s32 %v5503, 1
  %v5508 = vsel %vm5506, %v5507, %v5503
  %v5509 = vadd.s32 %v5504, %v5508
  %v5510 = vadd.s32 %v5509, 536870912
  %v5511 = vshrl.u32 %v5510, 30
  %v5512 = vshll.u32 %v5511, 30
  %v5513 = vsub.s32 %v5509, %v5512
  %vm5514 = vcmp.lt.s32.totalorder %v5513, 0
  %v5515 = vsub.s32 0, %v5513
  %v5516 = vsel %vm5514, %v5515, %v5513
  %v5517 = vclz %v5516
  %v5518 = vsub.s32 %v5517, 2
  %vm5519 = vcmp.gt.s32.totalorder 0, %v5518
  %v5520 = vsel %vm5519, 0, %v5518
  %v5521 = vsub.s32 32, %v5520
  %v5522 = vshll.u32 %v5513, %v5520
  %v5523 = vshrl.u32 %v5505, %v5521
  %v5524 = vor.u32 %v5522, %v5523
  %v5525 = vsub.s32 4294967266, %v5520
  %v5526 = vadd.s32 %v5525, 127
  %v5527 = vshll.u32 %v5526, 23
  %v5528 = vor.u32 4788187, %v5527
  %v5529 = vand.u32 2147483647, %v5528
  %v5531 = vcvt.s32.f32 %v5524
  %v5532 = vmul.f32 %v5531, %v5529
  %v5533 = vxor.u32 %v5532, 2147483648
  %v5534 = vsel %vm5451, %v5533, %v5532
  %v5535 = vsub.s32 4, %v5511
  %v5536 = vsel %vm5451, %v5535, %v5511
  %v5537 = vsel %vm5450, %v2327, %v5534
  %v5538 = vsel %vm5450, 0, %v5536
  %v5539 = vcosq.f32.pop %v5537
  %v5540 = vsinq.f32.pop %v5537
  %vm5541 = vweird.f32 %v2327
  %v5542 = vadd.s32 %v5538, 3
  %v5543 = vand.u32 %v5542, 3
  %vm5544 = vcmp.lt.s32.totalorder %v5543, 2
  %vm5545 = vcmp.eq.s32.totalorder %v5543, 0
  %v5546 = vxor.u32 %v5540, 2147483648
  %v5547 = vsel %vm5545, %v5539, %v5546
  %vm5548 = vcmp.eq.s32.totalorder %v5543, 2
  %v5549 = vxor.u32 %v5539, 2147483648
  %v5550 = vsel %vm5548, %v5549, %v5540
  %v5551 = vsel %vm5544, %v5547, %v5550
  %v5552 = vsel %vm5541, nan, %v5551
  %v5553 = vand.u32 2147483647, %v2328
  %vm5554 = vcmp.le.f32.partialorder %v5553, 0.7853982
  %vm5555 = vcmp.lt.s32.totalorder %v2328, 0
  %v5556 = vand.u32 %v2328, 2139095040
  %v5557 = vshrl.u32 %v5556, 23
  %v5558 = vsub.s32 %v5557, 127
  %v5559 = vand.u32 2147483647, %v2328
  %v5560 = vand.u32 %v5559, 8388607
  %v5561 = vor.u32 %v5560, 8388608
  %v5562 = vsub.s32 0, %v5561
  %v5563 = vadd.s32 %v5558, 1
  %vm5564 = vcmp.gt.s32.totalorder %v5563, 0
  %v5565 = vsel %vm5564, %v5563, 0
  %v5566 = vshrl.u32 %v5565, 5
  %v5567 = vand.u32 %v5565, 31
  %v5568 = vsub.s32 32, %v5567
  %v5569 = vshrl.u32 683565275, %v5568
  %v5570 = vshll.u32 683565275, %v5567
  %v5571 = vshrl.u32 2475754826, %v5568
  %v5572 = vor.u32 %v5570, %v5571
  %v5573 = vshll.u32 2475754826, %v5567
  %v5574 = vshrl.u32 2131351028, %v5568
  %v5575 = vor.u32 %v5573, %v5574
  %v5576 = vshll.u32 2131351028, %v5567
  %v5577 = vshrl.u32 2102212464, %v5568
  %v5578 = vor.u32 %v5576, %v5577
  %v5579 = vshll.u32 2102212464, %v5567
  %v5580 = vshrl.u32 920167782, %v5568
  %v5581 = vor.u32 %v5579, %v5580
  %v5582 = vshll.u32 920167782, %v5567
  %v5583 = vshrl.u32 1326507024, %v5568
  %v5584 = vor.u32 %v5582, %v5583
  %vm5585 = vcmp.lt.s32.totalorder %v5566, 1
  %vm5586 = vcmp.lt.s32.totalorder %v5566, 2
  %vm5587 = vcmp.lt.s32.totalorder %v5566, 3
  %vm5588 = vcmp.lt.s32.totalorder %v5566, 4
  %v5589 = vsel %vm5585, %v5569, %v5572
  %v5590 = vsel %vm5588, %v5578, 2102212464
  %v5591 = vsel %vm5587, %v5575, %v5590
  %v5592 = vsel %vm5586, %v5589, %v5591
  %v5593 = vsel %vm5585, %v5572, %v5575
  %v5594 = vsel %vm5588, %v5581, 920167782
  %v5595 = vsel %vm5587, %v5578, %v5594
  %v5596 = vsel %vm5586, %v5593, %v5595
  %v5597 = vsel %vm5585, %v5575, %v5578
  %v5598 = vsel %vm5588, %v5584, 1326507024
  %v5599 = vsel %vm5587, %v5581, %v5598
  %v5600 = vsel %vm5586, %v5597, %v5599
  %v5601 = vshll.u32 %v5561, 8
  %v5602 = vmul.u32.u64.compose %v5601, %v5600
  %v5603 = vextract.low.u32 %v5602
  %v5604 = vextract.high.u32 %v5602
  %v5605 = vmul.u32.u64.compose %v5601, %v5596
  %v5606 = vextract.low.u32 %v5605
  %v5607 = vextract.high.u32 %v5605
  %v5608 = vmul.u32 %v5601, %v5592
  %v5609 = vadd.s32 %v5604, %v5606
  %vm5610 = vc.u32 %v5604, %v5606
  %v5611 = vadd.s32 %v5607, 1
  %v5612 = vsel %vm5610, %v5611, %v5607
  %v5613 = vadd.s32 %v5608, %v5612
  %v5614 = vadd.s32 %v5613, 536870912
  %v5615 = vshrl.u32 %v5614, 30
  %v5616 = vshll.u32 %v5615, 30
  %v5617 = vsub.s32 %v5613, %v5616
  %vm5618 = vcmp.lt.s32.totalorder %v5617, 0
  %v5619 = vsub.s32 0, %v5617
  %v5620 = vsel %vm5618, %v5619, %v5617
  %v5621 = vclz %v5620
  %v5622 = vsub.s32 %v5621, 2
  %vm5623 = vcmp.gt.s32.totalorder 0, %v5622
  %v5624 = vsel %vm5623, 0, %v5622
  %v5625 = vsub.s32 32, %v5624
  %v5626 = vshll.u32 %v5617, %v5624
  %v5627 = vshrl.u32 %v5609, %v5625
  %v5628 = vor.u32 %v5626, %v5627
  %v5629 = vsub.s32 4294967266, %v5624
  %v5630 = vadd.s32 %v5629, 127
  %v5631 = vshll.u32 %v5630, 23
  %v5632 = vor.u32 4788187, %v5631
  %v5633 = vand.u32 2147483647, %v5632
  %v5635 = vcvt.s32.f32 %v5628
  %v5636 = vmul.f32 %v5635, %v5633
  %v5637 = vxor.u32 %v5636, 2147483648
  %v5638 = vsel %vm5555, %v5637, %v5636
  %v5639 = vsub.s32 4, %v5615
  %v5640 = vsel %vm5555, %v5639, %v5615
  %v5641 = vsel %vm5554, %v2328, %v5638
  %v5642 = vsel %vm5554, 0, %v5640
  %v5643 = vcosq.f32.pop %v5641
  %v5644 = vsinq.f32.pop %v5641
  %vm5645 = vweird.f32 %v2328
  %v5646 = vadd.s32 %v5642, 3
  %v5647 = vand.u32 %v5646, 3
  %vm5648 = vcmp.lt.s32.totalorder %v5647, 2
  %vm5649 = vcmp.eq.s32.totalorder %v5647, 0
  %v5650 = vxor.u32 %v5644, 2147483648
  %v5651 = vsel %vm5649, %v5643, %v5650
  %vm5652 = vcmp.eq.s32.totalorder %v5647, 2
  %v5653 = vxor.u32 %v5643, 2147483648
  %v5654 = vsel %vm5652, %v5653, %v5644
  %v5655 = vsel %vm5648, %v5651, %v5654
  %v5656 = vsel %vm5645, nan, %v5655
  %v5657 = vpack.c.bf16 %v2536, %v2432
  %v5658 = vpack.c.bf16 %v2744, %v2640
  %v5659 = vpack.c.bf16 %v2952, %v2848
  %v5660 = vpack.c.bf16 %v3160, %v3056
  %v5661 = vpack.c.bf16 %v3368, %v3264
  %v5662 = vpack.c.bf16 %v3576, %v3472
  %v5663 = vpack.c.bf16 %v3784, %v3680
  %v5664 = vpack.c.bf16 %v3992, %v3888
  %v5665 = vpack.c.bf16 %v4200, %v4096
  %v5666 = vpack.c.bf16 %v4408, %v4304
  %v5667 = vpack.c.bf16 %v4616, %v4512
  %v5668 = vpack.c.bf16 %v4824, %v4720
  %v5669 = vpack.c.bf16 %v5032, %v4928
  %v5670 = vpack.c.bf16 %v5240, %v5136
  %v5671 = vpack.c.bf16 %v5448, %v5344
  %v5672 = vpack.c.bf16 %v5656, %v5552
  %v5674 = vlaneseq
  %v5675 = vshrl.u32 %v5674, 7
  %v5676 = vsub.s32 0, %v5675
  %v5677 = vrot.slane %v146, %v5676
  %v5678 = vlaneseq
  %v5679 = vshrl.u32 %v5678, 7
  %v5680 = vsub.s32 1, %v5679
  %v5681 = vrot.slane %v146, %v5680
  %v5700 = vunpack.c.l.b16 %v130
  %v5701 = vunpack.c.h.b16 %v130
  %v5702 = vunpack.c.l.b16 %v131
  %v5703 = vunpack.c.h.b16 %v131
  %v5704 = vunpack.c.l.b16 %v132
  %v5705 = vunpack.c.h.b16 %v132
  %v5706 = vunpack.c.l.b16 %v133
  %v5707 = vunpack.c.h.b16 %v133
  %v5708 = vunpack.c.l.b16 %v134
  %v5709 = vunpack.c.h.b16 %v134
  %v5710 = vunpack.c.l.b16 %v135
  %v5711 = vunpack.c.h.b16 %v135
  %v5712 = vunpack.c.l.b16 %v136
  %v5713 = vunpack.c.h.b16 %v136
  %v5714 = vunpack.c.l.b16 %v137
  %v5715 = vunpack.c.h.b16 %v137
  %v5716 = vunpack.c.l.b16 %v138
  %v5717 = vunpack.c.h.b16 %v138
  %v5718 = vunpack.c.l.b16 %v139
  %v5719 = vunpack.c.h.b16 %v139
  %v5720 = vunpack.c.l.b16 %v140
  %v5721 = vunpack.c.h.b16 %v140
  %v5722 = vunpack.c.l.b16 %v141
  %v5723 = vunpack.c.h.b16 %v141
  %v5724 = vunpack.c.l.b16 %v142
  %v5725 = vunpack.c.h.b16 %v142
  %v5726 = vunpack.c.l.b16 %v143
  %v5727 = vunpack.c.h.b16 %v143
  %v5728 = vunpack.c.l.b16 %v144
  %v5729 = vunpack.c.h.b16 %v144
  %v5730 = vunpack.c.l.b16 %v145
  %v5731 = vunpack.c.h.b16 %v145
  %v5732 = vpack.c.b16 %v5702, %v5700
  %v5733 = vpack.c.b16 %v5703, %v5701
  %v5734 = vpack.c.b16 %v5706, %v5704
  %v5735 = vpack.c.b16 %v5707, %v5705
  %v5736 = vpack.c.b16 %v5710, %v5708
  %v5737 = vpack.c.b16 %v5711, %v5709
  %v5738 = vpack.c.b16 %v5714, %v5712
  %v5739 = vpack.c.b16 %v5715, %v5713
  %v5740 = vpack.c.b16 %v5718, %v5716
  %v5741 = vpack.c.b16 %v5719, %v5717
  %v5742 = vpack.c.b16 %v5722, %v5720
  %v5743 = vpack.c.b16 %v5723, %v5721
  %v5744 = vpack.c.b16 %v5726, %v5724
  %v5745 = vpack.c.b16 %v5727, %v5725
  %v5746 = vpack.c.b16 %v5730, %v5728
  %v5747 = vpack.c.b16 %v5731, %v5729
  %5764 = vmatprep.subr.bf16.mxu0 %v5747
  %5765 = vmatpush1.bf16.msra.mxu0 %v5746
  %5766 = vmatprep.subr.bf16.mxu0 %v5745
  %5767 = vmatpush1.bf16.msra.mxu0 %v5744
  %5768 = vmatprep.subr.bf16.mxu0 %v5743
  %5769 = vmatpush1.bf16.msra.mxu0 %v5742
  %5770 = vmatprep.subr.bf16.mxu0 %v5741
  %5771 = vmatpush1.bf16.msra.mxu0 %v5740
  %5772 = vmatprep.subr.bf16.mxu0 %v5739
  %5773 = vmatpush1.bf16.msra.mxu0 %v5738
  %5774 = vmatprep.subr.bf16.mxu0 %v5737
  %5775 = vmatpush1.bf16.msra.mxu0 %v5736
  %5776 = vmatprep.subr.bf16.mxu0 %v5735
  %5777 = vmatpush1.bf16.msra.mxu0 %v5734
  %5778 = vmatprep.subr.bf16.mxu0 %v5733
  %5779 = vmatpush1.bf16.msra.mxu0 %v5732
  %5780 = vmatprep.subr.bf16.mxu0 0
  %5781 = vmatpush2.bf16.msra.mxu0 0
  %5782 = vmatprep.subr.bf16.mxu0 0
  %5783 = vmatpush2.bf16.msra.mxu0 0
  %5784 = vmatprep.subr.bf16.mxu0 0
  %5785 = vmatpush2.bf16.msra.mxu0 0
  %5786 = vmatprep.subr.bf16.mxu0 0
  %5787 = vmatpush2.bf16.msra.mxu0 0
  %5788 = vmatprep.subr.bf16.mxu0 0
  %5789 = vmatpush2.bf16.msra.mxu0 0
  %5790 = vmatprep.subr.bf16.mxu0 0
  %5791 = vmatpush2.bf16.msra.mxu0 0
  %5792 = vmatprep.subr.bf16.mxu0 0
  %5793 = vmatpush2.bf16.msra.mxu0 0
  %5794 = vmatprep.subr.bf16.mxu0 0
  %5795 = vmatpush2.bf16.msra.mxu0 0
  %5796 = vmatprep.mubr.bf16.mxu0 0
  %5797 = vmatmul.mubr.bf16.gmra.mxu0 %v5657
  %v5798 = vpop.f32.mrf.mxu0
  %v5799 = vadd.f32 %v5677, %v5798
  %v5800 = vpop.f32.mrf.mxu0
  %v5801 = vadd.f32 %v5681, %v5800
  %v5802 = vpop.f32.mrf.mxu0
  %v5803 = vadd.f32 %v5677, %v5802
  %v5804 = vpop.f32.mrf.mxu0
  %v5805 = vadd.f32 %v5681, %v5804
  %5806 = vmatprep.mubr.bf16.mxu0 0
  %5807 = vmatmul.mubr.bf16.gmra.mxu0 %v5658
  %v5808 = vpop.f32.mrf.mxu0
  %v5809 = vadd.f32 %v5677, %v5808
  %v5810 = vpop.f32.mrf.mxu0
  %v5811 = vadd.f32 %v5681, %v5810
  %v5812 = vpop.f32.mrf.mxu0
  %v5813 = vadd.f32 %v5677, %v5812
  %v5814 = vpop.f32.mrf.mxu0
  %v5815 = vadd.f32 %v5681, %v5814
  %5816 = vmatprep.mubr.bf16.mxu0 0
  %5817 = vmatmul.mubr.bf16.gmra.mxu0 %v5659
  %v5818 = vpop.f32.mrf.mxu0
  %v5819 = vadd.f32 %v5677, %v5818
  %v5820 = vpop.f32.mrf.mxu0
  %v5821 = vadd.f32 %v5681, %v5820
  %v5822 = vpop.f32.mrf.mxu0
  %v5823 = vadd.f32 %v5677, %v5822
  %v5824 = vpop.f32.mrf.mxu0
  %v5825 = vadd.f32 %v5681, %v5824
  %5826 = vmatprep.mubr.bf16.mxu0 0
  %5827 = vmatmul.mubr.bf16.gmra.mxu0 %v5660
  %v5828 = vpop.f32.mrf.mxu0
  %v5829 = vadd.f32 %v5677, %v5828
  %v5830 = vpop.f32.mrf.mxu0
  %v5831 = vadd.f32 %v5681, %v5830
  %v5832 = vpop.f32.mrf.mxu0
  %v5833 = vadd.f32 %v5677, %v5832
  %v5834 = vpop.f32.mrf.mxu0
  %v5835 = vadd.f32 %v5681, %v5834
  %5836 = vmatprep.mubr.bf16.mxu0 0
  %5837 = vmatmul.mubr.bf16.gmra.mxu0 %v5661
  %v5838 = vpop.f32.mrf.mxu0
  %v5839 = vadd.f32 %v5677, %v5838
  %v5840 = vpop.f32.mrf.mxu0
  %v5841 = vadd.f32 %v5681, %v5840
  %v5842 = vpop.f32.mrf.mxu0
  %v5843 = vadd.f32 %v5677, %v5842
  %v5844 = vpop.f32.mrf.mxu0
  %v5845 = vadd.f32 %v5681, %v5844
  %5846 = vmatprep.mubr.bf16.mxu0 0
  %5847 = vmatmul.mubr.bf16.gmra.mxu0 %v5662
  %v5848 = vpop.f32.mrf.mxu0
  %v5849 = vadd.f32 %v5677, %v5848
  %v5850 = vpop.f32.mrf.mxu0
  %v5851 = vadd.f32 %v5681, %v5850
  %v5852 = vpop.f32.mrf.mxu0
  %v5853 = vadd.f32 %v5677, %v5852
  %v5854 = vpop.f32.mrf.mxu0
  %v5855 = vadd.f32 %v5681, %v5854
  %5856 = vmatprep.mubr.bf16.mxu0 0
  %5857 = vmatmul.mubr.bf16.gmra.mxu0 %v5663
  %v5858 = vpop.f32.mrf.mxu0
  %v5859 = vadd.f32 %v5677, %v5858
  %v5860 = vpop.f32.mrf.mxu0
  %v5861 = vadd.f32 %v5681, %v5860
  %v5862 = vpop.f32.mrf.mxu0
  %v5863 = vadd.f32 %v5677, %v5862
  %v5864 = vpop.f32.mrf.mxu0
  %v5865 = vadd.f32 %v5681, %v5864
  %5866 = vmatprep.mubr.bf16.mxu0 0
  %5867 = vmatmul.mubr.bf16.gmra.mxu0 %v5664
  %v5868 = vpop.f32.mrf.mxu0
  %v5869 = vadd.f32 %v5677, %v5868
  %v5870 = vpop.f32.mrf.mxu0
  %v5871 = vadd.f32 %v5681, %v5870
  %v5872 = vpop.f32.mrf.mxu0
  %v5873 = vadd.f32 %v5677, %v5872
  %v5874 = vpop.f32.mrf.mxu0
  %v5875 = vadd.f32 %v5681, %v5874
  %5876 = vmatprep.mubr.bf16.mxu0 0
  %5877 = vmatmul.mubr.bf16.gmra.mxu0 %v5665
  %v5878 = vpop.f32.mrf.mxu0
  %v5879 = vadd.f32 %v5677, %v5878
  %v5880 = vpop.f32.mrf.mxu0
  %v5881 = vadd.f32 %v5681, %v5880
  %v5882 = vpop.f32.mrf.mxu0
  %v5883 = vadd.f32 %v5677, %v5882
  %v5884 = vpop.f32.mrf.mxu0
  %v5885 = vadd.f32 %v5681, %v5884
  %5886 = vmatprep.mubr.bf16.mxu0 0
  %5887 = vmatmul.mubr.bf16.gmra.mxu0 %v5666
  %v5888 = vpop.f32.mrf.mxu0
  %v5889 = vadd.f32 %v5677, %v5888
  %v5890 = vpop.f32.mrf.mxu0
  %v5891 = vadd.f32 %v5681, %v5890
  %v5892 = vpop.f32.mrf.mxu0
  %v5893 = vadd.f32 %v5677, %v5892
  %v5894 = vpop.f32.mrf.mxu0
  %v5895 = vadd.f32 %v5681, %v5894
  %5896 = vmatprep.mubr.bf16.mxu0 0
  %5897 = vmatmul.mubr.bf16.gmra.mxu0 %v5667
  %v5898 = vpop.f32.mrf.mxu0
  %v5899 = vadd.f32 %v5677, %v5898
  %v5900 = vpop.f32.mrf.mxu0
  %v5901 = vadd.f32 %v5681, %v5900
  %v5902 = vpop.f32.mrf.mxu0
  %v5903 = vadd.f32 %v5677, %v5902
  %v5904 = vpop.f32.mrf.mxu0
  %v5905 = vadd.f32 %v5681, %v5904
  %5906 = vmatprep.mubr.bf16.mxu0 0
  %5907 = vmatmul.mubr.bf16.gmra.mxu0 %v5668
  %v5908 = vpop.f32.mrf.mxu0
  %v5909 = vadd.f32 %v5677, %v5908
  %v5910 = vpop.f32.mrf.mxu0
  %v5911 = vadd.f32 %v5681, %v5910
  %v5912 = vpop.f32.mrf.mxu0
  %v5913 = vadd.f32 %v5677, %v5912
  %v5914 = vpop.f32.mrf.mxu0
  %v5915 = vadd.f32 %v5681, %v5914
  %5916 = vmatprep.mubr.bf16.mxu0 0
  %5917 = vmatmul.mubr.bf16.gmra.mxu0 %v5669
  %v5918 = vpop.f32.mrf.mxu0
  %v5919 = vadd.f32 %v5677, %v5918
  %v5920 = vpop.f32.mrf.mxu0
  %v5921 = vadd.f32 %v5681, %v5920
  %v5922 = vpop.f32.mrf.mxu0
  %v5923 = vadd.f32 %v5677, %v5922
  %v5924 = vpop.f32.mrf.mxu0
  %v5925 = vadd.f32 %v5681, %v5924
  %5926 = vmatprep.mubr.bf16.mxu0 0
  %5927 = vmatmul.mubr.bf16.gmra.mxu0 %v5670
  %v5928 = vpop.f32.mrf.mxu0
  %v5929 = vadd.f32 %v5677, %v5928
  %v5930 = vpop.f32.mrf.mxu0
  %v5931 = vadd.f32 %v5681, %v5930
  %v5932 = vpop.f32.mrf.mxu0
  %v5933 = vadd.f32 %v5677, %v5932
  %v5934 = vpop.f32.mrf.mxu0
  %v5935 = vadd.f32 %v5681, %v5934
  %5936 = vmatprep.mubr.bf16.mxu0 0
  %5937 = vmatmul.mubr.bf16.gmra.mxu0 %v5671
  %v5938 = vpop.f32.mrf.mxu0
  %v5939 = vadd.f32 %v5677, %v5938
  %v5940 = vpop.f32.mrf.mxu0
  %v5941 = vadd.f32 %v5681, %v5940
  %v5942 = vpop.f32.mrf.mxu0
  %v5943 = vadd.f32 %v5677, %v5942
  %v5944 = vpop.f32.mrf.mxu0
  %v5945 = vadd.f32 %v5681, %v5944
  %5946 = vmatprep.mubr.bf16.mxu0 0
  %5947 = vmatmul.mubr.bf16.gmra.mxu0 %v5672
  %v5948 = vpop.f32.mrf.mxu0
  %v5949 = vadd.f32 %v5677, %v5948
  %v5950 = vpop.f32.mrf.mxu0
  %v5951 = vadd.f32 %v5681, %v5950
  %v5952 = vpop.f32.mrf.mxu0
  %v5953 = vadd.f32 %v5677, %v5952
  %v5954 = vpop.f32.mrf.mxu0
  %v5955 = vadd.f32 %v5681, %v5954
  %5956 = vdwg.mxu0
  %v5957 = vxor.u32 %v5799, 2147483648
  %v5958 = vxor.u32 %v5801, 2147483648
  %v5959 = vxor.u32 %v5803, 2147483648
  %v5960 = vxor.u32 %v5805, 2147483648
  %v5961 = vxor.u32 %v5809, 2147483648
  %v5962 = vxor.u32 %v5811, 2147483648
  %v5963 = vxor.u32 %v5813, 2147483648
  %v5964 = vxor.u32 %v5815, 2147483648
  %v5965 = vxor.u32 %v5819, 2147483648
  %v5966 = vxor.u32 %v5821, 2147483648
  %v5967 = vxor.u32 %v5823, 2147483648
  %v5968 = vxor.u32 %v5825, 2147483648
  %v5969 = vxor.u32 %v5829, 2147483648
  %v5970 = vxor.u32 %v5831, 2147483648
  %v5971 = vxor.u32 %v5833, 2147483648
  %v5972 = vxor.u32 %v5835, 2147483648
  %v5973 = vxor.u32 %v5839, 2147483648
  %v5974 = vxor.u32 %v5841, 2147483648
  %v5975 = vxor.u32 %v5843, 2147483648
  %v5976 = vxor.u32 %v5845, 2147483648
  %v5977 = vxor.u32 %v5849, 2147483648
  %v5978 = vxor.u32 %v5851, 2147483648
  %v5979 = vxor.u32 %v5853, 2147483648
  %v5980 = vxor.u32 %v5855, 2147483648
  %v5981 = vxor.u32 %v5859, 2147483648
  %v5982 = vxor.u32 %v5861, 2147483648
  %v5983 = vxor.u32 %v5863, 2147483648
  %v5984 = vxor.u32 %v5865, 2147483648
  %v5985 = vxor.u32 %v5869, 2147483648
  %v5986 = vxor.u32 %v5871, 2147483648
  %v5987 = vxor.u32 %v5873, 2147483648
  %v5988 = vxor.u32 %v5875, 2147483648
  %v5989 = vxor.u32 %v5879, 2147483648
  %v5990 = vxor.u32 %v5881, 2147483648
  %v5991 = vxor.u32 %v5883, 2147483648
  %v5992 = vxor.u32 %v5885, 2147483648
  %v5993 = vxor.u32 %v5889, 2147483648
  %v5994 = vxor.u32 %v5891, 2147483648
  %v5995 = vxor.u32 %v5893, 2147483648
  %v5996 = vxor.u32 %v5895, 2147483648
  %v5997 = vxor.u32 %v5899, 2147483648
  %v5998 = vxor.u32 %v5901, 2147483648
  %v5999 = vxor.u32 %v5903, 2147483648
  %v6000 = vxor.u32 %v5905, 2147483648
  %v6001 = vxor.u32 %v5909, 2147483648
  %v6002 = vxor.u32 %v5911, 2147483648
  %v6003 = vxor.u32 %v5913, 2147483648
  %v6004 = vxor.u32 %v5915, 2147483648
  %v6005 = vxor.u32 %v5919, 2147483648
  %v6006 = vxor.u32 %v5921, 2147483648
  %v6007 = vxor.u32 %v5923, 2147483648
  %v6008 = vxor.u32 %v5925, 2147483648
  %v6009 = vxor.u32 %v5929, 2147483648
  %v6010 = vxor.u32 %v5931, 2147483648
  %v6011 = vxor.u32 %v5933, 2147483648
  %v6012 = vxor.u32 %v5935, 2147483648
  %v6013 = vxor.u32 %v5939, 2147483648
  %v6014 = vxor.u32 %v5941, 2147483648
  %v6015 = vxor.u32 %v5943, 2147483648
  %v6016 = vxor.u32 %v5945, 2147483648
  %v6017 = vxor.u32 %v5949, 2147483648
  %v6018 = vxor.u32 %v5951, 2147483648
  %v6019 = vxor.u32 %v5953, 2147483648
  %v6020 = vxor.u32 %v5955, 2147483648
  %v6021 = vmul.f32 %v5957, 1.442695
  %v6022 = vpow.pop %v6021
  %v6023 = vmul.f32 %v5958, 1.442695
  %v6024 = vpow.pop %v6023
  %v6025 = vmul.f32 %v5959, 1.442695
  %v6026 = vpow.pop %v6025
  %v6027 = vmul.f32 %v5960, 1.442695
  %v6028 = vpow.pop %v6027
  %v6029 = vmul.f32 %v5961, 1.442695
  %v6030 = vpow.pop %v6029
  %v6031 = vmul.f32 %v5962, 1.442695
  %v6032 = vpow.pop %v6031
  %v6033 = vmul.f32 %v5963, 1.442695
  %v6034 = vpow.pop %v6033
  %v6035 = vmul.f32 %v5964, 1.442695
  %v6036 = vpow.pop %v6035
  %v6037 = vmul.f32 %v5965, 1.442695
  %v6038 = vpow.pop %v6037
  %v6039 = vmul.f32 %v5966, 1.442695
  %v6040 = vpow.pop %v6039
  %v6041 = vmul.f32 %v5967, 1.442695
  %v6042 = vpow.pop %v6041
  %v6043 = vmul.f32 %v5968, 1.442695
  %v6044 = vpow.pop %v6043
  %v6045 = vmul.f32 %v5969, 1.442695
  %v6046 = vpow.pop %v6045
  %v6047 = vmul.f32 %v5970, 1.442695
  %v6048 = vpow.pop %v6047
  %v6049 = vmul.f32 %v5971, 1.442695
  %v6050 = vpow.pop %v6049
  %v6051 = vmul.f32 %v5972, 1.442695
  %v6052 = vpow.pop %v6051
  %v6053 = vmul.f32 %v5973, 1.442695
  %v6054 = vpow.pop %v6053
  %v6055 = vmul.f32 %v5974, 1.442695
  %v6056 = vpow.pop %v6055
  %v6057 = vmul.f32 %v5975, 1.442695
  %v6058 = vpow.pop %v6057
  %v6059 = vmul.f32 %v5976, 1.442695
  %v6060 = vpow.pop %v6059
  %v6061 = vmul.f32 %v5977, 1.442695
  %v6062 = vpow.pop %v6061
  %v6063 = vmul.f32 %v5978, 1.442695
  %v6064 = vpow.pop %v6063
  %v6065 = vmul.f32 %v5979, 1.442695
  %v6066 = vpow.pop %v6065
  %v6067 = vmul.f32 %v5980, 1.442695
  %v6068 = vpow.pop %v6067
  %v6069 = vmul.f32 %v5981, 1.442695
  %v6070 = vpow.pop %v6069
  %v6071 = vmul.f32 %v5982, 1.442695
  %v6072 = vpow.pop %v6071
  %v6073 = vmul.f32 %v5983, 1.442695
  %v6074 = vpow.pop %v6073
  %v6075 = vmul.f32 %v5984, 1.442695
  %v6076 = vpow.pop %v6075
  %v6077 = vmul.f32 %v5985, 1.442695
  %v6078 = vpow.pop %v6077
  %v6079 = vmul.f32 %v5986, 1.442695
  %v6080 = vpow.pop %v6079
  %v6081 = vmul.f32 %v5987, 1.442695
  %v6082 = vpow.pop %v6081
  %v6083 = vmul.f32 %v5988, 1.442695
  %v6084 = vpow.pop %v6083
  %v6085 = vmul.f32 %v5989, 1.442695
  %v6086 = vpow.pop %v6085
  %v6087 = vmul.f32 %v5990, 1.442695
  %v6088 = vpow.pop %v6087
  %v6089 = vmul.f32 %v5991, 1.442695
  %v6090 = vpow.pop %v6089
  %v6091 = vmul.f32 %v5992, 1.442695
  %v6092 = vpow.pop %v6091
  %v6093 = vmul.f32 %v5993, 1.442695
  %v6094 = vpow.pop %v6093
  %v6095 = vmul.f32 %v5994, 1.442695
  %v6096 = vpow.pop %v6095
  %v6097 = vmul.f32 %v5995, 1.442695
  %v6098 = vpow.pop %v6097
  %v6099 = vmul.f32 %v5996, 1.442695
  %v6100 = vpow.pop %v6099
  %v6101 = vmul.f32 %v5997, 1.442695
  %v6102 = vpow.pop %v6101
  %v6103 = vmul.f32 %v5998, 1.442695
  %v6104 = vpow.pop %v6103
  %v6105 = vmul.f32 %v5999, 1.442695
  %v6106 = vpow.pop %v6105
  %v6107 = vmul.f32 %v6000, 1.442695
  %v6108 = vpow.pop %v6107
  %v6109 = vmul.f32 %v6001, 1.442695
  %v6110 = vpow.pop %v6109
  %v6111 = vmul.f32 %v6002, 1.442695
  %v6112 = vpow.pop %v6111
  %v6113 = vmul.f32 %v6003, 1.442695
  %v6114 = vpow.pop %v6113
  %v6115 = vmul.f32 %v6004, 1.442695
  %v6116 = vpow.pop %v6115
  %v6117 = vmul.f32 %v6005, 1.442695
  %v6118 = vpow.pop %v6117
  %v6119 = vmul.f32 %v6006, 1.442695
  %v6120 = vpow.pop %v6119
  %v6121 = vmul.f32 %v6007, 1.442695
  %v6122 = vpow.pop %v6121
  %v6123 = vmul.f32 %v6008, 1.442695
  %v6124 = vpow.pop %v6123
  %v6125 = vmul.f32 %v6009, 1.442695
  %v6126 = vpow.pop %v6125
  %v6127 = vmul.f32 %v6010, 1.442695
  %v6128 = vpow.pop %v6127
  %v6129 = vmul.f32 %v6011, 1.442695
  %v6130 = vpow.pop %v6129
  %v6131 = vmul.f32 %v6012, 1.442695
  %v6132 = vpow.pop %v6131
  %v6133 = vmul.f32 %v6013, 1.442695
  %v6134 = vpow.pop %v6133
  %v6135 = vmul.f32 %v6014, 1.442695
  %v6136 = vpow.pop %v6135
  %v6137 = vmul.f32 %v6015, 1.442695
  %v6138 = vpow.pop %v6137
  %v6139 = vmul.f32 %v6016, 1.442695
  %v6140 = vpow.pop %v6139
  %v6141 = vmul.f32 %v6017, 1.442695
  %v6142 = vpow.pop %v6141
  %v6143 = vmul.f32 %v6018, 1.442695
  %v6144 = vpow.pop %v6143
  %v6145 = vmul.f32 %v6019, 1.442695
  %v6146 = vpow.pop %v6145
  %v6147 = vmul.f32 %v6020, 1.442695
  %v6148 = vpow.pop %v6147
  %v6149 = vadd.f32 %v6022, 1.0
  %v6150 = vadd.f32 %v6024, 1.0
  %v6151 = vadd.f32 %v6026, 1.0
  %v6152 = vadd.f32 %v6028, 1.0
  %v6153 = vadd.f32 %v6030, 1.0
  %v6154 = vadd.f32 %v6032, 1.0
  %v6155 = vadd.f32 %v6034, 1.0
  %v6156 = vadd.f32 %v6036, 1.0
  %v6157 = vadd.f32 %v6038, 1.0
  %v6158 = vadd.f32 %v6040, 1.0
  %v6159 = vadd.f32 %v6042, 1.0
  %v6160 = vadd.f32 %v6044, 1.0
  %v6161 = vadd.f32 %v6046, 1.0
  %v6162 = vadd.f32 %v6048, 1.0
  %v6163 = vadd.f32 %v6050, 1.0
  %v6164 = vadd.f32 %v6052, 1.0
  %v6165 = vadd.f32 %v6054, 1.0
  %v6166 = vadd.f32 %v6056, 1.0
  %v6167 = vadd.f32 %v6058, 1.0
  %v6168 = vadd.f32 %v6060, 1.0
  %v6169 = vadd.f32 %v6062, 1.0
  %v6170 = vadd.f32 %v6064, 1.0
  %v6171 = vadd.f32 %v6066, 1.0
  %v6172 = vadd.f32 %v6068, 1.0
  %v6173 = vadd.f32 %v6070, 1.0
  %v6174 = vadd.f32 %v6072, 1.0
  %v6175 = vadd.f32 %v6074, 1.0
  %v6176 = vadd.f32 %v6076, 1.0
  %v6177 = vadd.f32 %v6078, 1.0
  %v6178 = vadd.f32 %v6080, 1.0
  %v6179 = vadd.f32 %v6082, 1.0
  %v6180 = vadd.f32 %v6084, 1.0
  %v6181 = vadd.f32 %v6086, 1.0
  %v6182 = vadd.f32 %v6088, 1.0
  %v6183 = vadd.f32 %v6090, 1.0
  %v6184 = vadd.f32 %v6092, 1.0
  %v6185 = vadd.f32 %v6094, 1.0
  %v6186 = vadd.f32 %v6096, 1.0
  %v6187 = vadd.f32 %v6098, 1.0
  %v6188 = vadd.f32 %v6100, 1.0
  %v6189 = vadd.f32 %v6102, 1.0
  %v6190 = vadd.f32 %v6104, 1.0
  %v6191 = vadd.f32 %v6106, 1.0
  %v6192 = vadd.f32 %v6108, 1.0
  %v6193 = vadd.f32 %v6110, 1.0
  %v6194 = vadd.f32 %v6112, 1.0
  %v6195 = vadd.f32 %v6114, 1.0
  %v6196 = vadd.f32 %v6116, 1.0
  %v6197 = vadd.f32 %v6118, 1.0
  %v6198 = vadd.f32 %v6120, 1.0
  %v6199 = vadd.f32 %v6122, 1.0
  %v6200 = vadd.f32 %v6124, 1.0
  %v6201 = vadd.f32 %v6126, 1.0
  %v6202 = vadd.f32 %v6128, 1.0
  %v6203 = vadd.f32 %v6130, 1.0
  %v6204 = vadd.f32 %v6132, 1.0
  %v6205 = vadd.f32 %v6134, 1.0
  %v6206 = vadd.f32 %v6136, 1.0
  %v6207 = vadd.f32 %v6138, 1.0
  %v6208 = vadd.f32 %v6140, 1.0
  %v6209 = vadd.f32 %v6142, 1.0
  %v6210 = vadd.f32 %v6144, 1.0
  %v6211 = vadd.f32 %v6146, 1.0
  %v6212 = vadd.f32 %v6148, 1.0
  %v6213 = vrcp.pop %v6149
  %v6214 = vmul.f32 1.0, %v6213
  %v6215 = vrcp.pop %v6150
  %v6216 = vmul.f32 1.0, %v6215
  %v6217 = vrcp.pop %v6151
  %v6218 = vmul.f32 1.0, %v6217
  %v6219 = vrcp.pop %v6152
  %v6220 = vmul.f32 1.0, %v6219
  %v6221 = vrcp.pop %v6153
  %v6222 = vmul.f32 1.0, %v6221
  %v6223 = vrcp.pop %v6154
  %v6224 = vmul.f32 1.0, %v6223
  %v6225 = vrcp.pop %v6155
  %v6226 = vmul.f32 1.0, %v6225
  %v6227 = vrcp.pop %v6156
  %v6228 = vmul.f32 1.0, %v6227
  %v6229 = vrcp.pop %v6157
  %v6230 = vmul.f32 1.0, %v6229
  %v6231 = vrcp.pop %v6158
  %v6232 = vmul.f32 1.0, %v6231
  %v6233 = vrcp.pop %v6159
  %v6234 = vmul.f32 1.0, %v6233
  %v6235 = vrcp.pop %v6160
  %v6236 = vmul.f32 1.0, %v6235
  %v6237 = vrcp.pop %v6161
  %v6238 = vmul.f32 1.0, %v6237
  %v6239 = vrcp.pop %v6162
  %v6240 = vmul.f32 1.0, %v6239
  %v6241 = vrcp.pop %v6163
  %v6242 = vmul.f32 1.0, %v6241
  %v6243 = vrcp.pop %v6164
  %v6244 = vmul.f32 1.0, %v6243
  %v6245 = vrcp.pop %v6165
  %v6246 = vmul.f32 1.0, %v6245
  %v6247 = vrcp.pop %v6166
  %v6248 = vmul.f32 1.0, %v6247
  %v6249 = vrcp.pop %v6167
  %v6250 = vmul.f32 1.0, %v6249
  %v6251 = vrcp.pop %v6168
  %v6252 = vmul.f32 1.0, %v6251
  %v6253 = vrcp.pop %v6169
  %v6254 = vmul.f32 1.0, %v6253
  %v6255 = vrcp.pop %v6170
  %v6256 = vmul.f32 1.0, %v6255
  %v6257 = vrcp.pop %v6171
  %v6258 = vmul.f32 1.0, %v6257
  %v6259 = vrcp.pop %v6172
  %v6260 = vmul.f32 1.0, %v6259
  %v6261 = vrcp.pop %v6173
  %v6262 = vmul.f32 1.0, %v6261
  %v6263 = vrcp.pop %v6174
  %v6264 = vmul.f32 1.0, %v6263
  %v6265 = vrcp.pop %v6175
  %v6266 = vmul.f32 1.0, %v6265
  %v6267 = vrcp.pop %v6176
  %v6268 = vmul.f32 1.0, %v6267
  %v6269 = vrcp.pop %v6177
  %v6270 = vmul.f32 1.0, %v6269
  %v6271 = vrcp.pop %v6178
  %v6272 = vmul.f32 1.0, %v6271
  %v6273 = vrcp.pop %v6179
  %v6274 = vmul.f32 1.0, %v6273
  %v6275 = vrcp.pop %v6180
  %v6276 = vmul.f32 1.0, %v6275
  %v6277 = vrcp.pop %v6181
  %v6278 = vmul.f32 1.0, %v6277
  %v6279 = vrcp.pop %v6182
  %v6280 = vmul.f32 1.0, %v6279
  %v6281 = vrcp.pop %v6183
  %v6282 = vmul.f32 1.0, %v6281
  %v6283 = vrcp.pop %v6184
  %v6284 = vmul.f32 1.0, %v6283
  %v6285 = vrcp.pop %v6185
  %v6286 = vmul.f32 1.0, %v6285
  %v6287 = vrcp.pop %v6186
  %v6288 = vmul.f32 1.0, %v6287
  %v6289 = vrcp.pop %v6187
  %v6290 = vmul.f32 1.0, %v6289
  %v6291 = vrcp.pop %v6188
  %v6292 = vmul.f32 1.0, %v6291
  %v6293 = vrcp.pop %v6189
  %v6294 = vmul.f32 1.0, %v6293
  %v6295 = vrcp.pop %v6190
  %v6296 = vmul.f32 1.0, %v6295
  %v6297 = vrcp.pop %v6191
  %v6298 = vmul.f32 1.0, %v6297
  %v6299 = vrcp.pop %v6192
  %v6300 = vmul.f32 1.0, %v6299
  %v6301 = vrcp.pop %v6193
  %v6302 = vmul.f32 1.0, %v6301
  %v6303 = vrcp.pop %v6194
  %v6304 = vmul.f32 1.0, %v6303
  %v6305 = vrcp.pop %v6195
  %v6306 = vmul.f32 1.0, %v6305
  %v6307 = vrcp.pop %v6196
  %v6308 = vmul.f32 1.0, %v6307
  %v6309 = vrcp.pop %v6197
  %v6310 = vmul.f32 1.0, %v6309
  %v6311 = vrcp.pop %v6198
  %v6312 = vmul.f32 1.0, %v6311
  %v6313 = vrcp.pop %v6199
  %v6314 = vmul.f32 1.0, %v6313
  %v6315 = vrcp.pop %v6200
  %v6316 = vmul.f32 1.0, %v6315
  %v6317 = vrcp.pop %v6201
  %v6318 = vmul.f32 1.0, %v6317
  %v6319 = vrcp.pop %v6202
  %v6320 = vmul.f32 1.0, %v6319
  %v6321 = vrcp.pop %v6203
  %v6322 = vmul.f32 1.0, %v6321
  %v6323 = vrcp.pop %v6204
  %v6324 = vmul.f32 1.0, %v6323
  %v6325 = vrcp.pop %v6205
  %v6326 = vmul.f32 1.0, %v6325
  %v6327 = vrcp.pop %v6206
  %v6328 = vmul.f32 1.0, %v6327
  %v6329 = vrcp.pop %v6207
  %v6330 = vmul.f32 1.0, %v6329
  %v6331 = vrcp.pop %v6208
  %v6332 = vmul.f32 1.0, %v6331
  %v6333 = vrcp.pop %v6209
  %v6334 = vmul.f32 1.0, %v6333
  %v6335 = vrcp.pop %v6210
  %v6336 = vmul.f32 1.0, %v6335
  %v6337 = vrcp.pop %v6211
  %v6338 = vmul.f32 1.0, %v6337
  %v6339 = vrcp.pop %v6212
  %v6340 = vmul.f32 1.0, %v6339
  %v6341 = vmul.f32 %v5799, %v6214
  %v6342 = vmul.f32 %v5801, %v6216
  %v6343 = vmul.f32 %v5803, %v6218
  %v6344 = vmul.f32 %v5805, %v6220
  %v6345 = vmul.f32 %v5809, %v6222
  %v6346 = vmul.f32 %v5811, %v6224
  %v6347 = vmul.f32 %v5813, %v6226
  %v6348 = vmul.f32 %v5815, %v6228
  %v6349 = vmul.f32 %v5819, %v6230
  %v6350 = vmul.f32 %v5821, %v6232
  %v6351 = vmul.f32 %v5823, %v6234
  %v6352 = vmul.f32 %v5825, %v6236
  %v6353 = vmul.f32 %v5829, %v6238
  %v6354 = vmul.f32 %v5831, %v6240
  %v6355 = vmul.f32 %v5833, %v6242
  %v6356 = vmul.f32 %v5835, %v6244
  %v6357 = vmul.f32 %v5839, %v6246
  %v6358 = vmul.f32 %v5841, %v6248
  %v6359 = vmul.f32 %v5843, %v6250
  %v6360 = vmul.f32 %v5845, %v6252
  %v6361 = vmul.f32 %v5849, %v6254
  %v6362 = vmul.f32 %v5851, %v6256
  %v6363 = vmul.f32 %v5853, %v6258
  %v6364 = vmul.f32 %v5855, %v6260
  %v6365 = vmul.f32 %v5859, %v6262
  %v6366 = vmul.f32 %v5861, %v6264
  %v6367 = vmul.f32 %v5863, %v6266
  %v6368 = vmul.f32 %v5865, %v6268
  %v6369 = vmul.f32 %v5869, %v6270
  %v6370 = vmul.f32 %v5871, %v6272
  %v6371 = vmul.f32 %v5873, %v6274
  %v6372 = vmul.f32 %v5875, %v6276
  %v6373 = vmul.f32 %v5879, %v6278
  %v6374 = vmul.f32 %v5881, %v6280
  %v6375 = vmul.f32 %v5883, %v6282
  %v6376 = vmul.f32 %v5885, %v6284
  %v6377 = vmul.f32 %v5889, %v6286
  %v6378 = vmul.f32 %v5891, %v6288
  %v6379 = vmul.f32 %v5893, %v6290
  %v6380 = vmul.f32 %v5895, %v6292
  %v6381 = vmul.f32 %v5899, %v6294
  %v6382 = vmul.f32 %v5901, %v6296
  %v6383 = vmul.f32 %v5903, %v6298
  %v6384 = vmul.f32 %v5905, %v6300
  %v6385 = vmul.f32 %v5909, %v6302
  %v6386 = vmul.f32 %v5911, %v6304
  %v6387 = vmul.f32 %v5913, %v6306
  %v6388 = vmul.f32 %v5915, %v6308
  %v6389 = vmul.f32 %v5919, %v6310
  %v6390 = vmul.f32 %v5921, %v6312
  %v6391 = vmul.f32 %v5923, %v6314
  %v6392 = vmul.f32 %v5925, %v6316
  %v6393 = vmul.f32 %v5929, %v6318
  %v6394 = vmul.f32 %v5931, %v6320
  %v6395 = vmul.f32 %v5933, %v6322
  %v6396 = vmul.f32 %v5935, %v6324
  %v6397 = vmul.f32 %v5939, %v6326
  %v6398 = vmul.f32 %v5941, %v6328
  %v6399 = vmul.f32 %v5943, %v6330
  %v6400 = vmul.f32 %v5945, %v6332
  %v6401 = vmul.f32 %v5949, %v6334
  %v6402 = vmul.f32 %v5951, %v6336
  %v6403 = vmul.f32 %v5953, %v6338
  %v6404 = vmul.f32 %v5955, %v6340
  %v6405 = vpack.c.bf16 %v6343, %v6341
  %v6406 = vpack.c.bf16 %v6344, %v6342
  %v6407 = vpack.c.bf16 %v6347, %v6345
  %v6408 = vpack.c.bf16 %v6348, %v6346
  %v6409 = vpack.c.bf16 %v6351, %v6349
  %v6410 = vpack.c.bf16 %v6352, %v6350
  %v6411 = vpack.c.bf16 %v6355, %v6353
  %v6412 = vpack.c.bf16 %v6356, %v6354
  %v6413 = vpack.c.bf16 %v6359, %v6357
  %v6414 = vpack.c.bf16 %v6360, %v6358
  %v6415 = vpack.c.bf16 %v6363, %v6361
  %v6416 = vpack.c.bf16 %v6364, %v6362
  %v6417 = vpack.c.bf16 %v6367, %v6365
  %v6418 = vpack.c.bf16 %v6368, %v6366
  %v6419 = vpack.c.bf16 %v6371, %v6369
  %v6420 = vpack.c.bf16 %v6372, %v6370
  %v6421 = vpack.c.bf16 %v6375, %v6373
  %v6422 = vpack.c.bf16 %v6376, %v6374
  %v6423 = vpack.c.bf16 %v6379, %v6377
  %v6424 = vpack.c.bf16 %v6380, %v6378
  %v6425 = vpack.c.bf16 %v6383, %v6381
  %v6426 = vpack.c.bf16 %v6384, %v6382
  %v6427 = vpack.c.bf16 %v6387, %v6385
  %v6428 = vpack.c.bf16 %v6388, %v6386
  %v6429 = vpack.c.bf16 %v6391, %v6389
  %v6430 = vpack.c.bf16 %v6392, %v6390
  %v6431 = vpack.c.bf16 %v6395, %v6393
  %v6432 = vpack.c.bf16 %v6396, %v6394
  %v6433 = vpack.c.bf16 %v6399, %v6397
  %v6434 = vpack.c.bf16 %v6400, %v6398
  %v6435 = vpack.c.bf16 %v6403, %v6401
  %v6436 = vpack.c.bf16 %v6404, %v6402
  %v6469 = vunpack.c.l.b16 %v98
  %v6470 = vunpack.c.l.b16 %v99
  %v6471 = vunpack.c.l.b16 %v100
  %v6472 = vunpack.c.l.b16 %v101
  %v6473 = vunpack.c.l.b16 %v102
  %v6474 = vunpack.c.l.b16 %v103
  %v6475 = vunpack.c.l.b16 %v104
  %v6476 = vunpack.c.l.b16 %v105
  %v6477 = vunpack.c.l.b16 %v106
  %v6478 = vunpack.c.l.b16 %v107
  %v6479 = vunpack.c.l.b16 %v108
  %v6480 = vunpack.c.l.b16 %v109
  %v6481 = vunpack.c.l.b16 %v110
  %v6482 = vunpack.c.l.b16 %v111
  %v6483 = vunpack.c.l.b16 %v112
  %v6484 = vunpack.c.l.b16 %v113
  %v6485 = vunpack.c.l.b16 %v114
  %v6486 = vunpack.c.l.b16 %v115
  %v6487 = vunpack.c.l.b16 %v116
  %v6488 = vunpack.c.l.b16 %v117
  %v6489 = vunpack.c.l.b16 %v118
  %v6490 = vunpack.c.l.b16 %v119
  %v6491 = vunpack.c.l.b16 %v120
  %v6492 = vunpack.c.l.b16 %v121
  %v6493 = vunpack.c.l.b16 %v122
  %v6494 = vunpack.c.l.b16 %v123
  %v6495 = vunpack.c.l.b16 %v124
  %v6496 = vunpack.c.l.b16 %v125
  %v6497 = vunpack.c.l.b16 %v126
  %v6498 = vunpack.c.l.b16 %v127
  %v6499 = vunpack.c.l.b16 %v128
  %v6500 = vunpack.c.l.b16 %v129
  %v6501 = vpack.c.b16 %v6470, %v6469
  %v6502 = vpack.c.b16 %v6472, %v6471
  %v6503 = vpack.c.b16 %v6474, %v6473
  %v6504 = vpack.c.b16 %v6476, %v6475
  %v6505 = vpack.c.b16 %v6478, %v6477
  %v6506 = vpack.c.b16 %v6480, %v6479
  %v6507 = vpack.c.b16 %v6482, %v6481
  %v6508 = vpack.c.b16 %v6484, %v6483
  %v6509 = vpack.c.b16 %v6486, %v6485
  %v6510 = vpack.c.b16 %v6488, %v6487
  %v6511 = vpack.c.b16 %v6490, %v6489
  %v6512 = vpack.c.b16 %v6492, %v6491
  %v6513 = vpack.c.b16 %v6494, %v6493
  %v6514 = vpack.c.b16 %v6496, %v6495
  %v6515 = vpack.c.b16 %v6498, %v6497
  %v6516 = vpack.c.b16 %v6500, %v6499
  %6533 = vmatprep.subr.bf16.mxu0 0
  %6534 = vmatpush1.bf16.msra.mxu0 %v6508
  %6535 = vmatprep.subr.bf16.mxu0 0
  %6536 = vmatpush1.bf16.msra.mxu0 %v6507
  %6537 = vmatprep.subr.bf16.mxu0 0
  %6538 = vmatpush1.bf16.msra.mxu0 %v6506
  %6539 = vmatprep.subr.bf16.mxu0 0
  %6540 = vmatpush1.bf16.msra.mxu0 %v6505
  %6541 = vmatprep.subr.bf16.mxu0 0
  %6542 = vmatpush1.bf16.msra.mxu0 %v6504
  %6543 = vmatprep.subr.bf16.mxu0 0
  %6544 = vmatpush1.bf16.msra.mxu0 %v6503
  %6545 = vmatprep.subr.bf16.mxu0 0
  %6546 = vmatpush1.bf16.msra.mxu0 %v6502
  %6547 = vmatprep.subr.bf16.mxu0 0
  %6548 = vmatpush1.bf16.msra.mxu0 %v6501
  %6549 = vmatprep.subr.bf16.mxu0 0
  %6550 = vmatpush2.bf16.msra.mxu0 %v6516
  %6551 = vmatprep.subr.bf16.mxu0 0
  %6552 = vmatpush2.bf16.msra.mxu0 %v6515
  %6553 = vmatprep.subr.bf16.mxu0 0
  %6554 = vmatpush2.bf16.msra.mxu0 %v6514
  %6555 = vmatprep.subr.bf16.mxu0 0
  %6556 = vmatpush2.bf16.msra.mxu0 %v6513
  %6557 = vmatprep.subr.bf16.mxu0 0
  %6558 = vmatpush2.bf16.msra.mxu0 %v6512
  %6559 = vmatprep.subr.bf16.mxu0 0
  %6560 = vmatpush2.bf16.msra.mxu0 %v6511
  %6561 = vmatprep.subr.bf16.mxu0 0
  %6562 = vmatpush2.bf16.msra.mxu0 %v6510
  %6563 = vmatprep.subr.bf16.mxu0 0
  %6564 = vmatpush2.bf16.msra.mxu0 %v6509
  %6565 = vmatprep.mubr.bf16.mxu0 %v6406
  %6566 = vmatmul.mubr.bf16.gmra.mxu0 %v6405
  %v6567 = vpop.f32.mrf.mxu0
  %v6568 = vadd.f32 %v151, %v6567
  %v6569 = vpop.f32.mrf.mxu0
  %v6570 = vpop.f32.mrf.mxu0
  %v6571 = vadd.f32 %v151, %v6570
  %v6572 = vpop.f32.mrf.mxu0
  %6573 = vmatprep.mubr.bf16.mxu0 %v6408
  %6574 = vmatmul.mubr.bf16.gmra.mxu0 %v6407
  %v6575 = vpop.f32.mrf.mxu0
  %v6576 = vadd.f32 %v151, %v6575
  %v6577 = vpop.f32.mrf.mxu0
  %v6578 = vpop.f32.mrf.mxu0
  %v6579 = vadd.f32 %v151, %v6578
  %v6580 = vpop.f32.mrf.mxu0
  %6581 = vmatprep.mubr.bf16.mxu0 %v6410
  %6582 = vmatmul.mubr.bf16.gmra.mxu0 %v6409
  %v6583 = vpop.f32.mrf.mxu0
  %v6584 = vadd.f32 %v151, %v6583
  %v6585 = vpop.f32.mrf.mxu0
  %v6586 = vpop.f32.mrf.mxu0
  %v6587 = vadd.f32 %v151, %v6586
  %v6588 = vpop.f32.mrf.mxu0
  %6589 = vmatprep.mubr.bf16.mxu0 %v6412
  %6590 = vmatmul.mubr.bf16.gmra.mxu0 %v6411
  %v6591 = vpop.f32.mrf.mxu0
  %v6592 = vadd.f32 %v151, %v6591
  %v6593 = vpop.f32.mrf.mxu0
  %v6594 = vpop.f32.mrf.mxu0
  %v6595 = vadd.f32 %v151, %v6594
  %v6596 = vpop.f32.mrf.mxu0
  %6597 = vmatprep.mubr.bf16.mxu0 %v6414
  %6598 = vmatmul.mubr.bf16.gmra.mxu0 %v6413
  %v6599 = vpop.f32.mrf.mxu0
  %v6600 = vadd.f32 %v151, %v6599
  %v6601 = vpop.f32.mrf.mxu0
  %v6602 = vpop.f32.mrf.mxu0
  %v6603 = vadd.f32 %v151, %v6602
  %v6604 = vpop.f32.mrf.mxu0
  %6605 = vmatprep.mubr.bf16.mxu0 %v6416
  %6606 = vmatmul.mubr.bf16.gmra.mxu0 %v6415
  %v6607 = vpop.f32.mrf.mxu0
  %v6608 = vadd.f32 %v151, %v6607
  %v6609 = vpop.f32.mrf.mxu0
  %v6610 = vpop.f32.mrf.mxu0
  %v6611 = vadd.f32 %v151, %v6610
  %v6612 = vpop.f32.mrf.mxu0
  %6613 = vmatprep.mubr.bf16.mxu0 %v6418
  %6614 = vmatmul.mubr.bf16.gmra.mxu0 %v6417
  %v6615 = vpop.f32.mrf.mxu0
  %v6616 = vadd.f32 %v151, %v6615
  %v6617 = vpop.f32.mrf.mxu0
  %v6618 = vpop.f32.mrf.mxu0
  %v6619 = vadd.f32 %v151, %v6618
  %v6620 = vpop.f32.mrf.mxu0
  %6621 = vmatprep.mubr.bf16.mxu0 %v6420
  %6622 = vmatmul.mubr.bf16.gmra.mxu0 %v6419
  %v6623 = vpop.f32.mrf.mxu0
  %v6624 = vadd.f32 %v151, %v6623
  %v6625 = vpop.f32.mrf.mxu0
  %v6626 = vpop.f32.mrf.mxu0
  %v6627 = vadd.f32 %v151, %v6626
  %v6628 = vpop.f32.mrf.mxu0
  %6629 = vmatprep.mubr.bf16.mxu0 %v6422
  %6630 = vmatmul.mubr.bf16.gmra.mxu0 %v6421
  %v6631 = vpop.f32.mrf.mxu0
  %v6632 = vadd.f32 %v151, %v6631
  %v6633 = vpop.f32.mrf.mxu0
  %v6634 = vpop.f32.mrf.mxu0
  %v6635 = vadd.f32 %v151, %v6634
  %v6636 = vpop.f32.mrf.mxu0
  %6637 = vmatprep.mubr.bf16.mxu0 %v6424
  %6638 = vmatmul.mubr.bf16.gmra.mxu0 %v6423
  %v6639 = vpop.f32.mrf.mxu0
  %v6640 = vadd.f32 %v151, %v6639
  %v6641 = vpop.f32.mrf.mxu0
  %v6642 = vpop.f32.mrf.mxu0
  %v6643 = vadd.f32 %v151, %v6642
  %v6644 = vpop.f32.mrf.mxu0
  %6645 = vmatprep.mubr.bf16.mxu0 %v6426
  %6646 = vmatmul.mubr.bf16.gmra.mxu0 %v6425
  %v6647 = vpop.f32.mrf.mxu0
  %v6648 = vadd.f32 %v151, %v6647
  %v6649 = vpop.f32.mrf.mxu0
  %v6650 = vpop.f32.mrf.mxu0
  %v6651 = vadd.f32 %v151, %v6650
  %v6652 = vpop.f32.mrf.mxu0
  %6653 = vmatprep.mubr.bf16.mxu0 %v6428
  %6654 = vmatmul.mubr.bf16.gmra.mxu0 %v6427
  %v6655 = vpop.f32.mrf.mxu0
  %v6656 = vadd.f32 %v151, %v6655
  %v6657 = vpop.f32.mrf.mxu0
  %v6658 = vpop.f32.mrf.mxu0
  %v6659 = vadd.f32 %v151, %v6658
  %v6660 = vpop.f32.mrf.mxu0
  %6661 = vmatprep.mubr.bf16.mxu0 %v6430
  %6662 = vmatmul.mubr.bf16.gmra.mxu0 %v6429
  %v6663 = vpop.f32.mrf.mxu0
  %v6664 = vadd.f32 %v151, %v6663
  %v6665 = vpop.f32.mrf.mxu0
  %v6666 = vpop.f32.mrf.mxu0
  %v6667 = vadd.f32 %v151, %v6666
  %v6668 = vpop.f32.mrf.mxu0
  %6669 = vmatprep.mubr.bf16.mxu0 %v6432
  %6670 = vmatmul.mubr.bf16.gmra.mxu0 %v6431
  %v6671 = vpop.f32.mrf.mxu0
  %v6672 = vadd.f32 %v151, %v6671
  %v6673 = vpop.f32.mrf.mxu0
  %v6674 = vpop.f32.mrf.mxu0
  %v6675 = vadd.f32 %v151, %v6674
  %v6676 = vpop.f32.mrf.mxu0
  %6677 = vmatprep.mubr.bf16.mxu0 %v6434
  %6678 = vmatmul.mubr.bf16.gmra.mxu0 %v6433
  %v6679 = vpop.f32.mrf.mxu0
  %v6680 = vadd.f32 %v151, %v6679
  %v6681 = vpop.f32.mrf.mxu0
  %v6682 = vpop.f32.mrf.mxu0
  %v6683 = vadd.f32 %v151, %v6682
  %v6684 = vpop.f32.mrf.mxu0
  %6685 = vmatprep.mubr.bf16.mxu0 %v6436
  %6686 = vmatmul.mubr.bf16.gmra.mxu0 %v6435
  %v6687 = vpop.f32.mrf.mxu0
  %v6688 = vadd.f32 %v151, %v6687
  %v6689 = vpop.f32.mrf.mxu0
  %v6690 = vpop.f32.mrf.mxu0
  %v6691 = vadd.f32 %v151, %v6690
  %v6692 = vpop.f32.mrf.mxu0
  %6693 = vdwg.mxu0
  %v6694 = vadd.f32 %v2073, %v1371
  %v6695 = vadd.f32 %v2074, %v1374
  %v6696 = vadd.f32 %v2075, %v1379
  %v6697 = vadd.f32 %v2076, %v1382
  %v6698 = vadd.f32 %v2077, %v1387
  %v6699 = vadd.f32 %v2078, %v1390
  %v6700 = vadd.f32 %v2079, %v1395
  %v6701 = vadd.f32 %v2080, %v1398
  %v6702 = vadd.f32 %v2081, %v1403
  %v6703 = vadd.f32 %v2082, %v1406
  %v6704 = vadd.f32 %v2083, %v1411
  %v6705 = vadd.f32 %v2084, %v1414
  %v6706 = vadd.f32 %v2085, %v1419
  %v6707 = vadd.f32 %v2086, %v1422
  %v6708 = vadd.f32 %v2087, %v1427
  %v6709 = vadd.f32 %v2088, %v1430
  %v6710 = vadd.f32 %v2089, %v1435
  %v6711 = vadd.f32 %v2090, %v1438
  %v6712 = vadd.f32 %v2091, %v1443
  %v6713 = vadd.f32 %v2092, %v1446
  %v6714 = vadd.f32 %v2093, %v1451
  %v6715 = vadd.f32 %v2094, %v1454
  %v6716 = vadd.f32 %v2095, %v1459
  %v6717 = vadd.f32 %v2096, %v1462
  %v6718 = vadd.f32 %v2097, %v1467
  %v6719 = vadd.f32 %v2098, %v1470
  %v6720 = vadd.f32 %v2099, %v1475
  %v6721 = vadd.f32 %v2100, %v1478
  %v6722 = vadd.f32 %v2101, %v1483
  %v6723 = vadd.f32 %v2102, %v1486
  %v6724 = vadd.f32 %v2103, %v1491
  %v6725 = vadd.f32 %v2104, %v1494
  %v6726 = vadd.f32 %v6694, %v6568
  %v6727 = vadd.f32 %v6695, %v6571
  %v6728 = vadd.f32 %v6696, %v6576
  %v6729 = vadd.f32 %v6697, %v6579
  %v6730 = vadd.f32 %v6698, %v6584
  %v6731 = vadd.f32 %v6699, %v6587
  %v6732 = vadd.f32 %v6700, %v6592
  %v6733 = vadd.f32 %v6701, %v6595
  %v6734 = vadd.f32 %v6702, %v6600
  %v6735 = vadd.f32 %v6703, %v6603
  %v6736 = vadd.f32 %v6704, %v6608
  %v6737 = vadd.f32 %v6705, %v6611
  %v6738 = vadd.f32 %v6706, %v6616
  %v6739 = vadd.f32 %v6707, %v6619
  %v6740 = vadd.f32 %v6708, %v6624
  %v6741 = vadd.f32 %v6709, %v6627
  %v6742 = vadd.f32 %v6710, %v6632
  %v6743 = vadd.f32 %v6711, %v6635
  %v6744 = vadd.f32 %v6712, %v6640
  %v6745 = vadd.f32 %v6713, %v6643
  %v6746 = vadd.f32 %v6714, %v6648
  %v6747 = vadd.f32 %v6715, %v6651
  %v6748 = vadd.f32 %v6716, %v6656
  %v6749 = vadd.f32 %v6717, %v6659
  %v6750 = vadd.f32 %v6718, %v6664
  %v6751 = vadd.f32 %v6719, %v6667
  %v6752 = vadd.f32 %v6720, %v6672
  %v6753 = vadd.f32 %v6721, %v6675
  %v6754 = vadd.f32 %v6722, %v6680
  %v6755 = vadd.f32 %v6723, %v6683
  %v6756 = vadd.f32 %v6724, %v6688
  %v6757 = vadd.f32 %v6725, %v6691
  %v6758 = vpack.c.bf16 %v6727, %v6726
  %v6759 = vpack.c.bf16 %v6729, %v6728
  %v6760 = vpack.c.bf16 %v6731, %v6730
  %v6761 = vpack.c.bf16 %v6733, %v6732
  %v6762 = vpack.c.bf16 %v6735, %v6734
  %v6763 = vpack.c.bf16 %v6737, %v6736
  %v6764 = vpack.c.bf16 %v6739, %v6738
  %v6765 = vpack.c.bf16 %v6741, %v6740
  %v6766 = vpack.c.bf16 %v6743, %v6742
  %v6767 = vpack.c.bf16 %v6745, %v6744
  %v6768 = vpack.c.bf16 %v6747, %v6746
  %v6769 = vpack.c.bf16 %v6749, %v6748
  %v6770 = vpack.c.bf16 %v6751, %v6750
  %v6771 = vpack.c.bf16 %v6753, %v6752
  %v6772 = vpack.c.bf16 %v6755, %v6754
  %v6773 = vpack.c.bf16 %v6757, %v6756
  %v6774 = vmul.f32 %v1756, %v160
  %v6775 = vmul.f32 %v1761, %v160
  %v6776 = vmul.f32 %v1766, %v160
  %v6777 = vmul.f32 %v1771, %v160
  %v6778 = vmul.f32 %v1776, %v160
  %v6779 = vmul.f32 %v1781, %v160
  %v6780 = vmul.f32 %v1786, %v160
  %v6781 = vmul.f32 %v1791, %v160
  %v6782 = vmul.f32 %v1796, %v160
  %v6783 = vmul.f32 %v1801, %v160
  %v6784 = vmul.f32 %v1806, %v160
  %v6785 = vmul.f32 %v1811, %v160
  %v6786 = vmul.f32 %v1816, %v160
  %v6787 = vmul.f32 %v1821, %v160
  %v6788 = vmul.f32 %v1826, %v160
  %v6789 = vmul.f32 %v1831, %v160
  %v6790 = vmul.f32 %v1836, %v160
  %v6791 = vmul.f32 %v1841, %v160
  %v6792 = vmul.f32 %v1846, %v160
  %v6793 = vmul.f32 %v1851, %v160
  %v6794 = vmul.f32 %v1856, %v160
  %v6795 = vmul.f32 %v1861, %v160
  %v6796 = vmul.f32 %v1866, %v160
  %v6797 = vmul.f32 %v1871, %v160
  %v6798 = vmul.f32 %v1876, %v160
  %v6799 = vmul.f32 %v1881, %v160
  %v6800 = vmul.f32 %v1886, %v160
  %v6801 = vmul.f32 %v1891, %v160
  %v6802 = vmul.f32 %v1896, %v160
  %v6803 = vmul.f32 %v1901, %v160
  %v6804 = vmul.f32 %v1906, %v160
  %v6805 = vmul.f32 %v1911, %v160
  %v6810 = vunpack.c.l.b16 %v50
  %v6811 = vunpack.c.l.b16 %v51
  %v6812 = vunpack.c.l.b16 %v52
  %v6813 = vunpack.c.l.b16 %v53
  %v6814 = vpack.c.b16 %v6811, %v6810
  %v6815 = vpack.c.b16 %v6813, %v6812
  %v6819 = vsel %vm237, %v6758, 0
  %v6822 = vsel %vm237, %v6759, 0
  %v6825 = vsel %vm237, %v6760, 0
  %v6828 = vsel %vm237, %v6761, 0
  %v6831 = vsel %vm237, %v6762, 0
  %v6834 = vsel %vm237, %v6763, 0
  %v6837 = vsel %vm237, %v6764, 0
  %v6840 = vsel %vm237, %v6765, 0
  %v6843 = vsel %vm237, %v6766, 0
  %v6846 = vsel %vm237, %v6767, 0
  %v6849 = vsel %vm237, %v6768, 0
  %v6852 = vsel %vm237, %v6769, 0
  %v6855 = vsel %vm237, %v6770, 0
  %v6858 = vsel %vm237, %v6771, 0
  %v6861 = vsel %vm237, %v6772, 0
  %v6864 = vsel %vm237, %v6773, 0
  %6866 = vmatprep.subr.bf16.mxu0 0
  %6867 = vmatpush1.bf16.msra.mxu0 0
  %6868 = vmatprep.subr.bf16.mxu0 0
  %6869 = vmatpush1.bf16.msra.mxu0 0
  %6870 = vmatprep.subr.bf16.mxu0 0
  %6871 = vmatpush1.bf16.msra.mxu0 0
  %6872 = vmatprep.subr.bf16.mxu0 0
  %6873 = vmatpush1.bf16.msra.mxu0 0
  %6874 = vmatprep.subr.bf16.mxu0 0
  %6875 = vmatpush1.bf16.msra.mxu0 0
  %6876 = vmatprep.subr.bf16.mxu0 0
  %6877 = vmatpush1.bf16.msra.mxu0 0
  %6878 = vmatprep.subr.bf16.mxu0 0
  %6879 = vmatpush1.bf16.msra.mxu0 %v6815
  %6880 = vmatprep.subr.bf16.mxu0 0
  %6881 = vmatpush1.bf16.msra.mxu0 %v6814
  %6882 = vmatprep.subr.bf16.mxu0 0
  %6883 = vmatpush2.bf16.msra.mxu0 0
  %6884 = vmatprep.subr.bf16.mxu0 0
  %6885 = vmatpush2.bf16.msra.mxu0 0
  %6886 = vmatprep.subr.bf16.mxu0 0
  %6887 = vmatpush2.bf16.msra.mxu0 0
  %6888 = vmatprep.subr.bf16.mxu0 0
  %6889 = vmatpush2.bf16.msra.mxu0 0
  %6890 = vmatprep.subr.bf16.mxu0 0
  %6891 = vmatpush2.bf16.msra.mxu0 0
  %6892 = vmatprep.subr.bf16.mxu0 0
  %6893 = vmatpush2.bf16.msra.mxu0 0
  %6894 = vmatprep.subr.bf16.mxu0 0
  %6895 = vmatpush2.bf16.msra.mxu0 0
  %6896 = vmatprep.subr.bf16.mxu0 0
  %6897 = vmatpush2.bf16.msra.mxu0 0
  %6898 = vmatprep.mubr.bf16.mxu0 0
  %6899 = vmatmul.mubr.bf16.gmra.mxu0 %v6819
  %v6900 = vpop.f32.mrf.mxu0
  %v6901 = vadd.f32 %v6774, %v6900
  %v6902 = vpop.f32.mrf.mxu0
  %v6903 = vpop.f32.mrf.mxu0
  %v6904 = vadd.f32 %v6775, %v6903
  %v6905 = vpop.f32.mrf.mxu0
  %6906 = vmatprep.mubr.bf16.mxu0 0
  %6907 = vmatmul.mubr.bf16.gmra.mxu0 %v6822
  %v6908 = vpop.f32.mrf.mxu0
  %v6909 = vadd.f32 %v6776, %v6908
  %v6910 = vpop.f32.mrf.mxu0
  %v6911 = vpop.f32.mrf.mxu0
  %v6912 = vadd.f32 %v6777, %v6911
  %v6913 = vpop.f32.mrf.mxu0
  %6914 = vmatprep.mubr.bf16.mxu0 0
  %6915 = vmatmul.mubr.bf16.gmra.mxu0 %v6825
  %v6916 = vpop.f32.mrf.mxu0
  %v6917 = vadd.f32 %v6778, %v6916
  %v6918 = vpop.f32.mrf.mxu0
  %v6919 = vpop.f32.mrf.mxu0
  %v6920 = vadd.f32 %v6779, %v6919
  %v6921 = vpop.f32.mrf.mxu0
  %6922 = vmatprep.mubr.bf16.mxu0 0
  %6923 = vmatmul.mubr.bf16.gmra.mxu0 %v6828
  %v6924 = vpop.f32.mrf.mxu0
  %v6925 = vadd.f32 %v6780, %v6924
  %v6926 = vpop.f32.mrf.mxu0
  %v6927 = vpop.f32.mrf.mxu0
  %v6928 = vadd.f32 %v6781, %v6927
  %v6929 = vpop.f32.mrf.mxu0
  %6930 = vmatprep.mubr.bf16.mxu0 0
  %6931 = vmatmul.mubr.bf16.gmra.mxu0 %v6831
  %v6932 = vpop.f32.mrf.mxu0
  %v6933 = vadd.f32 %v6782, %v6932
  %v6934 = vpop.f32.mrf.mxu0
  %v6935 = vpop.f32.mrf.mxu0
  %v6936 = vadd.f32 %v6783, %v6935
  %v6937 = vpop.f32.mrf.mxu0
  %6938 = vmatprep.mubr.bf16.mxu0 0
  %6939 = vmatmul.mubr.bf16.gmra.mxu0 %v6834
  %v6940 = vpop.f32.mrf.mxu0
  %v6941 = vadd.f32 %v6784, %v6940
  %v6942 = vpop.f32.mrf.mxu0
  %v6943 = vpop.f32.mrf.mxu0
  %v6944 = vadd.f32 %v6785, %v6943
  %v6945 = vpop.f32.mrf.mxu0
  %6946 = vmatprep.mubr.bf16.mxu0 0
  %6947 = vmatmul.mubr.bf16.gmra.mxu0 %v6837
  %v6948 = vpop.f32.mrf.mxu0
  %v6949 = vadd.f32 %v6786, %v6948
  %v6950 = vpop.f32.mrf.mxu0
  %v6951 = vpop.f32.mrf.mxu0
  %v6952 = vadd.f32 %v6787, %v6951
  %v6953 = vpop.f32.mrf.mxu0
  %6954 = vmatprep.mubr.bf16.mxu0 0
  %6955 = vmatmul.mubr.bf16.gmra.mxu0 %v6840
  %v6956 = vpop.f32.mrf.mxu0
  %v6957 = vadd.f32 %v6788, %v6956
  %v6958 = vpop.f32.mrf.mxu0
  %v6959 = vpop.f32.mrf.mxu0
  %v6960 = vadd.f32 %v6789, %v6959
  %v6961 = vpop.f32.mrf.mxu0
  %6962 = vmatprep.mubr.bf16.mxu0 0
  %6963 = vmatmul.mubr.bf16.gmra.mxu0 %v6843
  %v6964 = vpop.f32.mrf.mxu0
  %v6965 = vadd.f32 %v6790, %v6964
  %v6966 = vpop.f32.mrf.mxu0
  %v6967 = vpop.f32.mrf.mxu0
  %v6968 = vadd.f32 %v6791, %v6967
  %v6969 = vpop.f32.mrf.mxu0
  %6970 = vmatprep.mubr.bf16.mxu0 0
  %6971 = vmatmul.mubr.bf16.gmra.mxu0 %v6846
  %v6972 = vpop.f32.mrf.mxu0
  %v6973 = vadd.f32 %v6792, %v6972
  %v6974 = vpop.f32.mrf.mxu0
  %v6975 = vpop.f32.mrf.mxu0
  %v6976 = vadd.f32 %v6793, %v6975
  %v6977 = vpop.f32.mrf.mxu0
  %6978 = vmatprep.mubr.bf16.mxu0 0
  %6979 = vmatmul.mubr.bf16.gmra.mxu0 %v6849
  %v6980 = vpop.f32.mrf.mxu0
  %v6981 = vadd.f32 %v6794, %v6980
  %v6982 = vpop.f32.mrf.mxu0
  %v6983 = vpop.f32.mrf.mxu0
  %v6984 = vadd.f32 %v6795, %v6983
  %v6985 = vpop.f32.mrf.mxu0
  %6986 = vmatprep.mubr.bf16.mxu0 0
  %6987 = vmatmul.mubr.bf16.gmra.mxu0 %v6852
  %v6988 = vpop.f32.mrf.mxu0
  %v6989 = vadd.f32 %v6796, %v6988
  %v6990 = vpop.f32.mrf.mxu0
  %v6991 = vpop.f32.mrf.mxu0
  %v6992 = vadd.f32 %v6797, %v6991
  %v6993 = vpop.f32.mrf.mxu0
  %6994 = vmatprep.mubr.bf16.mxu0 0
  %6995 = vmatmul.mubr.bf16.gmra.mxu0 %v6855
  %v6996 = vpop.f32.mrf.mxu0
  %v6997 = vadd.f32 %v6798, %v6996
  %v6998 = vpop.f32.mrf.mxu0
  %v6999 = vpop.f32.mrf.mxu0
  %v7000 = vadd.f32 %v6799, %v6999
  %v7001 = vpop.f32.mrf.mxu0
  %7002 = vmatprep.mubr.bf16.mxu0 0
  %7003 = vmatmul.mubr.bf16.gmra.mxu0 %v6858
  %v7004 = vpop.f32.mrf.mxu0
  %v7005 = vadd.f32 %v6800, %v7004
  %v7006 = vpop.f32.mrf.mxu0
  %v7007 = vpop.f32.mrf.mxu0
  %v7008 = vadd.f32 %v6801, %v7007
  %v7009 = vpop.f32.mrf.mxu0
  %7010 = vmatprep.mubr.bf16.mxu0 0
  %7011 = vmatmul.mubr.bf16.gmra.mxu0 %v6861
  %v7012 = vpop.f32.mrf.mxu0
  %v7013 = vadd.f32 %v6802, %v7012
  %v7014 = vpop.f32.mrf.mxu0
  %v7015 = vpop.f32.mrf.mxu0
  %v7016 = vadd.f32 %v6803, %v7015
  %v7017 = vpop.f32.mrf.mxu0
  %7018 = vmatprep.mubr.bf16.mxu0 0
  %7019 = vmatmul.mubr.bf16.gmra.mxu0 %v6864
  %v7020 = vpop.f32.mrf.mxu0
  %v7021 = vadd.f32 %v6804, %v7020
  %v7022 = vpop.f32.mrf.mxu0
  %v7023 = vpop.f32.mrf.mxu0
  %v7024 = vadd.f32 %v6805, %v7023
  %v7025 = vpop.f32.mrf.mxu0
  %7026 = vdwg.mxu0
  %v7027 = vadd.f32 %v6901, %v152
  %v7028 = vadd.f32 %v6904, %v152
  %v7029 = vadd.f32 %v6909, %v152
  %v7030 = vadd.f32 %v6912, %v152
  %v7031 = vadd.f32 %v6917, %v152
  %v7032 = vadd.f32 %v6920, %v152
  %v7033 = vadd.f32 %v6925, %v152
  %v7034 = vadd.f32 %v6928, %v152
  %v7035 = vadd.f32 %v6933, %v152
  %v7036 = vadd.f32 %v6936, %v152
  %v7037 = vadd.f32 %v6941, %v152
  %v7038 = vadd.f32 %v6944, %v152
  %v7039 = vadd.f32 %v6949, %v152
  %v7040 = vadd.f32 %v6952, %v152
  %v7041 = vadd.f32 %v6957, %v152
  %v7042 = vadd.f32 %v6960, %v152
  %v7043 = vadd.f32 %v6965, %v152
  %v7044 = vadd.f32 %v6968, %v152
  %v7045 = vadd.f32 %v6973, %v152
  %v7046 = vadd.f32 %v6976, %v152
  %v7047 = vadd.f32 %v6981, %v152
  %v7048 = vadd.f32 %v6984, %v152
  %v7049 = vadd.f32 %v6989, %v152
  %v7050 = vadd.f32 %v6992, %v152
  %v7051 = vadd.f32 %v6997, %v152
  %v7052 = vadd.f32 %v7000, %v152
  %v7053 = vadd.f32 %v7005, %v152
  %v7054 = vadd.f32 %v7008, %v152
  %v7055 = vadd.f32 %v7013, %v152
  %v7056 = vadd.f32 %v7016, %v152
  %v7057 = vadd.f32 %v7021, %v152
  %v7058 = vadd.f32 %v7024, %v152
  %v7059 = vxor.u32 %v7027, 2147483648
  %v7060 = vxor.u32 %v7028, 2147483648
  %v7061 = vxor.u32 %v7029, 2147483648
  %v7062 = vxor.u32 %v7030, 2147483648
  %v7063 = vxor.u32 %v7031, 2147483648
  %v7064 = vxor.u32 %v7032, 2147483648
  %v7065 = vxor.u32 %v7033, 2147483648
  %v7066 = vxor.u32 %v7034, 2147483648
  %v7067 = vxor.u32 %v7035, 2147483648
  %v7068 = vxor.u32 %v7036, 2147483648
  %v7069 = vxor.u32 %v7037, 2147483648
  %v7070 = vxor.u32 %v7038, 2147483648
  %v7071 = vxor.u32 %v7039, 2147483648
  %v7072 = vxor.u32 %v7040, 2147483648
  %v7073 = vxor.u32 %v7041, 2147483648
  %v7074 = vxor.u32 %v7042, 2147483648
  %v7075 = vxor.u32 %v7043, 2147483648
  %v7076 = vxor.u32 %v7044, 2147483648
  %v7077 = vxor.u32 %v7045, 2147483648
  %v7078 = vxor.u32 %v7046, 2147483648
  %v7079 = vxor.u32 %v7047, 2147483648
  %v7080 = vxor.u32 %v7048, 2147483648
  %v7081 = vxor.u32 %v7049, 2147483648
  %v7082 = vxor.u32 %v7050, 2147483648
  %v7083 = vxor.u32 %v7051, 2147483648
  %v7084 = vxor.u32 %v7052, 2147483648
  %v7085 = vxor.u32 %v7053, 2147483648
  %v7086 = vxor.u32 %v7054, 2147483648
  %v7087 = vxor.u32 %v7055, 2147483648
  %v7088 = vxor.u32 %v7056, 2147483648
  %v7089 = vxor.u32 %v7057, 2147483648
  %v7090 = vxor.u32 %v7058, 2147483648
  %v7091 = vmul.f32 %v7059, 1.442695
  %v7092 = vpow.pop %v7091
  %v7093 = vmul.f32 %v7060, 1.442695
  %v7094 = vpow.pop %v7093
  %v7095 = vmul.f32 %v7061, 1.442695
  %v7096 = vpow.pop %v7095
  %v7097 = vmul.f32 %v7062, 1.442695
  %v7098 = vpow.pop %v7097
  %v7099 = vmul.f32 %v7063, 1.442695
  %v7100 = vpow.pop %v7099
  %v7101 = vmul.f32 %v7064, 1.442695
  %v7102 = vpow.pop %v7101
  %v7103 = vmul.f32 %v7065, 1.442695
  %v7104 = vpow.pop %v7103
  %v7105 = vmul.f32 %v7066, 1.442695
  %v7106 = vpow.pop %v7105
  %v7107 = vmul.f32 %v7067, 1.442695
  %v7108 = vpow.pop %v7107
  %v7109 = vmul.f32 %v7068, 1.442695
  %v7110 = vpow.pop %v7109
  %v7111 = vmul.f32 %v7069, 1.442695
  %v7112 = vpow.pop %v7111
  %v7113 = vmul.f32 %v7070, 1.442695
  %v7114 = vpow.pop %v7113
  %v7115 = vmul.f32 %v7071, 1.442695
  %v7116 = vpow.pop %v7115
  %v7117 = vmul.f32 %v7072, 1.442695
  %v7118 = vpow.pop %v7117
  %v7119 = vmul.f32 %v7073, 1.442695
  %v7120 = vpow.pop %v7119
  %v7121 = vmul.f32 %v7074, 1.442695
  %v7122 = vpow.pop %v7121
  %v7123 = vmul.f32 %v7075, 1.442695
  %v7124 = vpow.pop %v7123
  %v7125 = vmul.f32 %v7076, 1.442695
  %v7126 = vpow.pop %v7125
  %v7127 = vmul.f32 %v7077, 1.442695
  %v7128 = vpow.pop %v7127
  %v7129 = vmul.f32 %v7078, 1.442695
  %v7130 = vpow.pop %v7129
  %v7131 = vmul.f32 %v7079, 1.442695
  %v7132 = vpow.pop %v7131
  %v7133 = vmul.f32 %v7080, 1.442695
  %v7134 = vpow.pop %v7133
  %v7135 = vmul.f32 %v7081, 1.442695
  %v7136 = vpow.pop %v7135
  %v7137 = vmul.f32 %v7082, 1.442695
  %v7138 = vpow.pop %v7137
  %v7139 = vmul.f32 %v7083, 1.442695
  %v7140 = vpow.pop %v7139
  %v7141 = vmul.f32 %v7084, 1.442695
  %v7142 = vpow.pop %v7141
  %v7143 = vmul.f32 %v7085, 1.442695
  %v7144 = vpow.pop %v7143
  %v7145 = vmul.f32 %v7086, 1.442695
  %v7146 = vpow.pop %v7145
  %v7147 = vmul.f32 %v7087, 1.442695
  %v7148 = vpow.pop %v7147
  %v7149 = vmul.f32 %v7088, 1.442695
  %v7150 = vpow.pop %v7149
  %v7151 = vmul.f32 %v7089, 1.442695
  %v7152 = vpow.pop %v7151
  %v7153 = vmul.f32 %v7090, 1.442695
  %v7154 = vpow.pop %v7153
  %v7155 = vadd.f32 %v7092, 1.0
  %v7156 = vadd.f32 %v7094, 1.0
  %v7157 = vadd.f32 %v7096, 1.0
  %v7158 = vadd.f32 %v7098, 1.0
  %v7159 = vadd.f32 %v7100, 1.0
  %v7160 = vadd.f32 %v7102, 1.0
  %v7161 = vadd.f32 %v7104, 1.0
  %v7162 = vadd.f32 %v7106, 1.0
  %v7163 = vadd.f32 %v7108, 1.0
  %v7164 = vadd.f32 %v7110, 1.0
  %v7165 = vadd.f32 %v7112, 1.0
  %v7166 = vadd.f32 %v7114, 1.0
  %v7167 = vadd.f32 %v7116, 1.0
  %v7168 = vadd.f32 %v7118, 1.0
  %v7169 = vadd.f32 %v7120, 1.0
  %v7170 = vadd.f32 %v7122, 1.0
  %v7171 = vadd.f32 %v7124, 1.0
  %v7172 = vadd.f32 %v7126, 1.0
  %v7173 = vadd.f32 %v7128, 1.0
  %v7174 = vadd.f32 %v7130, 1.0
  %v7175 = vadd.f32 %v7132, 1.0
  %v7176 = vadd.f32 %v7134, 1.0
  %v7177 = vadd.f32 %v7136, 1.0
  %v7178 = vadd.f32 %v7138, 1.0
  %v7179 = vadd.f32 %v7140, 1.0
  %v7180 = vadd.f32 %v7142, 1.0
  %v7181 = vadd.f32 %v7144, 1.0
  %v7182 = vadd.f32 %v7146, 1.0
  %v7183 = vadd.f32 %v7148, 1.0
  %v7184 = vadd.f32 %v7150, 1.0
  %v7185 = vadd.f32 %v7152, 1.0
  %v7186 = vadd.f32 %v7154, 1.0
  %v7187 = vrcp.pop %v7155
  %v7188 = vmul.f32 1.0, %v7187
  %v7189 = vrcp.pop %v7156
  %v7190 = vmul.f32 1.0, %v7189
  %v7191 = vrcp.pop %v7157
  %v7192 = vmul.f32 1.0, %v7191
  %v7193 = vrcp.pop %v7158
  %v7194 = vmul.f32 1.0, %v7193
  %v7195 = vrcp.pop %v7159
  %v7196 = vmul.f32 1.0, %v7195
  %v7197 = vrcp.pop %v7160
  %v7198 = vmul.f32 1.0, %v7197
  %v7199 = vrcp.pop %v7161
  %v7200 = vmul.f32 1.0, %v7199
  %v7201 = vrcp.pop %v7162
  %v7202 = vmul.f32 1.0, %v7201
  %v7203 = vrcp.pop %v7163
  %v7204 = vmul.f32 1.0, %v7203
  %v7205 = vrcp.pop %v7164
  %v7206 = vmul.f32 1.0, %v7205
  %v7207 = vrcp.pop %v7165
  %v7208 = vmul.f32 1.0, %v7207
  %v7209 = vrcp.pop %v7166
  %v7210 = vmul.f32 1.0, %v7209
  %v7211 = vrcp.pop %v7167
  %v7212 = vmul.f32 1.0, %v7211
  %v7213 = vrcp.pop %v7168
  %v7214 = vmul.f32 1.0, %v7213
  %v7215 = vrcp.pop %v7169
  %v7216 = vmul.f32 1.0, %v7215
  %v7217 = vrcp.pop %v7170
  %v7218 = vmul.f32 1.0, %v7217
  %v7219 = vrcp.pop %v7171
  %v7220 = vmul.f32 1.0, %v7219
  %v7221 = vrcp.pop %v7172
  %v7222 = vmul.f32 1.0, %v7221
  %v7223 = vrcp.pop %v7173
  %v7224 = vmul.f32 1.0, %v7223
  %v7225 = vrcp.pop %v7174
  %v7226 = vmul.f32 1.0, %v7225
  %v7227 = vrcp.pop %v7175
  %v7228 = vmul.f32 1.0, %v7227
  %v7229 = vrcp.pop %v7176
  %v7230 = vmul.f32 1.0, %v7229
  %v7231 = vrcp.pop %v7177
  %v7232 = vmul.f32 1.0, %v7231
  %v7233 = vrcp.pop %v7178
  %v7234 = vmul.f32 1.0, %v7233
  %v7235 = vrcp.pop %v7179
  %v7236 = vmul.f32 1.0, %v7235
  %v7237 = vrcp.pop %v7180
  %v7238 = vmul.f32 1.0, %v7237
  %v7239 = vrcp.pop %v7181
  %v7240 = vmul.f32 1.0, %v7239
  %v7241 = vrcp.pop %v7182
  %v7242 = vmul.f32 1.0, %v7241
  %v7243 = vrcp.pop %v7183
  %v7244 = vmul.f32 1.0, %v7243
  %v7245 = vrcp.pop %v7184
  %v7246 = vmul.f32 1.0, %v7245
  %v7247 = vrcp.pop %v7185
  %v7248 = vmul.f32 1.0, %v7247
  %v7249 = vrcp.pop %v7186
  %v7250 = vmul.f32 1.0, %v7249
  %v7251 = vmul.f32 %v7027, %v7188
  %v7252 = vmul.f32 %v7028, %v7190
  %v7253 = vmul.f32 %v7029, %v7192
  %v7254 = vmul.f32 %v7030, %v7194
  %v7255 = vmul.f32 %v7031, %v7196
  %v7256 = vmul.f32 %v7032, %v7198
  %v7257 = vmul.f32 %v7033, %v7200
  %v7258 = vmul.f32 %v7034, %v7202
  %v7259 = vmul.f32 %v7035, %v7204
  %v7260 = vmul.f32 %v7036, %v7206
  %v7261 = vmul.f32 %v7037, %v7208
  %v7262 = vmul.f32 %v7038, %v7210
  %v7263 = vmul.f32 %v7039, %v7212
  %v7264 = vmul.f32 %v7040, %v7214
  %v7265 = vmul.f32 %v7041, %v7216
  %v7266 = vmul.f32 %v7042, %v7218
  %v7267 = vmul.f32 %v7043, %v7220
  %v7268 = vmul.f32 %v7044, %v7222
  %v7269 = vmul.f32 %v7045, %v7224
  %v7270 = vmul.f32 %v7046, %v7226
  %v7271 = vmul.f32 %v7047, %v7228
  %v7272 = vmul.f32 %v7048, %v7230
  %v7273 = vmul.f32 %v7049, %v7232
  %v7274 = vmul.f32 %v7050, %v7234
  %v7275 = vmul.f32 %v7051, %v7236
  %v7276 = vmul.f32 %v7052, %v7238
  %v7277 = vmul.f32 %v7053, %v7240
  %v7278 = vmul.f32 %v7054, %v7242
  %v7279 = vmul.f32 %v7055, %v7244
  %v7280 = vmul.f32 %v7056, %v7246
  %v7281 = vmul.f32 %v7057, %v7248
  %v7282 = vmul.f32 %v7058, %v7250
  %7283 = vadd.xlane.f32.xlu0 %v7251
  %v7284 = vpop.xlane.xlu0 %7283
  %7285 = vadd.xlane.f32.xlu0 %v7252
  %v7286 = vpop.xlane.xlu0 %7285
  %7287 = vadd.xlane.f32.xlu0 %v7253
  %v7288 = vpop.xlane.xlu0 %7287
  %7289 = vadd.xlane.f32.xlu0 %v7254
  %v7290 = vpop.xlane.xlu0 %7289
  %7291 = vadd.xlane.f32.xlu0 %v7255
  %v7292 = vpop.xlane.xlu0 %7291
  %7293 = vadd.xlane.f32.xlu0 %v7256
  %v7294 = vpop.xlane.xlu0 %7293
  %7295 = vadd.xlane.f32.xlu0 %v7257
  %v7296 = vpop.xlane.xlu0 %7295
  %7297 = vadd.xlane.f32.xlu0 %v7258
  %v7298 = vpop.xlane.xlu0 %7297
  %7299 = vadd.xlane.f32.xlu0 %v7259
  %v7300 = vpop.xlane.xlu0 %7299
  %7301 = vadd.xlane.f32.xlu0 %v7260
  %v7302 = vpop.xlane.xlu0 %7301
  %7303 = vadd.xlane.f32.xlu0 %v7261
  %v7304 = vpop.xlane.xlu0 %7303
  %7305 = vadd.xlane.f32.xlu0 %v7262
  %v7306 = vpop.xlane.xlu0 %7305
  %7307 = vadd.xlane.f32.xlu0 %v7263
  %v7308 = vpop.xlane.xlu0 %7307
  %7309 = vadd.xlane.f32.xlu0 %v7264
  %v7310 = vpop.xlane.xlu0 %7309
  %7311 = vadd.xlane.f32.xlu0 %v7265
  %v7312 = vpop.xlane.xlu0 %7311
  %7313 = vadd.xlane.f32.xlu0 %v7266
  %v7314 = vpop.xlane.xlu0 %7313
  %7315 = vadd.xlane.f32.xlu0 %v7267
  %v7316 = vpop.xlane.xlu0 %7315
  %7317 = vadd.xlane.f32.xlu0 %v7268
  %v7318 = vpop.xlane.xlu0 %7317
  %7319 = vadd.xlane.f32.xlu0 %v7269
  %v7320 = vpop.xlane.xlu0 %7319
  %7321 = vadd.xlane.f32.xlu0 %v7270
  %v7322 = vpop.xlane.xlu0 %7321
  %7323 = vadd.xlane.f32.xlu0 %v7271
  %v7324 = vpop.xlane.xlu0 %7323
  %7325 = vadd.xlane.f32.xlu0 %v7272
  %v7326 = vpop.xlane.xlu0 %7325
  %7327 = vadd.xlane.f32.xlu0 %v7273
  %v7328 = vpop.xlane.xlu0 %7327
  %7329 = vadd.xlane.f32.xlu0 %v7274
  %v7330 = vpop.xlane.xlu0 %7329
  %7331 = vadd.xlane.f32.xlu0 %v7275
  %v7332 = vpop.xlane.xlu0 %7331
  %7333 = vadd.xlane.f32.xlu0 %v7276
  %v7334 = vpop.xlane.xlu0 %7333
  %7335 = vadd.xlane.f32.xlu0 %v7277
  %v7336 = vpop.xlane.xlu0 %7335
  %7337 = vadd.xlane.f32.xlu0 %v7278
  %v7338 = vpop.xlane.xlu0 %7337
  %7339 = vadd.xlane.f32.xlu0 %v7279
  %v7340 = vpop.xlane.xlu0 %7339
  %7341 = vadd.xlane.f32.xlu0 %v7280
  %v7342 = vpop.xlane.xlu0 %7341
  %7343 = vadd.xlane.f32.xlu0 %v7281
  %v7344 = vpop.xlane.xlu0 %7343
  %7345 = vadd.xlane.f32.xlu0 %v7282
  %v7346 = vpop.xlane.xlu0 %7345
  %v7347 = vmul.f32 %v7284, 0.0078125
  %v7348 = vmul.f32 %v7286, 0.0078125
  %v7349 = vmul.f32 %v7288, 0.0078125
  %v7350 = vmul.f32 %v7290, 0.0078125
  %v7351 = vmul.f32 %v7292, 0.0078125
  %v7352 = vmul.f32 %v7294, 0.0078125
  %v7353 = vmul.f32 %v7296, 0.0078125
  %v7354 = vmul.f32 %v7298, 0.0078125
  %v7355 = vmul.f32 %v7300, 0.0078125
  %v7356 = vmul.f32 %v7302, 0.0078125
  %v7357 = vmul.f32 %v7304, 0.0078125
  %v7358 = vmul.f32 %v7306, 0.0078125
  %v7359 = vmul.f32 %v7308, 0.0078125
  %v7360 = vmul.f32 %v7310, 0.0078125
  %v7361 = vmul.f32 %v7312, 0.0078125
  %v7362 = vmul.f32 %v7314, 0.0078125
  %v7363 = vmul.f32 %v7316, 0.0078125
  %v7364 = vmul.f32 %v7318, 0.0078125
  %v7365 = vmul.f32 %v7320, 0.0078125
  %v7366 = vmul.f32 %v7322, 0.0078125
  %v7367 = vmul.f32 %v7324, 0.0078125
  %v7368 = vmul.f32 %v7326, 0.0078125
  %v7369 = vmul.f32 %v7328, 0.0078125
  %v7370 = vmul.f32 %v7330, 0.0078125
  %v7371 = vmul.f32 %v7332, 0.0078125
  %v7372 = vmul.f32 %v7334, 0.0078125
  %v7373 = vmul.f32 %v7336, 0.0078125
  %v7374 = vmul.f32 %v7338, 0.0078125
  %v7375 = vmul.f32 %v7340, 0.0078125
  %v7376 = vmul.f32 %v7342, 0.0078125
  %v7377 = vmul.f32 %v7344, 0.0078125
  %v7378 = vmul.f32 %v7346, 0.0078125
  %v7379 = vmul.f32 %v7251, %v7251
  %v7380 = vmul.f32 %v7252, %v7252
  %v7381 = vmul.f32 %v7253, %v7253
  %v7382 = vmul.f32 %v7254, %v7254
  %v7383 = vmul.f32 %v7255, %v7255
  %v7384 = vmul.f32 %v7256, %v7256
  %v7385 = vmul.f32 %v7257, %v7257
  %v7386 = vmul.f32 %v7258, %v7258
  %v7387 = vmul.f32 %v7259, %v7259
  %v7388 = vmul.f32 %v7260, %v7260
  %v7389 = vmul.f32 %v7261, %v7261
  %v7390 = vmul.f32 %v7262, %v7262
  %v7391 = vmul.f32 %v7263, %v7263
  %v7392 = vmul.f32 %v7264, %v7264
  %v7393 = vmul.f32 %v7265, %v7265
  %v7394 = vmul.f32 %v7266, %v7266
  %v7395 = vmul.f32 %v7267, %v7267
  %v7396 = vmul.f32 %v7268, %v7268
  %v7397 = vmul.f32 %v7269, %v7269
  %v7398 = vmul.f32 %v7270, %v7270
  %v7399 = vmul.f32 %v7271, %v7271
  %v7400 = vmul.f32 %v7272, %v7272
  %v7401 = vmul.f32 %v7273, %v7273
  %v7402 = vmul.f32 %v7274, %v7274
  %v7403 = vmul.f32 %v7275, %v7275
  %v7404 = vmul.f32 %v7276, %v7276
  %v7405 = vmul.f32 %v7277, %v7277
  %v7406 = vmul.f32 %v7278, %v7278
  %v7407 = vmul.f32 %v7279, %v7279
  %v7408 = vmul.f32 %v7280, %v7280
  %v7409 = vmul.f32 %v7281, %v7281
  %v7410 = vmul.f32 %v7282, %v7282
  %7411 = vadd.xlane.f32.xlu0 %v7379
  %v7412 = vpop.xlane.xlu0 %7411
  %7413 = vadd.xlane.f32.xlu0 %v7380
  %v7414 = vpop.xlane.xlu0 %7413
  %7415 = vadd.xlane.f32.xlu0 %v7381
  %v7416 = vpop.xlane.xlu0 %7415
  %7417 = vadd.xlane.f32.xlu0 %v7382
  %v7418 = vpop.xlane.xlu0 %7417
  %7419 = vadd.xlane.f32.xlu0 %v7383
  %v7420 = vpop.xlane.xlu0 %7419
  %7421 = vadd.xlane.f32.xlu0 %v7384
  %v7422 = vpop.xlane.xlu0 %7421
  %7423 = vadd.xlane.f32.xlu0 %v7385
  %v7424 = vpop.xlane.xlu0 %7423
  %7425 = vadd.xlane.f32.xlu0 %v7386
  %v7426 = vpop.xlane.xlu0 %7425
  %7427 = vadd.xlane.f32.xlu0 %v7387
  %v7428 = vpop.xlane.xlu0 %7427
  %7429 = vadd.xlane.f32.xlu0 %v7388
  %v7430 = vpop.xlane.xlu0 %7429
  %7431 = vadd.xlane.f32.xlu0 %v7389
  %v7432 = vpop.xlane.xlu0 %7431
  %7433 = vadd.xlane.f32.xlu0 %v7390
  %v7434 = vpop.xlane.xlu0 %7433
  %7435 = vadd.xlane.f32.xlu0 %v7391
  %v7436 = vpop.xlane.xlu0 %7435
  %7437 = vadd.xlane.f32.xlu0 %v7392
  %v7438 = vpop.xlane.xlu0 %7437
  %7439 = vadd.xlane.f32.xlu0 %v7393
  %v7440 = vpop.xlane.xlu0 %7439
  %7441 = vadd.xlane.f32.xlu0 %v7394
  %v7442 = vpop.xlane.xlu0 %7441
  %7443 = vadd.xlane.f32.xlu0 %v7395
  %v7444 = vpop.xlane.xlu0 %7443
  %7445 = vadd.xlane.f32.xlu0 %v7396
  %v7446 = vpop.xlane.xlu0 %7445
  %7447 = vadd.xlane.f32.xlu0 %v7397
  %v7448 = vpop.xlane.xlu0 %7447
  %7449 = vadd.xlane.f32.xlu0 %v7398
  %v7450 = vpop.xlane.xlu0 %7449
  %7451 = vadd.xlane.f32.xlu0 %v7399
  %v7452 = vpop.xlane.xlu0 %7451
  %7453 = vadd.xlane.f32.xlu0 %v7400
  %v7454 = vpop.xlane.xlu0 %7453
  %7455 = vadd.xlane.f32.xlu0 %v7401
  %v7456 = vpop.xlane.xlu0 %7455
  %7457 = vadd.xlane.f32.xlu0 %v7402
  %v7458 = vpop.xlane.xlu0 %7457
  %7459 = vadd.xlane.f32.xlu0 %v7403
  %v7460 = vpop.xlane.xlu0 %7459
  %7461 = vadd.xlane.f32.xlu0 %v7404
  %v7462 = vpop.xlane.xlu0 %7461
  %7463 = vadd.xlane.f32.xlu0 %v7405
  %v7464 = vpop.xlane.xlu0 %7463
  %7465 = vadd.xlane.f32.xlu0 %v7406
  %v7466 = vpop.xlane.xlu0 %7465
  %7467 = vadd.xlane.f32.xlu0 %v7407
  %v7468 = vpop.xlane.xlu0 %7467
  %7469 = vadd.xlane.f32.xlu0 %v7408
  %v7470 = vpop.xlane.xlu0 %7469
  %7471 = vadd.xlane.f32.xlu0 %v7409
  %v7472 = vpop.xlane.xlu0 %7471
  %7473 = vadd.xlane.f32.xlu0 %v7410
  %v7474 = vpop.xlane.xlu0 %7473
  %v7475 = vmul.f32 %v7412, 0.0078125
  %v7476 = vmul.f32 %v7414, 0.0078125
  %v7477 = vmul.f32 %v7416, 0.0078125
  %v7478 = vmul.f32 %v7418, 0.0078125
  %v7479 = vmul.f32 %v7420, 0.0078125
  %v7480 = vmul.f32 %v7422, 0.0078125
  %v7481 = vmul.f32 %v7424, 0.0078125
  %v7482 = vmul.f32 %v7426, 0.0078125
  %v7483 = vmul.f32 %v7428, 0.0078125
  %v7484 = vmul.f32 %v7430, 0.0078125
  %v7485 = vmul.f32 %v7432, 0.0078125
  %v7486 = vmul.f32 %v7434, 0.0078125
  %v7487 = vmul.f32 %v7436, 0.0078125
  %v7488 = vmul.f32 %v7438, 0.0078125
  %v7489 = vmul.f32 %v7440, 0.0078125
  %v7490 = vmul.f32 %v7442, 0.0078125
  %v7491 = vmul.f32 %v7444, 0.0078125
  %v7492 = vmul.f32 %v7446, 0.0078125
  %v7493 = vmul.f32 %v7448, 0.0078125
  %v7494 = vmul.f32 %v7450, 0.0078125
  %v7495 = vmul.f32 %v7452, 0.0078125
  %v7496 = vmul.f32 %v7454, 0.0078125
  %v7497 = vmul.f32 %v7456, 0.0078125
  %v7498 = vmul.f32 %v7458, 0.0078125
  %v7499 = vmul.f32 %v7460, 0.0078125
  %v7500 = vmul.f32 %v7462, 0.0078125
  %v7501 = vmul.f32 %v7464, 0.0078125
  %v7502 = vmul.f32 %v7466, 0.0078125
  %v7503 = vmul.f32 %v7468, 0.0078125
  %v7504 = vmul.f32 %v7470, 0.0078125
  %v7505 = vmul.f32 %v7472, 0.0078125
  %v7506 = vmul.f32 %v7474, 0.0078125
  %v7507 = vmul.f32 %v7347, %v7347
  %v7508 = vmul.f32 %v7348, %v7348
  %v7509 = vmul.f32 %v7349, %v7349
  %v7510 = vmul.f32 %v7350, %v7350
  %v7511 = vmul.f32 %v7351, %v7351
  %v7512 = vmul.f32 %v7352, %v7352
  %v7513 = vmul.f32 %v7353, %v7353
  %v7514 = vmul.f32 %v7354, %v7354
  %v7515 = vmul.f32 %v7355, %v7355
  %v7516 = vmul.f32 %v7356, %v7356
  %v7517 = vmul.f32 %v7357, %v7357
  %v7518 = vmul.f32 %v7358, %v7358
  %v7519 = vmul.f32 %v7359, %v7359
  %v7520 = vmul.f32 %v7360, %v7360
  %v7521 = vmul.f32 %v7361, %v7361
  %v7522 = vmul.f32 %v7362, %v7362
  %v7523 = vmul.f32 %v7363, %v7363
  %v7524 = vmul.f32 %v7364, %v7364
  %v7525 = vmul.f32 %v7365, %v7365
  %v7526 = vmul.f32 %v7366, %v7366
  %v7527 = vmul.f32 %v7367, %v7367
  %v7528 = vmul.f32 %v7368, %v7368
  %v7529 = vmul.f32 %v7369, %v7369
  %v7530 = vmul.f32 %v7370, %v7370
  %v7531 = vmul.f32 %v7371, %v7371
  %v7532 = vmul.f32 %v7372, %v7372
  %v7533 = vmul.f32 %v7373, %v7373
  %v7534 = vmul.f32 %v7374, %v7374
  %v7535 = vmul.f32 %v7375, %v7375
  %v7536 = vmul.f32 %v7376, %v7376
  %v7537 = vmul.f32 %v7377, %v7377
  %v7538 = vmul.f32 %v7378, %v7378
  %v7539 = vsub.f32 %v7475, %v7507
  %v7540 = vsub.f32 %v7476, %v7508
  %v7541 = vsub.f32 %v7477, %v7509
  %v7542 = vsub.f32 %v7478, %v7510
  %v7543 = vsub.f32 %v7479, %v7511
  %v7544 = vsub.f32 %v7480, %v7512
  %v7545 = vsub.f32 %v7481, %v7513
  %v7546 = vsub.f32 %v7482, %v7514
  %v7547 = vsub.f32 %v7483, %v7515
  %v7548 = vsub.f32 %v7484, %v7516
  %v7549 = vsub.f32 %v7485, %v7517
  %v7550 = vsub.f32 %v7486, %v7518
  %v7551 = vsub.f32 %v7487, %v7519
  %v7552 = vsub.f32 %v7488, %v7520
  %v7553 = vsub.f32 %v7489, %v7521
  %v7554 = vsub.f32 %v7490, %v7522
  %v7555 = vsub.f32 %v7491, %v7523
  %v7556 = vsub.f32 %v7492, %v7524
  %v7557 = vsub.f32 %v7493, %v7525
  %v7558 = vsub.f32 %v7494, %v7526
  %v7559 = vsub.f32 %v7495, %v7527
  %v7560 = vsub.f32 %v7496, %v7528
  %v7561 = vsub.f32 %v7497, %v7529
  %v7562 = vsub.f32 %v7498, %v7530
  %v7563 = vsub.f32 %v7499, %v7531
  %v7564 = vsub.f32 %v7500, %v7532
  %v7565 = vsub.f32 %v7501, %v7533
  %v7566 = vsub.f32 %v7502, %v7534
  %v7567 = vsub.f32 %v7503, %v7535
  %v7568 = vsub.f32 %v7504, %v7536
  %v7569 = vsub.f32 %v7505, %v7537
  %v7570 = vsub.f32 %v7506, %v7538
  %v7571 = vmax.f32 %v7539, 0.0
  %v7572 = vmax.f32 %v7540, 0.0
  %v7573 = vmax.f32 %v7541, 0.0
  %v7574 = vmax.f32 %v7542, 0.0
  %v7575 = vmax.f32 %v7543, 0.0
  %v7576 = vmax.f32 %v7544, 0.0
  %v7577 = vmax.f32 %v7545, 0.0
  %v7578 = vmax.f32 %v7546, 0.0
  %v7579 = vmax.f32 %v7547, 0.0
  %v7580 = vmax.f32 %v7548, 0.0
  %v7581 = vmax.f32 %v7549, 0.0
  %v7582 = vmax.f32 %v7550, 0.0
  %v7583 = vmax.f32 %v7551, 0.0
  %v7584 = vmax.f32 %v7552, 0.0
  %v7585 = vmax.f32 %v7553, 0.0
  %v7586 = vmax.f32 %v7554, 0.0
  %v7587 = vmax.f32 %v7555, 0.0
  %v7588 = vmax.f32 %v7556, 0.0
  %v7589 = vmax.f32 %v7557, 0.0
  %v7590 = vmax.f32 %v7558, 0.0
  %v7591 = vmax.f32 %v7559, 0.0
  %v7592 = vmax.f32 %v7560, 0.0
  %v7593 = vmax.f32 %v7561, 0.0
  %v7594 = vmax.f32 %v7562, 0.0
  %v7595 = vmax.f32 %v7563, 0.0
  %v7596 = vmax.f32 %v7564, 0.0
  %v7597 = vmax.f32 %v7565, 0.0
  %v7598 = vmax.f32 %v7566, 0.0
  %v7599 = vmax.f32 %v7567, 0.0
  %v7600 = vmax.f32 %v7568, 0.0
  %v7601 = vmax.f32 %v7569, 0.0
  %v7602 = vmax.f32 %v7570, 0.0
  %v7603 = vsub.f32 %v7251, %v7347
  %v7604 = vsub.f32 %v7252, %v7348
  %v7605 = vsub.f32 %v7253, %v7349
  %v7606 = vsub.f32 %v7254, %v7350
  %v7607 = vsub.f32 %v7255, %v7351
  %v7608 = vsub.f32 %v7256, %v7352
  %v7609 = vsub.f32 %v7257, %v7353
  %v7610 = vsub.f32 %v7258, %v7354
  %v7611 = vsub.f32 %v7259, %v7355
  %v7612 = vsub.f32 %v7260, %v7356
  %v7613 = vsub.f32 %v7261, %v7357
  %v7614 = vsub.f32 %v7262, %v7358
  %v7615 = vsub.f32 %v7263, %v7359
  %v7616 = vsub.f32 %v7264, %v7360
  %v7617 = vsub.f32 %v7265, %v7361
  %v7618 = vsub.f32 %v7266, %v7362
  %v7619 = vsub.f32 %v7267, %v7363
  %v7620 = vsub.f32 %v7268, %v7364
  %v7621 = vsub.f32 %v7269, %v7365
  %v7622 = vsub.f32 %v7270, %v7366
  %v7623 = vsub.f32 %v7271, %v7367
  %v7624 = vsub.f32 %v7272, %v7368
  %v7625 = vsub.f32 %v7273, %v7369
  %v7626 = vsub.f32 %v7274, %v7370
  %v7627 = vsub.f32 %v7275, %v7371
  %v7628 = vsub.f32 %v7276, %v7372
  %v7629 = vsub.f32 %v7277, %v7373
  %v7630 = vsub.f32 %v7278, %v7374
  %v7631 = vsub.f32 %v7279, %v7375
  %v7632 = vsub.f32 %v7280, %v7376
  %v7633 = vsub.f32 %v7281, %v7377
  %v7634 = vsub.f32 %v7282, %v7378
  %v7635 = vadd.f32 %v7571, 1e-05
  %v7636 = vadd.f32 %v7572, 1e-05
  %v7637 = vadd.f32 %v7573, 1e-05
  %v7638 = vadd.f32 %v7574, 1e-05
  %v7639 = vadd.f32 %v7575, 1e-05
  %v7640 = vadd.f32 %v7576, 1e-05
  %v7641 = vadd.f32 %v7577, 1e-05
  %v7642 = vadd.f32 %v7578, 1e-05
  %v7643 = vadd.f32 %v7579, 1e-05
  %v7644 = vadd.f32 %v7580, 1e-05
  %v7645 = vadd.f32 %v7581, 1e-05
  %v7646 = vadd.f32 %v7582, 1e-05
  %v7647 = vadd.f32 %v7583, 1e-05
  %v7648 = vadd.f32 %v7584, 1e-05
  %v7649 = vadd.f32 %v7585, 1e-05
  %v7650 = vadd.f32 %v7586, 1e-05
  %v7651 = vadd.f32 %v7587, 1e-05
  %v7652 = vadd.f32 %v7588, 1e-05
  %v7653 = vadd.f32 %v7589, 1e-05
  %v7654 = vadd.f32 %v7590, 1e-05
  %v7655 = vadd.f32 %v7591, 1e-05
  %v7656 = vadd.f32 %v7592, 1e-05
  %v7657 = vadd.f32 %v7593, 1e-05
  %v7658 = vadd.f32 %v7594, 1e-05
  %v7659 = vadd.f32 %v7595, 1e-05
  %v7660 = vadd.f32 %v7596, 1e-05
  %v7661 = vadd.f32 %v7597, 1e-05
  %v7662 = vadd.f32 %v7598, 1e-05
  %v7663 = vadd.f32 %v7599, 1e-05
  %v7664 = vadd.f32 %v7600, 1e-05
  %v7665 = vadd.f32 %v7601, 1e-05
  %v7666 = vadd.f32 %v7602, 1e-05
  %v7667 = vrsqrt.pop %v7635
  %v7668 = vrsqrt.pop %v7636
  %v7669 = vrsqrt.pop %v7637
  %v7670 = vrsqrt.pop %v7638
  %v7671 = vrsqrt.pop %v7639
  %v7672 = vrsqrt.pop %v7640
  %v7673 = vrsqrt.pop %v7641
  %v7674 = vrsqrt.pop %v7642
  %v7675 = vrsqrt.pop %v7643
  %v7676 = vrsqrt.pop %v7644
  %v7677 = vrsqrt.pop %v7645
  %v7678 = vrsqrt.pop %v7646
  %v7679 = vrsqrt.pop %v7647
  %v7680 = vrsqrt.pop %v7648
  %v7681 = vrsqrt.pop %v7649
  %v7682 = vrsqrt.pop %v7650
  %v7683 = vrsqrt.pop %v7651
  %v7684 = vrsqrt.pop %v7652
  %v7685 = vrsqrt.pop %v7653
  %v7686 = vrsqrt.pop %v7654
  %v7687 = vrsqrt.pop %v7655
  %v7688 = vrsqrt.pop %v7656
  %v7689 = vrsqrt.pop %v7657
  %v7690 = vrsqrt.pop %v7658
  %v7691 = vrsqrt.pop %v7659
  %v7692 = vrsqrt.pop %v7660
  %v7693 = vrsqrt.pop %v7661
  %v7694 = vrsqrt.pop %v7662
  %v7695 = vrsqrt.pop %v7663
  %v7696 = vrsqrt.pop %v7664
  %v7697 = vrsqrt.pop %v7665
  %v7698 = vrsqrt.pop %v7666
  %v7699 = vmul.f32 %v7603, %v7667
  %v7700 = vmul.f32 %v7604, %v7668
  %v7701 = vmul.f32 %v7605, %v7669
  %v7702 = vmul.f32 %v7606, %v7670
  %v7703 = vmul.f32 %v7607, %v7671
  %v7704 = vmul.f32 %v7608, %v7672
  %v7705 = vmul.f32 %v7609, %v7673
  %v7706 = vmul.f32 %v7610, %v7674
  %v7707 = vmul.f32 %v7611, %v7675
  %v7708 = vmul.f32 %v7612, %v7676
  %v7709 = vmul.f32 %v7613, %v7677
  %v7710 = vmul.f32 %v7614, %v7678
  %v7711 = vmul.f32 %v7615, %v7679
  %v7712 = vmul.f32 %v7616, %v7680
  %v7713 = vmul.f32 %v7617, %v7681
  %v7714 = vmul.f32 %v7618, %v7682
  %v7715 = vmul.f32 %v7619, %v7683
  %v7716 = vmul.f32 %v7620, %v7684
  %v7717 = vmul.f32 %v7621, %v7685
  %v7718 = vmul.f32 %v7622, %v7686
  %v7719 = vmul.f32 %v7623, %v7687
  %v7720 = vmul.f32 %v7624, %v7688
  %v7721 = vmul.f32 %v7625, %v7689
  %v7722 = vmul.f32 %v7626, %v7690
  %v7723 = vmul.f32 %v7627, %v7691
  %v7724 = vmul.f32 %v7628, %v7692
  %v7725 = vmul.f32 %v7629, %v7693
  %v7726 = vmul.f32 %v7630, %v7694
  %v7727 = vmul.f32 %v7631, %v7695
  %v7728 = vmul.f32 %v7632, %v7696
  %v7729 = vmul.f32 %v7633, %v7697
  %v7730 = vmul.f32 %v7634, %v7698
  %v7731 = vmul.f32 %v7699, %v153
  %v7732 = vmul.f32 %v7700, %v153
  %v7733 = vmul.f32 %v7701, %v153
  %v7734 = vmul.f32 %v7702, %v153
  %v7735 = vmul.f32 %v7703, %v153
  %v7736 = vmul.f32 %v7704, %v153
  %v7737 = vmul.f32 %v7705, %v153
  %v7738 = vmul.f32 %v7706, %v153
  %v7739 = vmul.f32 %v7707, %v153
  %v7740 = vmul.f32 %v7708, %v153
  %v7741 = vmul.f32 %v7709, %v153
  %v7742 = vmul.f32 %v7710, %v153
  %v7743 = vmul.f32 %v7711, %v153
  %v7744 = vmul.f32 %v7712, %v153
  %v7745 = vmul.f32 %v7713, %v153
  %v7746 = vmul.f32 %v7714, %v153
  %v7747 = vmul.f32 %v7715, %v153
  %v7748 = vmul.f32 %v7716, %v153
  %v7749 = vmul.f32 %v7717, %v153
  %v7750 = vmul.f32 %v7718, %v153
  %v7751 = vmul.f32 %v7719, %v153
  %v7752 = vmul.f32 %v7720, %v153
  %v7753 = vmul.f32 %v7721, %v153
  %v7754 = vmul.f32 %v7722, %v153
  %v7755 = vmul.f32 %v7723, %v153
  %v7756 = vmul.f32 %v7724, %v153
  %v7757 = vmul.f32 %v7725, %v153
  %v7758 = vmul.f32 %v7726, %v153
  %v7759 = vmul.f32 %v7727, %v153
  %v7760 = vmul.f32 %v7728, %v153
  %v7761 = vmul.f32 %v7729, %v153
  %v7762 = vmul.f32 %v7730, %v153
  %v7763 = vadd.f32 %v7731, %v154
  %v7764 = vadd.f32 %v7732, %v154
  %v7765 = vadd.f32 %v7733, %v154
  %v7766 = vadd.f32 %v7734, %v154
  %v7767 = vadd.f32 %v7735, %v154
  %v7768 = vadd.f32 %v7736, %v154
  %v7769 = vadd.f32 %v7737, %v154
  %v7770 = vadd.f32 %v7738, %v154
  %v7771 = vadd.f32 %v7739, %v154
  %v7772 = vadd.f32 %v7740, %v154
  %v7773 = vadd.f32 %v7741, %v154
  %v7774 = vadd.f32 %v7742, %v154
  %v7775 = vadd.f32 %v7743, %v154
  %v7776 = vadd.f32 %v7744, %v154
  %v7777 = vadd.f32 %v7745, %v154
  %v7778 = vadd.f32 %v7746, %v154
  %v7779 = vadd.f32 %v7747, %v154
  %v7780 = vadd.f32 %v7748, %v154
  %v7781 = vadd.f32 %v7749, %v154
  %v7782 = vadd.f32 %v7750, %v154
  %v7783 = vadd.f32 %v7751, %v154
  %v7784 = vadd.f32 %v7752, %v154
  %v7785 = vadd.f32 %v7753, %v154
  %v7786 = vadd.f32 %v7754, %v154
  %v7787 = vadd.f32 %v7755, %v154
  %v7788 = vadd.f32 %v7756, %v154
  %v7789 = vadd.f32 %v7757, %v154
  %v7790 = vadd.f32 %v7758, %v154
  %v7791 = vadd.f32 %v7759, %v154
  %v7792 = vadd.f32 %v7760, %v154
  %v7793 = vadd.f32 %v7761, %v154
  %v7794 = vadd.f32 %v7762, %v154
  %v7795 = vpack.c.bf16 %v7764, %v7763
  %v7796 = vpack.c.bf16 %v7766, %v7765
  %v7797 = vpack.c.bf16 %v7768, %v7767
  %v7798 = vpack.c.bf16 %v7770, %v7769
  %v7799 = vpack.c.bf16 %v7772, %v7771
  %v7800 = vpack.c.bf16 %v7774, %v7773
  %v7801 = vpack.c.bf16 %v7776, %v7775
  %v7802 = vpack.c.bf16 %v7778, %v7777
  %v7803 = vpack.c.bf16 %v7780, %v7779
  %v7804 = vpack.c.bf16 %v7782, %v7781
  %v7805 = vpack.c.bf16 %v7784, %v7783
  %v7806 = vpack.c.bf16 %v7786, %v7785
  %v7807 = vpack.c.bf16 %v7788, %v7787
  %v7808 = vpack.c.bf16 %v7790, %v7789
  %v7809 = vpack.c.bf16 %v7792, %v7791
  %v7810 = vpack.c.bf16 %v7794, %v7793
  %v7827 = vunpack.c.l.b16 %v54
  %v7828 = vunpack.c.l.b16 %v55
  %v7829 = vunpack.c.l.b16 %v56
  %v7830 = vunpack.c.l.b16 %v57
  %v7831 = vunpack.c.l.b16 %v58
  %v7832 = vunpack.c.l.b16 %v59
  %v7833 = vunpack.c.l.b16 %v60
  %v7834 = vunpack.c.l.b16 %v61
  %v7835 = vunpack.c.l.b16 %v62
  %v7836 = vunpack.c.l.b16 %v63
  %v7837 = vunpack.c.l.b16 %v64
  %v7838 = vunpack.c.l.b16 %v65
  %v7839 = vunpack.c.l.b16 %v66
  %v7840 = vunpack.c.l.b16 %v67
  %v7841 = vunpack.c.l.b16 %v68
  %v7842 = vunpack.c.l.b16 %v69
  %v7843 = vpack.c.b16 %v7828, %v7827
  %v7844 = vpack.c.b16 %v7830, %v7829
  %v7845 = vpack.c.b16 %v7832, %v7831
  %v7846 = vpack.c.b16 %v7834, %v7833
  %v7847 = vpack.c.b16 %v7836, %v7835
  %v7848 = vpack.c.b16 %v7838, %v7837
  %v7849 = vpack.c.b16 %v7840, %v7839
  %v7850 = vpack.c.b16 %v7842, %v7841
  %7859 = vmatprep.subr.bf16.mxu0 0
  %7860 = vmatpush1.bf16.msra.mxu0 %v7850
  %7861 = vmatprep.subr.bf16.mxu0 0
  %7862 = vmatpush1.bf16.msra.mxu0 %v7849
  %7863 = vmatprep.subr.bf16.mxu0 0
  %7864 = vmatpush1.bf16.msra.mxu0 %v7848
  %7865 = vmatprep.subr.bf16.mxu0 0
  %7866 = vmatpush1.bf16.msra.mxu0 %v7847
  %7867 = vmatprep.subr.bf16.mxu0 0
  %7868 = vmatpush1.bf16.msra.mxu0 %v7846
  %7869 = vmatprep.subr.bf16.mxu0 0
  %7870 = vmatpush1.bf16.msra.mxu0 %v7845
  %7871 = vmatprep.subr.bf16.mxu0 0
  %7872 = vmatpush1.bf16.msra.mxu0 %v7844
  %7873 = vmatprep.subr.bf16.mxu0 0
  %7874 = vmatpush1.bf16.msra.mxu0 %v7843
  %7875 = vmatprep.subr.bf16.mxu0 0
  %7876 = vmatpush2.bf16.msra.mxu0 0
  %7877 = vmatprep.subr.bf16.mxu0 0
  %7878 = vmatpush2.bf16.msra.mxu0 0
  %7879 = vmatprep.subr.bf16.mxu0 0
  %7880 = vmatpush2.bf16.msra.mxu0 0
  %7881 = vmatprep.subr.bf16.mxu0 0
  %7882 = vmatpush2.bf16.msra.mxu0 0
  %7883 = vmatprep.subr.bf16.mxu0 0
  %7884 = vmatpush2.bf16.msra.mxu0 0
  %7885 = vmatprep.subr.bf16.mxu0 0
  %7886 = vmatpush2.bf16.msra.mxu0 0
  %7887 = vmatprep.subr.bf16.mxu0 0
  %7888 = vmatpush2.bf16.msra.mxu0 0
  %7889 = vmatprep.subr.bf16.mxu0 0
  %7890 = vmatpush2.bf16.msra.mxu0 0
  %7891 = vmatprep.mubr.bf16.mxu0 0
  %7892 = vmatmul.mubr.bf16.gmra.mxu0 %v7795
  %v7893 = vpop.f32.mrf.mxu0
  %v7894 = vadd.f32 %v155, %v7893
  %v7895 = vpop.f32.mrf.mxu0
  %v7896 = vpop.f32.mrf.mxu0
  %v7897 = vadd.f32 %v155, %v7896
  %v7898 = vpop.f32.mrf.mxu0
  %7899 = vmatprep.mubr.bf16.mxu0 0
  %7900 = vmatmul.mubr.bf16.gmra.mxu0 %v7796
  %v7901 = vpop.f32.mrf.mxu0
  %v7902 = vadd.f32 %v155, %v7901
  %v7903 = vpop.f32.mrf.mxu0
  %v7904 = vpop.f32.mrf.mxu0
  %v7905 = vadd.f32 %v155, %v7904
  %v7906 = vpop.f32.mrf.mxu0
  %7907 = vmatprep.mubr.bf16.mxu0 0
  %7908 = vmatmul.mubr.bf16.gmra.mxu0 %v7797
  %v7909 = vpop.f32.mrf.mxu0
  %v7910 = vadd.f32 %v155, %v7909
  %v7911 = vpop.f32.mrf.mxu0
  %v7912 = vpop.f32.mrf.mxu0
  %v7913 = vadd.f32 %v155, %v7912
  %v7914 = vpop.f32.mrf.mxu0
  %7915 = vmatprep.mubr.bf16.mxu0 0
  %7916 = vmatmul.mubr.bf16.gmra.mxu0 %v7798
  %v7917 = vpop.f32.mrf.mxu0
  %v7918 = vadd.f32 %v155, %v7917
  %v7919 = vpop.f32.mrf.mxu0
  %v7920 = vpop.f32.mrf.mxu0
  %v7921 = vadd.f32 %v155, %v7920
  %v7922 = vpop.f32.mrf.mxu0
  %7923 = vmatprep.mubr.bf16.mxu0 0
  %7924 = vmatmul.mubr.bf16.gmra.mxu0 %v7799
  %v7925 = vpop.f32.mrf.mxu0
  %v7926 = vadd.f32 %v155, %v7925
  %v7927 = vpop.f32.mrf.mxu0
  %v7928 = vpop.f32.mrf.mxu0
  %v7929 = vadd.f32 %v155, %v7928
  %v7930 = vpop.f32.mrf.mxu0
  %7931 = vmatprep.mubr.bf16.mxu0 0
  %7932 = vmatmul.mubr.bf16.gmra.mxu0 %v7800
  %v7933 = vpop.f32.mrf.mxu0
  %v7934 = vadd.f32 %v155, %v7933
  %v7935 = vpop.f32.mrf.mxu0
  %v7936 = vpop.f32.mrf.mxu0
  %v7937 = vadd.f32 %v155, %v7936
  %v7938 = vpop.f32.mrf.mxu0
  %7939 = vmatprep.mubr.bf16.mxu0 0
  %7940 = vmatmul.mubr.bf16.gmra.mxu0 %v7801
  %v7941 = vpop.f32.mrf.mxu0
  %v7942 = vadd.f32 %v155, %v7941
  %v7943 = vpop.f32.mrf.mxu0
  %v7944 = vpop.f32.mrf.mxu0
  %v7945 = vadd.f32 %v155, %v7944
  %v7946 = vpop.f32.mrf.mxu0
  %7947 = vmatprep.mubr.bf16.mxu0 0
  %7948 = vmatmul.mubr.bf16.gmra.mxu0 %v7802
  %v7949 = vpop.f32.mrf.mxu0
  %v7950 = vadd.f32 %v155, %v7949
  %v7951 = vpop.f32.mrf.mxu0
  %v7952 = vpop.f32.mrf.mxu0
  %v7953 = vadd.f32 %v155, %v7952
  %v7954 = vpop.f32.mrf.mxu0
  %7955 = vmatprep.mubr.bf16.mxu0 0
  %7956 = vmatmul.mubr.bf16.gmra.mxu0 %v7803
  %v7957 = vpop.f32.mrf.mxu0
  %v7958 = vadd.f32 %v155, %v7957
  %v7959 = vpop.f32.mrf.mxu0
  %v7960 = vpop.f32.mrf.mxu0
  %v7961 = vadd.f32 %v155, %v7960
  %v7962 = vpop.f32.mrf.mxu0
  %7963 = vmatprep.mubr.bf16.mxu0 0
  %7964 = vmatmul.mubr.bf16.gmra.mxu0 %v7804
  %v7965 = vpop.f32.mrf.mxu0
  %v7966 = vadd.f32 %v155, %v7965
  %v7967 = vpop.f32.mrf.mxu0
  %v7968 = vpop.f32.mrf.mxu0
  %v7969 = vadd.f32 %v155, %v7968
  %v7970 = vpop.f32.mrf.mxu0
  %7971 = vmatprep.mubr.bf16.mxu0 0
  %7972 = vmatmul.mubr.bf16.gmra.mxu0 %v7805
  %v7973 = vpop.f32.mrf.mxu0
  %v7974 = vadd.f32 %v155, %v7973
  %v7975 = vpop.f32.mrf.mxu0
  %v7976 = vpop.f32.mrf.mxu0
  %v7977 = vadd.f32 %v155, %v7976
  %v7978 = vpop.f32.mrf.mxu0
  %7979 = vmatprep.mubr.bf16.mxu0 0
  %7980 = vmatmul.mubr.bf16.gmra.mxu0 %v7806
  %v7981 = vpop.f32.mrf.mxu0
  %v7982 = vadd.f32 %v155, %v7981
  %v7983 = vpop.f32.mrf.mxu0
  %v7984 = vpop.f32.mrf.mxu0
  %v7985 = vadd.f32 %v155, %v7984
  %v7986 = vpop.f32.mrf.mxu0
  %7987 = vmatprep.mubr.bf16.mxu0 0
  %7988 = vmatmul.mubr.bf16.gmra.mxu0 %v7807
  %v7989 = vpop.f32.mrf.mxu0
  %v7990 = vadd.f32 %v155, %v7989
  %v7991 = vpop.f32.mrf.mxu0
  %v7992 = vpop.f32.mrf.mxu0
  %v7993 = vadd.f32 %v155, %v7992
  %v7994 = vpop.f32.mrf.mxu0
  %7995 = vmatprep.mubr.bf16.mxu0 0
  %7996 = vmatmul.mubr.bf16.gmra.mxu0 %v7808
  %v7997 = vpop.f32.mrf.mxu0
  %v7998 = vadd.f32 %v155, %v7997
  %v7999 = vpop.f32.mrf.mxu0
  %v8000 = vpop.f32.mrf.mxu0
  %v8001 = vadd.f32 %v155, %v8000
  %v8002 = vpop.f32.mrf.mxu0
  %8003 = vmatprep.mubr.bf16.mxu0 0
  %8004 = vmatmul.mubr.bf16.gmra.mxu0 %v7809
  %v8005 = vpop.f32.mrf.mxu0
  %v8006 = vadd.f32 %v155, %v8005
  %v8007 = vpop.f32.mrf.mxu0
  %v8008 = vpop.f32.mrf.mxu0
  %v8009 = vadd.f32 %v155, %v8008
  %v8010 = vpop.f32.mrf.mxu0
  %8011 = vmatprep.mubr.bf16.mxu0 0
  %8012 = vmatmul.mubr.bf16.gmra.mxu0 %v7810
  %v8013 = vpop.f32.mrf.mxu0
  %v8014 = vadd.f32 %v155, %v8013
  %v8015 = vpop.f32.mrf.mxu0
  %v8016 = vpop.f32.mrf.mxu0
  %v8017 = vadd.f32 %v155, %v8016
  %v8018 = vpop.f32.mrf.mxu0
  %8019 = vdwg.mxu0
  %v8020 = vxor.u32 %v7894, 2147483648
  %v8021 = vxor.u32 %v7897, 2147483648
  %v8022 = vxor.u32 %v7902, 2147483648
  %v8023 = vxor.u32 %v7905, 2147483648
  %v8024 = vxor.u32 %v7910, 2147483648
  %v8025 = vxor.u32 %v7913, 2147483648
  %v8026 = vxor.u32 %v7918, 2147483648
  %v8027 = vxor.u32 %v7921, 2147483648
  %v8028 = vxor.u32 %v7926, 2147483648
  %v8029 = vxor.u32 %v7929, 2147483648
  %v8030 = vxor.u32 %v7934, 2147483648
  %v8031 = vxor.u32 %v7937, 2147483648
  %v8032 = vxor.u32 %v7942, 2147483648
  %v8033 = vxor.u32 %v7945, 2147483648
  %v8034 = vxor.u32 %v7950, 2147483648
  %v8035 = vxor.u32 %v7953, 2147483648
  %v8036 = vxor.u32 %v7958, 2147483648
  %v8037 = vxor.u32 %v7961, 2147483648
  %v8038 = vxor.u32 %v7966, 2147483648
  %v8039 = vxor.u32 %v7969, 2147483648
  %v8040 = vxor.u32 %v7974, 2147483648
  %v8041 = vxor.u32 %v7977, 2147483648
  %v8042 = vxor.u32 %v7982, 2147483648
  %v8043 = vxor.u32 %v7985, 2147483648
  %v8044 = vxor.u32 %v7990, 2147483648
  %v8045 = vxor.u32 %v7993, 2147483648
  %v8046 = vxor.u32 %v7998, 2147483648
  %v8047 = vxor.u32 %v8001, 2147483648
  %v8048 = vxor.u32 %v8006, 2147483648
  %v8049 = vxor.u32 %v8009, 2147483648
  %v8050 = vxor.u32 %v8014, 2147483648
  %v8051 = vxor.u32 %v8017, 2147483648
  %v8052 = vmul.f32 %v8020, 1.442695
  %v8053 = vpow.pop %v8052
  %v8054 = vmul.f32 %v8021, 1.442695
  %v8055 = vpow.pop %v8054
  %v8056 = vmul.f32 %v8022, 1.442695
  %v8057 = vpow.pop %v8056
  %v8058 = vmul.f32 %v8023, 1.442695
  %v8059 = vpow.pop %v8058
  %v8060 = vmul.f32 %v8024, 1.442695
  %v8061 = vpow.pop %v8060
  %v8062 = vmul.f32 %v8025, 1.442695
  %v8063 = vpow.pop %v8062
  %v8064 = vmul.f32 %v8026, 1.442695
  %v8065 = vpow.pop %v8064
  %v8066 = vmul.f32 %v8027, 1.442695
  %v8067 = vpow.pop %v8066
  %v8068 = vmul.f32 %v8028, 1.442695
  %v8069 = vpow.pop %v8068
  %v8070 = vmul.f32 %v8029, 1.442695
  %v8071 = vpow.pop %v8070
  %v8072 = vmul.f32 %v8030, 1.442695
  %v8073 = vpow.pop %v8072
  %v8074 = vmul.f32 %v8031, 1.442695
  %v8075 = vpow.pop %v8074
  %v8076 = vmul.f32 %v8032, 1.442695
  %v8077 = vpow.pop %v8076
  %v8078 = vmul.f32 %v8033, 1.442695
  %v8079 = vpow.pop %v8078
  %v8080 = vmul.f32 %v8034, 1.442695
  %v8081 = vpow.pop %v8080
  %v8082 = vmul.f32 %v8035, 1.442695
  %v8083 = vpow.pop %v8082
  %v8084 = vmul.f32 %v8036, 1.442695
  %v8085 = vpow.pop %v8084
  %v8086 = vmul.f32 %v8037, 1.442695
  %v8087 = vpow.pop %v8086
  %v8088 = vmul.f32 %v8038, 1.442695
  %v8089 = vpow.pop %v8088
  %v8090 = vmul.f32 %v8039, 1.442695
  %v8091 = vpow.pop %v8090
  %v8092 = vmul.f32 %v8040, 1.442695
  %v8093 = vpow.pop %v8092
  %v8094 = vmul.f32 %v8041, 1.442695
  %v8095 = vpow.pop %v8094
  %v8096 = vmul.f32 %v8042, 1.442695
  %v8097 = vpow.pop %v8096
  %v8098 = vmul.f32 %v8043, 1.442695
  %v8099 = vpow.pop %v8098
  %v8100 = vmul.f32 %v8044, 1.442695
  %v8101 = vpow.pop %v8100
  %v8102 = vmul.f32 %v8045, 1.442695
  %v8103 = vpow.pop %v8102
  %v8104 = vmul.f32 %v8046, 1.442695
  %v8105 = vpow.pop %v8104
  %v8106 = vmul.f32 %v8047, 1.442695
  %v8107 = vpow.pop %v8106
  %v8108 = vmul.f32 %v8048, 1.442695
  %v8109 = vpow.pop %v8108
  %v8110 = vmul.f32 %v8049, 1.442695
  %v8111 = vpow.pop %v8110
  %v8112 = vmul.f32 %v8050, 1.442695
  %v8113 = vpow.pop %v8112
  %v8114 = vmul.f32 %v8051, 1.442695
  %v8115 = vpow.pop %v8114
  %v8116 = vadd.f32 %v8053, 1.0
  %v8117 = vadd.f32 %v8055, 1.0
  %v8118 = vadd.f32 %v8057, 1.0
  %v8119 = vadd.f32 %v8059, 1.0
  %v8120 = vadd.f32 %v8061, 1.0
  %v8121 = vadd.f32 %v8063, 1.0
  %v8122 = vadd.f32 %v8065, 1.0
  %v8123 = vadd.f32 %v8067, 1.0
  %v8124 = vadd.f32 %v8069, 1.0
  %v8125 = vadd.f32 %v8071, 1.0
  %v8126 = vadd.f32 %v8073, 1.0
  %v8127 = vadd.f32 %v8075, 1.0
  %v8128 = vadd.f32 %v8077, 1.0
  %v8129 = vadd.f32 %v8079, 1.0
  %v8130 = vadd.f32 %v8081, 1.0
  %v8131 = vadd.f32 %v8083, 1.0
  %v8132 = vadd.f32 %v8085, 1.0
  %v8133 = vadd.f32 %v8087, 1.0
  %v8134 = vadd.f32 %v8089, 1.0
  %v8135 = vadd.f32 %v8091, 1.0
  %v8136 = vadd.f32 %v8093, 1.0
  %v8137 = vadd.f32 %v8095, 1.0
  %v8138 = vadd.f32 %v8097, 1.0
  %v8139 = vadd.f32 %v8099, 1.0
  %v8140 = vadd.f32 %v8101, 1.0
  %v8141 = vadd.f32 %v8103, 1.0
  %v8142 = vadd.f32 %v8105, 1.0
  %v8143 = vadd.f32 %v8107, 1.0
  %v8144 = vadd.f32 %v8109, 1.0
  %v8145 = vadd.f32 %v8111, 1.0
  %v8146 = vadd.f32 %v8113, 1.0
  %v8147 = vadd.f32 %v8115, 1.0
  %v8148 = vrcp.pop %v8116
  %v8149 = vmul.f32 1.0, %v8148
  %v8150 = vrcp.pop %v8117
  %v8151 = vmul.f32 1.0, %v8150
  %v8152 = vrcp.pop %v8118
  %v8153 = vmul.f32 1.0, %v8152
  %v8154 = vrcp.pop %v8119
  %v8155 = vmul.f32 1.0, %v8154
  %v8156 = vrcp.pop %v8120
  %v8157 = vmul.f32 1.0, %v8156
  %v8158 = vrcp.pop %v8121
  %v8159 = vmul.f32 1.0, %v8158
  %v8160 = vrcp.pop %v8122
  %v8161 = vmul.f32 1.0, %v8160
  %v8162 = vrcp.pop %v8123
  %v8163 = vmul.f32 1.0, %v8162
  %v8164 = vrcp.pop %v8124
  %v8165 = vmul.f32 1.0, %v8164
  %v8166 = vrcp.pop %v8125
  %v8167 = vmul.f32 1.0, %v8166
  %v8168 = vrcp.pop %v8126
  %v8169 = vmul.f32 1.0, %v8168
  %v8170 = vrcp.pop %v8127
  %v8171 = vmul.f32 1.0, %v8170
  %v8172 = vrcp.pop %v8128
  %v8173 = vmul.f32 1.0, %v8172
  %v8174 = vrcp.pop %v8129
  %v8175 = vmul.f32 1.0, %v8174
  %v8176 = vrcp.pop %v8130
  %v8177 = vmul.f32 1.0, %v8176
  %v8178 = vrcp.pop %v8131
  %v8179 = vmul.f32 1.0, %v8178
  %v8180 = vrcp.pop %v8132
  %v8181 = vmul.f32 1.0, %v8180
  %v8182 = vrcp.pop %v8133
  %v8183 = vmul.f32 1.0, %v8182
  %v8184 = vrcp.pop %v8134
  %v8185 = vmul.f32 1.0, %v8184
  %v8186 = vrcp.pop %v8135
  %v8187 = vmul.f32 1.0, %v8186
  %v8188 = vrcp.pop %v8136
  %v8189 = vmul.f32 1.0, %v8188
  %v8190 = vrcp.pop %v8137
  %v8191 = vmul.f32 1.0, %v8190
  %v8192 = vrcp.pop %v8138
  %v8193 = vmul.f32 1.0, %v8192
  %v8194 = vrcp.pop %v8139
  %v8195 = vmul.f32 1.0, %v8194
  %v8196 = vrcp.pop %v8140
  %v8197 = vmul.f32 1.0, %v8196
  %v8198 = vrcp.pop %v8141
  %v8199 = vmul.f32 1.0, %v8198
  %v8200 = vrcp.pop %v8142
  %v8201 = vmul.f32 1.0, %v8200
  %v8202 = vrcp.pop %v8143
  %v8203 = vmul.f32 1.0, %v8202
  %v8204 = vrcp.pop %v8144
  %v8205 = vmul.f32 1.0, %v8204
  %v8206 = vrcp.pop %v8145
  %v8207 = vmul.f32 1.0, %v8206
  %v8208 = vrcp.pop %v8146
  %v8209 = vmul.f32 1.0, %v8208
  %v8210 = vrcp.pop %v8147
  %v8211 = vmul.f32 1.0, %v8210
  %v8212 = vmul.f32 %v7894, %v8149
  %v8213 = vmul.f32 %v7897, %v8151
  %v8214 = vmul.f32 %v7902, %v8153
  %v8215 = vmul.f32 %v7905, %v8155
  %v8216 = vmul.f32 %v7910, %v8157
  %v8217 = vmul.f32 %v7913, %v8159
  %v8218 = vmul.f32 %v7918, %v8161
  %v8219 = vmul.f32 %v7921, %v8163
  %v8220 = vmul.f32 %v7926, %v8165
  %v8221 = vmul.f32 %v7929, %v8167
  %v8222 = vmul.f32 %v7934, %v8169
  %v8223 = vmul.f32 %v7937, %v8171
  %v8224 = vmul.f32 %v7942, %v8173
  %v8225 = vmul.f32 %v7945, %v8175
  %v8226 = vmul.f32 %v7950, %v8177
  %v8227 = vmul.f32 %v7953, %v8179
  %v8228 = vmul.f32 %v7958, %v8181
  %v8229 = vmul.f32 %v7961, %v8183
  %v8230 = vmul.f32 %v7966, %v8185
  %v8231 = vmul.f32 %v7969, %v8187
  %v8232 = vmul.f32 %v7974, %v8189
  %v8233 = vmul.f32 %v7977, %v8191
  %v8234 = vmul.f32 %v7982, %v8193
  %v8235 = vmul.f32 %v7985, %v8195
  %v8236 = vmul.f32 %v7990, %v8197
  %v8237 = vmul.f32 %v7993, %v8199
  %v8238 = vmul.f32 %v7998, %v8201
  %v8239 = vmul.f32 %v8001, %v8203
  %v8240 = vmul.f32 %v8006, %v8205
  %v8241 = vmul.f32 %v8009, %v8207
  %v8242 = vmul.f32 %v8014, %v8209
  %v8243 = vmul.f32 %v8017, %v8211
  %v8244 = vpack.c.bf16 %v8213, %v8212
  %v8245 = vpack.c.bf16 %v8215, %v8214
  %v8246 = vpack.c.bf16 %v8217, %v8216
  %v8247 = vpack.c.bf16 %v8219, %v8218
  %v8248 = vpack.c.bf16 %v8221, %v8220
  %v8249 = vpack.c.bf16 %v8223, %v8222
  %v8250 = vpack.c.bf16 %v8225, %v8224
  %v8251 = vpack.c.bf16 %v8227, %v8226
  %v8252 = vpack.c.bf16 %v8229, %v8228
  %v8253 = vpack.c.bf16 %v8231, %v8230
  %v8254 = vpack.c.bf16 %v8233, %v8232
  %v8255 = vpack.c.bf16 %v8235, %v8234
  %v8256 = vpack.c.bf16 %v8237, %v8236
  %v8257 = vpack.c.bf16 %v8239, %v8238
  %v8258 = vpack.c.bf16 %v8241, %v8240
  %v8259 = vpack.c.bf16 %v8243, %v8242
  %v8276 = vunpack.c.l.b16 %v70
  %v8277 = vunpack.c.l.b16 %v71
  %v8278 = vunpack.c.l.b16 %v72
  %v8279 = vunpack.c.l.b16 %v73
  %v8280 = vunpack.c.l.b16 %v74
  %v8281 = vunpack.c.l.b16 %v75
  %v8282 = vunpack.c.l.b16 %v76
  %v8283 = vunpack.c.l.b16 %v77
  %v8284 = vunpack.c.l.b16 %v78
  %v8285 = vunpack.c.l.b16 %v79
  %v8286 = vunpack.c.l.b16 %v80
  %v8287 = vunpack.c.l.b16 %v81
  %v8288 = vunpack.c.l.b16 %v82
  %v8289 = vunpack.c.l.b16 %v83
  %v8290 = vunpack.c.l.b16 %v84
  %v8291 = vunpack.c.l.b16 %v85
  %v8292 = vpack.c.b16 %v8277, %v8276
  %v8293 = vpack.c.b16 %v8279, %v8278
  %v8294 = vpack.c.b16 %v8281, %v8280
  %v8295 = vpack.c.b16 %v8283, %v8282
  %v8296 = vpack.c.b16 %v8285, %v8284
  %v8297 = vpack.c.b16 %v8287, %v8286
  %v8298 = vpack.c.b16 %v8289, %v8288
  %v8299 = vpack.c.b16 %v8291, %v8290
  %8308 = vmatprep.subr.bf16.mxu0 0
  %8309 = vmatpush1.bf16.msra.mxu0 %v8299
  %8310 = vmatprep.subr.bf16.mxu0 0
  %8311 = vmatpush1.bf16.msra.mxu0 %v8298
  %8312 = vmatprep.subr.bf16.mxu0 0
  %8313 = vmatpush1.bf16.msra.mxu0 %v8297
  %8314 = vmatprep.subr.bf16.mxu0 0
  %8315 = vmatpush1.bf16.msra.mxu0 %v8296
  %8316 = vmatprep.subr.bf16.mxu0 0
  %8317 = vmatpush1.bf16.msra.mxu0 %v8295
  %8318 = vmatprep.subr.bf16.mxu0 0
  %8319 = vmatpush1.bf16.msra.mxu0 %v8294
  %8320 = vmatprep.subr.bf16.mxu0 0
  %8321 = vmatpush1.bf16.msra.mxu0 %v8293
  %8322 = vmatprep.subr.bf16.mxu0 0
  %8323 = vmatpush1.bf16.msra.mxu0 %v8292
  %8324 = vmatprep.subr.bf16.mxu0 0
  %8325 = vmatpush2.bf16.msra.mxu0 0
  %8326 = vmatprep.subr.bf16.mxu0 0
  %8327 = vmatpush2.bf16.msra.mxu0 0
  %8328 = vmatprep.subr.bf16.mxu0 0
  %8329 = vmatpush2.bf16.msra.mxu0 0
  %8330 = vmatprep.subr.bf16.mxu0 0
  %8331 = vmatpush2.bf16.msra.mxu0 0
  %8332 = vmatprep.subr.bf16.mxu0 0
  %8333 = vmatpush2.bf16.msra.mxu0 0
  %8334 = vmatprep.subr.bf16.mxu0 0
  %8335 = vmatpush2.bf16.msra.mxu0 0
  %8336 = vmatprep.subr.bf16.mxu0 0
  %8337 = vmatpush2.bf16.msra.mxu0 0
  %8338 = vmatprep.subr.bf16.mxu0 0
  %8339 = vmatpush2.bf16.msra.mxu0 0
  %8340 = vmatprep.mubr.bf16.mxu0 0
  %8341 = vmatmul.mubr.bf16.gmra.mxu0 %v8244
  %v8342 = vpop.f32.mrf.mxu0
  %v8343 = vadd.f32 %v156, %v8342
  %v8344 = vpop.f32.mrf.mxu0
  %v8345 = vpop.f32.mrf.mxu0
  %v8346 = vadd.f32 %v156, %v8345
  %v8347 = vpop.f32.mrf.mxu0
  %8348 = vmatprep.mubr.bf16.mxu0 0
  %8349 = vmatmul.mubr.bf16.gmra.mxu0 %v8245
  %v8350 = vpop.f32.mrf.mxu0
  %v8351 = vadd.f32 %v156, %v8350
  %v8352 = vpop.f32.mrf.mxu0
  %v8353 = vpop.f32.mrf.mxu0
  %v8354 = vadd.f32 %v156, %v8353
  %v8355 = vpop.f32.mrf.mxu0
  %8356 = vmatprep.mubr.bf16.mxu0 0
  %8357 = vmatmul.mubr.bf16.gmra.mxu0 %v8246
  %v8358 = vpop.f32.mrf.mxu0
  %v8359 = vadd.f32 %v156, %v8358
  %v8360 = vpop.f32.mrf.mxu0
  %v8361 = vpop.f32.mrf.mxu0
  %v8362 = vadd.f32 %v156, %v8361
  %v8363 = vpop.f32.mrf.mxu0
  %8364 = vmatprep.mubr.bf16.mxu0 0
  %8365 = vmatmul.mubr.bf16.gmra.mxu0 %v8247
  %v8366 = vpop.f32.mrf.mxu0
  %v8367 = vadd.f32 %v156, %v8366
  %v8368 = vpop.f32.mrf.mxu0
  %v8369 = vpop.f32.mrf.mxu0
  %v8370 = vadd.f32 %v156, %v8369
  %v8371 = vpop.f32.mrf.mxu0
  %8372 = vmatprep.mubr.bf16.mxu0 0
  %8373 = vmatmul.mubr.bf16.gmra.mxu0 %v8248
  %v8374 = vpop.f32.mrf.mxu0
  %v8375 = vadd.f32 %v156, %v8374
  %v8376 = vpop.f32.mrf.mxu0
  %v8377 = vpop.f32.mrf.mxu0
  %v8378 = vadd.f32 %v156, %v8377
  %v8379 = vpop.f32.mrf.mxu0
  %8380 = vmatprep.mubr.bf16.mxu0 0
  %8381 = vmatmul.mubr.bf16.gmra.mxu0 %v8249
  %v8382 = vpop.f32.mrf.mxu0
  %v8383 = vadd.f32 %v156, %v8382
  %v8384 = vpop.f32.mrf.mxu0
  %v8385 = vpop.f32.mrf.mxu0
  %v8386 = vadd.f32 %v156, %v8385
  %v8387 = vpop.f32.mrf.mxu0
  %8388 = vmatprep.mubr.bf16.mxu0 0
  %8389 = vmatmul.mubr.bf16.gmra.mxu0 %v8250
  %v8390 = vpop.f32.mrf.mxu0
  %v8391 = vadd.f32 %v156, %v8390
  %v8392 = vpop.f32.mrf.mxu0
  %v8393 = vpop.f32.mrf.mxu0
  %v8394 = vadd.f32 %v156, %v8393
  %v8395 = vpop.f32.mrf.mxu0
  %8396 = vmatprep.mubr.bf16.mxu0 0
  %8397 = vmatmul.mubr.bf16.gmra.mxu0 %v8251
  %v8398 = vpop.f32.mrf.mxu0
  %v8399 = vadd.f32 %v156, %v8398
  %v8400 = vpop.f32.mrf.mxu0
  %v8401 = vpop.f32.mrf.mxu0
  %v8402 = vadd.f32 %v156, %v8401
  %v8403 = vpop.f32.mrf.mxu0
  %8404 = vmatprep.mubr.bf16.mxu0 0
  %8405 = vmatmul.mubr.bf16.gmra.mxu0 %v8252
  %v8406 = vpop.f32.mrf.mxu0
  %v8407 = vadd.f32 %v156, %v8406
  %v8408 = vpop.f32.mrf.mxu0
  %v8409 = vpop.f32.mrf.mxu0
  %v8410 = vadd.f32 %v156, %v8409
  %v8411 = vpop.f32.mrf.mxu0
  %8412 = vmatprep.mubr.bf16.mxu0 0
  %8413 = vmatmul.mubr.bf16.gmra.mxu0 %v8253
  %v8414 = vpop.f32.mrf.mxu0
  %v8415 = vadd.f32 %v156, %v8414
  %v8416 = vpop.f32.mrf.mxu0
  %v8417 = vpop.f32.mrf.mxu0
  %v8418 = vadd.f32 %v156, %v8417
  %v8419 = vpop.f32.mrf.mxu0
  %8420 = vmatprep.mubr.bf16.mxu0 0
  %8421 = vmatmul.mubr.bf16.gmra.mxu0 %v8254
  %v8422 = vpop.f32.mrf.mxu0
  %v8423 = vadd.f32 %v156, %v8422
  %v8424 = vpop.f32.mrf.mxu0
  %v8425 = vpop.f32.mrf.mxu0
  %v8426 = vadd.f32 %v156, %v8425
  %v8427 = vpop.f32.mrf.mxu0
  %8428 = vmatprep.mubr.bf16.mxu0 0
  %8429 = vmatmul.mubr.bf16.gmra.mxu0 %v8255
  %v8430 = vpop.f32.mrf.mxu0
  %v8431 = vadd.f32 %v156, %v8430
  %v8432 = vpop.f32.mrf.mxu0
  %v8433 = vpop.f32.mrf.mxu0
  %v8434 = vadd.f32 %v156, %v8433
  %v8435 = vpop.f32.mrf.mxu0
  %8436 = vmatprep.mubr.bf16.mxu0 0
  %8437 = vmatmul.mubr.bf16.gmra.mxu0 %v8256
  %v8438 = vpop.f32.mrf.mxu0
  %v8439 = vadd.f32 %v156, %v8438
  %v8440 = vpop.f32.mrf.mxu0
  %v8441 = vpop.f32.mrf.mxu0
  %v8442 = vadd.f32 %v156, %v8441
  %v8443 = vpop.f32.mrf.mxu0
  %8444 = vmatprep.mubr.bf16.mxu0 0
  %8445 = vmatmul.mubr.bf16.gmra.mxu0 %v8257
  %v8446 = vpop.f32.mrf.mxu0
  %v8447 = vadd.f32 %v156, %v8446
  %v8448 = vpop.f32.mrf.mxu0
  %v8449 = vpop.f32.mrf.mxu0
  %v8450 = vadd.f32 %v156, %v8449
  %v8451 = vpop.f32.mrf.mxu0
  %8452 = vmatprep.mubr.bf16.mxu0 0
  %8453 = vmatmul.mubr.bf16.gmra.mxu0 %v8258
  %v8454 = vpop.f32.mrf.mxu0
  %v8455 = vadd.f32 %v156, %v8454
  %v8456 = vpop.f32.mrf.mxu0
  %v8457 = vpop.f32.mrf.mxu0
  %v8458 = vadd.f32 %v156, %v8457
  %v8459 = vpop.f32.mrf.mxu0
  %8460 = vmatprep.mubr.bf16.mxu0 0
  %8461 = vmatmul.mubr.bf16.gmra.mxu0 %v8259
  %v8462 = vpop.f32.mrf.mxu0
  %v8463 = vadd.f32 %v156, %v8462
  %v8464 = vpop.f32.mrf.mxu0
  %v8465 = vpop.f32.mrf.mxu0
  %v8466 = vadd.f32 %v156, %v8465
  %v8467 = vpop.f32.mrf.mxu0
  %8468 = vdwg.mxu0
  %8469 = vrot.lane.b32.xlu0 %v18, 64
  %v8470 = vpop.permute.xlu0 %8469
  %8471 = vrot.lane.b32.xlu0 %v19, 64
  %v8472 = vpop.permute.xlu0 %8471
  %8473 = vrot.lane.b32.xlu0 %v20, 64
  %v8474 = vpop.permute.xlu0 %8473
  %8475 = vrot.lane.b32.xlu0 %v21, 64
  %v8476 = vpop.permute.xlu0 %8475
  %8477 = vrot.lane.b32.xlu0 %v22, 64
  %v8478 = vpop.permute.xlu0 %8477
  %8479 = vrot.lane.b32.xlu0 %v23, 64
  %v8480 = vpop.permute.xlu0 %8479
  %8481 = vrot.lane.b32.xlu0 %v24, 64
  %v8482 = vpop.permute.xlu0 %8481
  %8483 = vrot.lane.b32.xlu0 %v25, 64
  %v8484 = vpop.permute.xlu0 %8483
  %8485 = vrot.lane.b32.xlu0 %v26, 64
  %v8486 = vpop.permute.xlu0 %8485
  %8487 = vrot.lane.b32.xlu0 %v27, 64
  %v8488 = vpop.permute.xlu0 %8487
  %8489 = vrot.lane.b32.xlu0 %v28, 64
  %v8490 = vpop.permute.xlu0 %8489
  %8491 = vrot.lane.b32.xlu0 %v29, 64
  %v8492 = vpop.permute.xlu0 %8491
  %8493 = vrot.lane.b32.xlu0 %v30, 64
  %v8494 = vpop.permute.xlu0 %8493
  %8495 = vrot.lane.b32.xlu0 %v31, 64
  %v8496 = vpop.permute.xlu0 %8495
  %8497 = vrot.lane.b32.xlu0 %v32, 64
  %v8498 = vpop.permute.xlu0 %8497
  %8499 = vrot.lane.b32.xlu0 %v33, 64
  %v8500 = vpop.permute.xlu0 %8499
  %8501 = vrot.lane.b32.xlu0 %v34, 64
  %v8502 = vpop.permute.xlu0 %8501
  %8503 = vrot.lane.b32.xlu0 %v35, 64
  %v8504 = vpop.permute.xlu0 %8503
  %8505 = vrot.lane.b32.xlu0 %v36, 64
  %v8506 = vpop.permute.xlu0 %8505
  %8507 = vrot.lane.b32.xlu0 %v37, 64
  %v8508 = vpop.permute.xlu0 %8507
  %8509 = vrot.lane.b32.xlu0 %v38, 64
  %v8510 = vpop.permute.xlu0 %8509
  %8511 = vrot.lane.b32.xlu0 %v39, 64
  %v8512 = vpop.permute.xlu0 %8511
  %8513 = vrot.lane.b32.xlu0 %v40, 64
  %v8514 = vpop.permute.xlu0 %8513
  %8515 = vrot.lane.b32.xlu0 %v41, 64
  %v8516 = vpop.permute.xlu0 %8515
  %8517 = vrot.lane.b32.xlu0 %v42, 64
  %v8518 = vpop.permute.xlu0 %8517
  %8519 = vrot.lane.b32.xlu0 %v43, 64
  %v8520 = vpop.permute.xlu0 %8519
  %8521 = vrot.lane.b32.xlu0 %v44, 64
  %v8522 = vpop.permute.xlu0 %8521
  %8523 = vrot.lane.b32.xlu0 %v45, 64
  %v8524 = vpop.permute.xlu0 %8523
  %8525 = vrot.lane.b32.xlu0 %v46, 64
  %v8526 = vpop.permute.xlu0 %8525
  %8527 = vrot.lane.b32.xlu0 %v47, 64
  %v8528 = vpop.permute.xlu0 %8527
  %8529 = vrot.lane.b32.xlu0 %v48, 64
  %v8530 = vpop.permute.xlu0 %8529
  %8531 = vrot.lane.b32.xlu0 %v49, 64
  %v8532 = vpop.permute.xlu0 %8531
  %v8565 = vsub.f32 %v18, %v8470
  %v8566 = vsub.f32 %v19, %v8472
  %v8567 = vsub.f32 %v20, %v8474
  %v8568 = vsub.f32 %v21, %v8476
  %v8569 = vsub.f32 %v22, %v8478
  %v8570 = vsub.f32 %v23, %v8480
  %v8571 = vsub.f32 %v24, %v8482
  %v8572 = vsub.f32 %v25, %v8484
  %v8573 = vsub.f32 %v26, %v8486
  %v8574 = vsub.f32 %v27, %v8488
  %v8575 = vsub.f32 %v28, %v8490
  %v8576 = vsub.f32 %v29, %v8492
  %v8577 = vsub.f32 %v30, %v8494
  %v8578 = vsub.f32 %v31, %v8496
  %v8579 = vsub.f32 %v32, %v8498
  %v8580 = vsub.f32 %v33, %v8500
  %v8581 = vsub.f32 %v34, %v8502
  %v8582 = vsub.f32 %v35, %v8504
  %v8583 = vsub.f32 %v36, %v8506
  %v8584 = vsub.f32 %v37, %v8508
  %v8585 = vsub.f32 %v38, %v8510
  %v8586 = vsub.f32 %v39, %v8512
  %v8587 = vsub.f32 %v40, %v8514
  %v8588 = vsub.f32 %v41, %v8516
  %v8589 = vsub.f32 %v42, %v8518
  %v8590 = vsub.f32 %v43, %v8520
  %v8591 = vsub.f32 %v44, %v8522
  %v8592 = vsub.f32 %v45, %v8524
  %v8593 = vsub.f32 %v46, %v8526
  %v8594 = vsub.f32 %v47, %v8528
  %v8595 = vsub.f32 %v48, %v8530
  %v8596 = vsub.f32 %v49, %v8532
  %8629 = vrot.lane.b32.xlu0 %v8565, 64
  %v8630 = vpop.permute.xlu0 %8629
  %8631 = vrot.lane.b32.xlu0 %v8566, 64
  %v8632 = vpop.permute.xlu0 %8631
  %8633 = vrot.lane.b32.xlu0 %v8567, 64
  %v8634 = vpop.permute.xlu0 %8633
  %8635 = vrot.lane.b32.xlu0 %v8568, 64
  %v8636 = vpop.permute.xlu0 %8635
  %8637 = vrot.lane.b32.xlu0 %v8569, 64
  %v8638 = vpop.permute.xlu0 %8637
  %8639 = vrot.lane.b32.xlu0 %v8570, 64
  %v8640 = vpop.permute.xlu0 %8639
  %8641 = vrot.lane.b32.xlu0 %v8571, 64
  %v8642 = vpop.permute.xlu0 %8641
  %8643 = vrot.lane.b32.xlu0 %v8572, 64
  %v8644 = vpop.permute.xlu0 %8643
  %8645 = vrot.lane.b32.xlu0 %v8573, 64
  %v8646 = vpop.permute.xlu0 %8645
  %8647 = vrot.lane.b32.xlu0 %v8574, 64
  %v8648 = vpop.permute.xlu0 %8647
  %8649 = vrot.lane.b32.xlu0 %v8575, 64
  %v8650 = vpop.permute.xlu0 %8649
  %8651 = vrot.lane.b32.xlu0 %v8576, 64
  %v8652 = vpop.permute.xlu0 %8651
  %8653 = vrot.lane.b32.xlu0 %v8577, 64
  %v8654 = vpop.permute.xlu0 %8653
  %8655 = vrot.lane.b32.xlu0 %v8578, 64
  %v8656 = vpop.permute.xlu0 %8655
  %8657 = vrot.lane.b32.xlu0 %v8579, 64
  %v8658 = vpop.permute.xlu0 %8657
  %8659 = vrot.lane.b32.xlu0 %v8580, 64
  %v8660 = vpop.permute.xlu0 %8659
  %8661 = vrot.lane.b32.xlu0 %v8581, 64
  %v8662 = vpop.permute.xlu0 %8661
  %8663 = vrot.lane.b32.xlu0 %v8582, 64
  %v8664 = vpop.permute.xlu0 %8663
  %8665 = vrot.lane.b32.xlu0 %v8583, 64
  %v8666 = vpop.permute.xlu0 %8665
  %8667 = vrot.lane.b32.xlu0 %v8584, 64
  %v8668 = vpop.permute.xlu0 %8667
  %8669 = vrot.lane.b32.xlu0 %v8585, 64
  %v8670 = vpop.permute.xlu0 %8669
  %8671 = vrot.lane.b32.xlu0 %v8586, 64
  %v8672 = vpop.permute.xlu0 %8671
  %8673 = vrot.lane.b32.xlu0 %v8587, 64
  %v8674 = vpop.permute.xlu0 %8673
  %8675 = vrot.lane.b32.xlu0 %v8588, 64
  %v8676 = vpop.permute.xlu0 %8675
  %8677 = vrot.lane.b32.xlu0 %v8589, 64
  %v8678 = vpop.permute.xlu0 %8677
  %8679 = vrot.lane.b32.xlu0 %v8590, 64
  %v8680 = vpop.permute.xlu0 %8679
  %8681 = vrot.lane.b32.xlu0 %v8591, 64
  %v8682 = vpop.permute.xlu0 %8681
  %8683 = vrot.lane.b32.xlu0 %v8592, 64
  %v8684 = vpop.permute.xlu0 %8683
  %8685 = vrot.lane.b32.xlu0 %v8593, 64
  %v8686 = vpop.permute.xlu0 %8685
  %8687 = vrot.lane.b32.xlu0 %v8594, 64
  %v8688 = vpop.permute.xlu0 %8687
  %8689 = vrot.lane.b32.xlu0 %v8595, 64
  %v8690 = vpop.permute.xlu0 %8689
  %8691 = vrot.lane.b32.xlu0 %v8596, 64
  %v8692 = vpop.permute.xlu0 %8691
  %v8725 = vsub.f32 %v8343, %v8630
  %v8726 = vsub.f32 %v8346, %v8632
  %v8727 = vsub.f32 %v8351, %v8634
  %v8728 = vsub.f32 %v8354, %v8636
  %v8729 = vsub.f32 %v8359, %v8638
  %v8730 = vsub.f32 %v8362, %v8640
  %v8731 = vsub.f32 %v8367, %v8642
  %v8732 = vsub.f32 %v8370, %v8644
  %v8733 = vsub.f32 %v8375, %v8646
  %v8734 = vsub.f32 %v8378, %v8648
  %v8735 = vsub.f32 %v8383, %v8650
  %v8736 = vsub.f32 %v8386, %v8652
  %v8737 = vsub.f32 %v8391, %v8654
  %v8738 = vsub.f32 %v8394, %v8656
  %v8739 = vsub.f32 %v8399, %v8658
  %v8740 = vsub.f32 %v8402, %v8660
  %v8741 = vsub.f32 %v8407, %v8662
  %v8742 = vsub.f32 %v8410, %v8664
  %v8743 = vsub.f32 %v8415, %v8666
  %v8744 = vsub.f32 %v8418, %v8668
  %v8745 = vsub.f32 %v8423, %v8670
  %v8746 = vsub.f32 %v8426, %v8672
  %v8747 = vsub.f32 %v8431, %v8674
  %v8748 = vsub.f32 %v8434, %v8676
  %v8749 = vsub.f32 %v8439, %v8678
  %v8750 = vsub.f32 %v8442, %v8680
  %v8751 = vsub.f32 %v8447, %v8682
  %v8752 = vsub.f32 %v8450, %v8684
  %v8753 = vsub.f32 %v8455, %v8686
  %v8754 = vsub.f32 %v8458, %v8688
  %v8755 = vsub.f32 %v8463, %v8690
  %v8756 = vsub.f32 %v8466, %v8692
  %v8757 = vmul.f32 %v8725, %v8725
  %v8758 = vmul.f32 %v8726, %v8726
  %v8759 = vmul.f32 %v8727, %v8727
  %v8760 = vmul.f32 %v8728, %v8728
  %v8761 = vmul.f32 %v8729, %v8729
  %v8762 = vmul.f32 %v8730, %v8730
  %v8763 = vmul.f32 %v8731, %v8731
  %v8764 = vmul.f32 %v8732, %v8732
  %v8765 = vmul.f32 %v8733, %v8733
  %v8766 = vmul.f32 %v8734, %v8734
  %v8767 = vmul.f32 %v8735, %v8735
  %v8768 = vmul.f32 %v8736, %v8736
  %v8769 = vmul.f32 %v8737, %v8737
  %v8770 = vmul.f32 %v8738, %v8738
  %v8771 = vmul.f32 %v8739, %v8739
  %v8772 = vmul.f32 %v8740, %v8740
  %v8773 = vmul.f32 %v8741, %v8741
  %v8774 = vmul.f32 %v8742, %v8742
  %v8775 = vmul.f32 %v8743, %v8743
  %v8776 = vmul.f32 %v8744, %v8744
  %v8777 = vmul.f32 %v8745, %v8745
  %v8778 = vmul.f32 %v8746, %v8746
  %v8779 = vmul.f32 %v8747, %v8747
  %v8780 = vmul.f32 %v8748, %v8748
  %v8781 = vmul.f32 %v8749, %v8749
  %v8782 = vmul.f32 %v8750, %v8750
  %v8783 = vmul.f32 %v8751, %v8751
  %v8784 = vmul.f32 %v8752, %v8752
  %v8785 = vmul.f32 %v8753, %v8753
  %v8786 = vmul.f32 %v8754, %v8754
  %v8787 = vmul.f32 %v8755, %v8755
  %v8788 = vmul.f32 %v8756, %v8756
  %v8789 = vsel %vm237, %v8757, 0.0
  %8790 = vadd.xlane.f32.xlu0 %v8789
  %v8791 = vpop.xlane.xlu0 %8790
  %v8792 = vsel %vm237, %v8758, 0.0
  %8793 = vadd.xlane.f32.xlu0 %v8792
  %v8794 = vpop.xlane.xlu0 %8793
  %v8795 = vsel %vm237, %v8759, 0.0
  %8796 = vadd.xlane.f32.xlu0 %v8795
  %v8797 = vpop.xlane.xlu0 %8796
  %v8798 = vsel %vm237, %v8760, 0.0
  %8799 = vadd.xlane.f32.xlu0 %v8798
  %v8800 = vpop.xlane.xlu0 %8799
  %v8801 = vsel %vm237, %v8761, 0.0
  %8802 = vadd.xlane.f32.xlu0 %v8801
  %v8803 = vpop.xlane.xlu0 %8802
  %v8804 = vsel %vm237, %v8762, 0.0
  %8805 = vadd.xlane.f32.xlu0 %v8804
  %v8806 = vpop.xlane.xlu0 %8805
  %v8807 = vsel %vm237, %v8763, 0.0
  %8808 = vadd.xlane.f32.xlu0 %v8807
  %v8809 = vpop.xlane.xlu0 %8808
  %v8810 = vsel %vm237, %v8764, 0.0
  %8811 = vadd.xlane.f32.xlu0 %v8810
  %v8812 = vpop.xlane.xlu0 %8811
  %v8813 = vsel %vm237, %v8765, 0.0
  %8814 = vadd.xlane.f32.xlu0 %v8813
  %v8815 = vpop.xlane.xlu0 %8814
  %v8816 = vsel %vm237, %v8766, 0.0
  %8817 = vadd.xlane.f32.xlu0 %v8816
  %v8818 = vpop.xlane.xlu0 %8817
  %v8819 = vsel %vm237, %v8767, 0.0
  %8820 = vadd.xlane.f32.xlu0 %v8819
  %v8821 = vpop.xlane.xlu0 %8820
  %v8822 = vsel %vm237, %v8768, 0.0
  %8823 = vadd.xlane.f32.xlu0 %v8822
  %v8824 = vpop.xlane.xlu0 %8823
  %v8825 = vsel %vm237, %v8769, 0.0
  %8826 = vadd.xlane.f32.xlu0 %v8825
  %v8827 = vpop.xlane.xlu0 %8826
  %v8828 = vsel %vm237, %v8770, 0.0
  %8829 = vadd.xlane.f32.xlu0 %v8828
  %v8830 = vpop.xlane.xlu0 %8829
  %v8831 = vsel %vm237, %v8771, 0.0
  %8832 = vadd.xlane.f32.xlu0 %v8831
  %v8833 = vpop.xlane.xlu0 %8832
  %v8834 = vsel %vm237, %v8772, 0.0
  %8835 = vadd.xlane.f32.xlu0 %v8834
  %v8836 = vpop.xlane.xlu0 %8835
  %v8837 = vsel %vm237, %v8773, 0.0
  %8838 = vadd.xlane.f32.xlu0 %v8837
  %v8839 = vpop.xlane.xlu0 %8838
  %v8840 = vsel %vm237, %v8774, 0.0
  %8841 = vadd.xlane.f32.xlu0 %v8840
  %v8842 = vpop.xlane.xlu0 %8841
  %v8843 = vsel %vm237, %v8775, 0.0
  %8844 = vadd.xlane.f32.xlu0 %v8843
  %v8845 = vpop.xlane.xlu0 %8844
  %v8846 = vsel %vm237, %v8776, 0.0
  %8847 = vadd.xlane.f32.xlu0 %v8846
  %v8848 = vpop.xlane.xlu0 %8847
  %v8849 = vsel %vm237, %v8777, 0.0
  %8850 = vadd.xlane.f32.xlu0 %v8849
  %v8851 = vpop.xlane.xlu0 %8850
  %v8852 = vsel %vm237, %v8778, 0.0
  %8853 = vadd.xlane.f32.xlu0 %v8852
  %v8854 = vpop.xlane.xlu0 %8853
  %v8855 = vsel %vm237, %v8779, 0.0
  %8856 = vadd.xlane.f32.xlu0 %v8855
  %v8857 = vpop.xlane.xlu0 %8856
  %v8858 = vsel %vm237, %v8780, 0.0
  %8859 = vadd.xlane.f32.xlu0 %v8858
  %v8860 = vpop.xlane.xlu0 %8859
  %v8861 = vsel %vm237, %v8781, 0.0
  %8862 = vadd.xlane.f32.xlu0 %v8861
  %v8863 = vpop.xlane.xlu0 %8862
  %v8864 = vsel %vm237, %v8782, 0.0
  %8865 = vadd.xlane.f32.xlu0 %v8864
  %v8866 = vpop.xlane.xlu0 %8865
  %v8867 = vsel %vm237, %v8783, 0.0
  %8868 = vadd.xlane.f32.xlu0 %v8867
  %v8869 = vpop.xlane.xlu0 %8868
  %v8870 = vsel %vm237, %v8784, 0.0
  %8871 = vadd.xlane.f32.xlu0 %v8870
  %v8872 = vpop.xlane.xlu0 %8871
  %v8873 = vsel %vm237, %v8785, 0.0
  %8874 = vadd.xlane.f32.xlu0 %v8873
  %v8875 = vpop.xlane.xlu0 %8874
  %v8876 = vsel %vm237, %v8786, 0.0
  %8877 = vadd.xlane.f32.xlu0 %v8876
  %v8878 = vpop.xlane.xlu0 %8877
  %v8879 = vsel %vm237, %v8787, 0.0
  %8880 = vadd.xlane.f32.xlu0 %v8879
  %v8881 = vpop.xlane.xlu0 %8880
  %v8882 = vsel %vm237, %v8788, 0.0
  %8883 = vadd.xlane.f32.xlu0 %v8882
  %v8884 = vpop.xlane.xlu0 %8883
  %v8885 = vmul.f32 %v8791, %v159
  %v8886 = vmul.f32 %v8794, %v159
  %v8887 = vmul.f32 %v8797, %v159
  %v8888 = vmul.f32 %v8800, %v159
  %v8889 = vmul.f32 %v8803, %v159
  %v8890 = vmul.f32 %v8806, %v159
  %v8891 = vmul.f32 %v8809, %v159
  %v8892 = vmul.f32 %v8812, %v159
  %v8893 = vmul.f32 %v8815, %v159
  %v8894 = vmul.f32 %v8818, %v159
  %v8895 = vmul.f32 %v8821, %v159
  %v8896 = vmul.f32 %v8824, %v159
  %v8897 = vmul.f32 %v8827, %v159
  %v8898 = vmul.f32 %v8830, %v159
  %v8899 = vmul.f32 %v8833, %v159
  %v8900 = vmul.f32 %v8836, %v159
  %v8901 = vmul.f32 %v8839, %v159
  %v8902 = vmul.f32 %v8842, %v159
  %v8903 = vmul.f32 %v8845, %v159
  %v8904 = vmul.f32 %v8848, %v159
  %v8905 = vmul.f32 %v8851, %v159
  %v8906 = vmul.f32 %v8854, %v159
  %v8907 = vmul.f32 %v8857, %v159
  %v8908 = vmul.f32 %v8860, %v159
  %v8909 = vmul.f32 %v8863, %v159
  %v8910 = vmul.f32 %v8866, %v159
  %v8911 = vmul.f32 %v8869, %v159
  %v8912 = vmul.f32 %v8872, %v159
  %v8913 = vmul.f32 %v8875, %v159
  %v8914 = vmul.f32 %v8878, %v159
  %v8915 = vmul.f32 %v8881, %v159
  %v8916 = vmul.f32 %v8884, %v159
  %v8917 = vadd.f32 %v8343, %v8885
  %v8918 = vadd.f32 %v8346, %v8886
  %v8919 = vadd.f32 %v8351, %v8887
  %v8920 = vadd.f32 %v8354, %v8888
  %v8921 = vadd.f32 %v8359, %v8889
  %v8922 = vadd.f32 %v8362, %v8890
  %v8923 = vadd.f32 %v8367, %v8891
  %v8924 = vadd.f32 %v8370, %v8892
  %v8925 = vadd.f32 %v8375, %v8893
  %v8926 = vadd.f32 %v8378, %v8894
  %v8927 = vadd.f32 %v8383, %v8895
  %v8928 = vadd.f32 %v8386, %v8896
  %v8929 = vadd.f32 %v8391, %v8897
  %v8930 = vadd.f32 %v8394, %v8898
  %v8931 = vadd.f32 %v8399, %v8899
  %v8932 = vadd.f32 %v8402, %v8900
  %v8933 = vadd.f32 %v8407, %v8901
  %v8934 = vadd.f32 %v8410, %v8902
  %v8935 = vadd.f32 %v8415, %v8903
  %v8936 = vadd.f32 %v8418, %v8904
  %v8937 = vadd.f32 %v8423, %v8905
  %v8938 = vadd.f32 %v8426, %v8906
  %v8939 = vadd.f32 %v8431, %v8907
  %v8940 = vadd.f32 %v8434, %v8908
  %v8941 = vadd.f32 %v8439, %v8909
  %v8942 = vadd.f32 %v8442, %v8910
  %v8943 = vadd.f32 %v8447, %v8911
  %v8944 = vadd.f32 %v8450, %v8912
  %v8945 = vadd.f32 %v8455, %v8913
  %v8946 = vadd.f32 %v8458, %v8914
  %v8947 = vadd.f32 %v8463, %v8915
  %v8948 = vadd.f32 %v8466, %v8916
  %8949 = vst [vmem:[%s4] sm:$0xff] %v8917
  %8950 = vst [vmem:[%s4 + $0x8] sm:$0xff] %v8918
  %8951 = vst [vmem:[%s4 + $0x10] sm:$0xff] %v8919
  %8952 = vst [vmem:[%s4 + $0x18] sm:$0xff] %v8920
  %8953 = vst [vmem:[%s4 + $0x20] sm:$0xff] %v8921
  %8954 = vst [vmem:[%s4 + $0x28] sm:$0xff] %v8922
  %8955 = vst [vmem:[%s4 + $0x30] sm:$0xff] %v8923
  %8956 = vst [vmem:[%s4 + $0x38] sm:$0xff] %v8924
  %8957 = vst [vmem:[%s4 + $0x40] sm:$0xff] %v8925
  %8958 = vst [vmem:[%s4 + $0x48] sm:$0xff] %v8926
  %8959 = vst [vmem:[%s4 + $0x50] sm:$0xff] %v8927
  %8960 = vst [vmem:[%s4 + $0x58] sm:$0xff] %v8928
  %8961 = vst [vmem:[%s4 + $0x60] sm:$0xff] %v8929
  %8962 = vst [vmem:[%s4 + $0x68] sm:$0xff] %v8930
  %8963 = vst [vmem:[%s4 + $0x70] sm:$0xff] %v8931
  %8964 = vst [vmem:[%s4 + $0x78] sm:$0xff] %v8932
  %8965 = vst [vmem:[%s4 + $0x80] sm:$0xff] %v8933
  %8966 = vst [vmem:[%s4 + $0x88] sm:$0xff] %v8934
  %8967 = vst [vmem:[%s4 + $0x90] sm:$0xff] %v8935
  %8968 = vst [vmem:[%s4 + $0x98] sm:$0xff] %v8936
  %8969 = vst [vmem:[%s4 + $0xa0] sm:$0xff] %v8937
  %8970 = vst [vmem:[%s4 + $0xa8] sm:$0xff] %v8938
  %8971 = vst [vmem:[%s4 + $0xb0] sm:$0xff] %v8939
  %8972 = vst [vmem:[%s4 + $0xb8] sm:$0xff] %v8940
  %8973 = vst [vmem:[%s4 + $0xc0] sm:$0xff] %v8941
  %8974 = vst [vmem:[%s4 + $0xc8] sm:$0xff] %v8942
  %8975 = vst [vmem:[%s4 + $0xd0] sm:$0xff] %v8943
  %8976 = vst [vmem:[%s4 + $0xd8] sm:$0xff] %v8944
  %8977 = vst [vmem:[%s4 + $0xe0] sm:$0xff] %v8945
  %8978 = vst [vmem:[%s4 + $0xe8] sm:$0xff] %v8946
  %8979 = vst [vmem:[%s4 + $0xf0] sm:$0xff] %v8947
  %8980 = vst [vmem:[%s4 + $0xf8] sm:$0xff] %v8948
  %vm8981 = vcmask 785920
  %8982 = vst.msk [vmem:[%s4] sm:$0xff] %vm8981, %v8565
  %8983 = vst.msk [vmem:[%s4 + $0x8] sm:$0xff] %vm8981, %v8566
  %8984 = vst.msk [vmem:[%s4 + $0x10] sm:$0xff] %vm8981, %v8567
  %8985 = vst.msk [vmem:[%s4 + $0x18] sm:$0xff] %vm8981, %v8568
  %8986 = vst.msk [vmem:[%s4 + $0x20] sm:$0xff] %vm8981, %v8569
  %8987 = vst.msk [vmem:[%s4 + $0x28] sm:$0xff] %vm8981, %v8570
  %8988 = vst.msk [vmem:[%s4 + $0x30] sm:$0xff] %vm8981, %v8571
  %8989 = vst.msk [vmem:[%s4 + $0x38] sm:$0xff] %vm8981, %v8572
  %8990 = vst.msk [vmem:[%s4 + $0x40] sm:$0xff] %vm8981, %v8573
  %8991 = vst.msk [vmem:[%s4 + $0x48] sm:$0xff] %vm8981, %v8574
  %8992 = vst.msk [vmem:[%s4 + $0x50] sm:$0xff] %vm8981, %v8575
  %8993 = vst.msk [vmem:[%s4 + $0x58] sm:$0xff] %vm8981, %v8576
  %8994 = vst.msk [vmem:[%s4 + $0x60] sm:$0xff] %vm8981, %v8577
  %8995 = vst.msk [vmem:[%s4 + $0x68] sm:$0xff] %vm8981, %v8578
  %8996 = vst.msk [vmem:[%s4 + $0x70] sm:$0xff] %vm8981, %v8579
  %8997 = vst.msk [vmem:[%s4 + $0x78] sm:$0xff] %vm8981, %v8580
  %8998 = vst.msk [vmem:[%s4 + $0x80] sm:$0xff] %vm8981, %v8581
  %8999 = vst.msk [vmem:[%s4 + $0x88] sm:$0xff] %vm8981, %v8582
  %9000 = vst.msk [vmem:[%s4 + $0x90] sm:$0xff] %vm8981, %v8583
  %9001 = vst.msk [vmem:[%s4 + $0x98] sm:$0xff] %vm8981, %v8584
  %9002 = vst.msk [vmem:[%s4 + $0xa0] sm:$0xff] %vm8981, %v8585
  %9003 = vst.msk [vmem:[%s4 + $0xa8] sm:$0xff] %vm8981, %v8586
  %9004 = vst.msk [vmem:[%s4 + $0xb0] sm:$0xff] %vm8981, %v8587
  %9005 = vst.msk [vmem:[%s4 + $0xb8] sm:$0xff] %vm8981, %v8588
  %9006 = vst.msk [vmem:[%s4 + $0xc0] sm:$0xff] %vm8981, %v8589
  %9007 = vst.msk [vmem:[%s4 + $0xc8] sm:$0xff] %vm8981, %v8590
  %9008 = vst.msk [vmem:[%s4 + $0xd0] sm:$0xff] %vm8981, %v8591
  %9009 = vst.msk [vmem:[%s4 + $0xd8] sm:$0xff] %vm8981, %v8592
  %9010 = vst.msk [vmem:[%s4 + $0xe0] sm:$0xff] %vm8981, %v8593
  %9011 = vst.msk [vmem:[%s4 + $0xe8] sm:$0xff] %vm8981, %v8594
  %9012 = vst.msk [vmem:[%s4 + $0xf0] sm:$0xff] %vm8981, %v8595
  %9013 = vst.msk [vmem:[%s4 + $0xf8] sm:$0xff] %vm8981, %v8596
  // Predicated region
  $region18: #{knowledge_conditioned_diffusion_forward.1} parent=0 // pred_check
    _
  $region19: #{knowledge_conditioned_diffusion_forward.1} parent=0 // pred_check_branch
    %9015 = sbr.rel (0) target = $region21
  $region20: #{knowledge_conditioned_diffusion_forward.1} parent=0 // pred_region
    _
  $region21: #{knowledge_conditioned_diffusion_forward.1} parent=0 // pred_fallthru
    _
  // Predicated region
  $region22: #{knowledge_conditioned_diffusion_forward.1} parent=0 // pred_check
    _
  $region23: #{knowledge_conditioned_diffusion_forward.1} parent=0 // pred_check_branch
    %9017 = sbr.rel (0) target = $region25
  $region24: #{knowledge_conditioned_diffusion_forward.1} parent=0 // pred_region
    _
  $region25: #{knowledge_conditioned_diffusion_forward.1} parent=0 // pred_fallthru
    _

</llo_original>
